<compile_context>
chip_gen: v7x
topology: tpu7x:2x2x1
jax: 0.10.0
libtpu: 0.0.40
codegen_flags: <defaults>
</compile_context>

<pallas_src>
import functools

import jax
import jax.numpy as jnp
from jax.experimental import pallas as pl
from jax.experimental.pallas import tpu as pltpu


_FC_TN = 512


def _round_up(x, m):
    return ((x + m - 1) // m) * m


# ----------------------------------------------------------------------------
# Pallas kernel 1: fc layer (single matmul, bias fused, activations resident)
# ----------------------------------------------------------------------------
def _fc_kernel(a_ref, w_ref, b_ref, o_ref):
    o_ref[...] = (jnp.dot(a_ref[...], w_ref[...],
                          preferred_element_type=jnp.float32)
                  + b_ref[...]).astype(o_ref.dtype)


def fc_layer(x, w_t_p, b_p, n_out, *, out_dtype=jnp.bfloat16):
    """out = x @ w_t + b.   x:(M,K) f32 ; w_t_p:(K,Np) bf16 ; b_p:(1,Np) f32."""
    M, K = x.shape
    Np = w_t_p.shape[1]
    tn = _FC_TN
    Mp = _round_up(M, 8)
    x_p = jnp.pad(x.astype(jnp.bfloat16), ((0, Mp - M), (0, 0)))

    out = pl.pallas_call(
        _fc_kernel,
        out_shape=jax.ShapeDtypeStruct((Mp, Np), out_dtype),
        grid_spec=pltpu.PrefetchScalarGridSpec(
            num_scalar_prefetch=0,
            grid=(Np // tn,),
            in_specs=[
                pl.BlockSpec((Mp, K), lambda j: (0, 0)),   # activations resident
                pl.BlockSpec((K, tn), lambda j: (0, j)),   # weight column tile
                pl.BlockSpec((1, tn), lambda j: (0, j)),   # bias column tile
            ],
            out_specs=pl.BlockSpec((Mp, tn), lambda j: (0, j)),
        ),
        compiler_params=pltpu.CompilerParams(
            dimension_semantics=("parallel",)),
    )(x_p, w_t_p, b_p)
    return out[:M, :n_out]


# ----------------------------------------------------------------------------
# Pallas kernel 2: fused sub-pixel ConvTranspose2d(k=4, s=2) + bias + ReLU
# ----------------------------------------------------------------------------
def _deconv_kernel(x_ref, w_ref, b_ref, o_ref, *, relu, ta, wc):
    # x_ref: (1, Hp, Wp, Cin)     zero-padded activation plane (one batch elem)
    # w_ref: (4, Cin, Cout4p)     tap-major, phase-packed, lane-padded weight
    # b_ref: (1, Cout4p)          phase-tiled, lane-padded bias
    # o_ref: (1, ta, wc, Cout4p)  phase-packed output rows [r*ta, (r+1)*ta)
    r = pl.program_id(1)
    cin = x_ref.shape[-1]
    cout4 = o_ref.shape[-1]

    # Single dynamic load of the (ta+1)-row window; taps are static shifts.
    win = x_ref[:, pl.ds(r * ta, ta + 1), :, :]          # (1, ta+1, wc+1, Cin)

    acc = jnp.zeros((ta * wc, cout4), jnp.float32)
    for dh in range(2):
        for dw in range(2):
            a = win[:, 1 - dh:1 - dh + ta, 1 - dw:1 - dw + wc, :]
            a = a.reshape(ta * wc, cin)
            acc = acc + jnp.dot(a, w_ref[2 * dh + dw],
                                preferred_element_type=jnp.float32)

    out = acc + b_ref[...]
    if relu:
        out = jnp.maximum(out, 0.0)
    o_ref[...] = out.reshape(1, ta, wc, cout4).astype(o_ref.dtype)


def deconv_fused(x, w_all, b_all, op, cout, *, relu, out_dtype=jnp.bfloat16):
    """ConvTranspose2d(k=4, s=2, p=0, output_padding=op) on NHWC input.

    w_all: (4, Cin, Cout4p) phase-packed weight, Cout4p = round_up(4*cout, 128).
    """
    B, H, W, Cin = x.shape
    Cout4p = w_all.shape[2]

    Hout = 2 * H + 2 + op[0]
    Wout = 2 * W + 2 + op[1]
    Hc = (Hout + 1) // 2                    # phase-grid extent (rows)
    Wc = (Wout + 1) // 2                    # phase-grid extent (cols)
    Wcp = _round_up(Wc, 8)                  # lane/sublane-friendly phase width

    # Row tile: keep tile_m = ta*Wcp moderate and give the grid >= 2 row blocks.
    ta = max(1, min(Hc, 512 // Wcp))
    if Hc >= 2:
        ta = min(ta, (Hc + 1) // 2)
    Hcp = _round_up(Hc, ta)
    n_rb = Hcp // ta
    Hp, Wp = Hcp + 1, Wcp + 1

    # Zero-pad: 1 row/col on top/left, enough on bottom/right for all phases.
    x_pad = jnp.pad(x.astype(jnp.bfloat16),
                    ((0, 0), (1, Hp - 1 - H), (1, Wp - 1 - W), (0, 0)))

    flops = 2 * B * Hcp * Wcp * (4 * Cin) * Cout4p
    bytes_accessed = (x_pad.size * 2 + w_all.size * 2 + b_all.size * 4
                      + B * Hcp * Wcp * Cout4p * jnp.dtype(out_dtype).itemsize)

    kernel = functools.partial(_deconv_kernel, relu=relu, ta=ta, wc=Wcp)
    y = pl.pallas_call(
        kernel,
        out_shape=jax.ShapeDtypeStruct((B, Hcp, Wcp, Cout4p), out_dtype),
        grid_spec=pltpu.PrefetchScalarGridSpec(
            num_scalar_prefetch=0,
            grid=(B, n_rb),
            in_specs=[
                # Full padded plane of batch n; block index ignores r so the
                # plane stays VMEM-resident across the row-block loop.
                pl.BlockSpec((1, Hp, Wp, Cin), lambda n, r: (n, 0, 0, 0)),
                pl.BlockSpec((4, Cin, Cout4p), lambda n, r: (0, 0, 0)),
                pl.BlockSpec((1, Cout4p), lambda n, r: (0, 0)),
            ],
            out_specs=pl.BlockSpec((1, ta, Wcp, Cout4p),
                                   lambda n, r: (n, r, 0, 0)),
        ),
        compiler_params=pltpu.CompilerParams(
            dimension_semantics=("parallel", "parallel")),
        cost_estimate=pl.CostEstimate(flops=flops, transcendentals=0,
                                      bytes_accessed=bytes_accessed),
    )(x_pad, w_all, b_all)

    # Interleave the 4 phases back into the NHWC image (cheap XLA glue).
    y = y[:, :Hc, :Wc, :4 * cout]
    y = y.reshape(B, Hc, Wc, 2, 2, cout)
    y = jnp.transpose(y, (0, 1, 3, 2, 4, 5)).reshape(B, 2 * Hc, 2 * Wc, cout)
    return y[:, :Hout, :Wout, :]


# ----------------------------------------------------------------------------
# Parameter init (torch layouts) + one-time preprocessing (hoisted out of fwd)
# ----------------------------------------------------------------------------
def _encoder_spatial(target_h, target_w):
    h, w = target_h, target_w
    for _ in range(4):                                   # 4x Conv2d(k=4, s=2)
        h = (h - 4) // 2 + 1
        w = (w - 4) // 2 + 1
    return h, w


def init_conv_decoder_params(key, latent_dim, hidden_dim_rssm, out_channels,
                             encoder_flat_size):
    in_dim = hidden_dim_rssm + latent_dim
    ks = jax.random.split(key, 10)

    def w(k, shape, fan_in):
        return jax.random.normal(k, shape, jnp.float32) / jnp.sqrt(fan_in)

    return {
        "fc_w": w(ks[0], (encoder_flat_size, in_dim), in_dim),   # torch layout
        "fc_b": 0.01 * jax.random.normal(ks[1], (encoder_flat_size,), jnp.float32),
        "dc1_w": w(ks[2], (256, 128, 4, 4), 4 * 256),
        "dc1_b": 0.01 * jax.random.normal(ks[3], (128,), jnp.float32),
        "dc2_w": w(ks[4], (128, 64, 4, 4), 4 * 128),
        "dc2_b": 0.01 * jax.random.normal(ks[5], (64,), jnp.float32),
        "dc3_w": w(ks[6], (64, 32, 4, 4), 4 * 64),
        "dc3_b": 0.01 * jax.random.normal(ks[7], (32,), jnp.float32),
        "dc4_w": w(ks[8], (32, out_channels, 4, 4), 4 * 32),
        "dc4_b": 0.01 * jax.random.normal(ks[9], (out_channels,), jnp.float32),
    }


def _phase_pack_weight(wt):
    """(Cin, Cout, 4, 4) torch ConvTranspose2d weight -> (4 taps, Cin, 4*Cout).

    Row groups are taps (dh, dw) in {0,1}^2; column groups are phases (p, q):
    W[(dh,dw), ci, (p,q)*Cout + co] = wt[ci, co, p + 2*dh, q + 2*dw].
    """
    Cin, Cout = wt.shape[0], wt.shape[1]
    w6 = wt.reshape(Cin, Cout, 2, 2, 2, 2)               # (ci, co, dh, p, dw, q)
    w6 = jnp.transpose(w6, (2, 4, 0, 3, 5, 1))           # (dh, dw, ci, p, q, co)
    return w6.reshape(4, Cin, 4 * Cout)


def prepare_decoder_params(params, H_conv_out, W_conv_out):
    """One-time repack/permute/pad/cast of all weights (hoisted from forward)."""
    C = 256
    # fc: transpose to (K, N) and permute columns from torch .view order
    # (c*H*W + h*W + w) to NHWC order ((h*W + w)*C + c) so the fc output can be
    # reshaped to (B, H, W, 256) for free (no transpose before deconv1).
    fc_w_t = params["fc_w"].T                            # (in_dim, C*H*W)
    hw = jnp.arange(H_conv_out * W_conv_out)
    c = jnp.arange(C)
    perm = (c[None, :] * (H_conv_out * W_conv_out) + hw[:, None]).reshape(-1)
    fc_w_t = fc_w_t[:, perm]
    fc_b = params["fc_b"][perm]

    K, N = fc_w_t.shape
    Np = _round_up(N, _FC_TN)
    prepped = {
        "fc_w_t": jnp.pad(fc_w_t, ((0, 0), (0, Np - N))).astype(jnp.bfloat16),
        "fc_b": jnp.pad(fc_b, (0, Np - N)).astype(jnp.float32).reshape(1, Np),
    }
    for i in (1, 2, 3, 4):
        wt = params[f"dc{i}_w"]                          # (Cin, Cout, 4, 4)
        cout = wt.shape[1]
        wpk = _phase_pack_weight(wt)                     # (4, Cin, 4*Cout)
        npk = _round_up(4 * cout, 128)                   # lane-dense packed width
        prepped[f"dc{i}_w"] = jnp.pad(
            wpk, ((0, 0), (0, 0), (0, npk - 4 * cout))).astype(jnp.bfloat16)
        b = jnp.tile(params[f"dc{i}_b"], 4)
        prepped[f"dc{i}_b"] = jnp.pad(b, (0, npk - 4 * cout)).astype(
            jnp.float32).reshape(1, npk)
    return prepped


# ----------------------------------------------------------------------------
# Forward pass (matches the PyTorch module semantics; NCHW output at the API)
# ----------------------------------------------------------------------------
def conv_decoder_forward(pp, h, z_posterior, *, H_conv_out, W_conv_out,
                         out_channels):
    x = jnp.concatenate([h, z_posterior], axis=-1)                 # (B, D)
    flat = 256 * H_conv_out * W_conv_out
    x = fc_layer(x, pp["fc_w_t"], pp["fc_b"], flat)                # (B, flat)
    B = x.shape[0]
    # fc columns are pre-permuted to NHWC -> free reshape (torch .view + NHWC).
    x = x.reshape(B, H_conv_out, W_conv_out, 256)
    x = deconv_fused(x, pp["dc1_w"], pp["dc1_b"], (0, 1), 128, relu=True)
    x = deconv_fused(x, pp["dc2_w"], pp["dc2_b"], (0, 0), 64, relu=True)
    x = deconv_fused(x, pp["dc3_w"], pp["dc3_b"], (1, 1), 32, relu=True)
    x = deconv_fused(x, pp["dc4_w"], pp["dc4_b"], (0, 0), out_channels,
                     relu=False, out_dtype=jnp.float32)
    return jnp.transpose(x, (0, 3, 1, 2))                          # -> NCHW


# ----------------------------------------------------------------------------
# Pure-JAX fp32 reference (direct scatter form of ConvTranspose2d)
# ----------------------------------------------------------------------------
def _conv_transpose_ref(x_nchw, wt, b, op):
    N, Cin, H, W = x_nchw.shape
    Cout = wt.shape[1]
    Hout = (H - 1) * 2 + 4 + op[0]
    Wout = (W - 1) * 2 + 4 + op[1]
    out = jnp.zeros((N, Cout, Hout, Wout), jnp.float32) + b[None, :, None, None]
    for kh in range(4):
        for kw in range(4):
            contrib = jnp.einsum("nihw,io->nohw", x_nchw, wt[:, :, kh, kw],
                                 precision=jax.lax.Precision.HIGHEST)
            out = out.at[:, :, kh:kh + 2 * H:2, kw:kw + 2 * W:2].add(contrib)
    return out


def conv_decoder_ref(params, h, z_posterior, H_conv_out, W_conv_out):
    x = jnp.concatenate([h, z_posterior], axis=-1)
    x = jnp.dot(x, params["fc_w"].T,
                precision=jax.lax.Precision.HIGHEST) + params["fc_b"]
    x = x.reshape(-1, 256, H_conv_out, W_conv_out)
    x = jax.nn.relu(_conv_transpose_ref(x, params["dc1_w"], params["dc1_b"], (0, 1)))
    x = jax.nn.relu(_conv_transpose_ref(x, params["dc2_w"], params["dc2_b"], (0, 0)))
    x = jax.nn.relu(_conv_transpose_ref(x, params["dc3_w"], params["dc3_b"], (1, 1)))
    return _conv_transpose_ref(x, params["dc4_w"], params["dc4_b"], (0, 0))


# ----------------------------------------------------------------------------
if __name__ == "__main__":
    # Small config consistent with the module (scaled-down target image).
    latent_dim = 16
    hidden_dim_rssm = 32
    out_channels = 3
    target_h, target_w = 96, 80
    batch = 2

    H_conv_out, W_conv_out = _encoder_spatial(target_h, target_w)    # 4 x 3
    encoder_flat_size = 256 * H_conv_out * W_conv_out                # 3072

    key = jax.random.PRNGKey(0)
    kp, kh, kz = jax.random.split(key, 3)
    params = init_conv_decoder_params(kp, latent_dim, hidden_dim_rssm,
                                      out_channels, encoder_flat_size)
    pp = prepare_decoder_params(params, H_conv_out, W_conv_out)      # hoisted

    h = jax.random.normal(kh, (batch, hidden_dim_rssm), jnp.float32)
    z = jax.random.normal(kz, (batch, latent_dim), jnp.float32)

    fwd = jax.jit(functools.partial(conv_decoder_forward,
                                    H_conv_out=H_conv_out,
                                    W_conv_out=W_conv_out,
                                    out_channels=out_channels))
    out = jax.block_until_ready(fwd(pp, h, z))

    ref = jax.block_until_ready(
        conv_decoder_ref(params, h, z, H_conv_out, W_conv_out))

    assert out.shape == ref.shape, (out.shape, ref.shape)
    err = float(jnp.max(jnp.abs(out.astype(jnp.float32) - ref)))
    scale = float(jnp.max(jnp.abs(ref))) + 1e-6
    # bf16 operands / fp32 accumulation across 5 layers: allow a few % max-norm.
    assert err / scale < 0.08, ("relative error too large", err, scale)

    print("KERNEL_OK")
</pallas_src>

<mosaic_0001>
module attributes {stable_mosaic.version = 11 : i64} {
  func.func @_fc_kernel(%arg0: i32, %arg1: memref<8x48xbf16, #tpu.memory_space<vmem>>, %arg2: memref<48x512xbf16, #tpu.memory_space<vmem>>, %arg3: memref<1x512xf32, #tpu.memory_space<vmem>>, %arg4: memref<8x512xbf16, #tpu.memory_space<vmem>>) attributes {dimension_semantics = [#tpu.dimension_semantics<parallel>], iteration_bounds = array<i64: 6>, scalar_prefetch = 0 : i64, scratch_operands = 0 : i64, tpu.core_type = #tpu.core_type<tc>, window_params = [{pipeline_mode = #tpu.pipeline_mode<synchronous>, transform_indices = @transform_0, window_bounds = array<i64: 8, 48>}, {transform_indices = @transform_1, window_bounds = array<i64: 48, 512>}, {transform_indices = @transform_2, window_bounds = array<i64: 1, 512>}, {transform_indices = @transform_3, window_bounds = array<i64: 8, 512>}]} {
    %c0 = arith.constant 0 : index
    %c0_0 = arith.constant 0 : index
    %0 = vector.load %arg1[%c0, %c0_0] : memref<8x48xbf16, #tpu.memory_space<vmem>>, vector<8x48xbf16>
    %c0_1 = arith.constant 0 : index
    %c0_2 = arith.constant 0 : index
    %1 = vector.load %arg2[%c0_1, %c0_2] : memref<48x512xbf16, #tpu.memory_space<vmem>>, vector<48x512xbf16>
    %cst = arith.constant dense<0.000000e+00> : vector<8x512xf32>
    %2 = tpu.matmul %0, %1, %cst {dimension_numbers = #tpu.dot_dimension_numbers<[1], [0], [0], [1], [0, 0, 1, 1], [], []>} : vector<8x48xbf16>, vector<48x512xbf16>, vector<8x512xf32> -> vector<8x512xf32>
    %c0_3 = arith.constant 0 : index
    %c0_4 = arith.constant 0 : index
    %3 = vector.load %arg3[%c0_3, %c0_4] : memref<1x512xf32, #tpu.memory_space<vmem>>, vector<1x512xf32>
    %4 = vector.broadcast %3 : vector<1x512xf32> to vector<8x512xf32>
    %5 = arith.addf %2, %4 : vector<8x512xf32>
    %6 = arith.truncf %5 : vector<8x512xf32> to vector<8x512xbf16>
    %c0_5 = arith.constant 0 : index
    %c0_6 = arith.constant 0 : index
    %7 = vector.load %arg4[%c0_5, %c0_6] : memref<8x512xbf16, #tpu.memory_space<vmem>>, vector<8x512xbf16>
    tpu.vector_store %arg4[%c0_5, %c0_6], %6 {strides = array<i32>} : memref<8x512xbf16, #tpu.memory_space<vmem>>, vector<8x512xbf16>,
    return
  }
  func.func @transform_0(%arg0: i32) -> (i32, i32) {
    %c0_i32 = arith.constant 0 : i32
    %c0_i32_0 = arith.constant 0 : i32
    %c0_i32_1 = arith.constant 0 : i32
    return %c0_i32, %c0_i32_0 : i32, i32
  }
  func.func @transform_1(%arg0: i32) -> (i32, i32) {
    %c0_i32 = arith.constant 0 : i32
    %c0_i32_0 = arith.constant 0 : i32
    return %c0_i32, %arg0 : i32, i32
  }
  func.func @transform_2(%arg0: i32) -> (i32, i32) {
    %c0_i32 = arith.constant 0 : i32
    %c0_i32_0 = arith.constant 0 : i32
    return %c0_i32, %arg0 : i32, i32
  }
  func.func @transform_3(%arg0: i32) -> (i32, i32) {
    %c0_i32 = arith.constant 0 : i32
    %c0_i32_0 = arith.constant 0 : i32
    return %c0_i32, %arg0 : i32, i32
  }
}

module attributes {stable_mosaic.version = 11 : i64} {
  func.func @_deconv_kernel(%arg0: i32, %arg1: i32, %arg2: memref<1x7x9x256xbf16, #tpu.memory_space<vmem>>, %arg3: memref<4x256x512xbf16, #tpu.memory_space<vmem>>, %arg4: memref<1x512xf32, #tpu.memory_space<vmem>>, %arg5: memref<1x3x8x512xbf16, #tpu.memory_space<vmem>>) attributes {dimension_semantics = [#tpu.dimension_semantics<parallel>, #tpu.dimension_semantics<parallel>], iteration_bounds = array<i64: 2, 2>, scalar_prefetch = 0 : i64, scratch_operands = 0 : i64, tpu.core_type = #tpu.core_type<tc>, window_params = [{transform_indices = @transform_0, window_bounds = array<i64: 1, 7, 9, 256>}, {pipeline_mode = #tpu.pipeline_mode<synchronous>, transform_indices = @transform_1, window_bounds = array<i64: 4, 256, 512>}, {pipeline_mode = #tpu.pipeline_mode<synchronous>, transform_indices = @transform_2, window_bounds = array<i64: 1, 512>}, {transform_indices = @transform_3, window_bounds = array<i64: 1, 3, 8, 512>}]} {
    %c3_i32 = arith.constant 3 : i32
    %0 = arith.muli %arg1, %c3_i32 : i32
    %c0 = arith.constant 0 : index
    %1 = arith.index_cast %0 : i32 to index
    %c0_0 = arith.constant 0 : index
    %c0_1 = arith.constant 0 : index
    %2 = vector.load %arg2[%c0, %1, %c0_0, %c0_1] : memref<1x7x9x256xbf16, #tpu.memory_space<vmem>>, vector<1x4x9x256xbf16>
    %cst = arith.constant 0.000000e+00 : f32
    %3 = vector.broadcast %cst : f32 to vector<24x512xf32>
    %4 = vector.extract_strided_slice %2 {offsets = [0, 1, 1, 0], sizes = [1, 3, 8, 256], strides = [1, 1, 1, 1]} : vector<1x4x9x256xbf16> to vector<1x3x8x256xbf16>
    %5 = vector.shape_cast %4 : vector<1x3x8x256xbf16> to vector<24x256xbf16>
    %c0_2 = arith.constant 0 : index
    %c0_3 = arith.constant 0 : index
    %c0_4 = arith.constant 0 : index
    %6 = vector.load %arg3[%c0_2, %c0_3, %c0_4] : memref<4x256x512xbf16, #tpu.memory_space<vmem>>, vector<1x256x512xbf16>
    %7 = vector.shape_cast %6 : vector<1x256x512xbf16> to vector<256x512xbf16>
    %cst_5 = arith.constant dense<0.000000e+00> : vector<24x512xf32>
    %8 = tpu.matmul %5, %7, %cst_5 {dimension_numbers = #tpu.dot_dimension_numbers<[1], [0], [0], [1], [0, 0, 1, 1], [], []>} : vector<24x256xbf16>, vector<256x512xbf16>, vector<24x512xf32> -> vector<24x512xf32>
    %9 = arith.addf %3, %8 : vector<24x512xf32>
    %10 = vector.extract_strided_slice %2 {offsets = [0, 1, 0, 0], sizes = [1, 3, 8, 256], strides = [1, 1, 1, 1]} : vector<1x4x9x256xbf16> to vector<1x3x8x256xbf16>
    %11 = vector.shape_cast %10 : vector<1x3x8x256xbf16> to vector<24x256xbf16>
    %c1 = arith.constant 1 : index
    %c0_6 = arith.constant 0 : index
    %c0_7 = arith.constant 0 : index
    %12 = vector.load %arg3[%c1, %c0_6, %c0_7] : memref<4x256x512xbf16, #tpu.memory_space<vmem>>, vector<1x256x512xbf16>
    %13 = vector.shape_cast %12 : vector<1x256x512xbf16> to vector<256x512xbf16>
    %cst_8 = arith.constant dense<0.000000e+00> : vector<24x512xf32>
    %14 = tpu.matmul %11, %13, %cst_8 {dimension_numbers = #tpu.dot_dimension_numbers<[1], [0], [0], [1], [0, 0, 1, 1], [], []>} : vector<24x256xbf16>, vector<256x512xbf16>, vector<24x512xf32> -> vector<24x512xf32>
    %15 = arith.addf %9, %14 : vector<24x512xf32>
    %16 = vector.extract_strided_slice %2 {offsets = [0, 0, 1, 0], sizes = [1, 3, 8, 256], strides = [1, 1, 1, 1]} : vector<1x4x9x256xbf16> to vector<1x3x8x256xbf16>
    %17 = vector.shape_cast %16 : vector<1x3x8x256xbf16> to vector<24x256xbf16>
    %c2 = arith.constant 2 : index
    %c0_9 = arith.constant 0 : index
    %c0_10 = arith.constant 0 : index
    %18 = vector.load %arg3[%c2, %c0_9, %c0_10] : memref<4x256x512xbf16, #tpu.memory_space<vmem>>, vector<1x256x512xbf16>
    %19 = vector.shape_cast %18 : vector<1x256x512xbf16> to vector<256x512xbf16>
    %cst_11 = arith.constant dense<0.000000e+00> : vector<24x512xf32>
    %20 = tpu.matmul %17, %19, %cst_11 {dimension_numbers = #tpu.dot_dimension_numbers<[1], [0], [0], [1], [0, 0, 1, 1], [], []>} : vector<24x256xbf16>, vector<256x512xbf16>, vector<24x512xf32> -> vector<24x512xf32>
    %21 = arith.addf %15, %20 : vector<24x512xf32>
    %22 = vector.extract_strided_slice %2 {offsets = [0, 0, 0, 0], sizes = [1, 3, 8, 256], strides = [1, 1, 1, 1]} : vector<1x4x9x256xbf16> to vector<1x3x8x256xbf16>
    %23 = vector.shape_cast %22 : vector<1x3x8x256xbf16> to vector<24x256xbf16>
    %c3 = arith.constant 3 : index
    %c0_12 = arith.constant 0 : index
    %c0_13 = arith.constant 0 : index
    %24 = vector.load %arg3[%c3, %c0_12, %c0_13] : memref<4x256x512xbf16, #tpu.memory_space<vmem>>, vector<1x256x512xbf16>
    %25 = vector.shape_cast %24 : vector<1x256x512xbf16> to vector<256x512xbf16>
    %cst_14 = arith.constant dense<0.000000e+00> : vector<24x512xf32>
    %26 = tpu.matmul %23, %25, %cst_14 {dimension_numbers = #tpu.dot_dimension_numbers<[1], [0], [0], [1], [0, 0, 1, 1], [], []>} : vector<24x256xbf16>, vector<256x512xbf16>, vector<24x512xf32> -> vector<24x512xf32>
    %27 = arith.addf %21, %26 : vector<24x512xf32>
    %c0_15 = arith.constant 0 : index
    %c0_16 = arith.constant 0 : index
    %28 = vector.load %arg4[%c0_15, %c0_16] : memref<1x512xf32, #tpu.memory_space<vmem>>, vector<1x512xf32>
    %29 = vector.broadcast %28 : vector<1x512xf32> to vector<24x512xf32>
    %30 = arith.addf %27, %29 : vector<24x512xf32>
    %cst_17 = arith.constant 0.000000e+00 : f32
    %31 = vector.broadcast %cst_17 : f32 to vector<24x512xf32>
    %32 = arith.maximumf %30, %31 : vector<24x512xf32>
    %33 = vector.shape_cast %32 : vector<24x512xf32> to vector<1x3x8x512xf32>
    %34 = arith.truncf %33 : vector<1x3x8x512xf32> to vector<1x3x8x512xbf16>
    %c0_18 = arith.constant 0 : index
    %c0_19 = arith.constant 0 : index
    %c0_20 = arith.constant 0 : index
    %c0_21 = arith.constant 0 : index
    %35 = vector.load %arg5[%c0_18, %c0_19, %c0_20, %c0_21] : memref<1x3x8x512xbf16, #tpu.memory_space<vmem>>, vector<1x3x8x512xbf16>
    tpu.vector_store %arg5[%c0_18, %c0_19, %c0_20, %c0_21], %34 {strides = array<i32>} : memref<1x3x8x512xbf16, #tpu.memory_space<vmem>>, vector<1x3x8x512xbf16>,
    return
  }
  func.func @transform_0(%arg0: i32, %arg1: i32) -> (i32, i32, i32, i32) {
    %c0_i32 = arith.constant 0 : i32
    %c0_i32_0 = arith.constant 0 : i32
    %c0_i32_1 = arith.constant 0 : i32
    %c0_i32_2 = arith.constant 0 : i32
    return %arg0, %c0_i32, %c0_i32_0, %c0_i32_1 : i32, i32, i32, i32
  }
  func.func @transform_1(%arg0: i32, %arg1: i32) -> (i32, i32, i32) {
    %c0_i32 = arith.constant 0 : i32
    %c0_i32_0 = arith.constant 0 : i32
    %c0_i32_1 = arith.constant 0 : i32
    %c0_i32_2 = arith.constant 0 : i32
    return %c0_i32, %c0_i32_0, %c0_i32_1 : i32, i32, i32
  }
  func.func @transform_2(%arg0: i32, %arg1: i32) -> (i32, i32) {
    %c0_i32 = arith.constant 0 : i32
    %c0_i32_0 = arith.constant 0 : i32
    %c0_i32_1 = arith.constant 0 : i32
    return %c0_i32, %c0_i32_0 : i32, i32
  }
  func.func @transform_3(%arg0: i32, %arg1: i32) -> (i32, i32, i32, i32) {
    %c0_i32 = arith.constant 0 : i32
    %c0_i32_0 = arith.constant 0 : i32
    %c0_i32_1 = arith.constant 0 : i32
    return %arg0, %arg1, %c0_i32, %c0_i32_0 : i32, i32, i32, i32
  }
}

module attributes {stable_mosaic.version = 11 : i64} {
  func.func @_deconv_kernel(%arg0: i32, %arg1: i32, %arg2: memref<1x13x17x128xbf16, #tpu.memory_space<vmem>>, %arg3: memref<4x128x256xbf16, #tpu.memory_space<vmem>>, %arg4: memref<1x256xf32, #tpu.memory_space<vmem>>, %arg5: memref<1x6x16x256xbf16, #tpu.memory_space<vmem>>) attributes {dimension_semantics = [#tpu.dimension_semantics<parallel>, #tpu.dimension_semantics<parallel>], iteration_bounds = array<i64: 2, 2>, scalar_prefetch = 0 : i64, scratch_operands = 0 : i64, tpu.core_type = #tpu.core_type<tc>, window_params = [{transform_indices = @transform_0, window_bounds = array<i64: 1, 13, 17, 128>}, {pipeline_mode = #tpu.pipeline_mode<synchronous>, transform_indices = @transform_1, window_bounds = array<i64: 4, 128, 256>}, {pipeline_mode = #tpu.pipeline_mode<synchronous>, transform_indices = @transform_2, window_bounds = array<i64: 1, 256>}, {transform_indices = @transform_3, window_bounds = array<i64: 1, 6, 16, 256>}]} {
    %c6_i32 = arith.constant 6 : i32
    %0 = arith.muli %arg1, %c6_i32 : i32
    %c0 = arith.constant 0 : index
    %1 = arith.index_cast %0 : i32 to index
    %c0_0 = arith.constant 0 : index
    %c0_1 = arith.constant 0 : index
    %2 = vector.load %arg2[%c0, %1, %c0_0, %c0_1] : memref<1x13x17x128xbf16, #tpu.memory_space<vmem>>, vector<1x7x17x128xbf16>
    %cst = arith.constant 0.000000e+00 : f32
    %3 = vector.broadcast %cst : f32 to vector<96x256xf32>
    %4 = vector.extract_strided_slice %2 {offsets = [0, 1, 1, 0], sizes = [1, 6, 16, 128], strides = [1, 1, 1, 1]} : vector<1x7x17x128xbf16> to vector<1x6x16x128xbf16>
    %5 = vector.shape_cast %4 : vector<1x6x16x128xbf16> to vector<96x128xbf16>
    %c0_2 = arith.constant 0 : index
    %c0_3 = arith.constant 0 : index
    %c0_4 = arith.constant 0 : index
    %6 = vector.load %arg3[%c0_2, %c0_3, %c0_4] : memref<4x128x256xbf16, #tpu.memory_space<vmem>>, vector<1x128x256xbf16>
    %7 = vector.shape_cast %6 : vector<1x128x256xbf16> to vector<128x256xbf16>
    %cst_5 = arith.constant dense<0.000000e+00> : vector<96x256xf32>
    %8 = tpu.matmul %5, %7, %cst_5 {dimension_numbers = #tpu.dot_dimension_numbers<[1], [0], [0], [1], [0, 0, 1, 1], [], []>} : vector<96x128xbf16>, vector<128x256xbf16>, vector<96x256xf32> -> vector<96x256xf32>
    %9 = arith.addf %3, %8 : vector<96x256xf32>
    %10 = vector.extract_strided_slice %2 {offsets = [0, 1, 0, 0], sizes = [1, 6, 16, 128], strides = [1, 1, 1, 1]} : vector<1x7x17x128xbf16> to vector<1x6x16x128xbf16>
    %11 = vector.shape_cast %10 : vector<1x6x16x128xbf16> to vector<96x128xbf16>
    %c1 = arith.constant 1 : index
    %c0_6 = arith.constant 0 : index
    %c0_7 = arith.constant 0 : index
    %12 = vector.load %arg3[%c1, %c0_6, %c0_7] : memref<4x128x256xbf16, #tpu.memory_space<vmem>>, vector<1x128x256xbf16>
    %13 = vector.shape_cast %12 : vector<1x128x256xbf16> to vector<128x256xbf16>
    %cst_8 = arith.constant dense<0.000000e+00> : vector<96x256xf32>
    %14 = tpu.matmul %11, %13, %cst_8 {dimension_numbers = #tpu.dot_dimension_numbers<[1], [0], [0], [1], [0, 0, 1, 1], [], []>} : vector<96x128xbf16>, vector<128x256xbf16>, vector<96x256xf32> -> vector<96x256xf32>
    %15 = arith.addf %9, %14 : vector<96x256xf32>
    %16 = vector.extract_strided_slice %2 {offsets = [0, 0, 1, 0], sizes = [1, 6, 16, 128], strides = [1, 1, 1, 1]} : vector<1x7x17x128xbf16> to vector<1x6x16x128xbf16>
    %17 = vector.shape_cast %16 : vector<1x6x16x128xbf16> to vector<96x128xbf16>
    %c2 = arith.constant 2 : index
    %c0_9 = arith.constant 0 : index
    %c0_10 = arith.constant 0 : index
    %18 = vector.load %arg3[%c2, %c0_9, %c0_10] : memref<4x128x256xbf16, #tpu.memory_space<vmem>>, vector<1x128x256xbf16>
    %19 = vector.shape_cast %18 : vector<1x128x256xbf16> to vector<128x256xbf16>
    %cst_11 = arith.constant dense<0.000000e+00> : vector<96x256xf32>
    %20 = tpu.matmul %17, %19, %cst_11 {dimension_numbers = #tpu.dot_dimension_numbers<[1], [0], [0], [1], [0, 0, 1, 1], [], []>} : vector<96x128xbf16>, vector<128x256xbf16>, vector<96x256xf32> -> vector<96x256xf32>
    %21 = arith.addf %15, %20 : vector<96x256xf32>
    %22 = vector.extract_strided_slice %2 {offsets = [0, 0, 0, 0], sizes = [1, 6, 16, 128], strides = [1, 1, 1, 1]} : vector<1x7x17x128xbf16> to vector<1x6x16x128xbf16>
    %23 = vector.shape_cast %22 : vector<1x6x16x128xbf16> to vector<96x128xbf16>
    %c3 = arith.constant 3 : index
    %c0_12 = arith.constant 0 : index
    %c0_13 = arith.constant 0 : index
    %24 = vector.load %arg3[%c3, %c0_12, %c0_13] : memref<4x128x256xbf16, #tpu.memory_space<vmem>>, vector<1x128x256xbf16>
    %25 = vector.shape_cast %24 : vector<1x128x256xbf16> to vector<128x256xbf16>
    %cst_14 = arith.constant dense<0.000000e+00> : vector<96x256xf32>
    %26 = tpu.matmul %23, %25, %cst_14 {dimension_numbers = #tpu.dot_dimension_numbers<[1], [0], [0], [1], [0, 0, 1, 1], [], []>} : vector<96x128xbf16>, vector<128x256xbf16>, vector<96x256xf32> -> vector<96x256xf32>
    %27 = arith.addf %21, %26 : vector<96x256xf32>
    %c0_15 = arith.constant 0 : index
    %c0_16 = arith.constant 0 : index
    %28 = vector.load %arg4[%c0_15, %c0_16] : memref<1x256xf32, #tpu.memory_space<vmem>>, vector<1x256xf32>
    %29 = vector.broadcast %28 : vector<1x256xf32> to vector<96x256xf32>
    %30 = arith.addf %27, %29 : vector<96x256xf32>
    %cst_17 = arith.constant 0.000000e+00 : f32
    %31 = vector.broadcast %cst_17 : f32 to vector<96x256xf32>
    %32 = arith.maximumf %30, %31 : vector<96x256xf32>
    %33 = vector.shape_cast %32 : vector<96x256xf32> to vector<1x6x16x256xf32>
    %34 = arith.truncf %33 : vector<1x6x16x256xf32> to vector<1x6x16x256xbf16>
    %c0_18 = arith.constant 0 : index
    %c0_19 = arith.constant 0 : index
    %c0_20 = arith.constant 0 : index
    %c0_21 = arith.constant 0 : index
    %35 = vector.load %arg5[%c0_18, %c0_19, %c0_20, %c0_21] : memref<1x6x16x256xbf16, #tpu.memory_space<vmem>>, vector<1x6x16x256xbf16>
    tpu.vector_store %arg5[%c0_18, %c0_19, %c0_20, %c0_21], %34 {strides = array<i32>} : memref<1x6x16x256xbf16, #tpu.memory_space<vmem>>, vector<1x6x16x256xbf16>,
    return
  }
  func.func @transform_0(%arg0: i32, %arg1: i32) -> (i32, i32, i32, i32) {
    %c0_i32 = arith.constant 0 : i32
    %c0_i32_0 = arith.constant 0 : i32
    %c0_i32_1 = arith.constant 0 : i32
    %c0_i32_2 = arith.constant 0 : i32
    return %arg0, %c0_i32, %c0_i32_0, %c0_i32_1 : i32, i32, i32, i32
  }
  func.func @transform_1(%arg0: i32, %arg1: i32) -> (i32, i32, i32) {
    %c0_i32 = arith.constant 0 : i32
    %c0_i32_0 = arith.constant 0 : i32
    %c0_i32_1 = arith.constant 0 : i32
    %c0_i32_2 = arith.constant 0 : i32
    return %c0_i32, %c0_i32_0, %c0_i32_1 : i32, i32, i32
  }
  func.func @transform_2(%arg0: i32, %arg1: i32) -> (i32, i32) {
    %c0_i32 = arith.constant 0 : i32
    %c0_i32_0 = arith.constant 0 : i32
    %c0_i32_1 = arith.constant 0 : i32
    return %c0_i32, %c0_i32_0 : i32, i32
  }
  func.func @transform_3(%arg0: i32, %arg1: i32) -> (i32, i32, i32, i32) {
    %c0_i32 = arith.constant 0 : i32
    %c0_i32_0 = arith.constant 0 : i32
    %c0_i32_1 = arith.constant 0 : i32
    return %arg0, %arg1, %c0_i32, %c0_i32_0 : i32, i32, i32, i32
  }
}

module attributes {stable_mosaic.version = 11 : i64} {
  func.func @_deconv_kernel(%arg0: i32, %arg1: i32, %arg2: memref<1x25x25x64xbf16, #tpu.memory_space<vmem>>, %arg3: memref<4x64x128xbf16, #tpu.memory_space<vmem>>, %arg4: memref<1x128xf32, #tpu.memory_space<vmem>>, %arg5: memref<1x12x24x128xbf16, #tpu.memory_space<vmem>>) attributes {dimension_semantics = [#tpu.dimension_semantics<parallel>, #tpu.dimension_semantics<parallel>], iteration_bounds = array<i64: 2, 2>, scalar_prefetch = 0 : i64, scratch_operands = 0 : i64, tpu.core_type = #tpu.core_type<tc>, window_params = [{transform_indices = @transform_0, window_bounds = array<i64: 1, 25, 25, 64>}, {pipeline_mode = #tpu.pipeline_mode<synchronous>, transform_indices = @transform_1, window_bounds = array<i64: 4, 64, 128>}, {pipeline_mode = #tpu.pipeline_mode<synchronous>, transform_indices = @transform_2, window_bounds = array<i64: 1, 128>}, {transform_indices = @transform_3, window_bounds = array<i64: 1, 12, 24, 128>}]} {
    %c12_i32 = arith.constant 12 : i32
    %0 = arith.muli %arg1, %c12_i32 : i32
    %c0 = arith.constant 0 : index
    %1 = arith.index_cast %0 : i32 to index
    %c0_0 = arith.constant 0 : index
    %c0_1 = arith.constant 0 : index
    %2 = vector.load %arg2[%c0, %1, %c0_0, %c0_1] : memref<1x25x25x64xbf16, #tpu.memory_space<vmem>>, vector<1x13x25x64xbf16>
    %cst = arith.constant 0.000000e+00 : f32
    %3 = vector.broadcast %cst : f32 to vector<288x128xf32>
    %4 = vector.extract_strided_slice %2 {offsets = [0, 1, 1, 0], sizes = [1, 12, 24, 64], strides = [1, 1, 1, 1]} : vector<1x13x25x64xbf16> to vector<1x12x24x64xbf16>
    %5 = vector.shape_cast %4 : vector<1x12x24x64xbf16> to vector<288x64xbf16>
    %c0_2 = arith.constant 0 : index
    %c0_3 = arith.constant 0 : index
    %c0_4 = arith.constant 0 : index
    %6 = vector.load %arg3[%c0_2, %c0_3, %c0_4] : memref<4x64x128xbf16, #tpu.memory_space<vmem>>, vector<1x64x128xbf16>
    %7 = vector.shape_cast %6 : vector<1x64x128xbf16> to vector<64x128xbf16>
    %cst_5 = arith.constant dense<0.000000e+00> : vector<288x128xf32>
    %8 = tpu.matmul %5, %7, %cst_5 {dimension_numbers = #tpu.dot_dimension_numbers<[1], [0], [0], [1], [0, 0, 1, 1], [], []>} : vector<288x64xbf16>, vector<64x128xbf16>, vector<288x128xf32> -> vector<288x128xf32>
    %9 = arith.addf %3, %8 : vector<288x128xf32>
    %10 = vector.extract_strided_slice %2 {offsets = [0, 1, 0, 0], sizes = [1, 12, 24, 64], strides = [1, 1, 1, 1]} : vector<1x13x25x64xbf16> to vector<1x12x24x64xbf16>
    %11 = vector.shape_cast %10 : vector<1x12x24x64xbf16> to vector<288x64xbf16>
    %c1 = arith.constant 1 : index
    %c0_6 = arith.constant 0 : index
    %c0_7 = arith.constant 0 : index
    %12 = vector.load %arg3[%c1, %c0_6, %c0_7] : memref<4x64x128xbf16, #tpu.memory_space<vmem>>, vector<1x64x128xbf16>
    %13 = vector.shape_cast %12 : vector<1x64x128xbf16> to vector<64x128xbf16>
    %cst_8 = arith.constant dense<0.000000e+00> : vector<288x128xf32>
    %14 = tpu.matmul %11, %13, %cst_8 {dimension_numbers = #tpu.dot_dimension_numbers<[1], [0], [0], [1], [0, 0, 1, 1], [], []>} : vector<288x64xbf16>, vector<64x128xbf16>, vector<288x128xf32> -> vector<288x128xf32>
    %15 = arith.addf %9, %14 : vector<288x128xf32>
    %16 = vector.extract_strided_slice %2 {offsets = [0, 0, 1, 0], sizes = [1, 12, 24, 64], strides = [1, 1, 1, 1]} : vector<1x13x25x64xbf16> to vector<1x12x24x64xbf16>
    %17 = vector.shape_cast %16 : vector<1x12x24x64xbf16> to vector<288x64xbf16>
    %c2 = arith.constant 2 : index
    %c0_9 = arith.constant 0 : index
    %c0_10 = arith.constant 0 : index
    %18 = vector.load %arg3[%c2, %c0_9, %c0_10] : memref<4x64x128xbf16, #tpu.memory_space<vmem>>, vector<1x64x128xbf16>
    %19 = vector.shape_cast %18 : vector<1x64x128xbf16> to vector<64x128xbf16>
    %cst_11 = arith.constant dense<0.000000e+00> : vector<288x128xf32>
    %20 = tpu.matmul %17, %19, %cst_11 {dimension_numbers = #tpu.dot_dimension_numbers<[1], [0], [0], [1], [0, 0, 1, 1], [], []>} : vector<288x64xbf16>, vector<64x128xbf16>, vector<288x128xf32> -> vector<288x128xf32>
    %21 = arith.addf %15, %20 : vector<288x128xf32>
    %22 = vector.extract_strided_slice %2 {offsets = [0, 0, 0, 0], sizes = [1, 12, 24, 64], strides = [1, 1, 1, 1]} : vector<1x13x25x64xbf16> to vector<1x12x24x64xbf16>
    %23 = vector.shape_cast %22 : vector<1x12x24x64xbf16> to vector<288x64xbf16>
    %c3 = arith.constant 3 : index
    %c0_12 = arith.constant 0 : index
    %c0_13 = arith.constant 0 : index
    %24 = vector.load %arg3[%c3, %c0_12, %c0_13] : memref<4x64x128xbf16, #tpu.memory_space<vmem>>, vector<1x64x128xbf16>
    %25 = vector.shape_cast %24 : vector<1x64x128xbf16> to vector<64x128xbf16>
    %cst_14 = arith.constant dense<0.000000e+00> : vector<288x128xf32>
    %26 = tpu.matmul %23, %25, %cst_14 {dimension_numbers = #tpu.dot_dimension_numbers<[1], [0], [0], [1], [0, 0, 1, 1], [], []>} : vector<288x64xbf16>, vector<64x128xbf16>, vector<288x128xf32> -> vector<288x128xf32>
    %27 = arith.addf %21, %26 : vector<288x128xf32>
    %c0_15 = arith.constant 0 : index
    %c0_16 = arith.constant 0 : index
    %28 = vector.load %arg4[%c0_15, %c0_16] : memref<1x128xf32, #tpu.memory_space<vmem>>, vector<1x128xf32>
    %29 = vector.broadcast %28 : vector<1x128xf32> to vector<288x128xf32>
    %30 = arith.addf %27, %29 : vector<288x128xf32>
    %cst_17 = arith.constant 0.000000e+00 : f32
    %31 = vector.broadcast %cst_17 : f32 to vector<288x128xf32>
    %32 = arith.maximumf %30, %31 : vector<288x128xf32>
    %33 = vector.shape_cast %32 : vector<288x128xf32> to vector<1x12x24x128xf32>
    %34 = arith.truncf %33 : vector<1x12x24x128xf32> to vector<1x12x24x128xbf16>
    %c0_18 = arith.constant 0 : index
    %c0_19 = arith.constant 0 : index
    %c0_20 = arith.constant 0 : index
    %c0_21 = arith.constant 0 : index
    %35 = vector.load %arg5[%c0_18, %c0_19, %c0_20, %c0_21] : memref<1x12x24x128xbf16, #tpu.memory_space<vmem>>, vector<1x12x24x128xbf16>
    tpu.vector_store %arg5[%c0_18, %c0_19, %c0_20, %c0_21], %34 {strides = array<i32>} : memref<1x12x24x128xbf16, #tpu.memory_space<vmem>>, vector<1x12x24x128xbf16>,
    return
  }
  func.func @transform_0(%arg0: i32, %arg1: i32) -> (i32, i32, i32, i32) {
    %c0_i32 = arith.constant 0 : i32
    %c0_i32_0 = arith.constant 0 : i32
    %c0_i32_1 = arith.constant 0 : i32
    %c0_i32_2 = arith.constant 0 : i32
    return %arg0, %c0_i32, %c0_i32_0, %c0_i32_1 : i32, i32, i32, i32
  }
  func.func @transform_1(%arg0: i32, %arg1: i32) -> (i32, i32, i32) {
    %c0_i32 = arith.constant 0 : i32
    %c0_i32_0 = arith.constant 0 : i32
    %c0_i32_1 = arith.constant 0 : i32
    %c0_i32_2 = arith.constant 0 : i32
    return %c0_i32, %c0_i32_0, %c0_i32_1 : i32, i32, i32
  }
  func.func @transform_2(%arg0: i32, %arg1: i32) -> (i32, i32) {
    %c0_i32 = arith.constant 0 : i32
    %c0_i32_0 = arith.constant 0 : i32
    %c0_i32_1 = arith.constant 0 : i32
    return %c0_i32, %c0_i32_0 : i32, i32
  }
  func.func @transform_3(%arg0: i32, %arg1: i32) -> (i32, i32, i32, i32) {
    %c0_i32 = arith.constant 0 : i32
    %c0_i32_0 = arith.constant 0 : i32
    %c0_i32_1 = arith.constant 0 : i32
    return %arg0, %arg1, %c0_i32, %c0_i32_0 : i32, i32, i32, i32
  }
}

module attributes {stable_mosaic.version = 11 : i64} {
  func.func @_deconv_kernel(%arg0: i32, %arg1: i32, %arg2: memref<1x51x49x32xbf16, #tpu.memory_space<vmem>>, %arg3: memref<4x32x128xbf16, #tpu.memory_space<vmem>>, %arg4: memref<1x128xf32, #tpu.memory_space<vmem>>, %arg5: memref<1x10x48x128xf32, #tpu.memory_space<vmem>>) attributes {dimension_semantics = [#tpu.dimension_semantics<parallel>, #tpu.dimension_semantics<parallel>], iteration_bounds = array<i64: 2, 5>, scalar_prefetch = 0 : i64, scratch_operands = 0 : i64, tpu.core_type = #tpu.core_type<tc>, window_params = [{transform_indices = @transform_0, window_bounds = array<i64: 1, 51, 49, 32>}, {pipeline_mode = #tpu.pipeline_mode<synchronous>, transform_indices = @transform_1, window_bounds = array<i64: 4, 32, 128>}, {pipeline_mode = #tpu.pipeline_mode<synchronous>, transform_indices = @transform_2, window_bounds = array<i64: 1, 128>}, {transform_indices = @transform_3, window_bounds = array<i64: 1, 10, 48, 128>}]} {
    %c10_i32 = arith.constant 10 : i32
    %0 = arith.muli %arg1, %c10_i32 : i32
    %c0 = arith.constant 0 : index
    %1 = arith.index_cast %0 : i32 to index
    %c0_0 = arith.constant 0 : index
    %c0_1 = arith.constant 0 : index
    %2 = vector.load %arg2[%c0, %1, %c0_0, %c0_1] : memref<1x51x49x32xbf16, #tpu.memory_space<vmem>>, vector<1x11x49x32xbf16>
    %cst = arith.constant 0.000000e+00 : f32
    %3 = vector.broadcast %cst : f32 to vector<480x128xf32>
    %4 = vector.extract_strided_slice %2 {offsets = [0, 1, 1, 0], sizes = [1, 10, 48, 32], strides = [1, 1, 1, 1]} : vector<1x11x49x32xbf16> to vector<1x10x48x32xbf16>
    %5 = vector.shape_cast %4 : vector<1x10x48x32xbf16> to vector<480x32xbf16>
    %c0_2 = arith.constant 0 : index
    %c0_3 = arith.constant 0 : index
    %c0_4 = arith.constant 0 : index
    %6 = vector.load %arg3[%c0_2, %c0_3, %c0_4] : memref<4x32x128xbf16, #tpu.memory_space<vmem>>, vector<1x32x128xbf16>
    %7 = vector.shape_cast %6 : vector<1x32x128xbf16> to vector<32x128xbf16>
    %cst_5 = arith.constant dense<0.000000e+00> : vector<480x128xf32>
    %8 = tpu.matmul %5, %7, %cst_5 {dimension_numbers = #tpu.dot_dimension_numbers<[1], [0], [0], [1], [0, 0, 1, 1], [], []>} : vector<480x32xbf16>, vector<32x128xbf16>, vector<480x128xf32> -> vector<480x128xf32>
    %9 = arith.addf %3, %8 : vector<480x128xf32>
    %10 = vector.extract_strided_slice %2 {offsets = [0, 1, 0, 0], sizes = [1, 10, 48, 32], strides = [1, 1, 1, 1]} : vector<1x11x49x32xbf16> to vector<1x10x48x32xbf16>
    %11 = vector.shape_cast %10 : vector<1x10x48x32xbf16> to vector<480x32xbf16>
    %c1 = arith.constant 1 : index
    %c0_6 = arith.constant 0 : index
    %c0_7 = arith.constant 0 : index
    %12 = vector.load %arg3[%c1, %c0_6, %c0_7] : memref<4x32x128xbf16, #tpu.memory_space<vmem>>, vector<1x32x128xbf16>
    %13 = vector.shape_cast %12 : vector<1x32x128xbf16> to vector<32x128xbf16>
    %cst_8 = arith.constant dense<0.000000e+00> : vector<480x128xf32>
    %14 = tpu.matmul %11, %13, %cst_8 {dimension_numbers = #tpu.dot_dimension_numbers<[1], [0], [0], [1], [0, 0, 1, 1], [], []>} : vector<480x32xbf16>, vector<32x128xbf16>, vector<480x128xf32> -> vector<480x128xf32>
    %15 = arith.addf %9, %14 : vector<480x128xf32>
    %16 = vector.extract_strided_slice %2 {offsets = [0, 0, 1, 0], sizes = [1, 10, 48, 32], strides = [1, 1, 1, 1]} : vector<1x11x49x32xbf16> to vector<1x10x48x32xbf16>
    %17 = vector.shape_cast %16 : vector<1x10x48x32xbf16> to vector<480x32xbf16>
    %c2 = arith.constant 2 : index
    %c0_9 = arith.constant 0 : index
    %c0_10 = arith.constant 0 : index
    %18 = vector.load %arg3[%c2, %c0_9, %c0_10] : memref<4x32x128xbf16, #tpu.memory_space<vmem>>, vector<1x32x128xbf16>
    %19 = vector.shape_cast %18 : vector<1x32x128xbf16> to vector<32x128xbf16>
    %cst_11 = arith.constant dense<0.000000e+00> : vector<480x128xf32>
    %20 = tpu.matmul %17, %19, %cst_11 {dimension_numbers = #tpu.dot_dimension_numbers<[1], [0], [0], [1], [0, 0, 1, 1], [], []>} : vector<480x32xbf16>, vector<32x128xbf16>, vector<480x128xf32> -> vector<480x128xf32>
    %21 = arith.addf %15, %20 : vector<480x128xf32>
    %22 = vector.extract_strided_slice %2 {offsets = [0, 0, 0, 0], sizes = [1, 10, 48, 32], strides = [1, 1, 1, 1]} : vector<1x11x49x32xbf16> to vector<1x10x48x32xbf16>
    %23 = vector.shape_cast %22 : vector<1x10x48x32xbf16> to vector<480x32xbf16>
    %c3 = arith.constant 3 : index
    %c0_12 = arith.constant 0 : index
    %c0_13 = arith.constant 0 : index
    %24 = vector.load %arg3[%c3, %c0_12, %c0_13] : memref<4x32x128xbf16, #tpu.memory_space<vmem>>, vector<1x32x128xbf16>
    %25 = vector.shape_cast %24 : vector<1x32x128xbf16> to vector<32x128xbf16>
    %cst_14 = arith.constant dense<0.000000e+00> : vector<480x128xf32>
    %26 = tpu.matmul %23, %25, %cst_14 {dimension_numbers = #tpu.dot_dimension_numbers<[1], [0], [0], [1], [0, 0, 1, 1], [], []>} : vector<480x32xbf16>, vector<32x128xbf16>, vector<480x128xf32> -> vector<480x128xf32>
    %27 = arith.addf %21, %26 : vector<480x128xf32>
    %c0_15 = arith.constant 0 : index
    %c0_16 = arith.constant 0 : index
    %28 = vector.load %arg4[%c0_15, %c0_16] : memref<1x128xf32, #tpu.memory_space<vmem>>, vector<1x128xf32>
    %29 = vector.broadcast %28 : vector<1x128xf32> to vector<480x128xf32>
    %30 = arith.addf %27, %29 : vector<480x128xf32>
    %31 = vector.shape_cast %30 : vector<480x128xf32> to vector<1x10x48x128xf32>
    %c0_17 = arith.constant 0 : index
    %c0_18 = arith.constant 0 : index
    %c0_19 = arith.constant 0 : index
    %c0_20 = arith.constant 0 : index
    %32 = vector.load %arg5[%c0_17, %c0_18, %c0_19, %c0_20] : memref<1x10x48x128xf32, #tpu.memory_space<vmem>>, vector<1x10x48x128xf32>
    tpu.vector_store %arg5[%c0_17, %c0_18, %c0_19, %c0_20], %31 {strides = array<i32>} : memref<1x10x48x128xf32, #tpu.memory_space<vmem>>, vector<1x10x48x128xf32>,
    return
  }
  func.func @transform_0(%arg0: i32, %arg1: i32) -> (i32, i32, i32, i32) {
    %c0_i32 = arith.constant 0 : i32
    %c0_i32_0 = arith.constant 0 : i32
    %c0_i32_1 = arith.constant 0 : i32
    %c0_i32_2 = arith.constant 0 : i32
    return %arg0, %c0_i32, %c0_i32_0, %c0_i32_1 : i32, i32, i32, i32
  }
  func.func @transform_1(%arg0: i32, %arg1: i32) -> (i32, i32, i32) {
    %c0_i32 = arith.constant 0 : i32
    %c0_i32_0 = arith.constant 0 : i32
    %c0_i32_1 = arith.constant 0 : i32
    %c0_i32_2 = arith.constant 0 : i32
    return %c0_i32, %c0_i32_0, %c0_i32_1 : i32, i32, i32
  }
  func.func @transform_2(%arg0: i32, %arg1: i32) -> (i32, i32) {
    %c0_i32 = arith.constant 0 : i32
    %c0_i32_0 = arith.constant 0 : i32
    %c0_i32_1 = arith.constant 0 : i32
    return %c0_i32, %c0_i32_0 : i32, i32
  }
  func.func @transform_3(%arg0: i32, %arg1: i32) -> (i32, i32, i32, i32) {
    %c0_i32 = arith.constant 0 : i32
    %c0_i32_0 = arith.constant 0 : i32
    %c0_i32_1 = arith.constant 0 : i32
    return %arg0, %arg1, %c0_i32, %c0_i32_0 : i32, i32, i32, i32
  }
}

</mosaic_0001>

<llo_original>
// kernel: conv_decoder_forward.5
$region0: #{conv_decoder_forward.5}
  #allocation0 [shape = 'u32[]', space=smem, size = 0x4, offset = 0x4, fixed_abs, tag = 'smem constant byte address 0x4 - core index']
  #allocation1 [shape = 'u32[144,128]{1,0:T(1,128)}', space=vmem, size = 0x12000, scoped, tag = 'internal scratch']
  %s0 = inlined_call_operand.vmem [shape: bf16[8,48], index: 0, kind: input, shape index: {}]
  %s1 = inlined_call_operand.hbm [shape: bf16[48,3072], index: 1, kind: input, shape index: {}]
  %s2 = inlined_call_operand.hbm [shape: f32[1,3072], index: 2, kind: input, shape index: {}]
  %s3 = inlined_call_operand.vmem [shape: bf16[8,3072], index: 3, kind: output, shape index: {}]
  %s4 = sld [smem:[#allocation0]]
  $region53: #{conv_decoder_forward.5} parent=0
    _
  %s6 = ssub.s32 1, %s4
  %s7 = scalar_select 0, %s6, %s4
  $region1: #{conv_decoder_forward.5} parent=0
    #allocation2 [shape = 'u8[98304]{0}', space=vmem, size = 0x18000, scoped, tag = 'input window, operand 1']
    #allocation3 [shape = 's32[2]{0}', space=sflag, size = 0x8, scoped, tag = 'scoped memory for conv_decoder_forward.5']
    #allocation4 [shape = 'u8[4096]{0}', space=vmem, size = 0x1000, scoped, tag = 'input window, operand 2']
    #allocation5 [shape = 's32[2]{0}', space=sflag, size = 0x8, scoped, tag = 'scoped memory for conv_decoder_forward.5']
    %8 = vsyncpa [#allocation3], 0
    %s9 = scalar_lea.sflag [#allocation3], 1
    %10 = vsyncpa %s9, 0
    %11 = vsyncpa [#allocation5], 0
    %s12 = scalar_lea.sflag [#allocation5], 1
    %13 = vsyncpa %s12, 0
    loop: start=0, step=1, limit=8
    $region2: #{conv_decoder_forward.5} parent=1 // loop_pre_header
      _
    $region3: #{conv_decoder_forward.5} parent=1 // loop_header
      %s15 = sphi 0, %s19
      %p16 = scmp.ge.s32.totalorder %s15, 8
      %s23 = sphi 0, %s23
      %s25 = sphi 0, %s23
      %s26 = sphi 0, %s25
      %s40 = sphi 0, %s26
      %s46 = sphi 0, %s48
      %s49 = sphi 0, %s46
      %s50 = sphi 0, %s49
      %s66 = sphi 0, %s50
      %s72 = sphi 0, %s74
      %s75 = sphi 0, %s72
      %s76 = sphi 0, %s75
      %s92 = sphi 0, %s76
      %s98 = sphi 0, %s100
      %s101 = sphi 0, %s98
      %s102 = sphi 0, %s101
      %s118 = sphi 0, %s102
    $region4: #{conv_decoder_forward.5} parent=1 // loop_header_branch
      %18 = sbr.rel (%p16) target = $region8
    $region5: #{conv_decoder_forward.5} parent=1 // loop_body
      %s20 = ssub.s32 %s15, 1
      %s21 = ssub.s32 %s15, 2
      %s22 = sadd.s32 %s15, 1
      %s24 = sadd.s32 %s23, 1
      %p27 = scmp.eq.s32.totalorder %s15, 5
      %p28 = scmp.ne.s32.totalorder %s23, %s25
      %p29 = scmp.eq.s32.totalorder %s15, 0
      %p30 = por %p28, %p29
      %p31 = scmp.ne.s32.totalorder %s23, %s25
      %p32 = scmp.eq.s32.totalorder %s20, 5
      %p33 = por %p31, %p32
      %p34 = scmp.ne.s32.totalorder %s25, %s26
      %p35 = scmp.eq.s32.totalorder %s20, 0
      %p36 = por %p34, %p35
      %p37 = scmp.ne.s32.totalorder %s25, %s26
      %p38 = scmp.eq.s32.totalorder %s21, 5
      %p39 = por %p37, %p38
      %p41 = scmp.ne.s32.totalorder %s26, %s40
      %p42 = scmp.eq.s32.totalorder %s21, 0
      %p43 = por %p41, %p42
      %s44 = ssub.s32 %s15, %s22
      %p45 = scmp.eq.s32.totalorder %s44, 0
      %s47 = sadd.s32 %s46, 1
      %s48 = scalar_select %p45, %s46, %s47
      %p51 = pneg %p45
      %p52 = scmp.eq.s32.totalorder %s15, 5
      %p53 = por %p51, %p52
      %p54 = scmp.ne.s32.totalorder %s46, %s49
      %p55 = scmp.eq.s32.totalorder %s15, 0
      %p56 = por %p54, %p55
      %p57 = scmp.ne.s32.totalorder %s46, %s49
      %p58 = scmp.eq.s32.totalorder %s20, 5
      %p59 = por %p57, %p58
      %p60 = scmp.ne.s32.totalorder %s49, %s50
      %p61 = scmp.eq.s32.totalorder %s20, 0
      %p62 = por %p60, %p61
      %p63 = scmp.ne.s32.totalorder %s49, %s50
      %p64 = scmp.eq.s32.totalorder %s21, 5
      %p65 = por %p63, %p64
      %p67 = scmp.ne.s32.totalorder %s50, %s66
      %p68 = scmp.eq.s32.totalorder %s21, 0
      %p69 = por %p67, %p68
      %s70 = ssub.s32 %s15, %s22
      %p71 = scmp.eq.s32.totalorder %s70, 0
      %s73 = sadd.s32 %s72, 1
      %s74 = scalar_select %p71, %s72, %s73
      %p77 = pneg %p71
      %p78 = scmp.eq.s32.totalorder %s15, 5
      %p79 = por %p77, %p78
      %p80 = scmp.ne.s32.totalorder %s72, %s75
      %p81 = scmp.eq.s32.totalorder %s15, 0
      %p82 = por %p80, %p81
      %p83 = scmp.ne.s32.totalorder %s72, %s75
      %p84 = scmp.eq.s32.totalorder %s20, 5
      %p85 = por %p83, %p84
      %p86 = scmp.ne.s32.totalorder %s75, %s76
      %p87 = scmp.eq.s32.totalorder %s20, 0
      %p88 = por %p86, %p87
      %p89 = scmp.ne.s32.totalorder %s75, %s76
      %p90 = scmp.eq.s32.totalorder %s21, 5
      %p91 = por %p89, %p90
      %p93 = scmp.ne.s32.totalorder %s76, %s92
      %p94 = scmp.eq.s32.totalorder %s21, 0
      %p95 = por %p93, %p94
      %s96 = ssub.s32 %s15, %s22
      %p97 = scmp.eq.s32.totalorder %s96, 0
      %s99 = sadd.s32 %s98, 1
      %s100 = scalar_select %p97, %s98, %s99
      %p103 = pneg %p97
      %p104 = scmp.eq.s32.totalorder %s15, 5
      %p105 = por %p103, %p104
      %p106 = scmp.ne.s32.totalorder %s98, %s101
      %p107 = scmp.eq.s32.totalorder %s15, 0
      %p108 = por %p106, %p107
      %p109 = scmp.ne.s32.totalorder %s98, %s101
      %p110 = scmp.eq.s32.totalorder %s20, 5
      %p111 = por %p109, %p110
      %p112 = scmp.ne.s32.totalorder %s101, %s102
      %p113 = scmp.eq.s32.totalorder %s20, 0
      %p114 = por %p112, %p113
      %p115 = scmp.ne.s32.totalorder %s101, %s102
      %p116 = scmp.eq.s32.totalorder %s21, 5
      %p117 = por %p115, %p116
      %p119 = scmp.ne.s32.totalorder %s102, %s118
      %p120 = scmp.eq.s32.totalorder %s21, 0
      %p121 = por %p119, %p120
      %p122 = scmp.le.s32.totalorder 1, %s15
      %p123 = scmp.lt.s32.totalorder %s15, 7
      %p124 = pnand %p122, %p123
      %p125 = pneg %p124
      // Predicated region
      $region9: #{conv_decoder_forward.5} parent=5 // pred_check
        _
      $region10: #{conv_decoder_forward.5} parent=5 // pred_check_branch
        %127 = sbr.rel (%p124) target = $region12
      $region11: #{conv_decoder_forward.5} parent=5 // pred_region
        %s128 = ssub.s32 %s15, 1
        // Predicated region
        $region13: #{conv_decoder_forward.5} parent=11 // pred_check
          %p129 = pneg %p36
        $region14: #{conv_decoder_forward.5} parent=11 // pred_check_branch
          %131 = sbr.rel (%p129) target = $region16
        $region15: #{conv_decoder_forward.5} parent=11 // pred_region
          _
        $region16: #{conv_decoder_forward.5} parent=11 // pred_fallthru
          _
      $region12: #{conv_decoder_forward.5} parent=5 // pred_fallthru
        _
      %p132 = scmp.lt.s32.totalorder %s15, 6
      // Predicated region
      $region17: #{conv_decoder_forward.5} parent=5 // pred_check
        %p133 = pneg %p132
      $region18: #{conv_decoder_forward.5} parent=5 // pred_check_branch
        %135 = sbr.rel (%p133) target = $region20
      $region19: #{conv_decoder_forward.5} parent=5 // pred_region
        // Predicated region
        $region21: #{conv_decoder_forward.5} parent=19 // pred_check
          %p136 = pneg %p56
        $region22: #{conv_decoder_forward.5} parent=19 // pred_check_branch
          %138 = sbr.rel (%p136) target = $region24
        $region23: #{conv_decoder_forward.5} parent=19 // pred_region
          %s139 = sand.u32 %s46, 1
          %s140 = scalar_lea.sflag [#allocation3], %s139
          %s141 = sand.u32 %s46, 1
          %s142 = smul.addr %s141, 96
          %s143 = scalar_lea.vmem [#allocation2], %s142
          %s144 = smul.u32 4, %s15
          %s146 = ssub.s32 1536, 1536
          %147 = vsyncadd %s140, %s146
          %s148 = smul.addr %s144, 64
          %s149 = scalar_lea.hbm %s1, %s148
          %s150 = sshll.u32 %s143, 4
          %s151 = int_to_ptr.vmem [resolvable:$true] %s150
          %156 = dma.hbm_to_vmem [thread:$0]  %s149, 1536, %s151, %s140, 1536, 256, 16
        $region24: #{conv_decoder_forward.5} parent=19 // pred_fallthru
          _
        // Predicated region
        $region25: #{conv_decoder_forward.5} parent=19 // pred_check
          %p157 = pneg %p82
        $region26: #{conv_decoder_forward.5} parent=19 // pred_check_branch
          %159 = sbr.rel (%p157) target = $region28
        $region27: #{conv_decoder_forward.5} parent=19 // pred_region
          %s160 = sand.u32 %s72, 1
          %s161 = scalar_lea.sflag [#allocation5], %s160
          %s162 = sand.u32 %s72, 1
          %s163 = smul.addr %s162, 4
          %s164 = scalar_lea.vmem [#allocation4], %s163
          %s165 = smul.u32 4, %s15
          %s167 = ssub.s32 64, 64
          %168 = vsyncadd %s161, %s167
          %s169 = smul.addr %s165, 16
          %s170 = scalar_lea.hbm %s2, %s169
          %s172 = sshll.u32 %s164, 4
          %s173 = int_to_ptr.vmem [resolvable:$true] %s172
          %175 = dma.hbm_to_vmem [thread:$0]  %s170, 64, %s173, %s161
        $region28: #{conv_decoder_forward.5} parent=19 // pred_fallthru
          _
      $region20: #{conv_decoder_forward.5} parent=5 // pred_fallthru
        _
      %p176 = scmp.le.s32.totalorder 1, %s15
      %p177 = scmp.lt.s32.totalorder %s15, 7
      %p178 = pnand %p176, %p177
      %p179 = pneg %p178
      // Predicated region
      $region29: #{conv_decoder_forward.5} parent=5 // pred_check
        _
      $region30: #{conv_decoder_forward.5} parent=5 // pred_check_branch
        %181 = sbr.rel (%p178) target = $region32
      $region31: #{conv_decoder_forward.5} parent=5 // pred_region
        %s182 = ssub.s32 %s15, 1
        %s183 = sand.u32 %s49, 1
        %s184 = scalar_lea.sflag [#allocation3], %s183
        %s185 = sand.u32 %s49, 1
        %s186 = smul.addr %s185, 96
        %s187 = scalar_lea.vmem [#allocation2], %s186
        // Predicated region
        $region33: #{conv_decoder_forward.5} parent=31 // pred_check
          %p188 = pneg %p62
        $region34: #{conv_decoder_forward.5} parent=31 // pred_check_branch
          %190 = sbr.rel (%p188) target = $region36
        $region35: #{conv_decoder_forward.5} parent=31 // pred_region
          %191 = dma.done %s184, 1536
        $region36: #{conv_decoder_forward.5} parent=31 // pred_fallthru
          _
        %s192 = sand.u32 %s75, 1
        %s193 = scalar_lea.sflag [#allocation5], %s192
        %s194 = sand.u32 %s75, 1
        %s195 = smul.addr %s194, 4
        %s196 = scalar_lea.vmem [#allocation4], %s195
        // Predicated region
        $region37: #{conv_decoder_forward.5} parent=31 // pred_check
          %p197 = pneg %p88
        $region38: #{conv_decoder_forward.5} parent=31 // pred_check_branch
          %199 = sbr.rel (%p197) target = $region40
        $region39: #{conv_decoder_forward.5} parent=31 // pred_region
          %200 = dma.done %s193, 64
        $region40: #{conv_decoder_forward.5} parent=31 // pred_fallthru
          _
        %p201 = pneg %p36
        %p202 = pneg %p33
        %s203 = sand.u32 %s49, 1
        %s204 = scalar_lea.sflag [#allocation3], %s203
        %s205 = sand.u32 %s49, 1
        %s206 = smul.addr %s205, 96
        %s207 = scalar_lea.vmem [#allocation2], %s206
        %p208 = pneg %p62
        %p209 = pneg %p59
        %s210 = sand.u32 %s75, 1
        %s211 = scalar_lea.sflag [#allocation5], %s210
        %s212 = sand.u32 %s75, 1
        %s213 = smul.addr %s212, 4
        %s214 = scalar_lea.vmem [#allocation4], %s213
        %p215 = pneg %p88
        %p216 = pneg %p85
        %p217 = pneg %p114
        %p218 = pneg %p111
        %s219 = smul.u32 4, %s20
        %p220 = scmp.lt.s32.totalorder %s219, 23
        %s221 = scalar_select %p220, %s219, 23
        %s222 = smul.addr %s221, 4
        %s223 = scalar_lea.vmem %s3, %s222
        %s224 = smul.u32 4, %s20
        %s225 = smul.u32 4, %s20
        %s226 = smul.u32 4, %s20
        %p227 = scmp.lt.s32.totalorder %s226, 23
        %s228 = scalar_select %p227, %s226, 23
        %s229 = smul.addr %s228, 4
        %s230 = scalar_lea.vmem %s3, %s229
        %s231 = smul.u32 4, %s20
        %v233 = vld [vmem:[%s0] sm:$0xf]
        %v234 = vld [vmem:[%s187] sm:$0xff]
        %v235 = vld [vmem:[%s187 + $0x8] sm:$0xff]
        %v236 = vld [vmem:[%s187 + $0x10] sm:$0xff]
        %v237 = vld [vmem:[%s187 + $0x18] sm:$0xff]
        %v238 = vld [vmem:[%s187 + $0x20] sm:$0xff]
        %v239 = vld [vmem:[%s187 + $0x28] sm:$0xff]
        %v240 = vld [vmem:[%s187 + $0x30] sm:$0xff]
        %v241 = vld [vmem:[%s187 + $0x38] sm:$0xff]
        %v242 = vld [vmem:[%s187 + $0x40] sm:$0xff]
        %v243 = vld [vmem:[%s187 + $0x48] sm:$0xff]
        %v244 = vld [vmem:[%s187 + $0x50] sm:$0xff]
        %v245 = vld [vmem:[%s187 + $0x58] sm:$0xff]
        %v246 = vld [vmem:[%s196] sm:$0xf]
        %v248 = vlaneseq
        %v249 = vshrl.u32 %v248, 7
        %v250 = vsub.s32 0, %v249
        %v251 = vrot.slane %v246, %v250
        %v252 = vlaneseq
        %v253 = vshrl.u32 %v252, 7
        %v254 = vsub.s32 1, %v253
        %v255 = vrot.slane %v246, %v254
        %v256 = vlaneseq
        %v257 = vshrl.u32 %v256, 7
        %v258 = vsub.s32 2, %v257
        %v259 = vrot.slane %v246, %v258
        %v260 = vlaneseq
        %v261 = vshrl.u32 %v260, 7
        %v262 = vsub.s32 3, %v261
        %v263 = vrot.slane %v246, %v262
        %v280 = vunpack.c.l.b16 %v234
        %v281 = vunpack.c.h.b16 %v234
        %v282 = vunpack.c.l.b16 %v235
        %v283 = vunpack.c.h.b16 %v235
        %v284 = vunpack.c.l.b16 %v236
        %v285 = vunpack.c.h.b16 %v236
        %v286 = vunpack.c.l.b16 %v237
        %v287 = vunpack.c.h.b16 %v237
        %v288 = vunpack.c.l.b16 %v238
        %v289 = vunpack.c.h.b16 %v238
        %v290 = vunpack.c.l.b16 %v239
        %v291 = vunpack.c.h.b16 %v239
        %v292 = vunpack.c.l.b16 %v240
        %v293 = vunpack.c.h.b16 %v240
        %v294 = vunpack.c.l.b16 %v241
        %v295 = vunpack.c.h.b16 %v241
        %v296 = vunpack.c.l.b16 %v242
        %v297 = vunpack.c.h.b16 %v242
        %v298 = vunpack.c.l.b16 %v243
        %v299 = vunpack.c.h.b16 %v243
        %v300 = vunpack.c.l.b16 %v244
        %v301 = vunpack.c.h.b16 %v244
        %v302 = vunpack.c.l.b16 %v245
        %v303 = vunpack.c.h.b16 %v245
        %v304 = vpack.c.b16 %v284, %v280
        %v305 = vpack.c.b16 %v285, %v281
        %v306 = vpack.c.b16 %v286, %v282
        %v307 = vpack.c.b16 %v287, %v283
        %v308 = vpack.c.b16 %v292, %v288
        %v309 = vpack.c.b16 %v293, %v289
        %v310 = vpack.c.b16 %v294, %v290
        %v311 = vpack.c.b16 %v295, %v291
        %v312 = vpack.c.b16 %v300, %v296
        %v313 = vpack.c.b16 %v301, %v297
        %v314 = vpack.c.b16 %v302, %v298
        %v315 = vpack.c.b16 %v303, %v299
        %vm328 = vcmask 392192
        %v330 = vsel %vm328, %v233, 0
        %332 = vmatprep.subr.bf16.mxu0 %v305
        %333 = vmatpush1.bf16.msra.mxu0 %v304
        %334 = vmatprep.subr.bf16.mxu0 %v309
        %335 = vmatpush1.bf16.msra.mxu0 %v308
        %336 = vmatprep.subr.bf16.mxu0 %v313
        %337 = vmatpush1.bf16.msra.mxu0 %v312
        %338 = vmatprep.subr.bf16.mxu0 0
        %339 = vmatpush1.bf16.msra.mxu0 0
        %340 = vmatprep.subr.bf16.mxu0 0
        %341 = vmatpush1.bf16.msra.mxu0 0
        %342 = vmatprep.subr.bf16.mxu0 0
        %343 = vmatpush1.bf16.msra.mxu0 0
        %344 = vmatprep.subr.bf16.mxu0 0
        %345 = vmatpush1.bf16.msra.mxu0 0
        %346 = vmatprep.subr.bf16.mxu0 0
        %347 = vmatpush1.bf16.msra.mxu0 0
        %348 = vmatprep.subr.bf16.mxu0 0
        %349 = vmatpush1.bf16.msra.mxu0 0
        %350 = vmatprep.subr.bf16.mxu0 0
        %351 = vmatpush1.bf16.msra.mxu0 0
        %352 = vmatprep.subr.bf16.mxu0 0
        %353 = vmatpush1.bf16.msra.mxu0 0
        %354 = vmatprep.subr.bf16.mxu0 0
        %355 = vmatpush1.bf16.msra.mxu0 0
        %356 = vmatprep.subr.bf16.mxu0 0
        %357 = vmatpush1.bf16.msra.mxu0 0
        %358 = vmatprep.subr.bf16.mxu0 0
        %359 = vmatpush1.bf16.msra.mxu0 0
        %360 = vmatprep.subr.bf16.mxu0 0
        %361 = vmatpush1.bf16.msra.mxu0 0
        %362 = vmatprep.subr.bf16.mxu0 0
        %363 = vmatpush1.bf16.msra.mxu0 0
        %364 = vmatprep.mubr.bf16.mxu0 0
        %365 = vmatmul.mubr.bf16.gmra.mrb[0].mxu0 %v330
        %v366 = vpop.f32.mrb[0].mxu0
        %v367 = vadd.f32 %v251, %v366
        %v368 = vpop.f32.mrb[0].mxu0
        %v369 = vadd.f32 %v255, %v368
        %v370 = vpop.f32.mrb[0].mxu0
        %v371 = vpop.f32.mrb[0].mxu0
        %372 = vdwg.mxu0
        %373 = vmatprep.subr.bf16.mxu0 %v307
        %374 = vmatpush1.bf16.msra.mxu0 %v306
        %375 = vmatprep.subr.bf16.mxu0 %v311
        %376 = vmatpush1.bf16.msra.mxu0 %v310
        %377 = vmatprep.subr.bf16.mxu0 %v315
        %378 = vmatpush1.bf16.msra.mxu0 %v314
        %379 = vmatprep.subr.bf16.mxu0 0
        %380 = vmatpush1.bf16.msra.mxu0 0
        %381 = vmatprep.subr.bf16.mxu0 0
        %382 = vmatpush1.bf16.msra.mxu0 0
        %383 = vmatprep.subr.bf16.mxu0 0
        %384 = vmatpush1.bf16.msra.mxu0 0
        %385 = vmatprep.subr.bf16.mxu0 0
        %386 = vmatpush1.bf16.msra.mxu0 0
        %387 = vmatprep.subr.bf16.mxu0 0
        %388 = vmatpush1.bf16.msra.mxu0 0
        %389 = vmatprep.subr.bf16.mxu0 0
        %390 = vmatpush1.bf16.msra.mxu0 0
        %391 = vmatprep.subr.bf16.mxu0 0
        %392 = vmatpush1.bf16.msra.mxu0 0
        %393 = vmatprep.subr.bf16.mxu0 0
        %394 = vmatpush1.bf16.msra.mxu0 0
        %395 = vmatprep.subr.bf16.mxu0 0
        %396 = vmatpush1.bf16.msra.mxu0 0
        %397 = vmatprep.subr.bf16.mxu0 0
        %398 = vmatpush1.bf16.msra.mxu0 0
        %399 = vmatprep.subr.bf16.mxu0 0
        %400 = vmatpush1.bf16.msra.mxu0 0
        %401 = vmatprep.subr.bf16.mxu0 0
        %402 = vmatpush1.bf16.msra.mxu0 0
        %403 = vmatprep.subr.bf16.mxu0 0
        %404 = vmatpush1.bf16.msra.mxu0 0
        %405 = vmatprep.mubr.bf16.mxu0 0
        %406 = vmatmul.mubr.bf16.gmra.mrb[0].mxu0 %v330
        %v407 = vpop.f32.mrb[0].mxu0
        %v408 = vadd.f32 %v259, %v407
        %v409 = vpop.f32.mrb[0].mxu0
        %v410 = vadd.f32 %v263, %v409
        %v411 = vpop.f32.mrb[0].mxu0
        %v412 = vpop.f32.mrb[0].mxu0
        %413 = vdwg.mxu0
        %v414 = vpack.c.bf16 %v367, %v367
        %v415 = vpack.c.bf16 %v369, %v369
        %v416 = vpack.c.bf16 %v408, %v408
        %v417 = vpack.c.bf16 %v410, %v410
        %v422 = vunpack.c.l.b16 %v414
        %v423 = vunpack.c.l.b16 %v415
        %v424 = vunpack.c.l.b16 %v416
        %v425 = vunpack.c.l.b16 %v417
        %v426 = vpack.c.b16 %v423, %v422
        %v427 = vpack.c.b16 %v425, %v424
        %430 = vst [vmem:[%s230] sm:$0xff] %v426
        %431 = vst [vmem:[%s230 + $0x8] sm:$0xff] %v427
        %s432 = smul.u32 4, %s20
        %p433 = scmp.lt.s32.totalorder %s432, 23
        %s434 = scalar_select %p433, %s432, 23
        %s435 = smul.addr %s434, 4
        %s436 = scalar_lea.vmem %s3, %s435
        // Predicated region
        $region41: #{conv_decoder_forward.5} parent=31 // pred_check
          %p437 = pneg %p111
        $region42: #{conv_decoder_forward.5} parent=31 // pred_check_branch
          %439 = sbr.rel (%p437) target = $region44
        $region43: #{conv_decoder_forward.5} parent=31 // pred_region
          %s440 = smul.u32 4, %s20
        $region44: #{conv_decoder_forward.5} parent=31 // pred_fallthru
          _
      $region32: #{conv_decoder_forward.5} parent=5 // pred_fallthru
        _
      %p441 = scmp.le.s32.totalorder 2, %s15
      // Predicated region
      $region45: #{conv_decoder_forward.5} parent=5 // pred_check
        %p442 = pneg %p441
      $region46: #{conv_decoder_forward.5} parent=5 // pred_check_branch
        %444 = sbr.rel (%p442) target = $region48
      $region47: #{conv_decoder_forward.5} parent=5 // pred_region
        %s445 = ssub.s32 %s15, 2
        // Predicated region
        $region49: #{conv_decoder_forward.5} parent=47 // pred_check
          %p446 = pneg %p117
        $region50: #{conv_decoder_forward.5} parent=47 // pred_check_branch
          %448 = sbr.rel (%p446) target = $region52
        $region51: #{conv_decoder_forward.5} parent=47 // pred_region
          %s449 = smul.u32 4, %s21
          %p450 = scmp.lt.s32.totalorder %s449, 23
          %s451 = scalar_select %p450, %s449, 23
          %s452 = smul.addr %s451, 4
          %s453 = scalar_lea.vmem %s3, %s452
        $region52: #{conv_decoder_forward.5} parent=47 // pred_fallthru
          _
      $region48: #{conv_decoder_forward.5} parent=5 // pred_fallthru
        _
    $region6: #{conv_decoder_forward.5} parent=1 // loop_footer
      %s19 = sadd.s32 1, %s15
    $region7: #{conv_decoder_forward.5} parent=1 // loop_footer_branch
      %14 = sbr.rel target = $region3
    $region8: #{conv_decoder_forward.5} parent=1 // loop_exit
      _
    %454 = vsyncpa [#allocation3], 1
    %s455 = scalar_lea.sflag [#allocation3], 1
    %456 = vsyncpa %s455, 1
    %457 = vsyncpa [#allocation5], 1
    %s458 = scalar_lea.sflag [#allocation5], 1
    %459 = vsyncpa %s458, 1

// kernel: conv_decoder_forward.7
$region0: #{conv_decoder_forward.7}
  #allocation0 [shape = 'u32[]', space=smem, size = 0x4, offset = 0x4, fixed_abs, tag = 'smem constant byte address 0x4 - core index']
  #allocation1 [shape = 'u32[144,128]{1,0:T(1,128)}', space=vmem, size = 0x12000, scoped, tag = 'internal scratch']
  %s0 = inlined_call_operand.vmem [shape: bf16[2,13,17,128], index: 0, kind: input, shape index: {}]
  %s1 = inlined_call_operand.vmem [shape: bf16[4,128,256], index: 1, kind: input, shape index: {}]
  %s2 = inlined_call_operand.vmem [shape: f32[1,256], index: 2, kind: input, shape index: {}]
  %s3 = inlined_call_operand.vmem [shape: bf16[2,12,16,256], index: 3, kind: output, shape index: {}]
  %s4 = sld [smem:[#allocation0]]
  $region45: #{conv_decoder_forward.7} parent=0
    _
  %s6 = ssub.s32 1, %s4
  %s7 = scalar_select 0, %s6, %s4
  loop: start=0, step=1, limit=6
  $region2: #{conv_decoder_forward.7} parent=0 // loop_pre_header
    _
  $region3: #{conv_decoder_forward.7} parent=0 // loop_header
    %s9 = sphi 0, %s13
    %p10 = scmp.ge.s32.totalorder %s9, 6
    %s16 = sphi 0, %s28
    %s17 = sphi 0, %s24
    %s18 = sphi 0, %s16
    %s19 = sphi 0, %s17
    %s20 = sphi 0, %s18
    %s21 = sphi 0, %s19
    %s31 = sphi 0, %s33
    %s34 = sphi 0, %s31
    %s35 = sphi 0, %s34
    %s51 = sphi 0, %s35
    %s55 = sphi 0, %s55
    %s57 = sphi 0, %s55
    %s58 = sphi 0, %s57
    %s72 = sphi 0, %s58
    %s76 = sphi 0, %s76
    %s78 = sphi 0, %s76
    %s79 = sphi 0, %s78
    %s93 = sphi 0, %s79
    %s101 = sphi 0, %s103
    %s104 = sphi 0, %s101
    %s105 = sphi 0, %s104
    %s121 = sphi 0, %s105
  $region4: #{conv_decoder_forward.7} parent=0 // loop_header_branch
    %12 = sbr.rel (%p10) target = $region8
  $region5: #{conv_decoder_forward.7} parent=0 // loop_body
    %s14 = ssub.s32 %s9, 1
    %s15 = ssub.s32 %s9, 2
    %s22 = sadd.s32 1, %s17
    %p23 = scmp.ge.s32.totalorder %s22, 2
    %s24 = scalar_select %p23, 0, %s22
    %s25 = sadd.s32 1, %s16
    %s26 = scalar_select %p23, %s25, %s16
    %p27 = scmp.ge.s32.totalorder %s26, 2
    %s28 = scalar_select %p27, 0, %s26
    %s29 = ssub.s32 %s16, %s28
    %p30 = scmp.eq.s32.totalorder %s29, 0
    %s32 = sadd.s32 %s31, 1
    %s33 = scalar_select %p30, %s31, %s32
    %p36 = pneg %p30
    %p37 = scmp.eq.s32.totalorder %s9, 3
    %p38 = por %p36, %p37
    %p39 = scmp.ne.s32.totalorder %s31, %s34
    %p40 = scmp.eq.s32.totalorder %s9, 0
    %p41 = por %p39, %p40
    %p42 = scmp.ne.s32.totalorder %s31, %s34
    %p43 = scmp.eq.s32.totalorder %s14, 3
    %p44 = por %p42, %p43
    %p45 = scmp.ne.s32.totalorder %s34, %s35
    %p46 = scmp.eq.s32.totalorder %s14, 0
    %p47 = por %p45, %p46
    %p48 = scmp.ne.s32.totalorder %s34, %s35
    %p49 = scmp.eq.s32.totalorder %s15, 3
    %p50 = por %p48, %p49
    %p52 = scmp.ne.s32.totalorder %s35, %s51
    %p53 = scmp.eq.s32.totalorder %s15, 0
    %p54 = por %p52, %p53
    %s56 = sadd.s32 %s55, 1
    %p59 = scmp.eq.s32.totalorder %s9, 3
    %p60 = scmp.ne.s32.totalorder %s55, %s57
    %p61 = scmp.eq.s32.totalorder %s9, 0
    %p62 = por %p60, %p61
    %p63 = scmp.ne.s32.totalorder %s55, %s57
    %p64 = scmp.eq.s32.totalorder %s14, 3
    %p65 = por %p63, %p64
    %p66 = scmp.ne.s32.totalorder %s57, %s58
    %p67 = scmp.eq.s32.totalorder %s14, 0
    %p68 = por %p66, %p67
    %p69 = scmp.ne.s32.totalorder %s57, %s58
    %p70 = scmp.eq.s32.totalorder %s15, 3
    %p71 = por %p69, %p70
    %p73 = scmp.ne.s32.totalorder %s58, %s72
    %p74 = scmp.eq.s32.totalorder %s15, 0
    %p75 = por %p73, %p74
    %s77 = sadd.s32 %s76, 1
    %p80 = scmp.eq.s32.totalorder %s9, 3
    %p81 = scmp.ne.s32.totalorder %s76, %s78
    %p82 = scmp.eq.s32.totalorder %s9, 0
    %p83 = por %p81, %p82
    %p84 = scmp.ne.s32.totalorder %s76, %s78
    %p85 = scmp.eq.s32.totalorder %s14, 3
    %p86 = por %p84, %p85
    %p87 = scmp.ne.s32.totalorder %s78, %s79
    %p88 = scmp.eq.s32.totalorder %s14, 0
    %p89 = por %p87, %p88
    %p90 = scmp.ne.s32.totalorder %s78, %s79
    %p91 = scmp.eq.s32.totalorder %s15, 3
    %p92 = por %p90, %p91
    %p94 = scmp.ne.s32.totalorder %s79, %s93
    %p95 = scmp.eq.s32.totalorder %s15, 0
    %p96 = por %p94, %p95
    %s97 = ssub.s32 %s16, %s28
    %s98 = ssub.s32 %s17, %s24
    %s99 = sor.u32 %s97, %s98
    %p100 = scmp.eq.s32.totalorder %s99, 0
    %s102 = sadd.s32 %s101, 1
    %s103 = scalar_select %p100, %s101, %s102
    %p106 = pneg %p100
    %p107 = scmp.eq.s32.totalorder %s9, 3
    %p108 = por %p106, %p107
    %p109 = scmp.ne.s32.totalorder %s101, %s104
    %p110 = scmp.eq.s32.totalorder %s9, 0
    %p111 = por %p109, %p110
    %p112 = scmp.ne.s32.totalorder %s101, %s104
    %p113 = scmp.eq.s32.totalorder %s14, 3
    %p114 = por %p112, %p113
    %p115 = scmp.ne.s32.totalorder %s104, %s105
    %p116 = scmp.eq.s32.totalorder %s14, 0
    %p117 = por %p115, %p116
    %p118 = scmp.ne.s32.totalorder %s104, %s105
    %p119 = scmp.eq.s32.totalorder %s15, 3
    %p120 = por %p118, %p119
    %p122 = scmp.ne.s32.totalorder %s105, %s121
    %p123 = scmp.eq.s32.totalorder %s15, 0
    %p124 = por %p122, %p123
    %p125 = scmp.le.s32.totalorder 1, %s9
    %p126 = scmp.lt.s32.totalorder %s9, 5
    %p127 = pnand %p125, %p126
    %p128 = pneg %p127
    // Predicated region
    $region9: #{conv_decoder_forward.7} parent=5 // pred_check
      _
    $region10: #{conv_decoder_forward.7} parent=5 // pred_check_branch
      %130 = sbr.rel (%p127) target = $region12
    $region11: #{conv_decoder_forward.7} parent=5 // pred_region
      %s131 = ssub.s32 %s9, 1
      // Predicated region
      $region13: #{conv_decoder_forward.7} parent=11 // pred_check
        %p132 = pneg %p68
      $region14: #{conv_decoder_forward.7} parent=11 // pred_check_branch
        %134 = sbr.rel (%p132) target = $region16
      $region15: #{conv_decoder_forward.7} parent=11 // pred_region
        _
      $region16: #{conv_decoder_forward.7} parent=11 // pred_fallthru
        _
      // Predicated region
      $region17: #{conv_decoder_forward.7} parent=11 // pred_check
        %p135 = pneg %p89
      $region18: #{conv_decoder_forward.7} parent=11 // pred_check_branch
        %137 = sbr.rel (%p135) target = $region20
      $region19: #{conv_decoder_forward.7} parent=11 // pred_region
        _
      $region20: #{conv_decoder_forward.7} parent=11 // pred_fallthru
        _
    $region12: #{conv_decoder_forward.7} parent=5 // pred_fallthru
      _
    %p138 = scmp.lt.s32.totalorder %s9, 4
    // Predicated region
    $region21: #{conv_decoder_forward.7} parent=5 // pred_check
      %p139 = pneg %p138
    $region22: #{conv_decoder_forward.7} parent=5 // pred_check_branch
      %141 = sbr.rel (%p139) target = $region24
    $region23: #{conv_decoder_forward.7} parent=5 // pred_region
      // Predicated region
      $region25: #{conv_decoder_forward.7} parent=23 // pred_check
        %p142 = pneg %p41
      $region26: #{conv_decoder_forward.7} parent=23 // pred_check_branch
        %144 = sbr.rel (%p142) target = $region28
      $region27: #{conv_decoder_forward.7} parent=23 // pred_region
        %p145 = scmp.lt.s32.totalorder %s16, 1
        %s146 = scalar_select %p145, %s16, 1
        %s147 = smul.addr %s146, 39
        %s148 = smul.addr %s147, 4
        %s149 = scalar_lea.vmem %s0, %s148
      $region28: #{conv_decoder_forward.7} parent=23 // pred_fallthru
        _
    $region24: #{conv_decoder_forward.7} parent=5 // pred_fallthru
      _
    %p150 = scmp.le.s32.totalorder 1, %s9
    %p151 = scmp.lt.s32.totalorder %s9, 5
    %p152 = pnand %p150, %p151
    %p153 = pneg %p152
    // Predicated region
    $region29: #{conv_decoder_forward.7} parent=5 // pred_check
      _
    $region30: #{conv_decoder_forward.7} parent=5 // pred_check_branch
      %155 = sbr.rel (%p152) target = $region32
    $region31: #{conv_decoder_forward.7} parent=5 // pred_region
      %s156 = ssub.s32 %s9, 1
      %p157 = scmp.lt.s32.totalorder %s18, 1
      %s158 = scalar_select %p157, %s18, 1
      %s159 = smul.addr %s158, 39
      %s160 = smul.addr %s159, 4
      %s161 = scalar_lea.vmem %s0, %s160
      %p162 = pneg %p47
      %p163 = pneg %p44
      %p164 = pneg %p68
      %p165 = pneg %p65
      %p166 = pneg %p89
      %p167 = pneg %p86
      %p168 = pneg %p117
      %p169 = pneg %p114
      %s170 = smul.u32 6, %s19
      %p171 = scmp.lt.s32.totalorder %s18, 1
      %s172 = scalar_select %p171, %s18, 1
      %p173 = scmp.lt.s32.totalorder %s170, 11
      %s174 = scalar_select %p173, %s170, 11
      %s175 = smul.addr %s174, 4
      %s176 = smul.addr %s172, 48
      %s177 = sadd.s32 %s175, %s176
      %s178 = smul.addr %s177, 4
      %s179 = scalar_lea.vmem %s3, %s178
      %p180 = scmp.lt.s32.totalorder %s18, 1
      %s181 = scalar_select %p180, %s18, 1
      %s182 = smul.addr %s181, 39
      %s183 = smul.addr %s182, 4
      %s184 = scalar_lea.vmem %s0, %s183
      %s185 = smul.u32 6, %s19
      %p186 = scmp.lt.s32.totalorder %s18, 1
      %s187 = scalar_select %p186, %s18, 1
      %p188 = scmp.lt.s32.totalorder %s185, 11
      %s189 = scalar_select %p188, %s185, 11
      %s190 = smul.addr %s189, 4
      %s191 = smul.addr %s187, 48
      %s192 = sadd.s32 %s190, %s191
      %s193 = smul.addr %s192, 4
      %s194 = scalar_lea.vmem %s3, %s193
      %s195 = smul.u32 6, %s19
      %s197 = smul.u32 %s19, 6
      %s198 = smul.u32 %s197, 3
      %s199 = smul.addr %s198, 4
      %s200 = scalar_lea.vmem %s184, %s199
      %v201 = vld [vmem:[%s200] sm:$0xf]
      %v202 = vld [vmem:[%s200 + $0x4] sm:$0xf]
      %v203 = vld [vmem:[%s200 + $0x8] sm:$0x1]
      %v204 = vld [vmem:[%s200 + $0xc] sm:$0xf]
      %v205 = vld [vmem:[%s200 + $0x10] sm:$0xf]
      %v206 = vld [vmem:[%s200 + $0x14] sm:$0x1]
      %v207 = vld [vmem:[%s200 + $0x18] sm:$0xf]
      %v208 = vld [vmem:[%s200 + $0x1c] sm:$0xf]
      %v209 = vld [vmem:[%s200 + $0x20] sm:$0x1]
      %v210 = vld [vmem:[%s200 + $0x24] sm:$0xf]
      %v211 = vld [vmem:[%s200 + $0x28] sm:$0xf]
      %v212 = vld [vmem:[%s200 + $0x2c] sm:$0x1]
      %v213 = vld [vmem:[%s200 + $0x30] sm:$0xf]
      %v214 = vld [vmem:[%s200 + $0x34] sm:$0xf]
      %v215 = vld [vmem:[%s200 + $0x38] sm:$0x1]
      %v216 = vld [vmem:[%s200 + $0x3c] sm:$0xf]
      %v217 = vld [vmem:[%s200 + $0x40] sm:$0xf]
      %v218 = vld [vmem:[%s200 + $0x44] sm:$0x1]
      %v219 = vld [vmem:[%s200 + $0x48] sm:$0xf]
      %v220 = vld [vmem:[%s200 + $0x4c] sm:$0xf]
      %v221 = vld [vmem:[%s200 + $0x50] sm:$0x1]
      %vm222 = vsmask.f32 3328
      %vm223 = vsmask.f32 7440
      %vm224 = vmor %vm222, %vm223
      %v226 = vshrl.u32 %v204, 16
      %v228 = vrot.slane %v226, 4
      %v229 = vshll.u32 %v204, 16
      %v231 = vrot.slane %v229, 5
      %v232 = vor.u32 %v228, %v231
      %v233 = vrot.slane %v232, 4
      %v235 = vshll.u32 %v205, 16
      %v237 = vrot.slane %v235, 5
      %v238 = vsel %vm224, %v233, %v237
      %v239 = vshrl.u32 %v205, 16
      %v241 = vrot.slane %v239, 4
      %v242 = vor.u32 %v241, %v237
      %v243 = vrot.slane %v242, 4
      %v245 = vshll.u32 %v206, 16
      %v247 = vrot.slane %v245, 5
      %v248 = vsel %vm224, %v243, %v247
      %v250 = vshrl.u32 %v207, 16
      %v252 = vrot.slane %v250, 4
      %v253 = vshll.u32 %v207, 16
      %v255 = vrot.slane %v253, 5
      %v256 = vor.u32 %v252, %v255
      %v257 = vrot.slane %v256, 4
      %v259 = vshll.u32 %v208, 16
      %v261 = vrot.slane %v259, 5
      %v262 = vsel %vm224, %v257, %v261
      %v263 = vshrl.u32 %v208, 16
      %v265 = vrot.slane %v263, 4
      %v266 = vor.u32 %v265, %v261
      %v267 = vrot.slane %v266, 4
      %v269 = vshll.u32 %v209, 16
      %v271 = vrot.slane %v269, 5
      %v272 = vsel %vm224, %v267, %v271
      %v274 = vshrl.u32 %v210, 16
      %v276 = vrot.slane %v274, 4
      %v277 = vshll.u32 %v210, 16
      %v279 = vrot.slane %v277, 5
      %v280 = vor.u32 %v276, %v279
      %v281 = vrot.slane %v280, 4
      %v283 = vshll.u32 %v211, 16
      %v285 = vrot.slane %v283, 5
      %v286 = vsel %vm224, %v281, %v285
      %v287 = vshrl.u32 %v211, 16
      %v289 = vrot.slane %v287, 4
      %v290 = vor.u32 %v289, %v285
      %v291 = vrot.slane %v290, 4
      %v293 = vshll.u32 %v212, 16
      %v295 = vrot.slane %v293, 5
      %v296 = vsel %vm224, %v291, %v295
      %v298 = vshrl.u32 %v213, 16
      %v300 = vrot.slane %v298, 4
      %v301 = vshll.u32 %v213, 16
      %v303 = vrot.slane %v301, 5
      %v304 = vor.u32 %v300, %v303
      %v305 = vrot.slane %v304, 4
      %v307 = vshll.u32 %v214, 16
      %v309 = vrot.slane %v307, 5
      %v310 = vsel %vm224, %v305, %v309
      %v311 = vshrl.u32 %v214, 16
      %v313 = vrot.slane %v311, 4
      %v314 = vor.u32 %v313, %v309
      %v315 = vrot.slane %v314, 4
      %v317 = vshll.u32 %v215, 16
      %v319 = vrot.slane %v317, 5
      %v320 = vsel %vm224, %v315, %v319
      %v322 = vshrl.u32 %v216, 16
      %v324 = vrot.slane %v322, 4
      %v325 = vshll.u32 %v216, 16
      %v327 = vrot.slane %v325, 5
      %v328 = vor.u32 %v324, %v327
      %v329 = vrot.slane %v328, 4
      %v331 = vshll.u32 %v217, 16
      %v333 = vrot.slane %v331, 5
      %v334 = vsel %vm224, %v329, %v333
      %v335 = vshrl.u32 %v217, 16
      %v337 = vrot.slane %v335, 4
      %v338 = vor.u32 %v337, %v333
      %v339 = vrot.slane %v338, 4
      %v341 = vshll.u32 %v218, 16
      %v343 = vrot.slane %v341, 5
      %v344 = vsel %vm224, %v339, %v343
      %v346 = vshrl.u32 %v219, 16
      %v348 = vrot.slane %v346, 4
      %v349 = vshll.u32 %v219, 16
      %v351 = vrot.slane %v349, 5
      %v352 = vor.u32 %v348, %v351
      %v353 = vrot.slane %v352, 4
      %v355 = vshll.u32 %v220, 16
      %v357 = vrot.slane %v355, 5
      %v358 = vsel %vm224, %v353, %v357
      %v359 = vshrl.u32 %v220, 16
      %v361 = vrot.slane %v359, 4
      %v362 = vor.u32 %v361, %v357
      %v363 = vrot.slane %v362, 4
      %v365 = vshll.u32 %v221, 16
      %v367 = vrot.slane %v365, 5
      %v368 = vsel %vm224, %v363, %v367
      %v369 = vld [vmem:[%s1] sm:$0xff]
      %v370 = vld [vmem:[%s1 + $0x8] sm:$0xff]
      %v371 = vld [vmem:[%s1 + $0x10] sm:$0xff]
      %v372 = vld [vmem:[%s1 + $0x18] sm:$0xff]
      %v373 = vld [vmem:[%s1 + $0x20] sm:$0xff]
      %v374 = vld [vmem:[%s1 + $0x28] sm:$0xff]
      %v375 = vld [vmem:[%s1 + $0x30] sm:$0xff]
      %v376 = vld [vmem:[%s1 + $0x38] sm:$0xff]
      %v377 = vld [vmem:[%s1 + $0x40] sm:$0xff]
      %v378 = vld [vmem:[%s1 + $0x48] sm:$0xff]
      %v379 = vld [vmem:[%s1 + $0x50] sm:$0xff]
      %v380 = vld [vmem:[%s1 + $0x58] sm:$0xff]
      %v381 = vld [vmem:[%s1 + $0x60] sm:$0xff]
      %v382 = vld [vmem:[%s1 + $0x68] sm:$0xff]
      %v383 = vld [vmem:[%s1 + $0x70] sm:$0xff]
      %v384 = vld [vmem:[%s1 + $0x78] sm:$0xff]
      %s385 = scalar_lea.vmem %s1, 128
      %v386 = vld [vmem:[%s385] sm:$0xff]
      %v387 = vld [vmem:[%s385 + $0x8] sm:$0xff]
      %v388 = vld [vmem:[%s385 + $0x10] sm:$0xff]
      %v389 = vld [vmem:[%s385 + $0x18] sm:$0xff]
      %v390 = vld [vmem:[%s385 + $0x20] sm:$0xff]
      %v391 = vld [vmem:[%s385 + $0x28] sm:$0xff]
      %v392 = vld [vmem:[%s385 + $0x30] sm:$0xff]
      %v393 = vld [vmem:[%s385 + $0x38] sm:$0xff]
      %v394 = vld [vmem:[%s385 + $0x40] sm:$0xff]
      %v395 = vld [vmem:[%s385 + $0x48] sm:$0xff]
      %v396 = vld [vmem:[%s385 + $0x50] sm:$0xff]
      %v397 = vld [vmem:[%s385 + $0x58] sm:$0xff]
      %v398 = vld [vmem:[%s385 + $0x60] sm:$0xff]
      %v399 = vld [vmem:[%s385 + $0x68] sm:$0xff]
      %v400 = vld [vmem:[%s385 + $0x70] sm:$0xff]
      %v401 = vld [vmem:[%s385 + $0x78] sm:$0xff]
      %v414 = vunpack.c.l.b16 %v204
      %v415 = vunpack.c.l.b16 %v205
      %v416 = vunpack.c.l.b16 %v207
      %v417 = vunpack.c.l.b16 %v208
      %v418 = vunpack.c.l.b16 %v210
      %v419 = vunpack.c.l.b16 %v211
      %v420 = vunpack.c.l.b16 %v213
      %v421 = vunpack.c.l.b16 %v214
      %v422 = vunpack.c.l.b16 %v216
      %v423 = vunpack.c.l.b16 %v217
      %v424 = vunpack.c.l.b16 %v219
      %v425 = vunpack.c.l.b16 %v220
      %v426 = vpack.c.b16 %v415, %v414
      %v427 = vpack.c.b16 %v417, %v416
      %v428 = vpack.c.b16 %v419, %v418
      %v429 = vpack.c.b16 %v421, %v420
      %v430 = vpack.c.b16 %v423, %v422
      %v431 = vpack.c.b16 %v425, %v424
      %v454 = vunpack.c.l.b16 %v386
      %v455 = vunpack.c.h.b16 %v386
      %v456 = vunpack.c.l.b16 %v387
      %v457 = vunpack.c.h.b16 %v387
      %v458 = vunpack.c.l.b16 %v388
      %v459 = vunpack.c.h.b16 %v388
      %v460 = vunpack.c.l.b16 %v389
      %v461 = vunpack.c.h.b16 %v389
      %v462 = vunpack.c.l.b16 %v390
      %v463 = vunpack.c.h.b16 %v390
      %v464 = vunpack.c.l.b16 %v391
      %v465 = vunpack.c.h.b16 %v391
      %v466 = vunpack.c.l.b16 %v392
      %v467 = vunpack.c.h.b16 %v392
      %v468 = vunpack.c.l.b16 %v393
      %v469 = vunpack.c.h.b16 %v393
      %v470 = vunpack.c.l.b16 %v394
      %v471 = vunpack.c.h.b16 %v394
      %v472 = vunpack.c.l.b16 %v395
      %v473 = vunpack.c.h.b16 %v395
      %v474 = vunpack.c.l.b16 %v396
      %v475 = vunpack.c.h.b16 %v396
      %v476 = vunpack.c.l.b16 %v397
      %v477 = vunpack.c.h.b16 %v397
      %v478 = vunpack.c.l.b16 %v398
      %v479 = vunpack.c.h.b16 %v398
      %v480 = vunpack.c.l.b16 %v399
      %v481 = vunpack.c.h.b16 %v399
      %v482 = vunpack.c.l.b16 %v400
      %v483 = vunpack.c.h.b16 %v400
      %v484 = vunpack.c.l.b16 %v401
      %v485 = vunpack.c.h.b16 %v401
      %v486 = vpack.c.b16 %v456, %v454
      %v487 = vpack.c.b16 %v457, %v455
      %v488 = vpack.c.b16 %v460, %v458
      %v489 = vpack.c.b16 %v461, %v459
      %v490 = vpack.c.b16 %v464, %v462
      %v491 = vpack.c.b16 %v465, %v463
      %v492 = vpack.c.b16 %v468, %v466
      %v493 = vpack.c.b16 %v469, %v467
      %v494 = vpack.c.b16 %v472, %v470
      %v495 = vpack.c.b16 %v473, %v471
      %v496 = vpack.c.b16 %v476, %v474
      %v497 = vpack.c.b16 %v477, %v475
      %v498 = vpack.c.b16 %v480, %v478
      %v499 = vpack.c.b16 %v481, %v479
      %v500 = vpack.c.b16 %v484, %v482
      %v501 = vpack.c.b16 %v485, %v483
      %518 = vmatprep.subr.bf16.mxu0 %v487
      %519 = vmatpush1.bf16.msra.mxu0 %v486
      %520 = vmatprep.subr.bf16.mxu0 %v489
      %521 = vmatpush1.bf16.msra.mxu0 %v488
      %522 = vmatprep.subr.bf16.mxu0 %v491
      %523 = vmatpush1.bf16.msra.mxu0 %v490
      %524 = vmatprep.subr.bf16.mxu0 %v493
      %525 = vmatpush1.bf16.msra.mxu0 %v492
      %526 = vmatprep.subr.bf16.mxu0 %v495
      %527 = vmatpush1.bf16.msra.mxu0 %v494
      %528 = vmatprep.subr.bf16.mxu0 %v497
      %529 = vmatpush1.bf16.msra.mxu0 %v496
      %530 = vmatprep.subr.bf16.mxu0 %v499
      %531 = vmatpush1.bf16.msra.mxu0 %v498
      %532 = vmatprep.subr.bf16.mxu0 %v501
      %533 = vmatpush1.bf16.msra.mxu0 %v500
      %534 = vmatprep.subr.bf16.mxu0 0
      %535 = vmatpush1.bf16.msra.mxu0 0
      %536 = vmatprep.subr.bf16.mxu0 0
      %537 = vmatpush1.bf16.msra.mxu0 0
      %538 = vmatprep.subr.bf16.mxu0 0
      %539 = vmatpush1.bf16.msra.mxu0 0
      %540 = vmatprep.subr.bf16.mxu0 0
      %541 = vmatpush1.bf16.msra.mxu0 0
      %542 = vmatprep.subr.bf16.mxu0 0
      %543 = vmatpush1.bf16.msra.mxu0 0
      %544 = vmatprep.subr.bf16.mxu0 0
      %545 = vmatpush1.bf16.msra.mxu0 0
      %546 = vmatprep.subr.bf16.mxu0 0
      %547 = vmatpush1.bf16.msra.mxu0 0
      %548 = vmatprep.subr.bf16.mxu0 0
      %549 = vmatpush1.bf16.msra.mxu0 0
      %550 = vmatprep.mubr.bf16.mxu0 0
      %551 = vmatmul.mubr.bf16.gmra.mrb[0].mxu0 %v426
      %v552 = vpop.f32.mrb[0].mxu0
      %v553 = vadd.f32 0.0, %v552
      %v554 = vpop.f32.mrb[0].mxu0
      %v555 = vadd.f32 0.0, %v554
      %v556 = vpop.f32.mrb[0].mxu0
      %v557 = vadd.f32 0.0, %v556
      %v558 = vpop.f32.mrb[0].mxu0
      %v559 = vadd.f32 0.0, %v558
      %560 = vmatprep.mubr.bf16.mxu0 0
      %561 = vmatmul.mubr.bf16.gmra.mrb[0].mxu0 %v427
      %v562 = vpop.f32.mrb[0].mxu0
      %v563 = vadd.f32 0.0, %v562
      %v564 = vpop.f32.mrb[0].mxu0
      %v565 = vadd.f32 0.0, %v564
      %v566 = vpop.f32.mrb[0].mxu0
      %v567 = vadd.f32 0.0, %v566
      %v568 = vpop.f32.mrb[0].mxu0
      %v569 = vadd.f32 0.0, %v568
      %570 = vmatprep.mubr.bf16.mxu0 0
      %571 = vmatmul.mubr.bf16.gmra.mrb[0].mxu0 %v428
      %v572 = vpop.f32.mrb[0].mxu0
      %v573 = vadd.f32 0.0, %v572
      %v574 = vpop.f32.mrb[0].mxu0
      %v575 = vadd.f32 0.0, %v574
      %v576 = vpop.f32.mrb[0].mxu0
      %v577 = vadd.f32 0.0, %v576
      %v578 = vpop.f32.mrb[0].mxu0
      %v579 = vadd.f32 0.0, %v578
      %580 = vmatprep.mubr.bf16.mxu0 0
      %581 = vmatmul.mubr.bf16.gmra.mrb[0].mxu0 %v429
      %v582 = vpop.f32.mrb[0].mxu0
      %v583 = vadd.f32 0.0, %v582
      %v584 = vpop.f32.mrb[0].mxu0
      %v585 = vadd.f32 0.0, %v584
      %v586 = vpop.f32.mrb[0].mxu0
      %v587 = vadd.f32 0.0, %v586
      %v588 = vpop.f32.mrb[0].mxu0
      %v589 = vadd.f32 0.0, %v588
      %590 = vmatprep.mubr.bf16.mxu0 0
      %591 = vmatmul.mubr.bf16.gmra.mrb[0].mxu0 %v430
      %v592 = vpop.f32.mrb[0].mxu0
      %v593 = vadd.f32 0.0, %v592
      %v594 = vpop.f32.mrb[0].mxu0
      %v595 = vadd.f32 0.0, %v594
      %v596 = vpop.f32.mrb[0].mxu0
      %v597 = vadd.f32 0.0, %v596
      %v598 = vpop.f32.mrb[0].mxu0
      %v599 = vadd.f32 0.0, %v598
      %600 = vmatprep.mubr.bf16.mxu0 0
      %601 = vmatmul.mubr.bf16.gmra.mrb[0].mxu0 %v431
      %v602 = vpop.f32.mrb[0].mxu0
      %v603 = vadd.f32 0.0, %v602
      %v604 = vpop.f32.mrb[0].mxu0
      %v605 = vadd.f32 0.0, %v604
      %v606 = vpop.f32.mrb[0].mxu0
      %v607 = vadd.f32 0.0, %v606
      %v608 = vpop.f32.mrb[0].mxu0
      %v609 = vadd.f32 0.0, %v608
      %610 = vdwg.mxu0
      %v611 = vunpack.c.l.b16 %v238
      %v612 = vunpack.c.l.b16 %v248
      %v613 = vunpack.c.l.b16 %v262
      %v614 = vunpack.c.l.b16 %v272
      %v615 = vunpack.c.l.b16 %v286
      %v616 = vunpack.c.l.b16 %v296
      %v617 = vunpack.c.l.b16 %v310
      %v618 = vunpack.c.l.b16 %v320
      %v619 = vunpack.c.l.b16 %v334
      %v620 = vunpack.c.l.b16 %v344
      %v621 = vunpack.c.l.b16 %v358
      %v622 = vunpack.c.l.b16 %v368
      %v623 = vpack.c.b16 %v612, %v611
      %v624 = vpack.c.b16 %v614, %v613
      %v625 = vpack.c.b16 %v616, %v615
      %v626 = vpack.c.b16 %v618, %v617
      %v627 = vpack.c.b16 %v620, %v619
      %v628 = vpack.c.b16 %v622, %v621
      %v651 = vunpack.c.l.b16 %v369
      %v652 = vunpack.c.h.b16 %v369
      %v653 = vunpack.c.l.b16 %v370
      %v654 = vunpack.c.h.b16 %v370
      %v655 = vunpack.c.l.b16 %v371
      %v656 = vunpack.c.h.b16 %v371
      %v657 = vunpack.c.l.b16 %v372
      %v658 = vunpack.c.h.b16 %v372
      %v659 = vunpack.c.l.b16 %v373
      %v660 = vunpack.c.h.b16 %v373
      %v661 = vunpack.c.l.b16 %v374
      %v662 = vunpack.c.h.b16 %v374
      %v663 = vunpack.c.l.b16 %v375
      %v664 = vunpack.c.h.b16 %v375
      %v665 = vunpack.c.l.b16 %v376
      %v666 = vunpack.c.h.b16 %v376
      %v667 = vunpack.c.l.b16 %v377
      %v668 = vunpack.c.h.b16 %v377
      %v669 = vunpack.c.l.b16 %v378
      %v670 = vunpack.c.h.b16 %v378
      %v671 = vunpack.c.l.b16 %v379
      %v672 = vunpack.c.h.b16 %v379
      %v673 = vunpack.c.l.b16 %v380
      %v674 = vunpack.c.h.b16 %v380
      %v675 = vunpack.c.l.b16 %v381
      %v676 = vunpack.c.h.b16 %v381
      %v677 = vunpack.c.l.b16 %v382
      %v678 = vunpack.c.h.b16 %v382
      %v679 = vunpack.c.l.b16 %v383
      %v680 = vunpack.c.h.b16 %v383
      %v681 = vunpack.c.l.b16 %v384
      %v682 = vunpack.c.h.b16 %v384
      %v683 = vpack.c.b16 %v653, %v651
      %v684 = vpack.c.b16 %v654, %v652
      %v685 = vpack.c.b16 %v657, %v655
      %v686 = vpack.c.b16 %v658, %v656
      %v687 = vpack.c.b16 %v661, %v659
      %v688 = vpack.c.b16 %v662, %v660
      %v689 = vpack.c.b16 %v665, %v663
      %v690 = vpack.c.b16 %v666, %v664
      %v691 = vpack.c.b16 %v669, %v667
      %v692 = vpack.c.b16 %v670, %v668
      %v693 = vpack.c.b16 %v673, %v671
      %v694 = vpack.c.b16 %v674, %v672
      %v695 = vpack.c.b16 %v677, %v675
      %v696 = vpack.c.b16 %v678, %v676
      %v697 = vpack.c.b16 %v681, %v679
      %v698 = vpack.c.b16 %v682, %v680
      %715 = vmatprep.subr.bf16.mxu0 %v684
      %716 = vmatpush1.bf16.msra.mxu0 %v683
      %717 = vmatprep.subr.bf16.mxu0 %v686
      %718 = vmatpush1.bf16.msra.mxu0 %v685
      %719 = vmatprep.subr.bf16.mxu0 %v688
      %720 = vmatpush1.bf16.msra.mxu0 %v687
      %721 = vmatprep.subr.bf16.mxu0 %v690
      %722 = vmatpush1.bf16.msra.mxu0 %v689
      %723 = vmatprep.subr.bf16.mxu0 %v692
      %724 = vmatpush1.bf16.msra.mxu0 %v691
      %725 = vmatprep.subr.bf16.mxu0 %v694
      %726 = vmatpush1.bf16.msra.mxu0 %v693
      %727 = vmatprep.subr.bf16.mxu0 %v696
      %728 = vmatpush1.bf16.msra.mxu0 %v695
      %729 = vmatprep.subr.bf16.mxu0 %v698
      %730 = vmatpush1.bf16.msra.mxu0 %v697
      %731 = vmatprep.subr.bf16.mxu0 0
      %732 = vmatpush1.bf16.msra.mxu0 0
      %733 = vmatprep.subr.bf16.mxu0 0
      %734 = vmatpush1.bf16.msra.mxu0 0
      %735 = vmatprep.subr.bf16.mxu0 0
      %736 = vmatpush1.bf16.msra.mxu0 0
      %737 = vmatprep.subr.bf16.mxu0 0
      %738 = vmatpush1.bf16.msra.mxu0 0
      %739 = vmatprep.subr.bf16.mxu0 0
      %740 = vmatpush1.bf16.msra.mxu0 0
      %741 = vmatprep.subr.bf16.mxu0 0
      %742 = vmatpush1.bf16.msra.mxu0 0
      %743 = vmatprep.subr.bf16.mxu0 0
      %744 = vmatpush1.bf16.msra.mxu0 0
      %745 = vmatprep.subr.bf16.mxu0 0
      %746 = vmatpush1.bf16.msra.mxu0 0
      %747 = vmatprep.mubr.bf16.mxu0 0
      %748 = vmatmul.mubr.bf16.gmra.mrb[0].mxu0 %v623
      %v749 = vpop.f32.mrb[0].mxu0
      %v750 = vadd.f32 %v553, %v749
      %v751 = vpop.f32.mrb[0].mxu0
      %v752 = vadd.f32 %v555, %v751
      %v753 = vpop.f32.mrb[0].mxu0
      %v754 = vadd.f32 %v557, %v753
      %v755 = vpop.f32.mrb[0].mxu0
      %v756 = vadd.f32 %v559, %v755
      %757 = vmatprep.mubr.bf16.mxu0 0
      %758 = vmatmul.mubr.bf16.gmra.mrb[0].mxu0 %v624
      %v759 = vpop.f32.mrb[0].mxu0
      %v760 = vadd.f32 %v563, %v759
      %v761 = vpop.f32.mrb[0].mxu0
      %v762 = vadd.f32 %v565, %v761
      %v763 = vpop.f32.mrb[0].mxu0
      %v764 = vadd.f32 %v567, %v763
      %v765 = vpop.f32.mrb[0].mxu0
      %v766 = vadd.f32 %v569, %v765
      %767 = vmatprep.mubr.bf16.mxu0 0
      %768 = vmatmul.mubr.bf16.gmra.mrb[0].mxu0 %v625
      %v769 = vpop.f32.mrb[0].mxu0
      %v770 = vadd.f32 %v573, %v769
      %v771 = vpop.f32.mrb[0].mxu0
      %v772 = vadd.f32 %v575, %v771
      %v773 = vpop.f32.mrb[0].mxu0
      %v774 = vadd.f32 %v577, %v773
      %v775 = vpop.f32.mrb[0].mxu0
      %v776 = vadd.f32 %v579, %v775
      %777 = vmatprep.mubr.bf16.mxu0 0
      %778 = vmatmul.mubr.bf16.gmra.mrb[0].mxu0 %v626
      %v779 = vpop.f32.mrb[0].mxu0
      %v780 = vadd.f32 %v583, %v779
      %v781 = vpop.f32.mrb[0].mxu0
      %v782 = vadd.f32 %v585, %v781
      %v783 = vpop.f32.mrb[0].mxu0
      %v784 = vadd.f32 %v587, %v783
      %v785 = vpop.f32.mrb[0].mxu0
      %v786 = vadd.f32 %v589, %v785
      %787 = vmatprep.mubr.bf16.mxu0 0
      %788 = vmatmul.mubr.bf16.gmra.mrb[0].mxu0 %v627
      %v789 = vpop.f32.mrb[0].mxu0
      %v790 = vadd.f32 %v593, %v789
      %v791 = vpop.f32.mrb[0].mxu0
      %v792 = vadd.f32 %v595, %v791
      %v793 = vpop.f32.mrb[0].mxu0
      %v794 = vadd.f32 %v597, %v793
      %v795 = vpop.f32.mrb[0].mxu0
      %v796 = vadd.f32 %v599, %v795
      %797 = vmatprep.mubr.bf16.mxu0 0
      %798 = vmatmul.mubr.bf16.gmra.mrb[0].mxu0 %v628
      %v799 = vpop.f32.mrb[0].mxu0
      %v800 = vadd.f32 %v603, %v799
      %v801 = vpop.f32.mrb[0].mxu0
      %v802 = vadd.f32 %v605, %v801
      %v803 = vpop.f32.mrb[0].mxu0
      %v804 = vadd.f32 %v607, %v803
      %v805 = vpop.f32.mrb[0].mxu0
      %v806 = vadd.f32 %v609, %v805
      %807 = vdwg.mxu0
      %v809 = vshrl.u32 %v201, 16
      %v811 = vrot.slane %v809, 4
      %v812 = vshll.u32 %v201, 16
      %v814 = vrot.slane %v812, 5
      %v815 = vor.u32 %v811, %v814
      %v816 = vrot.slane %v815, 4
      %v818 = vshll.u32 %v202, 16
      %v820 = vrot.slane %v818, 5
      %v821 = vsel %vm224, %v816, %v820
      %v822 = vshrl.u32 %v202, 16
      %v824 = vrot.slane %v822, 4
      %v825 = vor.u32 %v824, %v820
      %v826 = vrot.slane %v825, 4
      %v828 = vshll.u32 %v203, 16
      %v830 = vrot.slane %v828, 5
      %v831 = vsel %vm224, %v826, %v830
      %s832 = scalar_lea.vmem %s1, 256
      %v833 = vld [vmem:[%s832] sm:$0xff]
      %v834 = vld [vmem:[%s832 + $0x8] sm:$0xff]
      %v835 = vld [vmem:[%s832 + $0x10] sm:$0xff]
      %v836 = vld [vmem:[%s832 + $0x18] sm:$0xff]
      %v837 = vld [vmem:[%s832 + $0x20] sm:$0xff]
      %v838 = vld [vmem:[%s832 + $0x28] sm:$0xff]
      %v839 = vld [vmem:[%s832 + $0x30] sm:$0xff]
      %v840 = vld [vmem:[%s832 + $0x38] sm:$0xff]
      %v841 = vld [vmem:[%s832 + $0x40] sm:$0xff]
      %v842 = vld [vmem:[%s832 + $0x48] sm:$0xff]
      %v843 = vld [vmem:[%s832 + $0x50] sm:$0xff]
      %v844 = vld [vmem:[%s832 + $0x58] sm:$0xff]
      %v845 = vld [vmem:[%s832 + $0x60] sm:$0xff]
      %v846 = vld [vmem:[%s832 + $0x68] sm:$0xff]
      %v847 = vld [vmem:[%s832 + $0x70] sm:$0xff]
      %v848 = vld [vmem:[%s832 + $0x78] sm:$0xff]
      %v849 = vunpack.c.l.b16 %v821
      %v850 = vunpack.c.l.b16 %v831
      %v851 = vpack.c.b16 %v850, %v849
      %v869 = vunpack.c.l.b16 %v833
      %v870 = vunpack.c.h.b16 %v833
      %v871 = vunpack.c.l.b16 %v834
      %v872 = vunpack.c.h.b16 %v834
      %v873 = vunpack.c.l.b16 %v835
      %v874 = vunpack.c.h.b16 %v835
      %v875 = vunpack.c.l.b16 %v836
      %v876 = vunpack.c.h.b16 %v836
      %v877 = vunpack.c.l.b16 %v837
      %v878 = vunpack.c.h.b16 %v837
      %v879 = vunpack.c.l.b16 %v838
      %v880 = vunpack.c.h.b16 %v838
      %v881 = vunpack.c.l.b16 %v839
      %v882 = vunpack.c.h.b16 %v839
      %v883 = vunpack.c.l.b16 %v840
      %v884 = vunpack.c.h.b16 %v840
      %v885 = vunpack.c.l.b16 %v841
      %v886 = vunpack.c.h.b16 %v841
      %v887 = vunpack.c.l.b16 %v842
      %v888 = vunpack.c.h.b16 %v842
      %v889 = vunpack.c.l.b16 %v843
      %v890 = vunpack.c.h.b16 %v843
      %v891 = vunpack.c.l.b16 %v844
      %v892 = vunpack.c.h.b16 %v844
      %v893 = vunpack.c.l.b16 %v845
      %v894 = vunpack.c.h.b16 %v845
      %v895 = vunpack.c.l.b16 %v846
      %v896 = vunpack.c.h.b16 %v846
      %v897 = vunpack.c.l.b16 %v847
      %v898 = vunpack.c.h.b16 %v847
      %v899 = vunpack.c.l.b16 %v848
      %v900 = vunpack.c.h.b16 %v848
      %v901 = vpack.c.b16 %v871, %v869
      %v902 = vpack.c.b16 %v872, %v870
      %v903 = vpack.c.b16 %v875, %v873
      %v904 = vpack.c.b16 %v876, %v874
      %v905 = vpack.c.b16 %v879, %v877
      %v906 = vpack.c.b16 %v880, %v878
      %v907 = vpack.c.b16 %v883, %v881
      %v908 = vpack.c.b16 %v884, %v882
      %v909 = vpack.c.b16 %v887, %v885
      %v910 = vpack.c.b16 %v888, %v886
      %v911 = vpack.c.b16 %v891, %v889
      %v912 = vpack.c.b16 %v892, %v890
      %v913 = vpack.c.b16 %v895, %v893
      %v914 = vpack.c.b16 %v896, %v894
      %v915 = vpack.c.b16 %v899, %v897
      %v916 = vpack.c.b16 %v900, %v898
      %933 = vmatprep.subr.bf16.mxu0 %v902
      %934 = vmatpush1.bf16.msra.mxu0 %v901
      %935 = vmatprep.subr.bf16.mxu0 %v904
      %936 = vmatpush1.bf16.msra.mxu0 %v903
      %937 = vmatprep.subr.bf16.mxu0 %v906
      %938 = vmatpush1.bf16.msra.mxu0 %v905
      %939 = vmatprep.subr.bf16.mxu0 %v908
      %940 = vmatpush1.bf16.msra.mxu0 %v907
      %941 = vmatprep.subr.bf16.mxu0 %v910
      %942 = vmatpush1.bf16.msra.mxu0 %v909
      %943 = vmatprep.subr.bf16.mxu0 %v912
      %944 = vmatpush1.bf16.msra.mxu0 %v911
      %945 = vmatprep.subr.bf16.mxu0 %v914
      %946 = vmatpush1.bf16.msra.mxu0 %v913
      %947 = vmatprep.subr.bf16.mxu0 %v916
      %948 = vmatpush1.bf16.msra.mxu0 %v915
      %949 = vmatprep.subr.bf16.mxu0 0
      %950 = vmatpush1.bf16.msra.mxu0 0
      %951 = vmatprep.subr.bf16.mxu0 0
      %952 = vmatpush1.bf16.msra.mxu0 0
      %953 = vmatprep.subr.bf16.mxu0 0
      %954 = vmatpush1.bf16.msra.mxu0 0
      %955 = vmatprep.subr.bf16.mxu0 0
      %956 = vmatpush1.bf16.msra.mxu0 0
      %957 = vmatprep.subr.bf16.mxu0 0
      %958 = vmatpush1.bf16.msra.mxu0 0
      %959 = vmatprep.subr.bf16.mxu0 0
      %960 = vmatpush1.bf16.msra.mxu0 0
      %961 = vmatprep.subr.bf16.mxu0 0
      %962 = vmatpush1.bf16.msra.mxu0 0
      %963 = vmatprep.subr.bf16.mxu0 0
      %964 = vmatpush1.bf16.msra.mxu0 0
      %965 = vmatprep.mubr.bf16.mxu0 0
      %966 = vmatmul.mubr.bf16.gmra.mrb[0].mxu0 %v851
      %v967 = vpop.f32.mrb[0].mxu0
      %v968 = vadd.f32 0.0, %v967
      %v969 = vpop.f32.mrb[0].mxu0
      %v970 = vadd.f32 0.0, %v969
      %v971 = vpop.f32.mrb[0].mxu0
      %v972 = vadd.f32 0.0, %v971
      %v973 = vpop.f32.mrb[0].mxu0
      %v974 = vadd.f32 0.0, %v973
      %975 = vmatprep.mubr.bf16.mxu0 0
      %976 = vmatmul.mubr.bf16.gmra.mrb[0].mxu0 %v623
      %v977 = vpop.f32.mrb[0].mxu0
      %v978 = vadd.f32 0.0, %v977
      %v979 = vpop.f32.mrb[0].mxu0
      %v980 = vadd.f32 0.0, %v979
      %v981 = vpop.f32.mrb[0].mxu0
      %v982 = vadd.f32 0.0, %v981
      %v983 = vpop.f32.mrb[0].mxu0
      %v984 = vadd.f32 0.0, %v983
      %985 = vmatprep.mubr.bf16.mxu0 0
      %986 = vmatmul.mubr.bf16.gmra.mrb[0].mxu0 %v624
      %v987 = vpop.f32.mrb[0].mxu0
      %v988 = vadd.f32 0.0, %v987
      %v989 = vpop.f32.mrb[0].mxu0
      %v990 = vadd.f32 0.0, %v989
      %v991 = vpop.f32.mrb[0].mxu0
      %v992 = vadd.f32 0.0, %v991
      %v993 = vpop.f32.mrb[0].mxu0
      %v994 = vadd.f32 0.0, %v993
      %995 = vmatprep.mubr.bf16.mxu0 0
      %996 = vmatmul.mubr.bf16.gmra.mrb[0].mxu0 %v625
      %v997 = vpop.f32.mrb[0].mxu0
      %v998 = vadd.f32 0.0, %v997
      %v999 = vpop.f32.mrb[0].mxu0
      %v1000 = vadd.f32 0.0, %v999
      %v1001 = vpop.f32.mrb[0].mxu0
      %v1002 = vadd.f32 0.0, %v1001
      %v1003 = vpop.f32.mrb[0].mxu0
      %v1004 = vadd.f32 0.0, %v1003
      %1005 = vmatprep.mubr.bf16.mxu0 0
      %1006 = vmatmul.mubr.bf16.gmra.mrb[0].mxu0 %v626
      %v1007 = vpop.f32.mrb[0].mxu0
      %v1008 = vadd.f32 0.0, %v1007
      %v1009 = vpop.f32.mrb[0].mxu0
      %v1010 = vadd.f32 0.0, %v1009
      %v1011 = vpop.f32.mrb[0].mxu0
      %v1012 = vadd.f32 0.0, %v1011
      %v1013 = vpop.f32.mrb[0].mxu0
      %v1014 = vadd.f32 0.0, %v1013
      %1015 = vmatprep.mubr.bf16.mxu0 0
      %1016 = vmatmul.mubr.bf16.gmra.mrb[0].mxu0 %v627
      %v1017 = vpop.f32.mrb[0].mxu0
      %v1018 = vadd.f32 0.0, %v1017
      %v1019 = vpop.f32.mrb[0].mxu0
      %v1020 = vadd.f32 0.0, %v1019
      %v1021 = vpop.f32.mrb[0].mxu0
      %v1022 = vadd.f32 0.0, %v1021
      %v1023 = vpop.f32.mrb[0].mxu0
      %v1024 = vadd.f32 0.0, %v1023
      %1025 = vdwg.mxu0
      %v1026 = vadd.f32 %v750, %v968
      %v1027 = vadd.f32 %v752, %v970
      %v1028 = vadd.f32 %v754, %v972
      %v1029 = vadd.f32 %v756, %v974
      %v1030 = vadd.f32 %v760, %v978
      %v1031 = vadd.f32 %v762, %v980
      %v1032 = vadd.f32 %v764, %v982
      %v1033 = vadd.f32 %v766, %v984
      %v1034 = vadd.f32 %v770, %v988
      %v1035 = vadd.f32 %v772, %v990
      %v1036 = vadd.f32 %v774, %v992
      %v1037 = vadd.f32 %v776, %v994
      %v1038 = vadd.f32 %v780, %v998
      %v1039 = vadd.f32 %v782, %v1000
      %v1040 = vadd.f32 %v784, %v1002
      %v1041 = vadd.f32 %v786, %v1004
      %v1042 = vadd.f32 %v790, %v1008
      %v1043 = vadd.f32 %v792, %v1010
      %v1044 = vadd.f32 %v794, %v1012
      %v1045 = vadd.f32 %v796, %v1014
      %v1046 = vadd.f32 %v800, %v1018
      %v1047 = vadd.f32 %v802, %v1020
      %v1048 = vadd.f32 %v804, %v1022
      %v1049 = vadd.f32 %v806, %v1024
      %s1050 = scalar_lea.vmem %s1, 384
      %v1051 = vld [vmem:[%s1050] sm:$0xff]
      %v1052 = vld [vmem:[%s1050 + $0x8] sm:$0xff]
      %v1053 = vld [vmem:[%s1050 + $0x10] sm:$0xff]
      %v1054 = vld [vmem:[%s1050 + $0x18] sm:$0xff]
      %v1055 = vld [vmem:[%s1050 + $0x20] sm:$0xff]
      %v1056 = vld [vmem:[%s1050 + $0x28] sm:$0xff]
      %v1057 = vld [vmem:[%s1050 + $0x30] sm:$0xff]
      %v1058 = vld [vmem:[%s1050 + $0x38] sm:$0xff]
      %v1059 = vld [vmem:[%s1050 + $0x40] sm:$0xff]
      %v1060 = vld [vmem:[%s1050 + $0x48] sm:$0xff]
      %v1061 = vld [vmem:[%s1050 + $0x50] sm:$0xff]
      %v1062 = vld [vmem:[%s1050 + $0x58] sm:$0xff]
      %v1063 = vld [vmem:[%s1050 + $0x60] sm:$0xff]
      %v1064 = vld [vmem:[%s1050 + $0x68] sm:$0xff]
      %v1065 = vld [vmem:[%s1050 + $0x70] sm:$0xff]
      %v1066 = vld [vmem:[%s1050 + $0x78] sm:$0xff]
      %v1069 = vunpack.c.l.b16 %v201
      %v1070 = vunpack.c.l.b16 %v202
      %v1071 = vpack.c.b16 %v1070, %v1069
      %v1089 = vunpack.c.l.b16 %v1051
      %v1090 = vunpack.c.h.b16 %v1051
      %v1091 = vunpack.c.l.b16 %v1052
      %v1092 = vunpack.c.h.b16 %v1052
      %v1093 = vunpack.c.l.b16 %v1053
      %v1094 = vunpack.c.h.b16 %v1053
      %v1095 = vunpack.c.l.b16 %v1054
      %v1096 = vunpack.c.h.b16 %v1054
      %v1097 = vunpack.c.l.b16 %v1055
      %v1098 = vunpack.c.h.b16 %v1055
      %v1099 = vunpack.c.l.b16 %v1056
      %v1100 = vunpack.c.h.b16 %v1056
      %v1101 = vunpack.c.l.b16 %v1057
      %v1102 = vunpack.c.h.b16 %v1057
      %v1103 = vunpack.c.l.b16 %v1058
      %v1104 = vunpack.c.h.b16 %v1058
      %v1105 = vunpack.c.l.b16 %v1059
      %v1106 = vunpack.c.h.b16 %v1059
      %v1107 = vunpack.c.l.b16 %v1060
      %v1108 = vunpack.c.h.b16 %v1060
      %v1109 = vunpack.c.l.b16 %v1061
      %v1110 = vunpack.c.h.b16 %v1061
      %v1111 = vunpack.c.l.b16 %v1062
      %v1112 = vunpack.c.h.b16 %v1062
      %v1113 = vunpack.c.l.b16 %v1063
      %v1114 = vunpack.c.h.b16 %v1063
      %v1115 = vunpack.c.l.b16 %v1064
      %v1116 = vunpack.c.h.b16 %v1064
      %v1117 = vunpack.c.l.b16 %v1065
      %v1118 = vunpack.c.h.b16 %v1065
      %v1119 = vunpack.c.l.b16 %v1066
      %v1120 = vunpack.c.h.b16 %v1066
      %v1121 = vpack.c.b16 %v1091, %v1089
      %v1122 = vpack.c.b16 %v1092, %v1090
      %v1123 = vpack.c.b16 %v1095, %v1093
      %v1124 = vpack.c.b16 %v1096, %v1094
      %v1125 = vpack.c.b16 %v1099, %v1097
      %v1126 = vpack.c.b16 %v1100, %v1098
      %v1127 = vpack.c.b16 %v1103, %v1101
      %v1128 = vpack.c.b16 %v1104, %v1102
      %v1129 = vpack.c.b16 %v1107, %v1105
      %v1130 = vpack.c.b16 %v1108, %v1106
      %v1131 = vpack.c.b16 %v1111, %v1109
      %v1132 = vpack.c.b16 %v1112, %v1110
      %v1133 = vpack.c.b16 %v1115, %v1113
      %v1134 = vpack.c.b16 %v1116, %v1114
      %v1135 = vpack.c.b16 %v1119, %v1117
      %v1136 = vpack.c.b16 %v1120, %v1118
      %1153 = vmatprep.subr.bf16.mxu0 %v1122
      %1154 = vmatpush1.bf16.msra.mxu0 %v1121
      %1155 = vmatprep.subr.bf16.mxu0 %v1124
      %1156 = vmatpush1.bf16.msra.mxu0 %v1123
      %1157 = vmatprep.subr.bf16.mxu0 %v1126
      %1158 = vmatpush1.bf16.msra.mxu0 %v1125
      %1159 = vmatprep.subr.bf16.mxu0 %v1128
      %1160 = vmatpush1.bf16.msra.mxu0 %v1127
      %1161 = vmatprep.subr.bf16.mxu0 %v1130
      %1162 = vmatpush1.bf16.msra.mxu0 %v1129
      %1163 = vmatprep.subr.bf16.mxu0 %v1132
      %1164 = vmatpush1.bf16.msra.mxu0 %v1131
      %1165 = vmatprep.subr.bf16.mxu0 %v1134
      %1166 = vmatpush1.bf16.msra.mxu0 %v1133
      %1167 = vmatprep.subr.bf16.mxu0 %v1136
      %1168 = vmatpush1.bf16.msra.mxu0 %v1135
      %1169 = vmatprep.subr.bf16.mxu0 0
      %1170 = vmatpush1.bf16.msra.mxu0 0
      %1171 = vmatprep.subr.bf16.mxu0 0
      %1172 = vmatpush1.bf16.msra.mxu0 0
      %1173 = vmatprep.subr.bf16.mxu0 0
      %1174 = vmatpush1.bf16.msra.mxu0 0
      %1175 = vmatprep.subr.bf16.mxu0 0
      %1176 = vmatpush1.bf16.msra.mxu0 0
      %1177 = vmatprep.subr.bf16.mxu0 0
      %1178 = vmatpush1.bf16.msra.mxu0 0
      %1179 = vmatprep.subr.bf16.mxu0 0
      %1180 = vmatpush1.bf16.msra.mxu0 0
      %1181 = vmatprep.subr.bf16.mxu0 0
      %1182 = vmatpush1.bf16.msra.mxu0 0
      %1183 = vmatprep.subr.bf16.mxu0 0
      %1184 = vmatpush1.bf16.msra.mxu0 0
      %1185 = vmatprep.mubr.bf16.mxu0 0
      %1186 = vmatmul.mubr.bf16.gmra.mrb[0].mxu0 %v1071
      %v1187 = vpop.f32.mrb[0].mxu0
      %v1188 = vadd.f32 0.0, %v1187
      %v1189 = vpop.f32.mrb[0].mxu0
      %v1190 = vadd.f32 0.0, %v1189
      %v1191 = vpop.f32.mrb[0].mxu0
      %v1192 = vadd.f32 0.0, %v1191
      %v1193 = vpop.f32.mrb[0].mxu0
      %v1194 = vadd.f32 0.0, %v1193
      %1195 = vmatprep.mubr.bf16.mxu0 0
      %1196 = vmatmul.mubr.bf16.gmra.mrb[0].mxu0 %v426
      %v1197 = vpop.f32.mrb[0].mxu0
      %v1198 = vadd.f32 0.0, %v1197
      %v1199 = vpop.f32.mrb[0].mxu0
      %v1200 = vadd.f32 0.0, %v1199
      %v1201 = vpop.f32.mrb[0].mxu0
      %v1202 = vadd.f32 0.0, %v1201
      %v1203 = vpop.f32.mrb[0].mxu0
      %v1204 = vadd.f32 0.0, %v1203
      %1205 = vmatprep.mubr.bf16.mxu0 0
      %1206 = vmatmul.mubr.bf16.gmra.mrb[0].mxu0 %v427
      %v1207 = vpop.f32.mrb[0].mxu0
      %v1208 = vadd.f32 0.0, %v1207
      %v1209 = vpop.f32.mrb[0].mxu0
      %v1210 = vadd.f32 0.0, %v1209
      %v1211 = vpop.f32.mrb[0].mxu0
      %v1212 = vadd.f32 0.0, %v1211
      %v1213 = vpop.f32.mrb[0].mxu0
      %v1214 = vadd.f32 0.0, %v1213
      %1215 = vmatprep.mubr.bf16.mxu0 0
      %1216 = vmatmul.mubr.bf16.gmra.mrb[0].mxu0 %v428
      %v1217 = vpop.f32.mrb[0].mxu0
      %v1218 = vadd.f32 0.0, %v1217
      %v1219 = vpop.f32.mrb[0].mxu0
      %v1220 = vadd.f32 0.0, %v1219
      %v1221 = vpop.f32.mrb[0].mxu0
      %v1222 = vadd.f32 0.0, %v1221
      %v1223 = vpop.f32.mrb[0].mxu0
      %v1224 = vadd.f32 0.0, %v1223
      %1225 = vmatprep.mubr.bf16.mxu0 0
      %1226 = vmatmul.mubr.bf16.gmra.mrb[0].mxu0 %v429
      %v1227 = vpop.f32.mrb[0].mxu0
      %v1228 = vadd.f32 0.0, %v1227
      %v1229 = vpop.f32.mrb[0].mxu0
      %v1230 = vadd.f32 0.0, %v1229
      %v1231 = vpop.f32.mrb[0].mxu0
      %v1232 = vadd.f32 0.0, %v1231
      %v1233 = vpop.f32.mrb[0].mxu0
      %v1234 = vadd.f32 0.0, %v1233
      %1235 = vmatprep.mubr.bf16.mxu0 0
      %1236 = vmatmul.mubr.bf16.gmra.mrb[0].mxu0 %v430
      %v1237 = vpop.f32.mrb[0].mxu0
      %v1238 = vadd.f32 0.0, %v1237
      %v1239 = vpop.f32.mrb[0].mxu0
      %v1240 = vadd.f32 0.0, %v1239
      %v1241 = vpop.f32.mrb[0].mxu0
      %v1242 = vadd.f32 0.0, %v1241
      %v1243 = vpop.f32.mrb[0].mxu0
      %v1244 = vadd.f32 0.0, %v1243
      %1245 = vdwg.mxu0
      %v1246 = vadd.f32 %v1026, %v1188
      %v1247 = vadd.f32 %v1027, %v1190
      %v1248 = vadd.f32 %v1028, %v1192
      %v1249 = vadd.f32 %v1029, %v1194
      %v1250 = vadd.f32 %v1030, %v1198
      %v1251 = vadd.f32 %v1031, %v1200
      %v1252 = vadd.f32 %v1032, %v1202
      %v1253 = vadd.f32 %v1033, %v1204
      %v1254 = vadd.f32 %v1034, %v1208
      %v1255 = vadd.f32 %v1035, %v1210
      %v1256 = vadd.f32 %v1036, %v1212
      %v1257 = vadd.f32 %v1037, %v1214
      %v1258 = vadd.f32 %v1038, %v1218
      %v1259 = vadd.f32 %v1039, %v1220
      %v1260 = vadd.f32 %v1040, %v1222
      %v1261 = vadd.f32 %v1041, %v1224
      %v1262 = vadd.f32 %v1042, %v1228
      %v1263 = vadd.f32 %v1043, %v1230
      %v1264 = vadd.f32 %v1044, %v1232
      %v1265 = vadd.f32 %v1045, %v1234
      %v1266 = vadd.f32 %v1046, %v1238
      %v1267 = vadd.f32 %v1047, %v1240
      %v1268 = vadd.f32 %v1048, %v1242
      %v1269 = vadd.f32 %v1049, %v1244
      %v1270 = vld [vmem:[%s2] sm:$0x3]
      %v1272 = vlaneseq
      %v1273 = vshrl.u32 %v1272, 7
      %v1274 = vsub.s32 0, %v1273
      %v1275 = vrot.slane %v1270, %v1274
      %v1276 = vlaneseq
      %v1277 = vshrl.u32 %v1276, 7
      %v1278 = vsub.s32 1, %v1277
      %v1279 = vrot.slane %v1270, %v1278
      %v1282 = vadd.f32 %v1246, %v1275
      %v1283 = vadd.f32 %v1247, %v1279
      %v1284 = vadd.f32 %v1248, %v1275
      %v1285 = vadd.f32 %v1249, %v1279
      %v1286 = vadd.f32 %v1250, %v1275
      %v1287 = vadd.f32 %v1251, %v1279
      %v1288 = vadd.f32 %v1252, %v1275
      %v1289 = vadd.f32 %v1253, %v1279
      %v1290 = vadd.f32 %v1254, %v1275
      %v1291 = vadd.f32 %v1255, %v1279
      %v1292 = vadd.f32 %v1256, %v1275
      %v1293 = vadd.f32 %v1257, %v1279
      %v1294 = vadd.f32 %v1258, %v1275
      %v1295 = vadd.f32 %v1259, %v1279
      %v1296 = vadd.f32 %v1260, %v1275
      %v1297 = vadd.f32 %v1261, %v1279
      %v1298 = vadd.f32 %v1262, %v1275
      %v1299 = vadd.f32 %v1263, %v1279
      %v1300 = vadd.f32 %v1264, %v1275
      %v1301 = vadd.f32 %v1265, %v1279
      %v1302 = vadd.f32 %v1266, %v1275
      %v1303 = vadd.f32 %v1267, %v1279
      %v1304 = vadd.f32 %v1268, %v1275
      %v1305 = vadd.f32 %v1269, %v1279
      %v1306 = vmax.f32 %v1282, 0.0
      %v1307 = vmax.f32 %v1283, 0.0
      %v1308 = vmax.f32 %v1284, 0.0
      %v1309 = vmax.f32 %v1285, 0.0
      %v1310 = vmax.f32 %v1286, 0.0
      %v1311 = vmax.f32 %v1287, 0.0
      %v1312 = vmax.f32 %v1288, 0.0
      %v1313 = vmax.f32 %v1289, 0.0
      %v1314 = vmax.f32 %v1290, 0.0
      %v1315 = vmax.f32 %v1291, 0.0
      %v1316 = vmax.f32 %v1292, 0.0
      %v1317 = vmax.f32 %v1293, 0.0
      %v1318 = vmax.f32 %v1294, 0.0
      %v1319 = vmax.f32 %v1295, 0.0
      %v1320 = vmax.f32 %v1296, 0.0
      %v1321 = vmax.f32 %v1297, 0.0
      %v1322 = vmax.f32 %v1298, 0.0
      %v1323 = vmax.f32 %v1299, 0.0
      %v1324 = vmax.f32 %v1300, 0.0
      %v1325 = vmax.f32 %v1301, 0.0
      %v1326 = vmax.f32 %v1302, 0.0
      %v1327 = vmax.f32 %v1303, 0.0
      %v1328 = vmax.f32 %v1304, 0.0
      %v1329 = vmax.f32 %v1305, 0.0
      %v1330 = vpack.c.bf16 %v1308, %v1306
      %v1331 = vpack.c.bf16 %v1309, %v1307
      %v1332 = vpack.c.bf16 %v1312, %v1310
      %v1333 = vpack.c.bf16 %v1313, %v1311
      %v1334 = vpack.c.bf16 %v1316, %v1314
      %v1335 = vpack.c.bf16 %v1317, %v1315
      %v1336 = vpack.c.bf16 %v1320, %v1318
      %v1337 = vpack.c.bf16 %v1321, %v1319
      %v1338 = vpack.c.bf16 %v1324, %v1322
      %v1339 = vpack.c.bf16 %v1325, %v1323
      %v1340 = vpack.c.bf16 %v1328, %v1326
      %v1341 = vpack.c.bf16 %v1329, %v1327
      %v1354 = vunpack.c.l.b16 %v1330
      %v1355 = vunpack.c.l.b16 %v1331
      %v1356 = vunpack.c.h.b16 %v1330
      %v1357 = vunpack.c.h.b16 %v1331
      %v1358 = vunpack.c.l.b16 %v1332
      %v1359 = vunpack.c.l.b16 %v1333
      %v1360 = vunpack.c.h.b16 %v1332
      %v1361 = vunpack.c.h.b16 %v1333
      %v1362 = vunpack.c.l.b16 %v1334
      %v1363 = vunpack.c.l.b16 %v1335
      %v1364 = vunpack.c.h.b16 %v1334
      %v1365 = vunpack.c.h.b16 %v1335
      %v1366 = vunpack.c.l.b16 %v1336
      %v1367 = vunpack.c.l.b16 %v1337
      %v1368 = vunpack.c.h.b16 %v1336
      %v1369 = vunpack.c.h.b16 %v1337
      %v1370 = vunpack.c.l.b16 %v1338
      %v1371 = vunpack.c.l.b16 %v1339
      %v1372 = vunpack.c.h.b16 %v1338
      %v1373 = vunpack.c.h.b16 %v1339
      %v1374 = vunpack.c.l.b16 %v1340
      %v1375 = vunpack.c.l.b16 %v1341
      %v1376 = vunpack.c.h.b16 %v1340
      %v1377 = vunpack.c.h.b16 %v1341
      %v1378 = vpack.c.b16 %v1355, %v1354
      %v1379 = vpack.c.b16 %v1357, %v1356
      %v1380 = vpack.c.b16 %v1359, %v1358
      %v1381 = vpack.c.b16 %v1361, %v1360
      %v1382 = vpack.c.b16 %v1363, %v1362
      %v1383 = vpack.c.b16 %v1365, %v1364
      %v1384 = vpack.c.b16 %v1367, %v1366
      %v1385 = vpack.c.b16 %v1369, %v1368
      %v1386 = vpack.c.b16 %v1371, %v1370
      %v1387 = vpack.c.b16 %v1373, %v1372
      %v1388 = vpack.c.b16 %v1375, %v1374
      %v1389 = vpack.c.b16 %v1377, %v1376
      %1402 = vst [vmem:[%s194] sm:$0xff] %v1378
      %1403 = vst [vmem:[%s194 + $0x8] sm:$0xff] %v1379
      %1404 = vst [vmem:[%s194 + $0x10] sm:$0xff] %v1380
      %1405 = vst [vmem:[%s194 + $0x18] sm:$0xff] %v1381
      %1406 = vst [vmem:[%s194 + $0x20] sm:$0xff] %v1382
      %1407 = vst [vmem:[%s194 + $0x28] sm:$0xff] %v1383
      %1408 = vst [vmem:[%s194 + $0x30] sm:$0xff] %v1384
      %1409 = vst [vmem:[%s194 + $0x38] sm:$0xff] %v1385
      %1410 = vst [vmem:[%s194 + $0x40] sm:$0xff] %v1386
      %1411 = vst [vmem:[%s194 + $0x48] sm:$0xff] %v1387
      %1412 = vst [vmem:[%s194 + $0x50] sm:$0xff] %v1388
      %1413 = vst [vmem:[%s194 + $0x58] sm:$0xff] %v1389
      %s1414 = smul.u32 6, %s19
      %p1415 = scmp.lt.s32.totalorder %s18, 1
      %s1416 = scalar_select %p1415, %s18, 1
      %p1417 = scmp.lt.s32.totalorder %s1414, 11
      %s1418 = scalar_select %p1417, %s1414, 11
      %s1419 = smul.addr %s1418, 4
      %s1420 = smul.addr %s1416, 48
      %s1421 = sadd.s32 %s1419, %s1420
      %s1422 = smul.addr %s1421, 4
      %s1423 = scalar_lea.vmem %s3, %s1422
      // Predicated region
      $region33: #{conv_decoder_forward.7} parent=31 // pred_check
        %p1424 = pneg %p114
      $region34: #{conv_decoder_forward.7} parent=31 // pred_check_branch
        %1426 = sbr.rel (%p1424) target = $region36
      $region35: #{conv_decoder_forward.7} parent=31 // pred_region
        %s1427 = smul.u32 6, %s19
      $region36: #{conv_decoder_forward.7} parent=31 // pred_fallthru
        _
    $region32: #{conv_decoder_forward.7} parent=5 // pred_fallthru
      _
    %p1428 = scmp.le.s32.totalorder 2, %s9
    // Predicated region
    $region37: #{conv_decoder_forward.7} parent=5 // pred_check
      %p1429 = pneg %p1428
    $region38: #{conv_decoder_forward.7} parent=5 // pred_check_branch
      %1431 = sbr.rel (%p1429) target = $region40
    $region39: #{conv_decoder_forward.7} parent=5 // pred_region
      %s1432 = ssub.s32 %s9, 2
      // Predicated region
      $region41: #{conv_decoder_forward.7} parent=39 // pred_check
        %p1433 = pneg %p120
      $region42: #{conv_decoder_forward.7} parent=39 // pred_check_branch
        %1435 = sbr.rel (%p1433) target = $region44
      $region43: #{conv_decoder_forward.7} parent=39 // pred_region
        %s1436 = smul.u32 6, %s21
        %p1437 = scmp.lt.s32.totalorder %s20, 1
        %s1438 = scalar_select %p1437, %s20, 1
        %p1439 = scmp.lt.s32.totalorder %s1436, 11
        %s1440 = scalar_select %p1439, %s1436, 11
        %s1441 = smul.addr %s1440, 4
        %s1442 = smul.addr %s1438, 48
        %s1443 = sadd.s32 %s1441, %s1442
        %s1444 = smul.addr %s1443, 4
        %s1445 = scalar_lea.vmem %s3, %s1444
      $region44: #{conv_decoder_forward.7} parent=39 // pred_fallthru
        _
    $region40: #{conv_decoder_forward.7} parent=5 // pred_fallthru
      _
  $region6: #{conv_decoder_forward.7} parent=0 // loop_footer
    %s13 = sadd.s32 1, %s9
  $region7: #{conv_decoder_forward.7} parent=0 // loop_footer_branch
    %8 = sbr.rel target = $region3
  $region8: #{conv_decoder_forward.7} parent=0 // loop_exit
    _

// kernel: conv_decoder_forward.6
$region0: #{conv_decoder_forward.6}
  #allocation0 [shape = 'u32[]', space=smem, size = 0x4, offset = 0x4, fixed_abs, tag = 'smem constant byte address 0x4 - core index']
  #allocation1 [shape = 'u32[144,128]{1,0:T(1,128)}', space=vmem, size = 0x12000, scoped, tag = 'internal scratch']
  %s0 = inlined_call_operand.vmem [shape: bf16[2,7,9,256], index: 0, kind: input, shape index: {}]
  %s1 = inlined_call_operand.hbm [shape: bf16[4,256,512], index: 1, kind: input, shape index: {}]
  %s2 = inlined_call_operand.hbm [shape: f32[1,512], index: 2, kind: input, shape index: {}]
  %s3 = inlined_call_operand.vmem [shape: bf16[2,6,8,512], index: 3, kind: output, shape index: {}]
  %s4 = sld [smem:[#allocation0]]
  $region53: #{conv_decoder_forward.6} parent=0
    _
  %s6 = ssub.s32 1, %s4
  %s7 = scalar_select 0, %s6, %s4
  $region1: #{conv_decoder_forward.6} parent=0
    #allocation2 [shape = 'u8[1048576]{0}', space=vmem, size = 0x100000, scoped, tag = 'input window, operand 1, single buffered']
    #allocation3 [shape = 's32[2]{0}', space=sflag, size = 0x8, scoped, tag = 'scoped memory for conv_decoder_forward.6']
    #allocation4 [shape = 'u8[2048]{0}', space=vmem, size = 0x800, scoped, tag = 'input window, operand 2, single buffered']
    #allocation5 [shape = 's32[1]{0}', space=sflag, size = 0x4, scoped, tag = 'scoped memory for conv_decoder_forward.6']
    %8 = vsyncpa [#allocation3], 0
    %9 = vsyncpa [#allocation5], 0
    loop: start=0, step=1, limit=6
    $region2: #{conv_decoder_forward.6} parent=1 // loop_pre_header
      _
    $region3: #{conv_decoder_forward.6} parent=1 // loop_header
      %s11 = sphi 0, %s15
      %p12 = scmp.ge.s32.totalorder %s11, 6
      %s18 = sphi 0, %s30
      %s19 = sphi 0, %s26
      %s20 = sphi 0, %s18
      %s21 = sphi 0, %s19
      %s22 = sphi 0, %s20
      %s23 = sphi 0, %s21
      %s33 = sphi 0, %s35
      %s36 = sphi 0, %s33
      %s37 = sphi 0, %s36
      %s53 = sphi 0, %s37
      %s57 = sphi 0, %s57
      %s59 = sphi 0, %s57
      %s60 = sphi 0, %s59
      %s74 = sphi 0, %s60
      %s78 = sphi 0, %s78
      %s80 = sphi 0, %s78
      %s81 = sphi 0, %s80
      %s95 = sphi 0, %s81
      %s103 = sphi 0, %s105
      %s106 = sphi 0, %s103
      %s107 = sphi 0, %s106
      %s123 = sphi 0, %s107
    $region4: #{conv_decoder_forward.6} parent=1 // loop_header_branch
      %14 = sbr.rel (%p12) target = $region8
    $region5: #{conv_decoder_forward.6} parent=1 // loop_body
      %s16 = ssub.s32 %s11, 1
      %s17 = ssub.s32 %s11, 2
      %s24 = sadd.s32 1, %s19
      %p25 = scmp.ge.s32.totalorder %s24, 2
      %s26 = scalar_select %p25, 0, %s24
      %s27 = sadd.s32 1, %s18
      %s28 = scalar_select %p25, %s27, %s18
      %p29 = scmp.ge.s32.totalorder %s28, 2
      %s30 = scalar_select %p29, 0, %s28
      %s31 = ssub.s32 %s18, %s30
      %p32 = scmp.eq.s32.totalorder %s31, 0
      %s34 = sadd.s32 %s33, 1
      %s35 = scalar_select %p32, %s33, %s34
      %p38 = pneg %p32
      %p39 = scmp.eq.s32.totalorder %s11, 3
      %p40 = por %p38, %p39
      %p41 = scmp.ne.s32.totalorder %s33, %s36
      %p42 = scmp.eq.s32.totalorder %s11, 0
      %p43 = por %p41, %p42
      %p44 = scmp.ne.s32.totalorder %s33, %s36
      %p45 = scmp.eq.s32.totalorder %s16, 3
      %p46 = por %p44, %p45
      %p47 = scmp.ne.s32.totalorder %s36, %s37
      %p48 = scmp.eq.s32.totalorder %s16, 0
      %p49 = por %p47, %p48
      %p50 = scmp.ne.s32.totalorder %s36, %s37
      %p51 = scmp.eq.s32.totalorder %s17, 3
      %p52 = por %p50, %p51
      %p54 = scmp.ne.s32.totalorder %s37, %s53
      %p55 = scmp.eq.s32.totalorder %s17, 0
      %p56 = por %p54, %p55
      %s58 = sadd.s32 %s57, 1
      %p61 = scmp.eq.s32.totalorder %s11, 3
      %p62 = scmp.ne.s32.totalorder %s57, %s59
      %p63 = scmp.eq.s32.totalorder %s11, 0
      %p64 = por %p62, %p63
      %p65 = scmp.ne.s32.totalorder %s57, %s59
      %p66 = scmp.eq.s32.totalorder %s16, 3
      %p67 = por %p65, %p66
      %p68 = scmp.ne.s32.totalorder %s59, %s60
      %p69 = scmp.eq.s32.totalorder %s16, 0
      %p70 = por %p68, %p69
      %p71 = scmp.ne.s32.totalorder %s59, %s60
      %p72 = scmp.eq.s32.totalorder %s17, 3
      %p73 = por %p71, %p72
      %p75 = scmp.ne.s32.totalorder %s60, %s74
      %p76 = scmp.eq.s32.totalorder %s17, 0
      %p77 = por %p75, %p76
      %s79 = sadd.s32 %s78, 1
      %p82 = scmp.eq.s32.totalorder %s11, 3
      %p83 = scmp.ne.s32.totalorder %s78, %s80
      %p84 = scmp.eq.s32.totalorder %s11, 0
      %p85 = por %p83, %p84
      %p86 = scmp.ne.s32.totalorder %s78, %s80
      %p87 = scmp.eq.s32.totalorder %s16, 3
      %p88 = por %p86, %p87
      %p89 = scmp.ne.s32.totalorder %s80, %s81
      %p90 = scmp.eq.s32.totalorder %s16, 0
      %p91 = por %p89, %p90
      %p92 = scmp.ne.s32.totalorder %s80, %s81
      %p93 = scmp.eq.s32.totalorder %s17, 3
      %p94 = por %p92, %p93
      %p96 = scmp.ne.s32.totalorder %s81, %s95
      %p97 = scmp.eq.s32.totalorder %s17, 0
      %p98 = por %p96, %p97
      %s99 = ssub.s32 %s18, %s30
      %s100 = ssub.s32 %s19, %s26
      %s101 = sor.u32 %s99, %s100
      %p102 = scmp.eq.s32.totalorder %s101, 0
      %s104 = sadd.s32 %s103, 1
      %s105 = scalar_select %p102, %s103, %s104
      %p108 = pneg %p102
      %p109 = scmp.eq.s32.totalorder %s11, 3
      %p110 = por %p108, %p109
      %p111 = scmp.ne.s32.totalorder %s103, %s106
      %p112 = scmp.eq.s32.totalorder %s11, 0
      %p113 = por %p111, %p112
      %p114 = scmp.ne.s32.totalorder %s103, %s106
      %p115 = scmp.eq.s32.totalorder %s16, 3
      %p116 = por %p114, %p115
      %p117 = scmp.ne.s32.totalorder %s106, %s107
      %p118 = scmp.eq.s32.totalorder %s16, 0
      %p119 = por %p117, %p118
      %p120 = scmp.ne.s32.totalorder %s106, %s107
      %p121 = scmp.eq.s32.totalorder %s17, 3
      %p122 = por %p120, %p121
      %p124 = scmp.ne.s32.totalorder %s107, %s123
      %p125 = scmp.eq.s32.totalorder %s17, 0
      %p126 = por %p124, %p125
      %p127 = scmp.le.s32.totalorder 1, %s11
      %p128 = scmp.lt.s32.totalorder %s11, 5
      %p129 = pnand %p127, %p128
      %p130 = pneg %p129
      // Predicated region
      $region9: #{conv_decoder_forward.6} parent=5 // pred_check
        _
      $region10: #{conv_decoder_forward.6} parent=5 // pred_check_branch
        %132 = sbr.rel (%p129) target = $region12
      $region11: #{conv_decoder_forward.6} parent=5 // pred_region
        %s133 = ssub.s32 %s11, 1
        // Predicated region
        $region13: #{conv_decoder_forward.6} parent=11 // pred_check
          %p134 = pneg %p70
        $region14: #{conv_decoder_forward.6} parent=11 // pred_check_branch
          %136 = sbr.rel (%p134) target = $region16
        $region15: #{conv_decoder_forward.6} parent=11 // pred_region
          %s138 = ssub.s32 32768, 32768
          %139 = vsyncadd [#allocation3], %s138
          %s140 = sshll.u32 [#allocation2], 4
          %s141 = int_to_ptr.vmem [resolvable:$true] %s140
          %146 = dma.hbm_to_vmem [thread:$0]  %s1, 32768, %s141, [#allocation3], 256, 256, 16
        $region16: #{conv_decoder_forward.6} parent=11 // pred_fallthru
          _
        // Predicated region
        $region17: #{conv_decoder_forward.6} parent=11 // pred_check
          %p147 = pneg %p91
        $region18: #{conv_decoder_forward.6} parent=11 // pred_check_branch
          %149 = sbr.rel (%p147) target = $region20
        $region19: #{conv_decoder_forward.6} parent=11 // pred_region
          %s151 = ssub.s32 64, 64
          %152 = vsyncadd [#allocation5], %s151
          %s154 = sshll.u32 [#allocation4], 4
          %s155 = int_to_ptr.vmem [resolvable:$true] %s154
          %157 = dma.hbm_to_vmem [thread:$0]  %s2, 64, %s155, [#allocation5]
        $region20: #{conv_decoder_forward.6} parent=11 // pred_fallthru
          _
      $region12: #{conv_decoder_forward.6} parent=5 // pred_fallthru
        _
      %p158 = scmp.lt.s32.totalorder %s11, 4
      // Predicated region
      $region21: #{conv_decoder_forward.6} parent=5 // pred_check
        %p159 = pneg %p158
      $region22: #{conv_decoder_forward.6} parent=5 // pred_check_branch
        %161 = sbr.rel (%p159) target = $region24
      $region23: #{conv_decoder_forward.6} parent=5 // pred_region
        // Predicated region
        $region25: #{conv_decoder_forward.6} parent=23 // pred_check
          %p162 = pneg %p43
        $region26: #{conv_decoder_forward.6} parent=23 // pred_check_branch
          %164 = sbr.rel (%p162) target = $region28
        $region27: #{conv_decoder_forward.6} parent=23 // pred_region
          %p165 = scmp.lt.s32.totalorder %s18, 1
          %s166 = scalar_select %p165, %s18, 1
          %s167 = smul.addr %s166, 28
          %s168 = smul.addr %s167, 4
          %s169 = scalar_lea.vmem %s0, %s168
        $region28: #{conv_decoder_forward.6} parent=23 // pred_fallthru
          _
      $region24: #{conv_decoder_forward.6} parent=5 // pred_fallthru
        _
      %p170 = scmp.le.s32.totalorder 1, %s11
      %p171 = scmp.lt.s32.totalorder %s11, 5
      %p172 = pnand %p170, %p171
      %p173 = pneg %p172
      // Predicated region
      $region29: #{conv_decoder_forward.6} parent=5 // pred_check
        _
      $region30: #{conv_decoder_forward.6} parent=5 // pred_check_branch
        %175 = sbr.rel (%p172) target = $region32
      $region31: #{conv_decoder_forward.6} parent=5 // pred_region
        %s176 = ssub.s32 %s11, 1
        // Predicated region
        $region33: #{conv_decoder_forward.6} parent=31 // pred_check
          %p177 = pneg %p70
        $region34: #{conv_decoder_forward.6} parent=31 // pred_check_branch
          %179 = sbr.rel (%p177) target = $region36
        $region35: #{conv_decoder_forward.6} parent=31 // pred_region
          %180 = dma.done [#allocation3], 32768
        $region36: #{conv_decoder_forward.6} parent=31 // pred_fallthru
          _
        // Predicated region
        $region37: #{conv_decoder_forward.6} parent=31 // pred_check
          %p181 = pneg %p91
        $region38: #{conv_decoder_forward.6} parent=31 // pred_check_branch
          %183 = sbr.rel (%p181) target = $region40
        $region39: #{conv_decoder_forward.6} parent=31 // pred_region
          %184 = dma.done [#allocation5], 64
        $region40: #{conv_decoder_forward.6} parent=31 // pred_fallthru
          _
        %p185 = scmp.lt.s32.totalorder %s20, 1
        %s186 = scalar_select %p185, %s20, 1
        %s187 = smul.addr %s186, 28
        %s188 = smul.addr %s187, 4
        %s189 = scalar_lea.vmem %s0, %s188
        %p190 = pneg %p49
        %p191 = pneg %p46
        %p192 = pneg %p70
        %p193 = pneg %p67
        %p194 = pneg %p91
        %p195 = pneg %p88
        %p196 = pneg %p119
        %p197 = pneg %p116
        %s198 = smul.u32 3, %s21
        %p199 = scmp.lt.s32.totalorder %s20, 1
        %s200 = scalar_select %p199, %s20, 1
        %p201 = scmp.lt.s32.totalorder %s198, 5
        %s202 = scalar_select %p201, %s198, 5
        %s203 = smul.addr %s202, 4
        %s204 = smul.addr %s200, 24
        %s205 = sadd.s32 %s203, %s204
        %s206 = smul.addr %s205, 4
        %s207 = scalar_lea.vmem %s3, %s206
        %p208 = scmp.lt.s32.totalorder %s20, 1
        %s209 = scalar_select %p208, %s20, 1
        %s210 = smul.addr %s209, 28
        %s211 = smul.addr %s210, 4
        %s212 = scalar_lea.vmem %s0, %s211
        %s213 = smul.u32 3, %s21
        %p214 = scmp.lt.s32.totalorder %s20, 1
        %s215 = scalar_select %p214, %s20, 1
        %p216 = scmp.lt.s32.totalorder %s213, 5
        %s217 = scalar_select %p216, %s213, 5
        %s218 = smul.addr %s217, 4
        %s219 = smul.addr %s215, 24
        %s220 = sadd.s32 %s218, %s219
        %s221 = smul.addr %s220, 4
        %s222 = scalar_lea.vmem %s3, %s221
        %s223 = smul.u32 3, %s21
        %s224 = smul.u32 %s21, 3
        %s225 = smul.u32 %s224, 4
        %s226 = smul.addr %s225, 4
        %s227 = scalar_lea.vmem %s212, %s226
        %v228 = vld [vmem:[%s227] sm:$0xff]
        %v229 = vld [vmem:[%s227 + $0x8] sm:$0x11]
        %v230 = vld [vmem:[%s227 + $0x10] sm:$0xff]
        %v231 = vld [vmem:[%s227 + $0x18] sm:$0x11]
        %v232 = vld [vmem:[%s227 + $0x20] sm:$0xff]
        %v233 = vld [vmem:[%s227 + $0x28] sm:$0x11]
        %v234 = vld [vmem:[%s227 + $0x30] sm:$0xff]
        %v235 = vld [vmem:[%s227 + $0x38] sm:$0x11]
        %vm236 = vsmask.f32 3328
        %vm237 = vsmask.f32 7440
        %vm238 = vmor %vm236, %vm237
        %v240 = vshrl.u32 %v230, 16
        %v242 = vrot.slane %v240, 4
        %v243 = vshll.u32 %v230, 16
        %v245 = vrot.slane %v243, 5
        %v246 = vor.u32 %v242, %v245
        %v247 = vrot.slane %v246, 4
        %v249 = vshll.u32 %v231, 16
        %v251 = vrot.slane %v249, 5
        %v252 = vsel %vm238, %v247, %v251
        %v254 = vshrl.u32 %v232, 16
        %v256 = vrot.slane %v254, 4
        %v257 = vshll.u32 %v232, 16
        %v259 = vrot.slane %v257, 5
        %v260 = vor.u32 %v256, %v259
        %v261 = vrot.slane %v260, 4
        %v263 = vshll.u32 %v233, 16
        %v265 = vrot.slane %v263, 5
        %v266 = vsel %vm238, %v261, %v265
        %v268 = vshrl.u32 %v234, 16
        %v270 = vrot.slane %v268, 4
        %v271 = vshll.u32 %v234, 16
        %v273 = vrot.slane %v271, 5
        %v274 = vor.u32 %v270, %v273
        %v275 = vrot.slane %v274, 4
        %v277 = vshll.u32 %v235, 16
        %v279 = vrot.slane %v277, 5
        %v280 = vsel %vm238, %v275, %v279
        %v281 = vld [vmem:[#allocation2] sm:$0xff]
        %v282 = vld [vmem:[#allocation2 + $0x8] sm:$0xff]
        %v283 = vld [vmem:[#allocation2 + $0x10] sm:$0xff]
        %v284 = vld [vmem:[#allocation2 + $0x18] sm:$0xff]
        %v285 = vld [vmem:[#allocation2 + $0x20] sm:$0xff]
        %v286 = vld [vmem:[#allocation2 + $0x28] sm:$0xff]
        %v287 = vld [vmem:[#allocation2 + $0x30] sm:$0xff]
        %v288 = vld [vmem:[#allocation2 + $0x38] sm:$0xff]
        %v289 = vld [vmem:[#allocation2 + $0x40] sm:$0xff]
        %v290 = vld [vmem:[#allocation2 + $0x48] sm:$0xff]
        %v291 = vld [vmem:[#allocation2 + $0x50] sm:$0xff]
        %v292 = vld [vmem:[#allocation2 + $0x58] sm:$0xff]
        %v293 = vld [vmem:[#allocation2 + $0x60] sm:$0xff]
        %v294 = vld [vmem:[#allocation2 + $0x68] sm:$0xff]
        %v295 = vld [vmem:[#allocation2 + $0x70] sm:$0xff]
        %v296 = vld [vmem:[#allocation2 + $0x78] sm:$0xff]
        %v297 = vld [vmem:[#allocation2 + $0x80] sm:$0xff]
        %v298 = vld [vmem:[#allocation2 + $0x88] sm:$0xff]
        %v299 = vld [vmem:[#allocation2 + $0x90] sm:$0xff]
        %v300 = vld [vmem:[#allocation2 + $0x98] sm:$0xff]
        %v301 = vld [vmem:[#allocation2 + $0xa0] sm:$0xff]
        %v302 = vld [vmem:[#allocation2 + $0xa8] sm:$0xff]
        %v303 = vld [vmem:[#allocation2 + $0xb0] sm:$0xff]
        %v304 = vld [vmem:[#allocation2 + $0xb8] sm:$0xff]
        %v305 = vld [vmem:[#allocation2 + $0xc0] sm:$0xff]
        %v306 = vld [vmem:[#allocation2 + $0xc8] sm:$0xff]
        %v307 = vld [vmem:[#allocation2 + $0xd0] sm:$0xff]
        %v308 = vld [vmem:[#allocation2 + $0xd8] sm:$0xff]
        %v309 = vld [vmem:[#allocation2 + $0xe0] sm:$0xff]
        %v310 = vld [vmem:[#allocation2 + $0xe8] sm:$0xff]
        %v311 = vld [vmem:[#allocation2 + $0xf0] sm:$0xff]
        %v312 = vld [vmem:[#allocation2 + $0xf8] sm:$0xff]
        %v313 = vld [vmem:[#allocation2 + $0x100] sm:$0xff]
        %v314 = vld [vmem:[#allocation2 + $0x108] sm:$0xff]
        %v315 = vld [vmem:[#allocation2 + $0x110] sm:$0xff]
        %v316 = vld [vmem:[#allocation2 + $0x118] sm:$0xff]
        %v317 = vld [vmem:[#allocation2 + $0x120] sm:$0xff]
        %v318 = vld [vmem:[#allocation2 + $0x128] sm:$0xff]
        %v319 = vld [vmem:[#allocation2 + $0x130] sm:$0xff]
        %v320 = vld [vmem:[#allocation2 + $0x138] sm:$0xff]
        %v321 = vld [vmem:[#allocation2 + $0x140] sm:$0xff]
        %v322 = vld [vmem:[#allocation2 + $0x148] sm:$0xff]
        %v323 = vld [vmem:[#allocation2 + $0x150] sm:$0xff]
        %v324 = vld [vmem:[#allocation2 + $0x158] sm:$0xff]
        %v325 = vld [vmem:[#allocation2 + $0x160] sm:$0xff]
        %v326 = vld [vmem:[#allocation2 + $0x168] sm:$0xff]
        %v327 = vld [vmem:[#allocation2 + $0x170] sm:$0xff]
        %v328 = vld [vmem:[#allocation2 + $0x178] sm:$0xff]
        %v329 = vld [vmem:[#allocation2 + $0x180] sm:$0xff]
        %v330 = vld [vmem:[#allocation2 + $0x188] sm:$0xff]
        %v331 = vld [vmem:[#allocation2 + $0x190] sm:$0xff]
        %v332 = vld [vmem:[#allocation2 + $0x198] sm:$0xff]
        %v333 = vld [vmem:[#allocation2 + $0x1a0] sm:$0xff]
        %v334 = vld [vmem:[#allocation2 + $0x1a8] sm:$0xff]
        %v335 = vld [vmem:[#allocation2 + $0x1b0] sm:$0xff]
        %v336 = vld [vmem:[#allocation2 + $0x1b8] sm:$0xff]
        %v337 = vld [vmem:[#allocation2 + $0x1c0] sm:$0xff]
        %v338 = vld [vmem:[#allocation2 + $0x1c8] sm:$0xff]
        %v339 = vld [vmem:[#allocation2 + $0x1d0] sm:$0xff]
        %v340 = vld [vmem:[#allocation2 + $0x1d8] sm:$0xff]
        %v341 = vld [vmem:[#allocation2 + $0x1e0] sm:$0xff]
        %v342 = vld [vmem:[#allocation2 + $0x1e8] sm:$0xff]
        %v343 = vld [vmem:[#allocation2 + $0x1f0] sm:$0xff]
        %v344 = vld [vmem:[#allocation2 + $0x1f8] sm:$0xff]
        %s345 = scalar_lea.vmem [#allocation2], 512
        %v346 = vld [vmem:[%s345] sm:$0xff]
        %v347 = vld [vmem:[%s345 + $0x8] sm:$0xff]
        %v348 = vld [vmem:[%s345 + $0x10] sm:$0xff]
        %v349 = vld [vmem:[%s345 + $0x18] sm:$0xff]
        %v350 = vld [vmem:[%s345 + $0x20] sm:$0xff]
        %v351 = vld [vmem:[%s345 + $0x28] sm:$0xff]
        %v352 = vld [vmem:[%s345 + $0x30] sm:$0xff]
        %v353 = vld [vmem:[%s345 + $0x38] sm:$0xff]
        %v354 = vld [vmem:[%s345 + $0x40] sm:$0xff]
        %v355 = vld [vmem:[%s345 + $0x48] sm:$0xff]
        %v356 = vld [vmem:[%s345 + $0x50] sm:$0xff]
        %v357 = vld [vmem:[%s345 + $0x58] sm:$0xff]
        %v358 = vld [vmem:[%s345 + $0x60] sm:$0xff]
        %v359 = vld [vmem:[%s345 + $0x68] sm:$0xff]
        %v360 = vld [vmem:[%s345 + $0x70] sm:$0xff]
        %v361 = vld [vmem:[%s345 + $0x78] sm:$0xff]
        %v362 = vld [vmem:[%s345 + $0x80] sm:$0xff]
        %v363 = vld [vmem:[%s345 + $0x88] sm:$0xff]
        %v364 = vld [vmem:[%s345 + $0x90] sm:$0xff]
        %v365 = vld [vmem:[%s345 + $0x98] sm:$0xff]
        %v366 = vld [vmem:[%s345 + $0xa0] sm:$0xff]
        %v367 = vld [vmem:[%s345 + $0xa8] sm:$0xff]
        %v368 = vld [vmem:[%s345 + $0xb0] sm:$0xff]
        %v369 = vld [vmem:[%s345 + $0xb8] sm:$0xff]
        %v370 = vld [vmem:[%s345 + $0xc0] sm:$0xff]
        %v371 = vld [vmem:[%s345 + $0xc8] sm:$0xff]
        %v372 = vld [vmem:[%s345 + $0xd0] sm:$0xff]
        %v373 = vld [vmem:[%s345 + $0xd8] sm:$0xff]
        %v374 = vld [vmem:[%s345 + $0xe0] sm:$0xff]
        %v375 = vld [vmem:[%s345 + $0xe8] sm:$0xff]
        %v376 = vld [vmem:[%s345 + $0xf0] sm:$0xff]
        %v377 = vld [vmem:[%s345 + $0xf8] sm:$0xff]
        %v378 = vld [vmem:[%s345 + $0x100] sm:$0xff]
        %v379 = vld [vmem:[%s345 + $0x108] sm:$0xff]
        %v380 = vld [vmem:[%s345 + $0x110] sm:$0xff]
        %v381 = vld [vmem:[%s345 + $0x118] sm:$0xff]
        %v382 = vld [vmem:[%s345 + $0x120] sm:$0xff]
        %v383 = vld [vmem:[%s345 + $0x128] sm:$0xff]
        %v384 = vld [vmem:[%s345 + $0x130] sm:$0xff]
        %v385 = vld [vmem:[%s345 + $0x138] sm:$0xff]
        %v386 = vld [vmem:[%s345 + $0x140] sm:$0xff]
        %v387 = vld [vmem:[%s345 + $0x148] sm:$0xff]
        %v388 = vld [vmem:[%s345 + $0x150] sm:$0xff]
        %v389 = vld [vmem:[%s345 + $0x158] sm:$0xff]
        %v390 = vld [vmem:[%s345 + $0x160] sm:$0xff]
        %v391 = vld [vmem:[%s345 + $0x168] sm:$0xff]
        %v392 = vld [vmem:[%s345 + $0x170] sm:$0xff]
        %v393 = vld [vmem:[%s345 + $0x178] sm:$0xff]
        %v394 = vld [vmem:[%s345 + $0x180] sm:$0xff]
        %v395 = vld [vmem:[%s345 + $0x188] sm:$0xff]
        %v396 = vld [vmem:[%s345 + $0x190] sm:$0xff]
        %v397 = vld [vmem:[%s345 + $0x198] sm:$0xff]
        %v398 = vld [vmem:[%s345 + $0x1a0] sm:$0xff]
        %v399 = vld [vmem:[%s345 + $0x1a8] sm:$0xff]
        %v400 = vld [vmem:[%s345 + $0x1b0] sm:$0xff]
        %v401 = vld [vmem:[%s345 + $0x1b8] sm:$0xff]
        %v402 = vld [vmem:[%s345 + $0x1c0] sm:$0xff]
        %v403 = vld [vmem:[%s345 + $0x1c8] sm:$0xff]
        %v404 = vld [vmem:[%s345 + $0x1d0] sm:$0xff]
        %v405 = vld [vmem:[%s345 + $0x1d8] sm:$0xff]
        %v406 = vld [vmem:[%s345 + $0x1e0] sm:$0xff]
        %v407 = vld [vmem:[%s345 + $0x1e8] sm:$0xff]
        %v408 = vld [vmem:[%s345 + $0x1f0] sm:$0xff]
        %v409 = vld [vmem:[%s345 + $0x1f8] sm:$0xff]
        %v413 = vunpack.c.l.b16 %v230
        %v414 = vunpack.c.h.b16 %v230
        %v415 = vunpack.c.l.b16 %v232
        %v416 = vunpack.c.h.b16 %v232
        %v417 = vunpack.c.l.b16 %v234
        %v418 = vunpack.c.h.b16 %v234
        %v419 = vpack.c.b16 %v415, %v413
        %v420 = vpack.c.b16 %v416, %v414
        %v421 = vpack.c.b16 %v417, %v417
        %v422 = vpack.c.b16 %v418, %v418
        %v491 = vunpack.c.l.b16 %v346
        %v492 = vunpack.c.h.b16 %v346
        %v493 = vunpack.c.l.b16 %v347
        %v494 = vunpack.c.h.b16 %v347
        %v495 = vunpack.c.l.b16 %v348
        %v496 = vunpack.c.h.b16 %v348
        %v497 = vunpack.c.l.b16 %v349
        %v498 = vunpack.c.h.b16 %v349
        %v499 = vunpack.c.l.b16 %v350
        %v500 = vunpack.c.h.b16 %v350
        %v501 = vunpack.c.l.b16 %v351
        %v502 = vunpack.c.h.b16 %v351
        %v503 = vunpack.c.l.b16 %v352
        %v504 = vunpack.c.h.b16 %v352
        %v505 = vunpack.c.l.b16 %v353
        %v506 = vunpack.c.h.b16 %v353
        %v507 = vunpack.c.l.b16 %v354
        %v508 = vunpack.c.h.b16 %v354
        %v509 = vunpack.c.l.b16 %v355
        %v510 = vunpack.c.h.b16 %v355
        %v511 = vunpack.c.l.b16 %v356
        %v512 = vunpack.c.h.b16 %v356
        %v513 = vunpack.c.l.b16 %v357
        %v514 = vunpack.c.h.b16 %v357
        %v515 = vunpack.c.l.b16 %v358
        %v516 = vunpack.c.h.b16 %v358
        %v517 = vunpack.c.l.b16 %v359
        %v518 = vunpack.c.h.b16 %v359
        %v519 = vunpack.c.l.b16 %v360
        %v520 = vunpack.c.h.b16 %v360
        %v521 = vunpack.c.l.b16 %v361
        %v522 = vunpack.c.h.b16 %v361
        %v523 = vunpack.c.l.b16 %v362
        %v524 = vunpack.c.h.b16 %v362
        %v525 = vunpack.c.l.b16 %v363
        %v526 = vunpack.c.h.b16 %v363
        %v527 = vunpack.c.l.b16 %v364
        %v528 = vunpack.c.h.b16 %v364
        %v529 = vunpack.c.l.b16 %v365
        %v530 = vunpack.c.h.b16 %v365
        %v531 = vunpack.c.l.b16 %v366
        %v532 = vunpack.c.h.b16 %v366
        %v533 = vunpack.c.l.b16 %v367
        %v534 = vunpack.c.h.b16 %v367
        %v535 = vunpack.c.l.b16 %v368
        %v536 = vunpack.c.h.b16 %v368
        %v537 = vunpack.c.l.b16 %v369
        %v538 = vunpack.c.h.b16 %v369
        %v539 = vunpack.c.l.b16 %v370
        %v540 = vunpack.c.h.b16 %v370
        %v541 = vunpack.c.l.b16 %v371
        %v542 = vunpack.c.h.b16 %v371
        %v543 = vunpack.c.l.b16 %v372
        %v544 = vunpack.c.h.b16 %v372
        %v545 = vunpack.c.l.b16 %v373
        %v546 = vunpack.c.h.b16 %v373
        %v547 = vunpack.c.l.b16 %v374
        %v548 = vunpack.c.h.b16 %v374
        %v549 = vunpack.c.l.b16 %v375
        %v550 = vunpack.c.h.b16 %v375
        %v551 = vunpack.c.l.b16 %v376
        %v552 = vunpack.c.h.b16 %v376
        %v553 = vunpack.c.l.b16 %v377
        %v554 = vunpack.c.h.b16 %v377
        %v555 = vunpack.c.l.b16 %v378
        %v556 = vunpack.c.h.b16 %v378
        %v557 = vunpack.c.l.b16 %v379
        %v558 = vunpack.c.h.b16 %v379
        %v559 = vunpack.c.l.b16 %v380
        %v560 = vunpack.c.h.b16 %v380
        %v561 = vunpack.c.l.b16 %v381
        %v562 = vunpack.c.h.b16 %v381
        %v563 = vunpack.c.l.b16 %v382
        %v564 = vunpack.c.h.b16 %v382
        %v565 = vunpack.c.l.b16 %v383
        %v566 = vunpack.c.h.b16 %v383
        %v567 = vunpack.c.l.b16 %v384
        %v568 = vunpack.c.h.b16 %v384
        %v569 = vunpack.c.l.b16 %v385
        %v570 = vunpack.c.h.b16 %v385
        %v571 = vunpack.c.l.b16 %v386
        %v572 = vunpack.c.h.b16 %v386
        %v573 = vunpack.c.l.b16 %v387
        %v574 = vunpack.c.h.b16 %v387
        %v575 = vunpack.c.l.b16 %v388
        %v576 = vunpack.c.h.b16 %v388
        %v577 = vunpack.c.l.b16 %v389
        %v578 = vunpack.c.h.b16 %v389
        %v579 = vunpack.c.l.b16 %v390
        %v580 = vunpack.c.h.b16 %v390
        %v581 = vunpack.c.l.b16 %v391
        %v582 = vunpack.c.h.b16 %v391
        %v583 = vunpack.c.l.b16 %v392
        %v584 = vunpack.c.h.b16 %v392
        %v585 = vunpack.c.l.b16 %v393
        %v586 = vunpack.c.h.b16 %v393
        %v587 = vunpack.c.l.b16 %v394
        %v588 = vunpack.c.h.b16 %v394
        %v589 = vunpack.c.l.b16 %v395
        %v590 = vunpack.c.h.b16 %v395
        %v591 = vunpack.c.l.b16 %v396
        %v592 = vunpack.c.h.b16 %v396
        %v593 = vunpack.c.l.b16 %v397
        %v594 = vunpack.c.h.b16 %v397
        %v595 = vunpack.c.l.b16 %v398
        %v596 = vunpack.c.h.b16 %v398
        %v597 = vunpack.c.l.b16 %v399
        %v598 = vunpack.c.h.b16 %v399
        %v599 = vunpack.c.l.b16 %v400
        %v600 = vunpack.c.h.b16 %v400
        %v601 = vunpack.c.l.b16 %v401
        %v602 = vunpack.c.h.b16 %v401
        %v603 = vunpack.c.l.b16 %v402
        %v604 = vunpack.c.h.b16 %v402
        %v605 = vunpack.c.l.b16 %v403
        %v606 = vunpack.c.h.b16 %v403
        %v607 = vunpack.c.l.b16 %v404
        %v608 = vunpack.c.h.b16 %v404
        %v609 = vunpack.c.l.b16 %v405
        %v610 = vunpack.c.h.b16 %v405
        %v611 = vunpack.c.l.b16 %v406
        %v612 = vunpack.c.h.b16 %v406
        %v613 = vunpack.c.l.b16 %v407
        %v614 = vunpack.c.h.b16 %v407
        %v615 = vunpack.c.l.b16 %v408
        %v616 = vunpack.c.h.b16 %v408
        %v617 = vunpack.c.l.b16 %v409
        %v618 = vunpack.c.h.b16 %v409
        %v619 = vpack.c.b16 %v495, %v491
        %v620 = vpack.c.b16 %v496, %v492
        %v621 = vpack.c.b16 %v497, %v493
        %v622 = vpack.c.b16 %v498, %v494
        %v623 = vpack.c.b16 %v503, %v499
        %v624 = vpack.c.b16 %v504, %v500
        %v625 = vpack.c.b16 %v505, %v501
        %v626 = vpack.c.b16 %v506, %v502
        %v627 = vpack.c.b16 %v511, %v507
        %v628 = vpack.c.b16 %v512, %v508
        %v629 = vpack.c.b16 %v513, %v509
        %v630 = vpack.c.b16 %v514, %v510
        %v631 = vpack.c.b16 %v519, %v515
        %v632 = vpack.c.b16 %v520, %v516
        %v633 = vpack.c.b16 %v521, %v517
        %v634 = vpack.c.b16 %v522, %v518
        %v635 = vpack.c.b16 %v527, %v523
        %v636 = vpack.c.b16 %v528, %v524
        %v637 = vpack.c.b16 %v529, %v525
        %v638 = vpack.c.b16 %v530, %v526
        %v639 = vpack.c.b16 %v535, %v531
        %v640 = vpack.c.b16 %v536, %v532
        %v641 = vpack.c.b16 %v537, %v533
        %v642 = vpack.c.b16 %v538, %v534
        %v643 = vpack.c.b16 %v543, %v539
        %v644 = vpack.c.b16 %v544, %v540
        %v645 = vpack.c.b16 %v545, %v541
        %v646 = vpack.c.b16 %v546, %v542
        %v647 = vpack.c.b16 %v551, %v547
        %v648 = vpack.c.b16 %v552, %v548
        %v649 = vpack.c.b16 %v553, %v549
        %v650 = vpack.c.b16 %v554, %v550
        %v651 = vpack.c.b16 %v559, %v555
        %v652 = vpack.c.b16 %v560, %v556
        %v653 = vpack.c.b16 %v561, %v557
        %v654 = vpack.c.b16 %v562, %v558
        %v655 = vpack.c.b16 %v567, %v563
        %v656 = vpack.c.b16 %v568, %v564
        %v657 = vpack.c.b16 %v569, %v565
        %v658 = vpack.c.b16 %v570, %v566
        %v659 = vpack.c.b16 %v575, %v571
        %v660 = vpack.c.b16 %v576, %v572
        %v661 = vpack.c.b16 %v577, %v573
        %v662 = vpack.c.b16 %v578, %v574
        %v663 = vpack.c.b16 %v583, %v579
        %v664 = vpack.c.b16 %v584, %v580
        %v665 = vpack.c.b16 %v585, %v581
        %v666 = vpack.c.b16 %v586, %v582
        %v667 = vpack.c.b16 %v591, %v587
        %v668 = vpack.c.b16 %v592, %v588
        %v669 = vpack.c.b16 %v593, %v589
        %v670 = vpack.c.b16 %v594, %v590
        %v671 = vpack.c.b16 %v599, %v595
        %v672 = vpack.c.b16 %v600, %v596
        %v673 = vpack.c.b16 %v601, %v597
        %v674 = vpack.c.b16 %v602, %v598
        %v675 = vpack.c.b16 %v607, %v603
        %v676 = vpack.c.b16 %v608, %v604
        %v677 = vpack.c.b16 %v609, %v605
        %v678 = vpack.c.b16 %v610, %v606
        %v679 = vpack.c.b16 %v615, %v611
        %v680 = vpack.c.b16 %v616, %v612
        %v681 = vpack.c.b16 %v617, %v613
        %v682 = vpack.c.b16 %v618, %v614
        %747 = vmatprep.subr.bf16.mxu0 %v620
        %748 = vmatpush1.bf16.msra.mxu0 %v619
        %749 = vmatprep.subr.bf16.mxu0 %v624
        %750 = vmatpush1.bf16.msra.mxu0 %v623
        %751 = vmatprep.subr.bf16.mxu0 %v628
        %752 = vmatpush1.bf16.msra.mxu0 %v627
        %753 = vmatprep.subr.bf16.mxu0 %v632
        %754 = vmatpush1.bf16.msra.mxu0 %v631
        %755 = vmatprep.subr.bf16.mxu0 %v636
        %756 = vmatpush1.bf16.msra.mxu0 %v635
        %757 = vmatprep.subr.bf16.mxu0 %v640
        %758 = vmatpush1.bf16.msra.mxu0 %v639
        %759 = vmatprep.subr.bf16.mxu0 %v644
        %760 = vmatpush1.bf16.msra.mxu0 %v643
        %761 = vmatprep.subr.bf16.mxu0 %v648
        %762 = vmatpush1.bf16.msra.mxu0 %v647
        %763 = vmatprep.subr.bf16.mxu0 %v652
        %764 = vmatpush1.bf16.msra.mxu0 %v651
        %765 = vmatprep.subr.bf16.mxu0 %v656
        %766 = vmatpush1.bf16.msra.mxu0 %v655
        %767 = vmatprep.subr.bf16.mxu0 %v660
        %768 = vmatpush1.bf16.msra.mxu0 %v659
        %769 = vmatprep.subr.bf16.mxu0 %v664
        %770 = vmatpush1.bf16.msra.mxu0 %v663
        %771 = vmatprep.subr.bf16.mxu0 %v668
        %772 = vmatpush1.bf16.msra.mxu0 %v667
        %773 = vmatprep.subr.bf16.mxu0 %v672
        %774 = vmatpush1.bf16.msra.mxu0 %v671
        %775 = vmatprep.subr.bf16.mxu0 %v676
        %776 = vmatpush1.bf16.msra.mxu0 %v675
        %777 = vmatprep.subr.bf16.mxu0 %v680
        %778 = vmatpush1.bf16.msra.mxu0 %v679
        %779 = vmatprep.mubr.bf16.mxu0 %v420
        %780 = vmatmul.mubr.bf16.gmra.mrb[0].mxu0 %v419
        %v781 = vpop.f32.mrb[0].mxu0
        %v782 = vadd.f32 0.0, %v781
        %v783 = vpop.f32.mrb[0].mxu0
        %v784 = vadd.f32 0.0, %v783
        %v785 = vpop.f32.mrb[0].mxu0
        %v786 = vadd.f32 0.0, %v785
        %v787 = vpop.f32.mrb[0].mxu0
        %v788 = vadd.f32 0.0, %v787
        %789 = vmatprep.mubr.bf16.mxu0 %v422
        %790 = vmatmul.mubr.bf16.gmra.mrb[0].mxu0 %v421
        %v791 = vpop.f32.mrb[0].mxu0
        %v792 = vadd.f32 0.0, %v791
        %v793 = vpop.f32.mrb[0].mxu0
        %v794 = vadd.f32 0.0, %v793
        %v795 = vpop.f32.mrb[0].mxu0
        %v796 = vpop.f32.mrb[0].mxu0
        %797 = vdwg.mxu0
        %798 = vmatprep.subr.bf16.mxu0 %v622
        %799 = vmatpush1.bf16.msra.mxu0 %v621
        %800 = vmatprep.subr.bf16.mxu0 %v626
        %801 = vmatpush1.bf16.msra.mxu0 %v625
        %802 = vmatprep.subr.bf16.mxu0 %v630
        %803 = vmatpush1.bf16.msra.mxu0 %v629
        %804 = vmatprep.subr.bf16.mxu0 %v634
        %805 = vmatpush1.bf16.msra.mxu0 %v633
        %806 = vmatprep.subr.bf16.mxu0 %v638
        %807 = vmatpush1.bf16.msra.mxu0 %v637
        %808 = vmatprep.subr.bf16.mxu0 %v642
        %809 = vmatpush1.bf16.msra.mxu0 %v641
        %810 = vmatprep.subr.bf16.mxu0 %v646
        %811 = vmatpush1.bf16.msra.mxu0 %v645
        %812 = vmatprep.subr.bf16.mxu0 %v650
        %813 = vmatpush1.bf16.msra.mxu0 %v649
        %814 = vmatprep.subr.bf16.mxu0 %v654
        %815 = vmatpush1.bf16.msra.mxu0 %v653
        %816 = vmatprep.subr.bf16.mxu0 %v658
        %817 = vmatpush1.bf16.msra.mxu0 %v657
        %818 = vmatprep.subr.bf16.mxu0 %v662
        %819 = vmatpush1.bf16.msra.mxu0 %v661
        %820 = vmatprep.subr.bf16.mxu0 %v666
        %821 = vmatpush1.bf16.msra.mxu0 %v665
        %822 = vmatprep.subr.bf16.mxu0 %v670
        %823 = vmatpush1.bf16.msra.mxu0 %v669
        %824 = vmatprep.subr.bf16.mxu0 %v674
        %825 = vmatpush1.bf16.msra.mxu0 %v673
        %826 = vmatprep.subr.bf16.mxu0 %v678
        %827 = vmatpush1.bf16.msra.mxu0 %v677
        %828 = vmatprep.subr.bf16.mxu0 %v682
        %829 = vmatpush1.bf16.msra.mxu0 %v681
        %830 = vmatprep.mubr.bf16.mxu0 %v420
        %831 = vmatmul.mubr.bf16.gmra.mrb[0].mxu0 %v419
        %v832 = vpop.f32.mrb[0].mxu0
        %v833 = vadd.f32 0.0, %v832
        %v834 = vpop.f32.mrb[0].mxu0
        %v835 = vadd.f32 0.0, %v834
        %v836 = vpop.f32.mrb[0].mxu0
        %v837 = vadd.f32 0.0, %v836
        %v838 = vpop.f32.mrb[0].mxu0
        %v839 = vadd.f32 0.0, %v838
        %840 = vmatprep.mubr.bf16.mxu0 %v422
        %841 = vmatmul.mubr.bf16.gmra.mrb[0].mxu0 %v421
        %v842 = vpop.f32.mrb[0].mxu0
        %v843 = vadd.f32 0.0, %v842
        %v844 = vpop.f32.mrb[0].mxu0
        %v845 = vadd.f32 0.0, %v844
        %v846 = vpop.f32.mrb[0].mxu0
        %v847 = vpop.f32.mrb[0].mxu0
        %848 = vdwg.mxu0
        %v849 = vunpack.c.l.b16 %v252
        %v850 = vunpack.c.h.b16 %v252
        %v851 = vunpack.c.l.b16 %v266
        %v852 = vunpack.c.h.b16 %v266
        %v853 = vunpack.c.l.b16 %v280
        %v854 = vunpack.c.h.b16 %v280
        %v855 = vpack.c.b16 %v851, %v849
        %v856 = vpack.c.b16 %v852, %v850
        %v857 = vpack.c.b16 %v853, %v853
        %v858 = vpack.c.b16 %v854, %v854
        %v927 = vunpack.c.l.b16 %v281
        %v928 = vunpack.c.h.b16 %v281
        %v929 = vunpack.c.l.b16 %v282
        %v930 = vunpack.c.h.b16 %v282
        %v931 = vunpack.c.l.b16 %v283
        %v932 = vunpack.c.h.b16 %v283
        %v933 = vunpack.c.l.b16 %v284
        %v934 = vunpack.c.h.b16 %v284
        %v935 = vunpack.c.l.b16 %v285
        %v936 = vunpack.c.h.b16 %v285
        %v937 = vunpack.c.l.b16 %v286
        %v938 = vunpack.c.h.b16 %v286
        %v939 = vunpack.c.l.b16 %v287
        %v940 = vunpack.c.h.b16 %v287
        %v941 = vunpack.c.l.b16 %v288
        %v942 = vunpack.c.h.b16 %v288
        %v943 = vunpack.c.l.b16 %v289
        %v944 = vunpack.c.h.b16 %v289
        %v945 = vunpack.c.l.b16 %v290
        %v946 = vunpack.c.h.b16 %v290
        %v947 = vunpack.c.l.b16 %v291
        %v948 = vunpack.c.h.b16 %v291
        %v949 = vunpack.c.l.b16 %v292
        %v950 = vunpack.c.h.b16 %v292
        %v951 = vunpack.c.l.b16 %v293
        %v952 = vunpack.c.h.b16 %v293
        %v953 = vunpack.c.l.b16 %v294
        %v954 = vunpack.c.h.b16 %v294
        %v955 = vunpack.c.l.b16 %v295
        %v956 = vunpack.c.h.b16 %v295
        %v957 = vunpack.c.l.b16 %v296
        %v958 = vunpack.c.h.b16 %v296
        %v959 = vunpack.c.l.b16 %v297
        %v960 = vunpack.c.h.b16 %v297
        %v961 = vunpack.c.l.b16 %v298
        %v962 = vunpack.c.h.b16 %v298
        %v963 = vunpack.c.l.b16 %v299
        %v964 = vunpack.c.h.b16 %v299
        %v965 = vunpack.c.l.b16 %v300
        %v966 = vunpack.c.h.b16 %v300
        %v967 = vunpack.c.l.b16 %v301
        %v968 = vunpack.c.h.b16 %v301
        %v969 = vunpack.c.l.b16 %v302
        %v970 = vunpack.c.h.b16 %v302
        %v971 = vunpack.c.l.b16 %v303
        %v972 = vunpack.c.h.b16 %v303
        %v973 = vunpack.c.l.b16 %v304
        %v974 = vunpack.c.h.b16 %v304
        %v975 = vunpack.c.l.b16 %v305
        %v976 = vunpack.c.h.b16 %v305
        %v977 = vunpack.c.l.b16 %v306
        %v978 = vunpack.c.h.b16 %v306
        %v979 = vunpack.c.l.b16 %v307
        %v980 = vunpack.c.h.b16 %v307
        %v981 = vunpack.c.l.b16 %v308
        %v982 = vunpack.c.h.b16 %v308
        %v983 = vunpack.c.l.b16 %v309
        %v984 = vunpack.c.h.b16 %v309
        %v985 = vunpack.c.l.b16 %v310
        %v986 = vunpack.c.h.b16 %v310
        %v987 = vunpack.c.l.b16 %v311
        %v988 = vunpack.c.h.b16 %v311
        %v989 = vunpack.c.l.b16 %v312
        %v990 = vunpack.c.h.b16 %v312
        %v991 = vunpack.c.l.b16 %v313
        %v992 = vunpack.c.h.b16 %v313
        %v993 = vunpack.c.l.b16 %v314
        %v994 = vunpack.c.h.b16 %v314
        %v995 = vunpack.c.l.b16 %v315
        %v996 = vunpack.c.h.b16 %v315
        %v997 = vunpack.c.l.b16 %v316
        %v998 = vunpack.c.h.b16 %v316
        %v999 = vunpack.c.l.b16 %v317
        %v1000 = vunpack.c.h.b16 %v317
        %v1001 = vunpack.c.l.b16 %v318
        %v1002 = vunpack.c.h.b16 %v318
        %v1003 = vunpack.c.l.b16 %v319
        %v1004 = vunpack.c.h.b16 %v319
        %v1005 = vunpack.c.l.b16 %v320
        %v1006 = vunpack.c.h.b16 %v320
        %v1007 = vunpack.c.l.b16 %v321
        %v1008 = vunpack.c.h.b16 %v321
        %v1009 = vunpack.c.l.b16 %v322
        %v1010 = vunpack.c.h.b16 %v322
        %v1011 = vunpack.c.l.b16 %v323
        %v1012 = vunpack.c.h.b16 %v323
        %v1013 = vunpack.c.l.b16 %v324
        %v1014 = vunpack.c.h.b16 %v324
        %v1015 = vunpack.c.l.b16 %v325
        %v1016 = vunpack.c.h.b16 %v325
        %v1017 = vunpack.c.l.b16 %v326
        %v1018 = vunpack.c.h.b16 %v326
        %v1019 = vunpack.c.l.b16 %v327
        %v1020 = vunpack.c.h.b16 %v327
        %v1021 = vunpack.c.l.b16 %v328
        %v1022 = vunpack.c.h.b16 %v328
        %v1023 = vunpack.c.l.b16 %v329
        %v1024 = vunpack.c.h.b16 %v329
        %v1025 = vunpack.c.l.b16 %v330
        %v1026 = vunpack.c.h.b16 %v330
        %v1027 = vunpack.c.l.b16 %v331
        %v1028 = vunpack.c.h.b16 %v331
        %v1029 = vunpack.c.l.b16 %v332
        %v1030 = vunpack.c.h.b16 %v332
        %v1031 = vunpack.c.l.b16 %v333
        %v1032 = vunpack.c.h.b16 %v333
        %v1033 = vunpack.c.l.b16 %v334
        %v1034 = vunpack.c.h.b16 %v334
        %v1035 = vunpack.c.l.b16 %v335
        %v1036 = vunpack.c.h.b16 %v335
        %v1037 = vunpack.c.l.b16 %v336
        %v1038 = vunpack.c.h.b16 %v336
        %v1039 = vunpack.c.l.b16 %v337
        %v1040 = vunpack.c.h.b16 %v337
        %v1041 = vunpack.c.l.b16 %v338
        %v1042 = vunpack.c.h.b16 %v338
        %v1043 = vunpack.c.l.b16 %v339
        %v1044 = vunpack.c.h.b16 %v339
        %v1045 = vunpack.c.l.b16 %v340
        %v1046 = vunpack.c.h.b16 %v340
        %v1047 = vunpack.c.l.b16 %v341
        %v1048 = vunpack.c.h.b16 %v341
        %v1049 = vunpack.c.l.b16 %v342
        %v1050 = vunpack.c.h.b16 %v342
        %v1051 = vunpack.c.l.b16 %v343
        %v1052 = vunpack.c.h.b16 %v343
        %v1053 = vunpack.c.l.b16 %v344
        %v1054 = vunpack.c.h.b16 %v344
        %v1055 = vpack.c.b16 %v931, %v927
        %v1056 = vpack.c.b16 %v932, %v928
        %v1057 = vpack.c.b16 %v933, %v929
        %v1058 = vpack.c.b16 %v934, %v930
        %v1059 = vpack.c.b16 %v939, %v935
        %v1060 = vpack.c.b16 %v940, %v936
        %v1061 = vpack.c.b16 %v941, %v937
        %v1062 = vpack.c.b16 %v942, %v938
        %v1063 = vpack.c.b16 %v947, %v943
        %v1064 = vpack.c.b16 %v948, %v944
        %v1065 = vpack.c.b16 %v949, %v945
        %v1066 = vpack.c.b16 %v950, %v946
        %v1067 = vpack.c.b16 %v955, %v951
        %v1068 = vpack.c.b16 %v956, %v952
        %v1069 = vpack.c.b16 %v957, %v953
        %v1070 = vpack.c.b16 %v958, %v954
        %v1071 = vpack.c.b16 %v963, %v959
        %v1072 = vpack.c.b16 %v964, %v960
        %v1073 = vpack.c.b16 %v965, %v961
        %v1074 = vpack.c.b16 %v966, %v962
        %v1075 = vpack.c.b16 %v971, %v967
        %v1076 = vpack.c.b16 %v972, %v968
        %v1077 = vpack.c.b16 %v973, %v969
        %v1078 = vpack.c.b16 %v974, %v970
        %v1079 = vpack.c.b16 %v979, %v975
        %v1080 = vpack.c.b16 %v980, %v976
        %v1081 = vpack.c.b16 %v981, %v977
        %v1082 = vpack.c.b16 %v982, %v978
        %v1083 = vpack.c.b16 %v987, %v983
        %v1084 = vpack.c.b16 %v988, %v984
        %v1085 = vpack.c.b16 %v989, %v985
        %v1086 = vpack.c.b16 %v990, %v986
        %v1087 = vpack.c.b16 %v995, %v991
        %v1088 = vpack.c.b16 %v996, %v992
        %v1089 = vpack.c.b16 %v997, %v993
        %v1090 = vpack.c.b16 %v998, %v994
        %v1091 = vpack.c.b16 %v1003, %v999
        %v1092 = vpack.c.b16 %v1004, %v1000
        %v1093 = vpack.c.b16 %v1005, %v1001
        %v1094 = vpack.c.b16 %v1006, %v1002
        %v1095 = vpack.c.b16 %v1011, %v1007
        %v1096 = vpack.c.b16 %v1012, %v1008
        %v1097 = vpack.c.b16 %v1013, %v1009
        %v1098 = vpack.c.b16 %v1014, %v1010
        %v1099 = vpack.c.b16 %v1019, %v1015
        %v1100 = vpack.c.b16 %v1020, %v1016
        %v1101 = vpack.c.b16 %v1021, %v1017
        %v1102 = vpack.c.b16 %v1022, %v1018
        %v1103 = vpack.c.b16 %v1027, %v1023
        %v1104 = vpack.c.b16 %v1028, %v1024
        %v1105 = vpack.c.b16 %v1029, %v1025
        %v1106 = vpack.c.b16 %v1030, %v1026
        %v1107 = vpack.c.b16 %v1035, %v1031
        %v1108 = vpack.c.b16 %v1036, %v1032
        %v1109 = vpack.c.b16 %v1037, %v1033
        %v1110 = vpack.c.b16 %v1038, %v1034
        %v1111 = vpack.c.b16 %v1043, %v1039
        %v1112 = vpack.c.b16 %v1044, %v1040
        %v1113 = vpack.c.b16 %v1045, %v1041
        %v1114 = vpack.c.b16 %v1046, %v1042
        %v1115 = vpack.c.b16 %v1051, %v1047
        %v1116 = vpack.c.b16 %v1052, %v1048
        %v1117 = vpack.c.b16 %v1053, %v1049
        %v1118 = vpack.c.b16 %v1054, %v1050
        %1183 = vmatprep.subr.bf16.mxu0 %v1056
        %1184 = vmatpush1.bf16.msra.mxu0 %v1055
        %1185 = vmatprep.subr.bf16.mxu0 %v1060
        %1186 = vmatpush1.bf16.msra.mxu0 %v1059
        %1187 = vmatprep.subr.bf16.mxu0 %v1064
        %1188 = vmatpush1.bf16.msra.mxu0 %v1063
        %1189 = vmatprep.subr.bf16.mxu0 %v1068
        %1190 = vmatpush1.bf16.msra.mxu0 %v1067
        %1191 = vmatprep.subr.bf16.mxu0 %v1072
        %1192 = vmatpush1.bf16.msra.mxu0 %v1071
        %1193 = vmatprep.subr.bf16.mxu0 %v1076
        %1194 = vmatpush1.bf16.msra.mxu0 %v1075
        %1195 = vmatprep.subr.bf16.mxu0 %v1080
        %1196 = vmatpush1.bf16.msra.mxu0 %v1079
        %1197 = vmatprep.subr.bf16.mxu0 %v1084
        %1198 = vmatpush1.bf16.msra.mxu0 %v1083
        %1199 = vmatprep.subr.bf16.mxu0 %v1088
        %1200 = vmatpush1.bf16.msra.mxu0 %v1087
        %1201 = vmatprep.subr.bf16.mxu0 %v1092
        %1202 = vmatpush1.bf16.msra.mxu0 %v1091
        %1203 = vmatprep.subr.bf16.mxu0 %v1096
        %1204 = vmatpush1.bf16.msra.mxu0 %v1095
        %1205 = vmatprep.subr.bf16.mxu0 %v1100
        %1206 = vmatpush1.bf16.msra.mxu0 %v1099
        %1207 = vmatprep.subr.bf16.mxu0 %v1104
        %1208 = vmatpush1.bf16.msra.mxu0 %v1103
        %1209 = vmatprep.subr.bf16.mxu0 %v1108
        %1210 = vmatpush1.bf16.msra.mxu0 %v1107
        %1211 = vmatprep.subr.bf16.mxu0 %v1112
        %1212 = vmatpush1.bf16.msra.mxu0 %v1111
        %1213 = vmatprep.subr.bf16.mxu0 %v1116
        %1214 = vmatpush1.bf16.msra.mxu0 %v1115
        %1215 = vmatprep.mubr.bf16.mxu0 %v856
        %1216 = vmatmul.mubr.bf16.gmra.mrb[0].mxu0 %v855
        %v1217 = vpop.f32.mrb[0].mxu0
        %v1218 = vadd.f32 %v782, %v1217
        %v1219 = vpop.f32.mrb[0].mxu0
        %v1220 = vadd.f32 %v784, %v1219
        %v1221 = vpop.f32.mrb[0].mxu0
        %v1222 = vadd.f32 %v786, %v1221
        %v1223 = vpop.f32.mrb[0].mxu0
        %v1224 = vadd.f32 %v788, %v1223
        %1225 = vmatprep.mubr.bf16.mxu0 %v858
        %1226 = vmatmul.mubr.bf16.gmra.mrb[0].mxu0 %v857
        %v1227 = vpop.f32.mrb[0].mxu0
        %v1228 = vadd.f32 %v792, %v1227
        %v1229 = vpop.f32.mrb[0].mxu0
        %v1230 = vadd.f32 %v794, %v1229
        %v1231 = vpop.f32.mrb[0].mxu0
        %v1232 = vpop.f32.mrb[0].mxu0
        %1233 = vdwg.mxu0
        %1234 = vmatprep.subr.bf16.mxu0 %v1058
        %1235 = vmatpush1.bf16.msra.mxu0 %v1057
        %1236 = vmatprep.subr.bf16.mxu0 %v1062
        %1237 = vmatpush1.bf16.msra.mxu0 %v1061
        %1238 = vmatprep.subr.bf16.mxu0 %v1066
        %1239 = vmatpush1.bf16.msra.mxu0 %v1065
        %1240 = vmatprep.subr.bf16.mxu0 %v1070
        %1241 = vmatpush1.bf16.msra.mxu0 %v1069
        %1242 = vmatprep.subr.bf16.mxu0 %v1074
        %1243 = vmatpush1.bf16.msra.mxu0 %v1073
        %1244 = vmatprep.subr.bf16.mxu0 %v1078
        %1245 = vmatpush1.bf16.msra.mxu0 %v1077
        %1246 = vmatprep.subr.bf16.mxu0 %v1082
        %1247 = vmatpush1.bf16.msra.mxu0 %v1081
        %1248 = vmatprep.subr.bf16.mxu0 %v1086
        %1249 = vmatpush1.bf16.msra.mxu0 %v1085
        %1250 = vmatprep.subr.bf16.mxu0 %v1090
        %1251 = vmatpush1.bf16.msra.mxu0 %v1089
        %1252 = vmatprep.subr.bf16.mxu0 %v1094
        %1253 = vmatpush1.bf16.msra.mxu0 %v1093
        %1254 = vmatprep.subr.bf16.mxu0 %v1098
        %1255 = vmatpush1.bf16.msra.mxu0 %v1097
        %1256 = vmatprep.subr.bf16.mxu0 %v1102
        %1257 = vmatpush1.bf16.msra.mxu0 %v1101
        %1258 = vmatprep.subr.bf16.mxu0 %v1106
        %1259 = vmatpush1.bf16.msra.mxu0 %v1105
        %1260 = vmatprep.subr.bf16.mxu0 %v1110
        %1261 = vmatpush1.bf16.msra.mxu0 %v1109
        %1262 = vmatprep.subr.bf16.mxu0 %v1114
        %1263 = vmatpush1.bf16.msra.mxu0 %v1113
        %1264 = vmatprep.subr.bf16.mxu0 %v1118
        %1265 = vmatpush1.bf16.msra.mxu0 %v1117
        %1266 = vmatprep.mubr.bf16.mxu0 %v856
        %1267 = vmatmul.mubr.bf16.gmra.mrb[0].mxu0 %v855
        %v1268 = vpop.f32.mrb[0].mxu0
        %v1269 = vadd.f32 %v833, %v1268
        %v1270 = vpop.f32.mrb[0].mxu0
        %v1271 = vadd.f32 %v835, %v1270
        %v1272 = vpop.f32.mrb[0].mxu0
        %v1273 = vadd.f32 %v837, %v1272
        %v1274 = vpop.f32.mrb[0].mxu0
        %v1275 = vadd.f32 %v839, %v1274
        %1276 = vmatprep.mubr.bf16.mxu0 %v858
        %1277 = vmatmul.mubr.bf16.gmra.mrb[0].mxu0 %v857
        %v1278 = vpop.f32.mrb[0].mxu0
        %v1279 = vadd.f32 %v843, %v1278
        %v1280 = vpop.f32.mrb[0].mxu0
        %v1281 = vadd.f32 %v845, %v1280
        %v1282 = vpop.f32.mrb[0].mxu0
        %v1283 = vpop.f32.mrb[0].mxu0
        %1284 = vdwg.mxu0
        %v1286 = vshrl.u32 %v228, 16
        %v1288 = vrot.slane %v1286, 4
        %v1289 = vshll.u32 %v228, 16
        %v1291 = vrot.slane %v1289, 5
        %v1292 = vor.u32 %v1288, %v1291
        %v1293 = vrot.slane %v1292, 4
        %v1295 = vshll.u32 %v229, 16
        %v1297 = vrot.slane %v1295, 5
        %v1298 = vsel %vm238, %v1293, %v1297
        %s1299 = scalar_lea.vmem [#allocation2], 1024
        %v1300 = vld [vmem:[%s1299] sm:$0xff]
        %v1301 = vld [vmem:[%s1299 + $0x8] sm:$0xff]
        %v1302 = vld [vmem:[%s1299 + $0x10] sm:$0xff]
        %v1303 = vld [vmem:[%s1299 + $0x18] sm:$0xff]
        %v1304 = vld [vmem:[%s1299 + $0x20] sm:$0xff]
        %v1305 = vld [vmem:[%s1299 + $0x28] sm:$0xff]
        %v1306 = vld [vmem:[%s1299 + $0x30] sm:$0xff]
        %v1307 = vld [vmem:[%s1299 + $0x38] sm:$0xff]
        %v1308 = vld [vmem:[%s1299 + $0x40] sm:$0xff]
        %v1309 = vld [vmem:[%s1299 + $0x48] sm:$0xff]
        %v1310 = vld [vmem:[%s1299 + $0x50] sm:$0xff]
        %v1311 = vld [vmem:[%s1299 + $0x58] sm:$0xff]
        %v1312 = vld [vmem:[%s1299 + $0x60] sm:$0xff]
        %v1313 = vld [vmem:[%s1299 + $0x68] sm:$0xff]
        %v1314 = vld [vmem:[%s1299 + $0x70] sm:$0xff]
        %v1315 = vld [vmem:[%s1299 + $0x78] sm:$0xff]
        %v1316 = vld [vmem:[%s1299 + $0x80] sm:$0xff]
        %v1317 = vld [vmem:[%s1299 + $0x88] sm:$0xff]
        %v1318 = vld [vmem:[%s1299 + $0x90] sm:$0xff]
        %v1319 = vld [vmem:[%s1299 + $0x98] sm:$0xff]
        %v1320 = vld [vmem:[%s1299 + $0xa0] sm:$0xff]
        %v1321 = vld [vmem:[%s1299 + $0xa8] sm:$0xff]
        %v1322 = vld [vmem:[%s1299 + $0xb0] sm:$0xff]
        %v1323 = vld [vmem:[%s1299 + $0xb8] sm:$0xff]
        %v1324 = vld [vmem:[%s1299 + $0xc0] sm:$0xff]
        %v1325 = vld [vmem:[%s1299 + $0xc8] sm:$0xff]
        %v1326 = vld [vmem:[%s1299 + $0xd0] sm:$0xff]
        %v1327 = vld [vmem:[%s1299 + $0xd8] sm:$0xff]
        %v1328 = vld [vmem:[%s1299 + $0xe0] sm:$0xff]
        %v1329 = vld [vmem:[%s1299 + $0xe8] sm:$0xff]
        %v1330 = vld [vmem:[%s1299 + $0xf0] sm:$0xff]
        %v1331 = vld [vmem:[%s1299 + $0xf8] sm:$0xff]
        %v1332 = vld [vmem:[%s1299 + $0x100] sm:$0xff]
        %v1333 = vld [vmem:[%s1299 + $0x108] sm:$0xff]
        %v1334 = vld [vmem:[%s1299 + $0x110] sm:$0xff]
        %v1335 = vld [vmem:[%s1299 + $0x118] sm:$0xff]
        %v1336 = vld [vmem:[%s1299 + $0x120] sm:$0xff]
        %v1337 = vld [vmem:[%s1299 + $0x128] sm:$0xff]
        %v1338 = vld [vmem:[%s1299 + $0x130] sm:$0xff]
        %v1339 = vld [vmem:[%s1299 + $0x138] sm:$0xff]
        %v1340 = vld [vmem:[%s1299 + $0x140] sm:$0xff]
        %v1341 = vld [vmem:[%s1299 + $0x148] sm:$0xff]
        %v1342 = vld [vmem:[%s1299 + $0x150] sm:$0xff]
        %v1343 = vld [vmem:[%s1299 + $0x158] sm:$0xff]
        %v1344 = vld [vmem:[%s1299 + $0x160] sm:$0xff]
        %v1345 = vld [vmem:[%s1299 + $0x168] sm:$0xff]
        %v1346 = vld [vmem:[%s1299 + $0x170] sm:$0xff]
        %v1347 = vld [vmem:[%s1299 + $0x178] sm:$0xff]
        %v1348 = vld [vmem:[%s1299 + $0x180] sm:$0xff]
        %v1349 = vld [vmem:[%s1299 + $0x188] sm:$0xff]
        %v1350 = vld [vmem:[%s1299 + $0x190] sm:$0xff]
        %v1351 = vld [vmem:[%s1299 + $0x198] sm:$0xff]
        %v1352 = vld [vmem:[%s1299 + $0x1a0] sm:$0xff]
        %v1353 = vld [vmem:[%s1299 + $0x1a8] sm:$0xff]
        %v1354 = vld [vmem:[%s1299 + $0x1b0] sm:$0xff]
        %v1355 = vld [vmem:[%s1299 + $0x1b8] sm:$0xff]
        %v1356 = vld [vmem:[%s1299 + $0x1c0] sm:$0xff]
        %v1357 = vld [vmem:[%s1299 + $0x1c8] sm:$0xff]
        %v1358 = vld [vmem:[%s1299 + $0x1d0] sm:$0xff]
        %v1359 = vld [vmem:[%s1299 + $0x1d8] sm:$0xff]
        %v1360 = vld [vmem:[%s1299 + $0x1e0] sm:$0xff]
        %v1361 = vld [vmem:[%s1299 + $0x1e8] sm:$0xff]
        %v1362 = vld [vmem:[%s1299 + $0x1f0] sm:$0xff]
        %v1363 = vld [vmem:[%s1299 + $0x1f8] sm:$0xff]
        %v1364 = vunpack.c.l.b16 %v1298
        %v1365 = vunpack.c.h.b16 %v1298
        %v1366 = vpack.c.b16 %v849, %v1364
        %v1367 = vpack.c.b16 %v850, %v1365
        %v1368 = vpack.c.b16 %v851, %v851
        %v1369 = vpack.c.b16 %v852, %v852
        %v1438 = vunpack.c.l.b16 %v1300
        %v1439 = vunpack.c.h.b16 %v1300
        %v1440 = vunpack.c.l.b16 %v1301
        %v1441 = vunpack.c.h.b16 %v1301
        %v1442 = vunpack.c.l.b16 %v1302
        %v1443 = vunpack.c.h.b16 %v1302
        %v1444 = vunpack.c.l.b16 %v1303
        %v1445 = vunpack.c.h.b16 %v1303
        %v1446 = vunpack.c.l.b16 %v1304
        %v1447 = vunpack.c.h.b16 %v1304
        %v1448 = vunpack.c.l.b16 %v1305
        %v1449 = vunpack.c.h.b16 %v1305
        %v1450 = vunpack.c.l.b16 %v1306
        %v1451 = vunpack.c.h.b16 %v1306
        %v1452 = vunpack.c.l.b16 %v1307
        %v1453 = vunpack.c.h.b16 %v1307
        %v1454 = vunpack.c.l.b16 %v1308
        %v1455 = vunpack.c.h.b16 %v1308
        %v1456 = vunpack.c.l.b16 %v1309
        %v1457 = vunpack.c.h.b16 %v1309
        %v1458 = vunpack.c.l.b16 %v1310
        %v1459 = vunpack.c.h.b16 %v1310
        %v1460 = vunpack.c.l.b16 %v1311
        %v1461 = vunpack.c.h.b16 %v1311
        %v1462 = vunpack.c.l.b16 %v1312
        %v1463 = vunpack.c.h.b16 %v1312
        %v1464 = vunpack.c.l.b16 %v1313
        %v1465 = vunpack.c.h.b16 %v1313
        %v1466 = vunpack.c.l.b16 %v1314
        %v1467 = vunpack.c.h.b16 %v1314
        %v1468 = vunpack.c.l.b16 %v1315
        %v1469 = vunpack.c.h.b16 %v1315
        %v1470 = vunpack.c.l.b16 %v1316
        %v1471 = vunpack.c.h.b16 %v1316
        %v1472 = vunpack.c.l.b16 %v1317
        %v1473 = vunpack.c.h.b16 %v1317
        %v1474 = vunpack.c.l.b16 %v1318
        %v1475 = vunpack.c.h.b16 %v1318
        %v1476 = vunpack.c.l.b16 %v1319
        %v1477 = vunpack.c.h.b16 %v1319
        %v1478 = vunpack.c.l.b16 %v1320
        %v1479 = vunpack.c.h.b16 %v1320
        %v1480 = vunpack.c.l.b16 %v1321
        %v1481 = vunpack.c.h.b16 %v1321
        %v1482 = vunpack.c.l.b16 %v1322
        %v1483 = vunpack.c.h.b16 %v1322
        %v1484 = vunpack.c.l.b16 %v1323
        %v1485 = vunpack.c.h.b16 %v1323
        %v1486 = vunpack.c.l.b16 %v1324
        %v1487 = vunpack.c.h.b16 %v1324
        %v1488 = vunpack.c.l.b16 %v1325
        %v1489 = vunpack.c.h.b16 %v1325
        %v1490 = vunpack.c.l.b16 %v1326
        %v1491 = vunpack.c.h.b16 %v1326
        %v1492 = vunpack.c.l.b16 %v1327
        %v1493 = vunpack.c.h.b16 %v1327
        %v1494 = vunpack.c.l.b16 %v1328
        %v1495 = vunpack.c.h.b16 %v1328
        %v1496 = vunpack.c.l.b16 %v1329
        %v1497 = vunpack.c.h.b16 %v1329
        %v1498 = vunpack.c.l.b16 %v1330
        %v1499 = vunpack.c.h.b16 %v1330
        %v1500 = vunpack.c.l.b16 %v1331
        %v1501 = vunpack.c.h.b16 %v1331
        %v1502 = vunpack.c.l.b16 %v1332
        %v1503 = vunpack.c.h.b16 %v1332
        %v1504 = vunpack.c.l.b16 %v1333
        %v1505 = vunpack.c.h.b16 %v1333
        %v1506 = vunpack.c.l.b16 %v1334
        %v1507 = vunpack.c.h.b16 %v1334
        %v1508 = vunpack.c.l.b16 %v1335
        %v1509 = vunpack.c.h.b16 %v1335
        %v1510 = vunpack.c.l.b16 %v1336
        %v1511 = vunpack.c.h.b16 %v1336
        %v1512 = vunpack.c.l.b16 %v1337
        %v1513 = vunpack.c.h.b16 %v1337
        %v1514 = vunpack.c.l.b16 %v1338
        %v1515 = vunpack.c.h.b16 %v1338
        %v1516 = vunpack.c.l.b16 %v1339
        %v1517 = vunpack.c.h.b16 %v1339
        %v1518 = vunpack.c.l.b16 %v1340
        %v1519 = vunpack.c.h.b16 %v1340
        %v1520 = vunpack.c.l.b16 %v1341
        %v1521 = vunpack.c.h.b16 %v1341
        %v1522 = vunpack.c.l.b16 %v1342
        %v1523 = vunpack.c.h.b16 %v1342
        %v1524 = vunpack.c.l.b16 %v1343
        %v1525 = vunpack.c.h.b16 %v1343
        %v1526 = vunpack.c.l.b16 %v1344
        %v1527 = vunpack.c.h.b16 %v1344
        %v1528 = vunpack.c.l.b16 %v1345
        %v1529 = vunpack.c.h.b16 %v1345
        %v1530 = vunpack.c.l.b16 %v1346
        %v1531 = vunpack.c.h.b16 %v1346
        %v1532 = vunpack.c.l.b16 %v1347
        %v1533 = vunpack.c.h.b16 %v1347
        %v1534 = vunpack.c.l.b16 %v1348
        %v1535 = vunpack.c.h.b16 %v1348
        %v1536 = vunpack.c.l.b16 %v1349
        %v1537 = vunpack.c.h.b16 %v1349
        %v1538 = vunpack.c.l.b16 %v1350
        %v1539 = vunpack.c.h.b16 %v1350
        %v1540 = vunpack.c.l.b16 %v1351
        %v1541 = vunpack.c.h.b16 %v1351
        %v1542 = vunpack.c.l.b16 %v1352
        %v1543 = vunpack.c.h.b16 %v1352
        %v1544 = vunpack.c.l.b16 %v1353
        %v1545 = vunpack.c.h.b16 %v1353
        %v1546 = vunpack.c.l.b16 %v1354
        %v1547 = vunpack.c.h.b16 %v1354
        %v1548 = vunpack.c.l.b16 %v1355
        %v1549 = vunpack.c.h.b16 %v1355
        %v1550 = vunpack.c.l.b16 %v1356
        %v1551 = vunpack.c.h.b16 %v1356
        %v1552 = vunpack.c.l.b16 %v1357
        %v1553 = vunpack.c.h.b16 %v1357
        %v1554 = vunpack.c.l.b16 %v1358
        %v1555 = vunpack.c.h.b16 %v1358
        %v1556 = vunpack.c.l.b16 %v1359
        %v1557 = vunpack.c.h.b16 %v1359
        %v1558 = vunpack.c.l.b16 %v1360
        %v1559 = vunpack.c.h.b16 %v1360
        %v1560 = vunpack.c.l.b16 %v1361
        %v1561 = vunpack.c.h.b16 %v1361
        %v1562 = vunpack.c.l.b16 %v1362
        %v1563 = vunpack.c.h.b16 %v1362
        %v1564 = vunpack.c.l.b16 %v1363
        %v1565 = vunpack.c.h.b16 %v1363
        %v1566 = vpack.c.b16 %v1442, %v1438
        %v1567 = vpack.c.b16 %v1443, %v1439
        %v1568 = vpack.c.b16 %v1444, %v1440
        %v1569 = vpack.c.b16 %v1445, %v1441
        %v1570 = vpack.c.b16 %v1450, %v1446
        %v1571 = vpack.c.b16 %v1451, %v1447
        %v1572 = vpack.c.b16 %v1452, %v1448
        %v1573 = vpack.c.b16 %v1453, %v1449
        %v1574 = vpack.c.b16 %v1458, %v1454
        %v1575 = vpack.c.b16 %v1459, %v1455
        %v1576 = vpack.c.b16 %v1460, %v1456
        %v1577 = vpack.c.b16 %v1461, %v1457
        %v1578 = vpack.c.b16 %v1466, %v1462
        %v1579 = vpack.c.b16 %v1467, %v1463
        %v1580 = vpack.c.b16 %v1468, %v1464
        %v1581 = vpack.c.b16 %v1469, %v1465
        %v1582 = vpack.c.b16 %v1474, %v1470
        %v1583 = vpack.c.b16 %v1475, %v1471
        %v1584 = vpack.c.b16 %v1476, %v1472
        %v1585 = vpack.c.b16 %v1477, %v1473
        %v1586 = vpack.c.b16 %v1482, %v1478
        %v1587 = vpack.c.b16 %v1483, %v1479
        %v1588 = vpack.c.b16 %v1484, %v1480
        %v1589 = vpack.c.b16 %v1485, %v1481
        %v1590 = vpack.c.b16 %v1490, %v1486
        %v1591 = vpack.c.b16 %v1491, %v1487
        %v1592 = vpack.c.b16 %v1492, %v1488
        %v1593 = vpack.c.b16 %v1493, %v1489
        %v1594 = vpack.c.b16 %v1498, %v1494
        %v1595 = vpack.c.b16 %v1499, %v1495
        %v1596 = vpack.c.b16 %v1500, %v1496
        %v1597 = vpack.c.b16 %v1501, %v1497
        %v1598 = vpack.c.b16 %v1506, %v1502
        %v1599 = vpack.c.b16 %v1507, %v1503
        %v1600 = vpack.c.b16 %v1508, %v1504
        %v1601 = vpack.c.b16 %v1509, %v1505
        %v1602 = vpack.c.b16 %v1514, %v1510
        %v1603 = vpack.c.b16 %v1515, %v1511
        %v1604 = vpack.c.b16 %v1516, %v1512
        %v1605 = vpack.c.b16 %v1517, %v1513
        %v1606 = vpack.c.b16 %v1522, %v1518
        %v1607 = vpack.c.b16 %v1523, %v1519
        %v1608 = vpack.c.b16 %v1524, %v1520
        %v1609 = vpack.c.b16 %v1525, %v1521
        %v1610 = vpack.c.b16 %v1530, %v1526
        %v1611 = vpack.c.b16 %v1531, %v1527
        %v1612 = vpack.c.b16 %v1532, %v1528
        %v1613 = vpack.c.b16 %v1533, %v1529
        %v1614 = vpack.c.b16 %v1538, %v1534
        %v1615 = vpack.c.b16 %v1539, %v1535
        %v1616 = vpack.c.b16 %v1540, %v1536
        %v1617 = vpack.c.b16 %v1541, %v1537
        %v1618 = vpack.c.b16 %v1546, %v1542
        %v1619 = vpack.c.b16 %v1547, %v1543
        %v1620 = vpack.c.b16 %v1548, %v1544
        %v1621 = vpack.c.b16 %v1549, %v1545
        %v1622 = vpack.c.b16 %v1554, %v1550
        %v1623 = vpack.c.b16 %v1555, %v1551
        %v1624 = vpack.c.b16 %v1556, %v1552
        %v1625 = vpack.c.b16 %v1557, %v1553
        %v1626 = vpack.c.b16 %v1562, %v1558
        %v1627 = vpack.c.b16 %v1563, %v1559
        %v1628 = vpack.c.b16 %v1564, %v1560
        %v1629 = vpack.c.b16 %v1565, %v1561
        %1694 = vmatprep.subr.bf16.mxu0 %v1567
        %1695 = vmatpush1.bf16.msra.mxu0 %v1566
        %1696 = vmatprep.subr.bf16.mxu0 %v1571
        %1697 = vmatpush1.bf16.msra.mxu0 %v1570
        %1698 = vmatprep.subr.bf16.mxu0 %v1575
        %1699 = vmatpush1.bf16.msra.mxu0 %v1574
        %1700 = vmatprep.subr.bf16.mxu0 %v1579
        %1701 = vmatpush1.bf16.msra.mxu0 %v1578
        %1702 = vmatprep.subr.bf16.mxu0 %v1583
        %1703 = vmatpush1.bf16.msra.mxu0 %v1582
        %1704 = vmatprep.subr.bf16.mxu0 %v1587
        %1705 = vmatpush1.bf16.msra.mxu0 %v1586
        %1706 = vmatprep.subr.bf16.mxu0 %v1591
        %1707 = vmatpush1.bf16.msra.mxu0 %v1590
        %1708 = vmatprep.subr.bf16.mxu0 %v1595
        %1709 = vmatpush1.bf16.msra.mxu0 %v1594
        %1710 = vmatprep.subr.bf16.mxu0 %v1599
        %1711 = vmatpush1.bf16.msra.mxu0 %v1598
        %1712 = vmatprep.subr.bf16.mxu0 %v1603
        %1713 = vmatpush1.bf16.msra.mxu0 %v1602
        %1714 = vmatprep.subr.bf16.mxu0 %v1607
        %1715 = vmatpush1.bf16.msra.mxu0 %v1606
        %1716 = vmatprep.subr.bf16.mxu0 %v1611
        %1717 = vmatpush1.bf16.msra.mxu0 %v1610
        %1718 = vmatprep.subr.bf16.mxu0 %v1615
        %1719 = vmatpush1.bf16.msra.mxu0 %v1614
        %1720 = vmatprep.subr.bf16.mxu0 %v1619
        %1721 = vmatpush1.bf16.msra.mxu0 %v1618
        %1722 = vmatprep.subr.bf16.mxu0 %v1623
        %1723 = vmatpush1.bf16.msra.mxu0 %v1622
        %1724 = vmatprep.subr.bf16.mxu0 %v1627
        %1725 = vmatpush1.bf16.msra.mxu0 %v1626
        %1726 = vmatprep.mubr.bf16.mxu0 %v1367
        %1727 = vmatmul.mubr.bf16.gmra.mrb[0].mxu0 %v1366
        %v1728 = vpop.f32.mrb[0].mxu0
        %v1729 = vadd.f32 0.0, %v1728
        %v1730 = vpop.f32.mrb[0].mxu0
        %v1731 = vadd.f32 0.0, %v1730
        %v1732 = vpop.f32.mrb[0].mxu0
        %v1733 = vadd.f32 0.0, %v1732
        %v1734 = vpop.f32.mrb[0].mxu0
        %v1735 = vadd.f32 0.0, %v1734
        %1736 = vmatprep.mubr.bf16.mxu0 %v1369
        %1737 = vmatmul.mubr.bf16.gmra.mrb[0].mxu0 %v1368
        %v1738 = vpop.f32.mrb[0].mxu0
        %v1739 = vadd.f32 0.0, %v1738
        %v1740 = vpop.f32.mrb[0].mxu0
        %v1741 = vadd.f32 0.0, %v1740
        %v1742 = vpop.f32.mrb[0].mxu0
        %v1743 = vpop.f32.mrb[0].mxu0
        %1744 = vdwg.mxu0
        %1745 = vmatprep.subr.bf16.mxu0 %v1569
        %1746 = vmatpush1.bf16.msra.mxu0 %v1568
        %1747 = vmatprep.subr.bf16.mxu0 %v1573
        %1748 = vmatpush1.bf16.msra.mxu0 %v1572
        %1749 = vmatprep.subr.bf16.mxu0 %v1577
        %1750 = vmatpush1.bf16.msra.mxu0 %v1576
        %1751 = vmatprep.subr.bf16.mxu0 %v1581
        %1752 = vmatpush1.bf16.msra.mxu0 %v1580
        %1753 = vmatprep.subr.bf16.mxu0 %v1585
        %1754 = vmatpush1.bf16.msra.mxu0 %v1584
        %1755 = vmatprep.subr.bf16.mxu0 %v1589
        %1756 = vmatpush1.bf16.msra.mxu0 %v1588
        %1757 = vmatprep.subr.bf16.mxu0 %v1593
        %1758 = vmatpush1.bf16.msra.mxu0 %v1592
        %1759 = vmatprep.subr.bf16.mxu0 %v1597
        %1760 = vmatpush1.bf16.msra.mxu0 %v1596
        %1761 = vmatprep.subr.bf16.mxu0 %v1601
        %1762 = vmatpush1.bf16.msra.mxu0 %v1600
        %1763 = vmatprep.subr.bf16.mxu0 %v1605
        %1764 = vmatpush1.bf16.msra.mxu0 %v1604
        %1765 = vmatprep.subr.bf16.mxu0 %v1609
        %1766 = vmatpush1.bf16.msra.mxu0 %v1608
        %1767 = vmatprep.subr.bf16.mxu0 %v1613
        %1768 = vmatpush1.bf16.msra.mxu0 %v1612
        %1769 = vmatprep.subr.bf16.mxu0 %v1617
        %1770 = vmatpush1.bf16.msra.mxu0 %v1616
        %1771 = vmatprep.subr.bf16.mxu0 %v1621
        %1772 = vmatpush1.bf16.msra.mxu0 %v1620
        %1773 = vmatprep.subr.bf16.mxu0 %v1625
        %1774 = vmatpush1.bf16.msra.mxu0 %v1624
        %1775 = vmatprep.subr.bf16.mxu0 %v1629
        %1776 = vmatpush1.bf16.msra.mxu0 %v1628
        %1777 = vmatprep.mubr.bf16.mxu0 %v1367
        %1778 = vmatmul.mubr.bf16.gmra.mrb[0].mxu0 %v1366
        %v1779 = vpop.f32.mrb[0].mxu0
        %v1780 = vadd.f32 0.0, %v1779
        %v1781 = vpop.f32.mrb[0].mxu0
        %v1782 = vadd.f32 0.0, %v1781
        %v1783 = vpop.f32.mrb[0].mxu0
        %v1784 = vadd.f32 0.0, %v1783
        %v1785 = vpop.f32.mrb[0].mxu0
        %v1786 = vadd.f32 0.0, %v1785
        %1787 = vmatprep.mubr.bf16.mxu0 %v1369
        %1788 = vmatmul.mubr.bf16.gmra.mrb[0].mxu0 %v1368
        %v1789 = vpop.f32.mrb[0].mxu0
        %v1790 = vadd.f32 0.0, %v1789
        %v1791 = vpop.f32.mrb[0].mxu0
        %v1792 = vadd.f32 0.0, %v1791
        %v1793 = vpop.f32.mrb[0].mxu0
        %v1794 = vpop.f32.mrb[0].mxu0
        %1795 = vdwg.mxu0
        %v1796 = vadd.f32 %v1218, %v1729
        %v1797 = vadd.f32 %v1220, %v1731
        %v1798 = vadd.f32 %v1269, %v1780
        %v1799 = vadd.f32 %v1271, %v1782
        %v1800 = vadd.f32 %v1222, %v1733
        %v1801 = vadd.f32 %v1224, %v1735
        %v1802 = vadd.f32 %v1273, %v1784
        %v1803 = vadd.f32 %v1275, %v1786
        %v1804 = vadd.f32 %v1228, %v1739
        %v1805 = vadd.f32 %v1230, %v1741
        %v1806 = vadd.f32 %v1279, %v1790
        %v1807 = vadd.f32 %v1281, %v1792
        %s1808 = scalar_lea.vmem [#allocation2], 1536
        %v1809 = vld [vmem:[%s1808] sm:$0xff]
        %v1810 = vld [vmem:[%s1808 + $0x8] sm:$0xff]
        %v1811 = vld [vmem:[%s1808 + $0x10] sm:$0xff]
        %v1812 = vld [vmem:[%s1808 + $0x18] sm:$0xff]
        %v1813 = vld [vmem:[%s1808 + $0x20] sm:$0xff]
        %v1814 = vld [vmem:[%s1808 + $0x28] sm:$0xff]
        %v1815 = vld [vmem:[%s1808 + $0x30] sm:$0xff]
        %v1816 = vld [vmem:[%s1808 + $0x38] sm:$0xff]
        %v1817 = vld [vmem:[%s1808 + $0x40] sm:$0xff]
        %v1818 = vld [vmem:[%s1808 + $0x48] sm:$0xff]
        %v1819 = vld [vmem:[%s1808 + $0x50] sm:$0xff]
        %v1820 = vld [vmem:[%s1808 + $0x58] sm:$0xff]
        %v1821 = vld [vmem:[%s1808 + $0x60] sm:$0xff]
        %v1822 = vld [vmem:[%s1808 + $0x68] sm:$0xff]
        %v1823 = vld [vmem:[%s1808 + $0x70] sm:$0xff]
        %v1824 = vld [vmem:[%s1808 + $0x78] sm:$0xff]
        %v1825 = vld [vmem:[%s1808 + $0x80] sm:$0xff]
        %v1826 = vld [vmem:[%s1808 + $0x88] sm:$0xff]
        %v1827 = vld [vmem:[%s1808 + $0x90] sm:$0xff]
        %v1828 = vld [vmem:[%s1808 + $0x98] sm:$0xff]
        %v1829 = vld [vmem:[%s1808 + $0xa0] sm:$0xff]
        %v1830 = vld [vmem:[%s1808 + $0xa8] sm:$0xff]
        %v1831 = vld [vmem:[%s1808 + $0xb0] sm:$0xff]
        %v1832 = vld [vmem:[%s1808 + $0xb8] sm:$0xff]
        %v1833 = vld [vmem:[%s1808 + $0xc0] sm:$0xff]
        %v1834 = vld [vmem:[%s1808 + $0xc8] sm:$0xff]
        %v1835 = vld [vmem:[%s1808 + $0xd0] sm:$0xff]
        %v1836 = vld [vmem:[%s1808 + $0xd8] sm:$0xff]
        %v1837 = vld [vmem:[%s1808 + $0xe0] sm:$0xff]
        %v1838 = vld [vmem:[%s1808 + $0xe8] sm:$0xff]
        %v1839 = vld [vmem:[%s1808 + $0xf0] sm:$0xff]
        %v1840 = vld [vmem:[%s1808 + $0xf8] sm:$0xff]
        %v1841 = vld [vmem:[%s1808 + $0x100] sm:$0xff]
        %v1842 = vld [vmem:[%s1808 + $0x108] sm:$0xff]
        %v1843 = vld [vmem:[%s1808 + $0x110] sm:$0xff]
        %v1844 = vld [vmem:[%s1808 + $0x118] sm:$0xff]
        %v1845 = vld [vmem:[%s1808 + $0x120] sm:$0xff]
        %v1846 = vld [vmem:[%s1808 + $0x128] sm:$0xff]
        %v1847 = vld [vmem:[%s1808 + $0x130] sm:$0xff]
        %v1848 = vld [vmem:[%s1808 + $0x138] sm:$0xff]
        %v1849 = vld [vmem:[%s1808 + $0x140] sm:$0xff]
        %v1850 = vld [vmem:[%s1808 + $0x148] sm:$0xff]
        %v1851 = vld [vmem:[%s1808 + $0x150] sm:$0xff]
        %v1852 = vld [vmem:[%s1808 + $0x158] sm:$0xff]
        %v1853 = vld [vmem:[%s1808 + $0x160] sm:$0xff]
        %v1854 = vld [vmem:[%s1808 + $0x168] sm:$0xff]
        %v1855 = vld [vmem:[%s1808 + $0x170] sm:$0xff]
        %v1856 = vld [vmem:[%s1808 + $0x178] sm:$0xff]
        %v1857 = vld [vmem:[%s1808 + $0x180] sm:$0xff]
        %v1858 = vld [vmem:[%s1808 + $0x188] sm:$0xff]
        %v1859 = vld [vmem:[%s1808 + $0x190] sm:$0xff]
        %v1860 = vld [vmem:[%s1808 + $0x198] sm:$0xff]
        %v1861 = vld [vmem:[%s1808 + $0x1a0] sm:$0xff]
        %v1862 = vld [vmem:[%s1808 + $0x1a8] sm:$0xff]
        %v1863 = vld [vmem:[%s1808 + $0x1b0] sm:$0xff]
        %v1864 = vld [vmem:[%s1808 + $0x1b8] sm:$0xff]
        %v1865 = vld [vmem:[%s1808 + $0x1c0] sm:$0xff]
        %v1866 = vld [vmem:[%s1808 + $0x1c8] sm:$0xff]
        %v1867 = vld [vmem:[%s1808 + $0x1d0] sm:$0xff]
        %v1868 = vld [vmem:[%s1808 + $0x1d8] sm:$0xff]
        %v1869 = vld [vmem:[%s1808 + $0x1e0] sm:$0xff]
        %v1870 = vld [vmem:[%s1808 + $0x1e8] sm:$0xff]
        %v1871 = vld [vmem:[%s1808 + $0x1f0] sm:$0xff]
        %v1872 = vld [vmem:[%s1808 + $0x1f8] sm:$0xff]
        %v1874 = vunpack.c.l.b16 %v228
        %v1875 = vunpack.c.h.b16 %v228
        %v1876 = vpack.c.b16 %v413, %v1874
        %v1877 = vpack.c.b16 %v414, %v1875
        %v1878 = vpack.c.b16 %v415, %v415
        %v1879 = vpack.c.b16 %v416, %v416
        %v1948 = vunpack.c.l.b16 %v1809
        %v1949 = vunpack.c.h.b16 %v1809
        %v1950 = vunpack.c.l.b16 %v1810
        %v1951 = vunpack.c.h.b16 %v1810
        %v1952 = vunpack.c.l.b16 %v1811
        %v1953 = vunpack.c.h.b16 %v1811
        %v1954 = vunpack.c.l.b16 %v1812
        %v1955 = vunpack.c.h.b16 %v1812
        %v1956 = vunpack.c.l.b16 %v1813
        %v1957 = vunpack.c.h.b16 %v1813
        %v1958 = vunpack.c.l.b16 %v1814
        %v1959 = vunpack.c.h.b16 %v1814
        %v1960 = vunpack.c.l.b16 %v1815
        %v1961 = vunpack.c.h.b16 %v1815
        %v1962 = vunpack.c.l.b16 %v1816
        %v1963 = vunpack.c.h.b16 %v1816
        %v1964 = vunpack.c.l.b16 %v1817
        %v1965 = vunpack.c.h.b16 %v1817
        %v1966 = vunpack.c.l.b16 %v1818
        %v1967 = vunpack.c.h.b16 %v1818
        %v1968 = vunpack.c.l.b16 %v1819
        %v1969 = vunpack.c.h.b16 %v1819
        %v1970 = vunpack.c.l.b16 %v1820
        %v1971 = vunpack.c.h.b16 %v1820
        %v1972 = vunpack.c.l.b16 %v1821
        %v1973 = vunpack.c.h.b16 %v1821
        %v1974 = vunpack.c.l.b16 %v1822
        %v1975 = vunpack.c.h.b16 %v1822
        %v1976 = vunpack.c.l.b16 %v1823
        %v1977 = vunpack.c.h.b16 %v1823
        %v1978 = vunpack.c.l.b16 %v1824
        %v1979 = vunpack.c.h.b16 %v1824
        %v1980 = vunpack.c.l.b16 %v1825
        %v1981 = vunpack.c.h.b16 %v1825
        %v1982 = vunpack.c.l.b16 %v1826
        %v1983 = vunpack.c.h.b16 %v1826
        %v1984 = vunpack.c.l.b16 %v1827
        %v1985 = vunpack.c.h.b16 %v1827
        %v1986 = vunpack.c.l.b16 %v1828
        %v1987 = vunpack.c.h.b16 %v1828
        %v1988 = vunpack.c.l.b16 %v1829
        %v1989 = vunpack.c.h.b16 %v1829
        %v1990 = vunpack.c.l.b16 %v1830
        %v1991 = vunpack.c.h.b16 %v1830
        %v1992 = vunpack.c.l.b16 %v1831
        %v1993 = vunpack.c.h.b16 %v1831
        %v1994 = vunpack.c.l.b16 %v1832
        %v1995 = vunpack.c.h.b16 %v1832
        %v1996 = vunpack.c.l.b16 %v1833
        %v1997 = vunpack.c.h.b16 %v1833
        %v1998 = vunpack.c.l.b16 %v1834
        %v1999 = vunpack.c.h.b16 %v1834
        %v2000 = vunpack.c.l.b16 %v1835
        %v2001 = vunpack.c.h.b16 %v1835
        %v2002 = vunpack.c.l.b16 %v1836
        %v2003 = vunpack.c.h.b16 %v1836
        %v2004 = vunpack.c.l.b16 %v1837
        %v2005 = vunpack.c.h.b16 %v1837
        %v2006 = vunpack.c.l.b16 %v1838
        %v2007 = vunpack.c.h.b16 %v1838
        %v2008 = vunpack.c.l.b16 %v1839
        %v2009 = vunpack.c.h.b16 %v1839
        %v2010 = vunpack.c.l.b16 %v1840
        %v2011 = vunpack.c.h.b16 %v1840
        %v2012 = vunpack.c.l.b16 %v1841
        %v2013 = vunpack.c.h.b16 %v1841
        %v2014 = vunpack.c.l.b16 %v1842
        %v2015 = vunpack.c.h.b16 %v1842
        %v2016 = vunpack.c.l.b16 %v1843
        %v2017 = vunpack.c.h.b16 %v1843
        %v2018 = vunpack.c.l.b16 %v1844
        %v2019 = vunpack.c.h.b16 %v1844
        %v2020 = vunpack.c.l.b16 %v1845
        %v2021 = vunpack.c.h.b16 %v1845
        %v2022 = vunpack.c.l.b16 %v1846
        %v2023 = vunpack.c.h.b16 %v1846
        %v2024 = vunpack.c.l.b16 %v1847
        %v2025 = vunpack.c.h.b16 %v1847
        %v2026 = vunpack.c.l.b16 %v1848
        %v2027 = vunpack.c.h.b16 %v1848
        %v2028 = vunpack.c.l.b16 %v1849
        %v2029 = vunpack.c.h.b16 %v1849
        %v2030 = vunpack.c.l.b16 %v1850
        %v2031 = vunpack.c.h.b16 %v1850
        %v2032 = vunpack.c.l.b16 %v1851
        %v2033 = vunpack.c.h.b16 %v1851
        %v2034 = vunpack.c.l.b16 %v1852
        %v2035 = vunpack.c.h.b16 %v1852
        %v2036 = vunpack.c.l.b16 %v1853
        %v2037 = vunpack.c.h.b16 %v1853
        %v2038 = vunpack.c.l.b16 %v1854
        %v2039 = vunpack.c.h.b16 %v1854
        %v2040 = vunpack.c.l.b16 %v1855
        %v2041 = vunpack.c.h.b16 %v1855
        %v2042 = vunpack.c.l.b16 %v1856
        %v2043 = vunpack.c.h.b16 %v1856
        %v2044 = vunpack.c.l.b16 %v1857
        %v2045 = vunpack.c.h.b16 %v1857
        %v2046 = vunpack.c.l.b16 %v1858
        %v2047 = vunpack.c.h.b16 %v1858
        %v2048 = vunpack.c.l.b16 %v1859
        %v2049 = vunpack.c.h.b16 %v1859
        %v2050 = vunpack.c.l.b16 %v1860
        %v2051 = vunpack.c.h.b16 %v1860
        %v2052 = vunpack.c.l.b16 %v1861
        %v2053 = vunpack.c.h.b16 %v1861
        %v2054 = vunpack.c.l.b16 %v1862
        %v2055 = vunpack.c.h.b16 %v1862
        %v2056 = vunpack.c.l.b16 %v1863
        %v2057 = vunpack.c.h.b16 %v1863
        %v2058 = vunpack.c.l.b16 %v1864
        %v2059 = vunpack.c.h.b16 %v1864
        %v2060 = vunpack.c.l.b16 %v1865
        %v2061 = vunpack.c.h.b16 %v1865
        %v2062 = vunpack.c.l.b16 %v1866
        %v2063 = vunpack.c.h.b16 %v1866
        %v2064 = vunpack.c.l.b16 %v1867
        %v2065 = vunpack.c.h.b16 %v1867
        %v2066 = vunpack.c.l.b16 %v1868
        %v2067 = vunpack.c.h.b16 %v1868
        %v2068 = vunpack.c.l.b16 %v1869
        %v2069 = vunpack.c.h.b16 %v1869
        %v2070 = vunpack.c.l.b16 %v1870
        %v2071 = vunpack.c.h.b16 %v1870
        %v2072 = vunpack.c.l.b16 %v1871
        %v2073 = vunpack.c.h.b16 %v1871
        %v2074 = vunpack.c.l.b16 %v1872
        %v2075 = vunpack.c.h.b16 %v1872
        %v2076 = vpack.c.b16 %v1952, %v1948
        %v2077 = vpack.c.b16 %v1953, %v1949
        %v2078 = vpack.c.b16 %v1954, %v1950
        %v2079 = vpack.c.b16 %v1955, %v1951
        %v2080 = vpack.c.b16 %v1960, %v1956
        %v2081 = vpack.c.b16 %v1961, %v1957
        %v2082 = vpack.c.b16 %v1962, %v1958
        %v2083 = vpack.c.b16 %v1963, %v1959
        %v2084 = vpack.c.b16 %v1968, %v1964
        %v2085 = vpack.c.b16 %v1969, %v1965
        %v2086 = vpack.c.b16 %v1970, %v1966
        %v2087 = vpack.c.b16 %v1971, %v1967
        %v2088 = vpack.c.b16 %v1976, %v1972
        %v2089 = vpack.c.b16 %v1977, %v1973
        %v2090 = vpack.c.b16 %v1978, %v1974
        %v2091 = vpack.c.b16 %v1979, %v1975
        %v2092 = vpack.c.b16 %v1984, %v1980
        %v2093 = vpack.c.b16 %v1985, %v1981
        %v2094 = vpack.c.b16 %v1986, %v1982
        %v2095 = vpack.c.b16 %v1987, %v1983
        %v2096 = vpack.c.b16 %v1992, %v1988
        %v2097 = vpack.c.b16 %v1993, %v1989
        %v2098 = vpack.c.b16 %v1994, %v1990
        %v2099 = vpack.c.b16 %v1995, %v1991
        %v2100 = vpack.c.b16 %v2000, %v1996
        %v2101 = vpack.c.b16 %v2001, %v1997
        %v2102 = vpack.c.b16 %v2002, %v1998
        %v2103 = vpack.c.b16 %v2003, %v1999
        %v2104 = vpack.c.b16 %v2008, %v2004
        %v2105 = vpack.c.b16 %v2009, %v2005
        %v2106 = vpack.c.b16 %v2010, %v2006
        %v2107 = vpack.c.b16 %v2011, %v2007
        %v2108 = vpack.c.b16 %v2016, %v2012
        %v2109 = vpack.c.b16 %v2017, %v2013
        %v2110 = vpack.c.b16 %v2018, %v2014
        %v2111 = vpack.c.b16 %v2019, %v2015
        %v2112 = vpack.c.b16 %v2024, %v2020
        %v2113 = vpack.c.b16 %v2025, %v2021
        %v2114 = vpack.c.b16 %v2026, %v2022
        %v2115 = vpack.c.b16 %v2027, %v2023
        %v2116 = vpack.c.b16 %v2032, %v2028
        %v2117 = vpack.c.b16 %v2033, %v2029
        %v2118 = vpack.c.b16 %v2034, %v2030
        %v2119 = vpack.c.b16 %v2035, %v2031
        %v2120 = vpack.c.b16 %v2040, %v2036
        %v2121 = vpack.c.b16 %v2041, %v2037
        %v2122 = vpack.c.b16 %v2042, %v2038
        %v2123 = vpack.c.b16 %v2043, %v2039
        %v2124 = vpack.c.b16 %v2048, %v2044
        %v2125 = vpack.c.b16 %v2049, %v2045
        %v2126 = vpack.c.b16 %v2050, %v2046
        %v2127 = vpack.c.b16 %v2051, %v2047
        %v2128 = vpack.c.b16 %v2056, %v2052
        %v2129 = vpack.c.b16 %v2057, %v2053
        %v2130 = vpack.c.b16 %v2058, %v2054
        %v2131 = vpack.c.b16 %v2059, %v2055
        %v2132 = vpack.c.b16 %v2064, %v2060
        %v2133 = vpack.c.b16 %v2065, %v2061
        %v2134 = vpack.c.b16 %v2066, %v2062
        %v2135 = vpack.c.b16 %v2067, %v2063
        %v2136 = vpack.c.b16 %v2072, %v2068
        %v2137 = vpack.c.b16 %v2073, %v2069
        %v2138 = vpack.c.b16 %v2074, %v2070
        %v2139 = vpack.c.b16 %v2075, %v2071
        %2204 = vmatprep.subr.bf16.mxu0 %v2077
        %2205 = vmatpush1.bf16.msra.mxu0 %v2076
        %2206 = vmatprep.subr.bf16.mxu0 %v2081
        %2207 = vmatpush1.bf16.msra.mxu0 %v2080
        %2208 = vmatprep.subr.bf16.mxu0 %v2085
        %2209 = vmatpush1.bf16.msra.mxu0 %v2084
        %2210 = vmatprep.subr.bf16.mxu0 %v2089
        %2211 = vmatpush1.bf16.msra.mxu0 %v2088
        %2212 = vmatprep.subr.bf16.mxu0 %v2093
        %2213 = vmatpush1.bf16.msra.mxu0 %v2092
        %2214 = vmatprep.subr.bf16.mxu0 %v2097
        %2215 = vmatpush1.bf16.msra.mxu0 %v2096
        %2216 = vmatprep.subr.bf16.mxu0 %v2101
        %2217 = vmatpush1.bf16.msra.mxu0 %v2100
        %2218 = vmatprep.subr.bf16.mxu0 %v2105
        %2219 = vmatpush1.bf16.msra.mxu0 %v2104
        %2220 = vmatprep.subr.bf16.mxu0 %v2109
        %2221 = vmatpush1.bf16.msra.mxu0 %v2108
        %2222 = vmatprep.subr.bf16.mxu0 %v2113
        %2223 = vmatpush1.bf16.msra.mxu0 %v2112
        %2224 = vmatprep.subr.bf16.mxu0 %v2117
        %2225 = vmatpush1.bf16.msra.mxu0 %v2116
        %2226 = vmatprep.subr.bf16.mxu0 %v2121
        %2227 = vmatpush1.bf16.msra.mxu0 %v2120
        %2228 = vmatprep.subr.bf16.mxu0 %v2125
        %2229 = vmatpush1.bf16.msra.mxu0 %v2124
        %2230 = vmatprep.subr.bf16.mxu0 %v2129
        %2231 = vmatpush1.bf16.msra.mxu0 %v2128
        %2232 = vmatprep.subr.bf16.mxu0 %v2133
        %2233 = vmatpush1.bf16.msra.mxu0 %v2132
        %2234 = vmatprep.subr.bf16.mxu0 %v2137
        %2235 = vmatpush1.bf16.msra.mxu0 %v2136
        %2236 = vmatprep.mubr.bf16.mxu0 %v1877
        %2237 = vmatmul.mubr.bf16.gmra.mrb[0].mxu0 %v1876
        %v2238 = vpop.f32.mrb[0].mxu0
        %v2239 = vadd.f32 0.0, %v2238
        %v2240 = vpop.f32.mrb[0].mxu0
        %v2241 = vadd.f32 0.0, %v2240
        %v2242 = vpop.f32.mrb[0].mxu0
        %v2243 = vadd.f32 0.0, %v2242
        %v2244 = vpop.f32.mrb[0].mxu0
        %v2245 = vadd.f32 0.0, %v2244
        %2246 = vmatprep.mubr.bf16.mxu0 %v1879
        %2247 = vmatmul.mubr.bf16.gmra.mrb[0].mxu0 %v1878
        %v2248 = vpop.f32.mrb[0].mxu0
        %v2249 = vadd.f32 0.0, %v2248
        %v2250 = vpop.f32.mrb[0].mxu0
        %v2251 = vadd.f32 0.0, %v2250
        %v2252 = vpop.f32.mrb[0].mxu0
        %v2253 = vpop.f32.mrb[0].mxu0
        %2254 = vdwg.mxu0
        %2255 = vmatprep.subr.bf16.mxu0 %v2079
        %2256 = vmatpush1.bf16.msra.mxu0 %v2078
        %2257 = vmatprep.subr.bf16.mxu0 %v2083
        %2258 = vmatpush1.bf16.msra.mxu0 %v2082
        %2259 = vmatprep.subr.bf16.mxu0 %v2087
        %2260 = vmatpush1.bf16.msra.mxu0 %v2086
        %2261 = vmatprep.subr.bf16.mxu0 %v2091
        %2262 = vmatpush1.bf16.msra.mxu0 %v2090
        %2263 = vmatprep.subr.bf16.mxu0 %v2095
        %2264 = vmatpush1.bf16.msra.mxu0 %v2094
        %2265 = vmatprep.subr.bf16.mxu0 %v2099
        %2266 = vmatpush1.bf16.msra.mxu0 %v2098
        %2267 = vmatprep.subr.bf16.mxu0 %v2103
        %2268 = vmatpush1.bf16.msra.mxu0 %v2102
        %2269 = vmatprep.subr.bf16.mxu0 %v2107
        %2270 = vmatpush1.bf16.msra.mxu0 %v2106
        %2271 = vmatprep.subr.bf16.mxu0 %v2111
        %2272 = vmatpush1.bf16.msra.mxu0 %v2110
        %2273 = vmatprep.subr.bf16.mxu0 %v2115
        %2274 = vmatpush1.bf16.msra.mxu0 %v2114
        %2275 = vmatprep.subr.bf16.mxu0 %v2119
        %2276 = vmatpush1.bf16.msra.mxu0 %v2118
        %2277 = vmatprep.subr.bf16.mxu0 %v2123
        %2278 = vmatpush1.bf16.msra.mxu0 %v2122
        %2279 = vmatprep.subr.bf16.mxu0 %v2127
        %2280 = vmatpush1.bf16.msra.mxu0 %v2126
        %2281 = vmatprep.subr.bf16.mxu0 %v2131
        %2282 = vmatpush1.bf16.msra.mxu0 %v2130
        %2283 = vmatprep.subr.bf16.mxu0 %v2135
        %2284 = vmatpush1.bf16.msra.mxu0 %v2134
        %2285 = vmatprep.subr.bf16.mxu0 %v2139
        %2286 = vmatpush1.bf16.msra.mxu0 %v2138
        %2287 = vmatprep.mubr.bf16.mxu0 %v1877
        %2288 = vmatmul.mubr.bf16.gmra.mrb[0].mxu0 %v1876
        %v2289 = vpop.f32.mrb[0].mxu0
        %v2290 = vadd.f32 0.0, %v2289
        %v2291 = vpop.f32.mrb[0].mxu0
        %v2292 = vadd.f32 0.0, %v2291
        %v2293 = vpop.f32.mrb[0].mxu0
        %v2294 = vadd.f32 0.0, %v2293
        %v2295 = vpop.f32.mrb[0].mxu0
        %v2296 = vadd.f32 0.0, %v2295
        %2297 = vmatprep.mubr.bf16.mxu0 %v1879
        %2298 = vmatmul.mubr.bf16.gmra.mrb[0].mxu0 %v1878
        %v2299 = vpop.f32.mrb[0].mxu0
        %v2300 = vadd.f32 0.0, %v2299
        %v2301 = vpop.f32.mrb[0].mxu0
        %v2302 = vadd.f32 0.0, %v2301
        %v2303 = vpop.f32.mrb[0].mxu0
        %v2304 = vpop.f32.mrb[0].mxu0
        %2305 = vdwg.mxu0
        %v2306 = vadd.f32 %v1796, %v2239
        %v2307 = vadd.f32 %v1797, %v2241
        %v2308 = vadd.f32 %v1798, %v2290
        %v2309 = vadd.f32 %v1799, %v2292
        %v2310 = vadd.f32 %v1800, %v2243
        %v2311 = vadd.f32 %v1801, %v2245
        %v2312 = vadd.f32 %v1802, %v2294
        %v2313 = vadd.f32 %v1803, %v2296
        %v2314 = vadd.f32 %v1804, %v2249
        %v2315 = vadd.f32 %v1805, %v2251
        %v2316 = vadd.f32 %v1806, %v2300
        %v2317 = vadd.f32 %v1807, %v2302
        %v2318 = vld [vmem:[#allocation4] sm:$0xf]
        %v2320 = vlaneseq
        %v2321 = vshrl.u32 %v2320, 7
        %v2322 = vsub.s32 0, %v2321
        %v2323 = vrot.slane %v2318, %v2322
        %v2324 = vlaneseq
        %v2325 = vshrl.u32 %v2324, 7
        %v2326 = vsub.s32 1, %v2325
        %v2327 = vrot.slane %v2318, %v2326
        %v2328 = vlaneseq
        %v2329 = vshrl.u32 %v2328, 7
        %v2330 = vsub.s32 2, %v2329
        %v2331 = vrot.slane %v2318, %v2330
        %v2332 = vlaneseq
        %v2333 = vshrl.u32 %v2332, 7
        %v2334 = vsub.s32 3, %v2333
        %v2335 = vrot.slane %v2318, %v2334
        %v2340 = vadd.f32 %v2306, %v2323
        %v2341 = vadd.f32 %v2307, %v2327
        %v2342 = vadd.f32 %v2308, %v2331
        %v2343 = vadd.f32 %v2309, %v2335
        %v2344 = vadd.f32 %v2310, %v2323
        %v2345 = vadd.f32 %v2311, %v2327
        %v2346 = vadd.f32 %v2312, %v2331
        %v2347 = vadd.f32 %v2313, %v2335
        %v2348 = vadd.f32 %v2314, %v2323
        %v2349 = vadd.f32 %v2315, %v2327
        %v2350 = vadd.f32 %v2316, %v2331
        %v2351 = vadd.f32 %v2317, %v2335
        %v2352 = vmax.f32 %v2340, 0.0
        %v2353 = vmax.f32 %v2341, 0.0
        %v2354 = vmax.f32 %v2342, 0.0
        %v2355 = vmax.f32 %v2343, 0.0
        %v2356 = vmax.f32 %v2344, 0.0
        %v2357 = vmax.f32 %v2345, 0.0
        %v2358 = vmax.f32 %v2346, 0.0
        %v2359 = vmax.f32 %v2347, 0.0
        %v2360 = vmax.f32 %v2348, 0.0
        %v2361 = vmax.f32 %v2349, 0.0
        %v2362 = vmax.f32 %v2350, 0.0
        %v2363 = vmax.f32 %v2351, 0.0
        %v2364 = vpack.c.bf16 %v2352, %v2352
        %v2365 = vpack.c.bf16 %v2353, %v2353
        %v2366 = vpack.c.bf16 %v2354, %v2354
        %v2367 = vpack.c.bf16 %v2355, %v2355
        %v2368 = vpack.c.bf16 %v2356, %v2356
        %v2369 = vpack.c.bf16 %v2357, %v2357
        %v2370 = vpack.c.bf16 %v2358, %v2358
        %v2371 = vpack.c.bf16 %v2359, %v2359
        %v2372 = vpack.c.bf16 %v2360, %v2360
        %v2373 = vpack.c.bf16 %v2361, %v2361
        %v2374 = vpack.c.bf16 %v2362, %v2362
        %v2375 = vpack.c.bf16 %v2363, %v2363
        %v2388 = vunpack.c.l.b16 %v2364
        %v2389 = vunpack.c.l.b16 %v2365
        %v2390 = vunpack.c.l.b16 %v2366
        %v2391 = vunpack.c.l.b16 %v2367
        %v2392 = vunpack.c.l.b16 %v2368
        %v2393 = vunpack.c.l.b16 %v2369
        %v2394 = vunpack.c.l.b16 %v2370
        %v2395 = vunpack.c.l.b16 %v2371
        %v2396 = vunpack.c.l.b16 %v2372
        %v2397 = vunpack.c.l.b16 %v2373
        %v2398 = vunpack.c.l.b16 %v2374
        %v2399 = vunpack.c.l.b16 %v2375
        %v2400 = vpack.c.b16 %v2389, %v2388
        %v2401 = vpack.c.b16 %v2391, %v2390
        %v2402 = vpack.c.b16 %v2393, %v2392
        %v2403 = vpack.c.b16 %v2395, %v2394
        %v2404 = vpack.c.b16 %v2397, %v2396
        %v2405 = vpack.c.b16 %v2399, %v2398
        %2412 = vst [vmem:[%s222] sm:$0xff] %v2400
        %2413 = vst [vmem:[%s222 + $0x8] sm:$0xff] %v2401
        %2414 = vst [vmem:[%s222 + $0x10] sm:$0xff] %v2402
        %2415 = vst [vmem:[%s222 + $0x18] sm:$0xff] %v2403
        %2416 = vst [vmem:[%s222 + $0x20] sm:$0xff] %v2404
        %2417 = vst [vmem:[%s222 + $0x28] sm:$0xff] %v2405
        %s2418 = smul.u32 3, %s21
        %p2419 = scmp.lt.s32.totalorder %s20, 1
        %s2420 = scalar_select %p2419, %s20, 1
        %p2421 = scmp.lt.s32.totalorder %s2418, 5
        %s2422 = scalar_select %p2421, %s2418, 5
        %s2423 = smul.addr %s2422, 4
        %s2424 = smul.addr %s2420, 24
        %s2425 = sadd.s32 %s2423, %s2424
        %s2426 = smul.addr %s2425, 4
        %s2427 = scalar_lea.vmem %s3, %s2426
        // Predicated region
        $region41: #{conv_decoder_forward.6} parent=31 // pred_check
          %p2428 = pneg %p116
        $region42: #{conv_decoder_forward.6} parent=31 // pred_check_branch
          %2430 = sbr.rel (%p2428) target = $region44
        $region43: #{conv_decoder_forward.6} parent=31 // pred_region
          %s2431 = smul.u32 3, %s21
        $region44: #{conv_decoder_forward.6} parent=31 // pred_fallthru
          _
      $region32: #{conv_decoder_forward.6} parent=5 // pred_fallthru
        _
      %p2432 = scmp.le.s32.totalorder 2, %s11
      // Predicated region
      $region45: #{conv_decoder_forward.6} parent=5 // pred_check
        %p2433 = pneg %p2432
      $region46: #{conv_decoder_forward.6} parent=5 // pred_check_branch
        %2435 = sbr.rel (%p2433) target = $region48
      $region47: #{conv_decoder_forward.6} parent=5 // pred_region
        %s2436 = ssub.s32 %s11, 2
        // Predicated region
        $region49: #{conv_decoder_forward.6} parent=47 // pred_check
          %p2437 = pneg %p122
        $region50: #{conv_decoder_forward.6} parent=47 // pred_check_branch
          %2439 = sbr.rel (%p2437) target = $region52
        $region51: #{conv_decoder_forward.6} parent=47 // pred_region
          %s2440 = smul.u32 3, %s23
          %p2441 = scmp.lt.s32.totalorder %s22, 1
          %s2442 = scalar_select %p2441, %s22, 1
          %p2443 = scmp.lt.s32.totalorder %s2440, 5
          %s2444 = scalar_select %p2443, %s2440, 5
          %s2445 = smul.addr %s2444, 4
          %s2446 = smul.addr %s2442, 24
          %s2447 = sadd.s32 %s2445, %s2446
          %s2448 = smul.addr %s2447, 4
          %s2449 = scalar_lea.vmem %s3, %s2448
        $region52: #{conv_decoder_forward.6} parent=47 // pred_fallthru
          _
      $region48: #{conv_decoder_forward.6} parent=5 // pred_fallthru
        _
    $region6: #{conv_decoder_forward.6} parent=1 // loop_footer
      %s15 = sadd.s32 1, %s11
    $region7: #{conv_decoder_forward.6} parent=1 // loop_footer_branch
      %10 = sbr.rel target = $region3
    $region8: #{conv_decoder_forward.6} parent=1 // loop_exit
      _
    %2450 = vsyncpa [#allocation3], 1
    %s2451 = scalar_lea.sflag [#allocation3], 1
    %2452 = vsyncpa %s2451, 1
    %2453 = vsyncpa [#allocation5], 1

// kernel: conv_decoder_forward.8
$region0: #{conv_decoder_forward.8}
  #allocation0 [shape = 'u32[]', space=smem, size = 0x4, offset = 0x4, fixed_abs, tag = 'smem constant byte address 0x4 - core index']
  #allocation1 [shape = 'u32[144,128]{1,0:T(1,128)}', space=vmem, size = 0x12000, scoped, tag = 'internal scratch']
  %s0 = inlined_call_operand.vmem [shape: bf16[2,25,25,64], index: 0, kind: input, shape index: {}]
  %s1 = inlined_call_operand.vmem [shape: bf16[4,64,128], index: 1, kind: input, shape index: {}]
  %s2 = inlined_call_operand.vmem [shape: f32[1,128], index: 2, kind: input, shape index: {}]
  %s3 = inlined_call_operand.vmem [shape: bf16[2,24,24,128], index: 3, kind: output, shape index: {}]
  %s4 = sld [smem:[#allocation0]]
  $region45: #{conv_decoder_forward.8} parent=0
    _
  %s6 = ssub.s32 1, %s4
  %s7 = scalar_select 0, %s6, %s4
  loop: start=0, step=1, limit=6
  $region2: #{conv_decoder_forward.8} parent=0 // loop_pre_header
    _
  $region3: #{conv_decoder_forward.8} parent=0 // loop_header
    %s9 = sphi 0, %s13
    %p10 = scmp.ge.s32.totalorder %s9, 6
    %s16 = sphi 0, %s28
    %s17 = sphi 0, %s24
    %s18 = sphi 0, %s16
    %s19 = sphi 0, %s17
    %s20 = sphi 0, %s18
    %s21 = sphi 0, %s19
    %s31 = sphi 0, %s33
    %s34 = sphi 0, %s31
    %s35 = sphi 0, %s34
    %s51 = sphi 0, %s35
    %s55 = sphi 0, %s55
    %s57 = sphi 0, %s55
    %s58 = sphi 0, %s57
    %s72 = sphi 0, %s58
    %s76 = sphi 0, %s76
    %s78 = sphi 0, %s76
    %s79 = sphi 0, %s78
    %s93 = sphi 0, %s79
    %s101 = sphi 0, %s103
    %s104 = sphi 0, %s101
    %s105 = sphi 0, %s104
    %s121 = sphi 0, %s105
  $region4: #{conv_decoder_forward.8} parent=0 // loop_header_branch
    %12 = sbr.rel (%p10) target = $region8
  $region5: #{conv_decoder_forward.8} parent=0 // loop_body
    %s14 = ssub.s32 %s9, 1
    %s15 = ssub.s32 %s9, 2
    %s22 = sadd.s32 1, %s17
    %p23 = scmp.ge.s32.totalorder %s22, 2
    %s24 = scalar_select %p23, 0, %s22
    %s25 = sadd.s32 1, %s16
    %s26 = scalar_select %p23, %s25, %s16
    %p27 = scmp.ge.s32.totalorder %s26, 2
    %s28 = scalar_select %p27, 0, %s26
    %s29 = ssub.s32 %s16, %s28
    %p30 = scmp.eq.s32.totalorder %s29, 0
    %s32 = sadd.s32 %s31, 1
    %s33 = scalar_select %p30, %s31, %s32
    %p36 = pneg %p30
    %p37 = scmp.eq.s32.totalorder %s9, 3
    %p38 = por %p36, %p37
    %p39 = scmp.ne.s32.totalorder %s31, %s34
    %p40 = scmp.eq.s32.totalorder %s9, 0
    %p41 = por %p39, %p40
    %p42 = scmp.ne.s32.totalorder %s31, %s34
    %p43 = scmp.eq.s32.totalorder %s14, 3
    %p44 = por %p42, %p43
    %p45 = scmp.ne.s32.totalorder %s34, %s35
    %p46 = scmp.eq.s32.totalorder %s14, 0
    %p47 = por %p45, %p46
    %p48 = scmp.ne.s32.totalorder %s34, %s35
    %p49 = scmp.eq.s32.totalorder %s15, 3
    %p50 = por %p48, %p49
    %p52 = scmp.ne.s32.totalorder %s35, %s51
    %p53 = scmp.eq.s32.totalorder %s15, 0
    %p54 = por %p52, %p53
    %s56 = sadd.s32 %s55, 1
    %p59 = scmp.eq.s32.totalorder %s9, 3
    %p60 = scmp.ne.s32.totalorder %s55, %s57
    %p61 = scmp.eq.s32.totalorder %s9, 0
    %p62 = por %p60, %p61
    %p63 = scmp.ne.s32.totalorder %s55, %s57
    %p64 = scmp.eq.s32.totalorder %s14, 3
    %p65 = por %p63, %p64
    %p66 = scmp.ne.s32.totalorder %s57, %s58
    %p67 = scmp.eq.s32.totalorder %s14, 0
    %p68 = por %p66, %p67
    %p69 = scmp.ne.s32.totalorder %s57, %s58
    %p70 = scmp.eq.s32.totalorder %s15, 3
    %p71 = por %p69, %p70
    %p73 = scmp.ne.s32.totalorder %s58, %s72
    %p74 = scmp.eq.s32.totalorder %s15, 0
    %p75 = por %p73, %p74
    %s77 = sadd.s32 %s76, 1
    %p80 = scmp.eq.s32.totalorder %s9, 3
    %p81 = scmp.ne.s32.totalorder %s76, %s78
    %p82 = scmp.eq.s32.totalorder %s9, 0
    %p83 = por %p81, %p82
    %p84 = scmp.ne.s32.totalorder %s76, %s78
    %p85 = scmp.eq.s32.totalorder %s14, 3
    %p86 = por %p84, %p85
    %p87 = scmp.ne.s32.totalorder %s78, %s79
    %p88 = scmp.eq.s32.totalorder %s14, 0
    %p89 = por %p87, %p88
    %p90 = scmp.ne.s32.totalorder %s78, %s79
    %p91 = scmp.eq.s32.totalorder %s15, 3
    %p92 = por %p90, %p91
    %p94 = scmp.ne.s32.totalorder %s79, %s93
    %p95 = scmp.eq.s32.totalorder %s15, 0
    %p96 = por %p94, %p95
    %s97 = ssub.s32 %s16, %s28
    %s98 = ssub.s32 %s17, %s24
    %s99 = sor.u32 %s97, %s98
    %p100 = scmp.eq.s32.totalorder %s99, 0
    %s102 = sadd.s32 %s101, 1
    %s103 = scalar_select %p100, %s101, %s102
    %p106 = pneg %p100
    %p107 = scmp.eq.s32.totalorder %s9, 3
    %p108 = por %p106, %p107
    %p109 = scmp.ne.s32.totalorder %s101, %s104
    %p110 = scmp.eq.s32.totalorder %s9, 0
    %p111 = por %p109, %p110
    %p112 = scmp.ne.s32.totalorder %s101, %s104
    %p113 = scmp.eq.s32.totalorder %s14, 3
    %p114 = por %p112, %p113
    %p115 = scmp.ne.s32.totalorder %s104, %s105
    %p116 = scmp.eq.s32.totalorder %s14, 0
    %p117 = por %p115, %p116
    %p118 = scmp.ne.s32.totalorder %s104, %s105
    %p119 = scmp.eq.s32.totalorder %s15, 3
    %p120 = por %p118, %p119
    %p122 = scmp.ne.s32.totalorder %s105, %s121
    %p123 = scmp.eq.s32.totalorder %s15, 0
    %p124 = por %p122, %p123
    %p125 = scmp.le.s32.totalorder 1, %s9
    %p126 = scmp.lt.s32.totalorder %s9, 5
    %p127 = pnand %p125, %p126
    %p128 = pneg %p127
    // Predicated region
    $region9: #{conv_decoder_forward.8} parent=5 // pred_check
      _
    $region10: #{conv_decoder_forward.8} parent=5 // pred_check_branch
      %130 = sbr.rel (%p127) target = $region12
    $region11: #{conv_decoder_forward.8} parent=5 // pred_region
      %s131 = ssub.s32 %s9, 1
      // Predicated region
      $region13: #{conv_decoder_forward.8} parent=11 // pred_check
        %p132 = pneg %p68
      $region14: #{conv_decoder_forward.8} parent=11 // pred_check_branch
        %134 = sbr.rel (%p132) target = $region16
      $region15: #{conv_decoder_forward.8} parent=11 // pred_region
        _
      $region16: #{conv_decoder_forward.8} parent=11 // pred_fallthru
        _
      // Predicated region
      $region17: #{conv_decoder_forward.8} parent=11 // pred_check
        %p135 = pneg %p89
      $region18: #{conv_decoder_forward.8} parent=11 // pred_check_branch
        %137 = sbr.rel (%p135) target = $region20
      $region19: #{conv_decoder_forward.8} parent=11 // pred_region
        _
      $region20: #{conv_decoder_forward.8} parent=11 // pred_fallthru
        _
    $region12: #{conv_decoder_forward.8} parent=5 // pred_fallthru
      _
    %p138 = scmp.lt.s32.totalorder %s9, 4
    // Predicated region
    $region21: #{conv_decoder_forward.8} parent=5 // pred_check
      %p139 = pneg %p138
    $region22: #{conv_decoder_forward.8} parent=5 // pred_check_branch
      %141 = sbr.rel (%p139) target = $region24
    $region23: #{conv_decoder_forward.8} parent=5 // pred_region
      // Predicated region
      $region25: #{conv_decoder_forward.8} parent=23 // pred_check
        %p142 = pneg %p41
      $region26: #{conv_decoder_forward.8} parent=23 // pred_check_branch
        %144 = sbr.rel (%p142) target = $region28
      $region27: #{conv_decoder_forward.8} parent=23 // pred_region
        %p145 = scmp.lt.s32.totalorder %s16, 1
        %s146 = scalar_select %p145, %s16, 1
        %s147 = smul.addr %s146, 100
        %s148 = smul.addr %s147, 4
        %s149 = scalar_lea.vmem %s0, %s148
      $region28: #{conv_decoder_forward.8} parent=23 // pred_fallthru
        _
    $region24: #{conv_decoder_forward.8} parent=5 // pred_fallthru
      _
    %p150 = scmp.le.s32.totalorder 1, %s9
    %p151 = scmp.lt.s32.totalorder %s9, 5
    %p152 = pnand %p150, %p151
    %p153 = pneg %p152
    // Predicated region
    $region29: #{conv_decoder_forward.8} parent=5 // pred_check
      _
    $region30: #{conv_decoder_forward.8} parent=5 // pred_check_branch
      %155 = sbr.rel (%p152) target = $region32
    $region31: #{conv_decoder_forward.8} parent=5 // pred_region
      %s156 = ssub.s32 %s9, 1
      %p157 = scmp.lt.s32.totalorder %s18, 1
      %s158 = scalar_select %p157, %s18, 1
      %s159 = smul.addr %s158, 100
      %s160 = smul.addr %s159, 4
      %s161 = scalar_lea.vmem %s0, %s160
      %p162 = pneg %p47
      %p163 = pneg %p44
      %p164 = pneg %p68
      %p165 = pneg %p65
      %p166 = pneg %p89
      %p167 = pneg %p86
      %p168 = pneg %p117
      %p169 = pneg %p114
      %s170 = smul.u32 12, %s19
      %p171 = scmp.lt.s32.totalorder %s18, 1
      %s172 = scalar_select %p171, %s18, 1
      %p173 = scmp.lt.s32.totalorder %s170, 23
      %s174 = scalar_select %p173, %s170, 23
      %s175 = smul.addr %s174, 3
      %s176 = smul.addr %s172, 72
      %s177 = sadd.s32 %s175, %s176
      %s178 = smul.addr %s177, 4
      %s179 = scalar_lea.vmem %s3, %s178
      %p180 = scmp.lt.s32.totalorder %s18, 1
      %s181 = scalar_select %p180, %s18, 1
      %s182 = smul.addr %s181, 100
      %s183 = smul.addr %s182, 4
      %s184 = scalar_lea.vmem %s0, %s183
      %s185 = smul.u32 12, %s19
      %p186 = scmp.lt.s32.totalorder %s18, 1
      %s187 = scalar_select %p186, %s18, 1
      %p188 = scmp.lt.s32.totalorder %s185, 23
      %s189 = scalar_select %p188, %s185, 23
      %s190 = smul.addr %s189, 3
      %s191 = smul.addr %s187, 72
      %s192 = sadd.s32 %s190, %s191
      %s193 = smul.addr %s192, 4
      %s194 = scalar_lea.vmem %s3, %s193
      %s195 = smul.u32 12, %s19
      %s197 = smul.u32 %s19, 12
      %s198 = smul.u32 %s197, 4
      %s199 = smul.addr %s198, 4
      %s200 = scalar_lea.vmem %s184, %s199
      %v201 = vld [vmem:[%s200] sm:$0xf]
      %v202 = vld [vmem:[%s200 + $0x4] sm:$0xf]
      %v203 = vld [vmem:[%s200 + $0x8] sm:$0xf]
      %v204 = vld [vmem:[%s200 + $0xc] sm:$0x1]
      %v205 = vld [vmem:[%s200 + $0x10] sm:$0xf]
      %v206 = vld [vmem:[%s200 + $0x14] sm:$0xf]
      %v207 = vld [vmem:[%s200 + $0x18] sm:$0xf]
      %v208 = vld [vmem:[%s200 + $0x1c] sm:$0x1]
      %v209 = vld [vmem:[%s200 + $0x20] sm:$0xf]
      %v210 = vld [vmem:[%s200 + $0x24] sm:$0xf]
      %v211 = vld [vmem:[%s200 + $0x28] sm:$0xf]
      %v212 = vld [vmem:[%s200 + $0x2c] sm:$0x1]
      %v213 = vld [vmem:[%s200 + $0x30] sm:$0xf]
      %v214 = vld [vmem:[%s200 + $0x34] sm:$0xf]
      %v215 = vld [vmem:[%s200 + $0x38] sm:$0xf]
      %v216 = vld [vmem:[%s200 + $0x3c] sm:$0x1]
      %v217 = vld [vmem:[%s200 + $0x40] sm:$0xf]
      %v218 = vld [vmem:[%s200 + $0x44] sm:$0xf]
      %v219 = vld [vmem:[%s200 + $0x48] sm:$0xf]
      %v220 = vld [vmem:[%s200 + $0x4c] sm:$0x1]
      %v221 = vld [vmem:[%s200 + $0x50] sm:$0xf]
      %v222 = vld [vmem:[%s200 + $0x54] sm:$0xf]
      %v223 = vld [vmem:[%s200 + $0x58] sm:$0xf]
      %v224 = vld [vmem:[%s200 + $0x5c] sm:$0x1]
      %v225 = vld [vmem:[%s200 + $0x60] sm:$0xf]
      %v226 = vld [vmem:[%s200 + $0x64] sm:$0xf]
      %v227 = vld [vmem:[%s200 + $0x68] sm:$0xf]
      %v228 = vld [vmem:[%s200 + $0x6c] sm:$0x1]
      %v229 = vld [vmem:[%s200 + $0x70] sm:$0xf]
      %v230 = vld [vmem:[%s200 + $0x74] sm:$0xf]
      %v231 = vld [vmem:[%s200 + $0x78] sm:$0xf]
      %v232 = vld [vmem:[%s200 + $0x7c] sm:$0x1]
      %v233 = vld [vmem:[%s200 + $0x80] sm:$0xf]
      %v234 = vld [vmem:[%s200 + $0x84] sm:$0xf]
      %v235 = vld [vmem:[%s200 + $0x88] sm:$0xf]
      %v236 = vld [vmem:[%s200 + $0x8c] sm:$0x1]
      %v237 = vld [vmem:[%s200 + $0x90] sm:$0xf]
      %v238 = vld [vmem:[%s200 + $0x94] sm:$0xf]
      %v239 = vld [vmem:[%s200 + $0x98] sm:$0xf]
      %v240 = vld [vmem:[%s200 + $0x9c] sm:$0x1]
      %v241 = vld [vmem:[%s200 + $0xa0] sm:$0xf]
      %v242 = vld [vmem:[%s200 + $0xa4] sm:$0xf]
      %v243 = vld [vmem:[%s200 + $0xa8] sm:$0xf]
      %v244 = vld [vmem:[%s200 + $0xac] sm:$0x1]
      %v245 = vld [vmem:[%s200 + $0xb0] sm:$0xf]
      %v246 = vld [vmem:[%s200 + $0xb4] sm:$0xf]
      %v247 = vld [vmem:[%s200 + $0xb8] sm:$0xf]
      %v248 = vld [vmem:[%s200 + $0xbc] sm:$0x1]
      %v249 = vld [vmem:[%s200 + $0xc0] sm:$0xf]
      %v250 = vld [vmem:[%s200 + $0xc4] sm:$0xf]
      %v251 = vld [vmem:[%s200 + $0xc8] sm:$0xf]
      %v252 = vld [vmem:[%s200 + $0xcc] sm:$0x1]
      %vm253 = vsmask.f32 3328
      %vm254 = vsmask.f32 7440
      %vm255 = vmor %vm253, %vm254
      %v257 = vshrl.u32 %v205, 16
      %v259 = vrot.slane %v257, 4
      %v260 = vshll.u32 %v205, 16
      %v262 = vrot.slane %v260, 5
      %v263 = vor.u32 %v259, %v262
      %v264 = vrot.slane %v263, 4
      %v266 = vshll.u32 %v206, 16
      %v268 = vrot.slane %v266, 5
      %v269 = vsel %vm255, %v264, %v268
      %v270 = vshrl.u32 %v206, 16
      %v272 = vrot.slane %v270, 4
      %v273 = vor.u32 %v272, %v268
      %v274 = vrot.slane %v273, 4
      %v276 = vshll.u32 %v207, 16
      %v278 = vrot.slane %v276, 5
      %v279 = vsel %vm255, %v274, %v278
      %v280 = vshrl.u32 %v207, 16
      %v282 = vrot.slane %v280, 4
      %v283 = vor.u32 %v282, %v278
      %v284 = vrot.slane %v283, 4
      %v286 = vshll.u32 %v208, 16
      %v288 = vrot.slane %v286, 5
      %v289 = vsel %vm255, %v284, %v288
      %v291 = vshrl.u32 %v209, 16
      %v293 = vrot.slane %v291, 4
      %v294 = vshll.u32 %v209, 16
      %v296 = vrot.slane %v294, 5
      %v297 = vor.u32 %v293, %v296
      %v298 = vrot.slane %v297, 4
      %v300 = vshll.u32 %v210, 16
      %v302 = vrot.slane %v300, 5
      %v303 = vsel %vm255, %v298, %v302
      %v304 = vshrl.u32 %v210, 16
      %v306 = vrot.slane %v304, 4
      %v307 = vor.u32 %v306, %v302
      %v308 = vrot.slane %v307, 4
      %v310 = vshll.u32 %v211, 16
      %v312 = vrot.slane %v310, 5
      %v313 = vsel %vm255, %v308, %v312
      %v314 = vshrl.u32 %v211, 16
      %v316 = vrot.slane %v314, 4
      %v317 = vor.u32 %v316, %v312
      %v318 = vrot.slane %v317, 4
      %v320 = vshll.u32 %v212, 16
      %v322 = vrot.slane %v320, 5
      %v323 = vsel %vm255, %v318, %v322
      %v325 = vshrl.u32 %v213, 16
      %v327 = vrot.slane %v325, 4
      %v328 = vshll.u32 %v213, 16
      %v330 = vrot.slane %v328, 5
      %v331 = vor.u32 %v327, %v330
      %v332 = vrot.slane %v331, 4
      %v334 = vshll.u32 %v214, 16
      %v336 = vrot.slane %v334, 5
      %v337 = vsel %vm255, %v332, %v336
      %v338 = vshrl.u32 %v214, 16
      %v340 = vrot.slane %v338, 4
      %v341 = vor.u32 %v340, %v336
      %v342 = vrot.slane %v341, 4
      %v344 = vshll.u32 %v215, 16
      %v346 = vrot.slane %v344, 5
      %v347 = vsel %vm255, %v342, %v346
      %v348 = vshrl.u32 %v215, 16
      %v350 = vrot.slane %v348, 4
      %v351 = vor.u32 %v350, %v346
      %v352 = vrot.slane %v351, 4
      %v354 = vshll.u32 %v216, 16
      %v356 = vrot.slane %v354, 5
      %v357 = vsel %vm255, %v352, %v356
      %v359 = vshrl.u32 %v217, 16
      %v361 = vrot.slane %v359, 4
      %v362 = vshll.u32 %v217, 16
      %v364 = vrot.slane %v362, 5
      %v365 = vor.u32 %v361, %v364
      %v366 = vrot.slane %v365, 4
      %v368 = vshll.u32 %v218, 16
      %v370 = vrot.slane %v368, 5
      %v371 = vsel %vm255, %v366, %v370
      %v372 = vshrl.u32 %v218, 16
      %v374 = vrot.slane %v372, 4
      %v375 = vor.u32 %v374, %v370
      %v376 = vrot.slane %v375, 4
      %v378 = vshll.u32 %v219, 16
      %v380 = vrot.slane %v378, 5
      %v381 = vsel %vm255, %v376, %v380
      %v382 = vshrl.u32 %v219, 16
      %v384 = vrot.slane %v382, 4
      %v385 = vor.u32 %v384, %v380
      %v386 = vrot.slane %v385, 4
      %v388 = vshll.u32 %v220, 16
      %v390 = vrot.slane %v388, 5
      %v391 = vsel %vm255, %v386, %v390
      %v393 = vshrl.u32 %v221, 16
      %v395 = vrot.slane %v393, 4
      %v396 = vshll.u32 %v221, 16
      %v398 = vrot.slane %v396, 5
      %v399 = vor.u32 %v395, %v398
      %v400 = vrot.slane %v399, 4
      %v402 = vshll.u32 %v222, 16
      %v404 = vrot.slane %v402, 5
      %v405 = vsel %vm255, %v400, %v404
      %v406 = vshrl.u32 %v222, 16
      %v408 = vrot.slane %v406, 4
      %v409 = vor.u32 %v408, %v404
      %v410 = vrot.slane %v409, 4
      %v412 = vshll.u32 %v223, 16
      %v414 = vrot.slane %v412, 5
      %v415 = vsel %vm255, %v410, %v414
      %v416 = vshrl.u32 %v223, 16
      %v418 = vrot.slane %v416, 4
      %v419 = vor.u32 %v418, %v414
      %v420 = vrot.slane %v419, 4
      %v422 = vshll.u32 %v224, 16
      %v424 = vrot.slane %v422, 5
      %v425 = vsel %vm255, %v420, %v424
      %v427 = vshrl.u32 %v225, 16
      %v429 = vrot.slane %v427, 4
      %v430 = vshll.u32 %v225, 16
      %v432 = vrot.slane %v430, 5
      %v433 = vor.u32 %v429, %v432
      %v434 = vrot.slane %v433, 4
      %v436 = vshll.u32 %v226, 16
      %v438 = vrot.slane %v436, 5
      %v439 = vsel %vm255, %v434, %v438
      %v440 = vshrl.u32 %v226, 16
      %v442 = vrot.slane %v440, 4
      %v443 = vor.u32 %v442, %v438
      %v444 = vrot.slane %v443, 4
      %v446 = vshll.u32 %v227, 16
      %v448 = vrot.slane %v446, 5
      %v449 = vsel %vm255, %v444, %v448
      %v450 = vshrl.u32 %v227, 16
      %v452 = vrot.slane %v450, 4
      %v453 = vor.u32 %v452, %v448
      %v454 = vrot.slane %v453, 4
      %v456 = vshll.u32 %v228, 16
      %v458 = vrot.slane %v456, 5
      %v459 = vsel %vm255, %v454, %v458
      %v461 = vshrl.u32 %v229, 16
      %v463 = vrot.slane %v461, 4
      %v464 = vshll.u32 %v229, 16
      %v466 = vrot.slane %v464, 5
      %v467 = vor.u32 %v463, %v466
      %v468 = vrot.slane %v467, 4
      %v470 = vshll.u32 %v230, 16
      %v472 = vrot.slane %v470, 5
      %v473 = vsel %vm255, %v468, %v472
      %v474 = vshrl.u32 %v230, 16
      %v476 = vrot.slane %v474, 4
      %v477 = vor.u32 %v476, %v472
      %v478 = vrot.slane %v477, 4
      %v480 = vshll.u32 %v231, 16
      %v482 = vrot.slane %v480, 5
      %v483 = vsel %vm255, %v478, %v482
      %v484 = vshrl.u32 %v231, 16
      %v486 = vrot.slane %v484, 4
      %v487 = vor.u32 %v486, %v482
      %v488 = vrot.slane %v487, 4
      %v490 = vshll.u32 %v232, 16
      %v492 = vrot.slane %v490, 5
      %v493 = vsel %vm255, %v488, %v492
      %v495 = vshrl.u32 %v233, 16
      %v497 = vrot.slane %v495, 4
      %v498 = vshll.u32 %v233, 16
      %v500 = vrot.slane %v498, 5
      %v501 = vor.u32 %v497, %v500
      %v502 = vrot.slane %v501, 4
      %v504 = vshll.u32 %v234, 16
      %v506 = vrot.slane %v504, 5
      %v507 = vsel %vm255, %v502, %v506
      %v508 = vshrl.u32 %v234, 16
      %v510 = vrot.slane %v508, 4
      %v511 = vor.u32 %v510, %v506
      %v512 = vrot.slane %v511, 4
      %v514 = vshll.u32 %v235, 16
      %v516 = vrot.slane %v514, 5
      %v517 = vsel %vm255, %v512, %v516
      %v518 = vshrl.u32 %v235, 16
      %v520 = vrot.slane %v518, 4
      %v521 = vor.u32 %v520, %v516
      %v522 = vrot.slane %v521, 4
      %v524 = vshll.u32 %v236, 16
      %v526 = vrot.slane %v524, 5
      %v527 = vsel %vm255, %v522, %v526
      %v529 = vshrl.u32 %v237, 16
      %v531 = vrot.slane %v529, 4
      %v532 = vshll.u32 %v237, 16
      %v534 = vrot.slane %v532, 5
      %v535 = vor.u32 %v531, %v534
      %v536 = vrot.slane %v535, 4
      %v538 = vshll.u32 %v238, 16
      %v540 = vrot.slane %v538, 5
      %v541 = vsel %vm255, %v536, %v540
      %v542 = vshrl.u32 %v238, 16
      %v544 = vrot.slane %v542, 4
      %v545 = vor.u32 %v544, %v540
      %v546 = vrot.slane %v545, 4
      %v548 = vshll.u32 %v239, 16
      %v550 = vrot.slane %v548, 5
      %v551 = vsel %vm255, %v546, %v550
      %v552 = vshrl.u32 %v239, 16
      %v554 = vrot.slane %v552, 4
      %v555 = vor.u32 %v554, %v550
      %v556 = vrot.slane %v555, 4
      %v558 = vshll.u32 %v240, 16
      %v560 = vrot.slane %v558, 5
      %v561 = vsel %vm255, %v556, %v560
      %v563 = vshrl.u32 %v241, 16
      %v565 = vrot.slane %v563, 4
      %v566 = vshll.u32 %v241, 16
      %v568 = vrot.slane %v566, 5
      %v569 = vor.u32 %v565, %v568
      %v570 = vrot.slane %v569, 4
      %v572 = vshll.u32 %v242, 16
      %v574 = vrot.slane %v572, 5
      %v575 = vsel %vm255, %v570, %v574
      %v576 = vshrl.u32 %v242, 16
      %v578 = vrot.slane %v576, 4
      %v579 = vor.u32 %v578, %v574
      %v580 = vrot.slane %v579, 4
      %v582 = vshll.u32 %v243, 16
      %v584 = vrot.slane %v582, 5
      %v585 = vsel %vm255, %v580, %v584
      %v586 = vshrl.u32 %v243, 16
      %v588 = vrot.slane %v586, 4
      %v589 = vor.u32 %v588, %v584
      %v590 = vrot.slane %v589, 4
      %v592 = vshll.u32 %v244, 16
      %v594 = vrot.slane %v592, 5
      %v595 = vsel %vm255, %v590, %v594
      %v597 = vshrl.u32 %v245, 16
      %v599 = vrot.slane %v597, 4
      %v600 = vshll.u32 %v245, 16
      %v602 = vrot.slane %v600, 5
      %v603 = vor.u32 %v599, %v602
      %v604 = vrot.slane %v603, 4
      %v606 = vshll.u32 %v246, 16
      %v608 = vrot.slane %v606, 5
      %v609 = vsel %vm255, %v604, %v608
      %v610 = vshrl.u32 %v246, 16
      %v612 = vrot.slane %v610, 4
      %v613 = vor.u32 %v612, %v608
      %v614 = vrot.slane %v613, 4
      %v616 = vshll.u32 %v247, 16
      %v618 = vrot.slane %v616, 5
      %v619 = vsel %vm255, %v614, %v618
      %v620 = vshrl.u32 %v247, 16
      %v622 = vrot.slane %v620, 4
      %v623 = vor.u32 %v622, %v618
      %v624 = vrot.slane %v623, 4
      %v626 = vshll.u32 %v248, 16
      %v628 = vrot.slane %v626, 5
      %v629 = vsel %vm255, %v624, %v628
      %v631 = vshrl.u32 %v249, 16
      %v633 = vrot.slane %v631, 4
      %v634 = vshll.u32 %v249, 16
      %v636 = vrot.slane %v634, 5
      %v637 = vor.u32 %v633, %v636
      %v638 = vrot.slane %v637, 4
      %v640 = vshll.u32 %v250, 16
      %v642 = vrot.slane %v640, 5
      %v643 = vsel %vm255, %v638, %v642
      %v644 = vshrl.u32 %v250, 16
      %v646 = vrot.slane %v644, 4
      %v647 = vor.u32 %v646, %v642
      %v648 = vrot.slane %v647, 4
      %v650 = vshll.u32 %v251, 16
      %v652 = vrot.slane %v650, 5
      %v653 = vsel %vm255, %v648, %v652
      %v654 = vshrl.u32 %v251, 16
      %v656 = vrot.slane %v654, 4
      %v657 = vor.u32 %v656, %v652
      %v658 = vrot.slane %v657, 4
      %v660 = vshll.u32 %v252, 16
      %v662 = vrot.slane %v660, 5
      %v663 = vsel %vm255, %v658, %v662
      %v664 = vld [vmem:[%s1] sm:$0xf]
      %v665 = vld [vmem:[%s1 + $0x4] sm:$0xf]
      %v666 = vld [vmem:[%s1 + $0x8] sm:$0xf]
      %v667 = vld [vmem:[%s1 + $0xc] sm:$0xf]
      %v668 = vld [vmem:[%s1 + $0x10] sm:$0xf]
      %v669 = vld [vmem:[%s1 + $0x14] sm:$0xf]
      %v670 = vld [vmem:[%s1 + $0x18] sm:$0xf]
      %v671 = vld [vmem:[%s1 + $0x1c] sm:$0xf]
      %s672 = scalar_lea.vmem %s1, 32
      %v673 = vld [vmem:[%s672] sm:$0xf]
      %v674 = vld [vmem:[%s672 + $0x4] sm:$0xf]
      %v675 = vld [vmem:[%s672 + $0x8] sm:$0xf]
      %v676 = vld [vmem:[%s672 + $0xc] sm:$0xf]
      %v677 = vld [vmem:[%s672 + $0x10] sm:$0xf]
      %v678 = vld [vmem:[%s672 + $0x14] sm:$0xf]
      %v679 = vld [vmem:[%s672 + $0x18] sm:$0xf]
      %v680 = vld [vmem:[%s672 + $0x1c] sm:$0xf]
      %v717 = vunpack.c.l.b16 %v205
      %v718 = vunpack.c.l.b16 %v206
      %v719 = vunpack.c.l.b16 %v207
      %v720 = vunpack.c.l.b16 %v209
      %v721 = vunpack.c.l.b16 %v210
      %v722 = vunpack.c.l.b16 %v211
      %v723 = vunpack.c.l.b16 %v213
      %v724 = vunpack.c.l.b16 %v214
      %v725 = vunpack.c.l.b16 %v215
      %v726 = vunpack.c.l.b16 %v217
      %v727 = vunpack.c.l.b16 %v218
      %v728 = vunpack.c.l.b16 %v219
      %v729 = vunpack.c.l.b16 %v221
      %v730 = vunpack.c.l.b16 %v222
      %v731 = vunpack.c.l.b16 %v223
      %v732 = vunpack.c.l.b16 %v225
      %v733 = vunpack.c.l.b16 %v226
      %v734 = vunpack.c.l.b16 %v227
      %v735 = vunpack.c.l.b16 %v229
      %v736 = vunpack.c.l.b16 %v230
      %v737 = vunpack.c.l.b16 %v231
      %v738 = vunpack.c.l.b16 %v233
      %v739 = vunpack.c.l.b16 %v234
      %v740 = vunpack.c.l.b16 %v235
      %v741 = vunpack.c.l.b16 %v237
      %v742 = vunpack.c.l.b16 %v238
      %v743 = vunpack.c.l.b16 %v239
      %v744 = vunpack.c.l.b16 %v241
      %v745 = vunpack.c.l.b16 %v242
      %v746 = vunpack.c.l.b16 %v243
      %v747 = vunpack.c.l.b16 %v245
      %v748 = vunpack.c.l.b16 %v246
      %v749 = vunpack.c.l.b16 %v247
      %v750 = vunpack.c.l.b16 %v249
      %v751 = vunpack.c.l.b16 %v250
      %v752 = vunpack.c.l.b16 %v251
      %v753 = vpack.c.b16 %v718, %v717
      %v754 = vpack.c.b16 %v720, %v719
      %v755 = vpack.c.b16 %v722, %v721
      %v756 = vpack.c.b16 %v724, %v723
      %v757 = vpack.c.b16 %v726, %v725
      %v758 = vpack.c.b16 %v728, %v727
      %v759 = vpack.c.b16 %v730, %v729
      %v760 = vpack.c.b16 %v732, %v731
      %v761 = vpack.c.b16 %v734, %v733
      %v762 = vpack.c.b16 %v736, %v735
      %v763 = vpack.c.b16 %v738, %v737
      %v764 = vpack.c.b16 %v740, %v739
      %v765 = vpack.c.b16 %v742, %v741
      %v766 = vpack.c.b16 %v744, %v743
      %v767 = vpack.c.b16 %v746, %v745
      %v768 = vpack.c.b16 %v748, %v747
      %v769 = vpack.c.b16 %v750, %v749
      %v770 = vpack.c.b16 %v752, %v751
      %v779 = vunpack.c.l.b16 %v673
      %v780 = vunpack.c.l.b16 %v674
      %v781 = vunpack.c.l.b16 %v675
      %v782 = vunpack.c.l.b16 %v676
      %v783 = vunpack.c.l.b16 %v677
      %v784 = vunpack.c.l.b16 %v678
      %v785 = vunpack.c.l.b16 %v679
      %v786 = vunpack.c.l.b16 %v680
      %v787 = vpack.c.b16 %v780, %v779
      %v788 = vpack.c.b16 %v782, %v781
      %v789 = vpack.c.b16 %v784, %v783
      %v790 = vpack.c.b16 %v786, %v785
      %vm795 = vcmask 523264
      %v797 = vsel %vm795, %v753, 0
      %v800 = vsel %vm795, %v754, 0
      %v803 = vsel %vm795, %v755, 0
      %v806 = vsel %vm795, %v756, 0
      %v809 = vsel %vm795, %v757, 0
      %v812 = vsel %vm795, %v758, 0
      %v815 = vsel %vm795, %v759, 0
      %v818 = vsel %vm795, %v760, 0
      %v821 = vsel %vm795, %v761, 0
      %v824 = vsel %vm795, %v762, 0
      %v827 = vsel %vm795, %v763, 0
      %v830 = vsel %vm795, %v764, 0
      %v833 = vsel %vm795, %v765, 0
      %v836 = vsel %vm795, %v766, 0
      %v839 = vsel %vm795, %v767, 0
      %v842 = vsel %vm795, %v768, 0
      %v845 = vsel %vm795, %v769, 0
      %v848 = vsel %vm795, %v770, 0
      %850 = vmatprep.subr.bf16.mxu0 0
      %851 = vmatpush1.bf16.msra.mxu0 %v787
      %852 = vmatprep.subr.bf16.mxu0 0
      %853 = vmatpush1.bf16.msra.mxu0 %v788
      %854 = vmatprep.subr.bf16.mxu0 0
      %855 = vmatpush1.bf16.msra.mxu0 %v789
      %856 = vmatprep.subr.bf16.mxu0 0
      %857 = vmatpush1.bf16.msra.mxu0 %v790
      %858 = vmatprep.subr.bf16.mxu0 0
      %859 = vmatpush1.bf16.msra.mxu0 0
      %860 = vmatprep.subr.bf16.mxu0 0
      %861 = vmatpush1.bf16.msra.mxu0 0
      %862 = vmatprep.subr.bf16.mxu0 0
      %863 = vmatpush1.bf16.msra.mxu0 0
      %864 = vmatprep.subr.bf16.mxu0 0
      %865 = vmatpush1.bf16.msra.mxu0 0
      %866 = vmatprep.subr.bf16.mxu0 0
      %867 = vmatpush1.bf16.msra.mxu0 0
      %868 = vmatprep.subr.bf16.mxu0 0
      %869 = vmatpush1.bf16.msra.mxu0 0
      %870 = vmatprep.subr.bf16.mxu0 0
      %871 = vmatpush1.bf16.msra.mxu0 0
      %872 = vmatprep.subr.bf16.mxu0 0
      %873 = vmatpush1.bf16.msra.mxu0 0
      %874 = vmatprep.subr.bf16.mxu0 0
      %875 = vmatpush1.bf16.msra.mxu0 0
      %876 = vmatprep.subr.bf16.mxu0 0
      %877 = vmatpush1.bf16.msra.mxu0 0
      %878 = vmatprep.subr.bf16.mxu0 0
      %879 = vmatpush1.bf16.msra.mxu0 0
      %880 = vmatprep.subr.bf16.mxu0 0
      %881 = vmatpush1.bf16.msra.mxu0 0
      %882 = vmatprep.mubr.bf16.mxu0 0
      %883 = vmatmul.mubr.bf16.gmra.mrb[0].mxu0 %v797
      %v884 = vpop.f32.mrb[0].mxu0
      %v885 = vadd.f32 0.0, %v884
      %v886 = vpop.f32.mrb[0].mxu0
      %v887 = vpop.f32.mrb[0].mxu0
      %v888 = vadd.f32 0.0, %v887
      %v889 = vpop.f32.mrb[0].mxu0
      %890 = vmatprep.mubr.bf16.mxu0 0
      %891 = vmatmul.mubr.bf16.gmra.mrb[0].mxu0 %v800
      %v892 = vpop.f32.mrb[0].mxu0
      %v893 = vadd.f32 0.0, %v892
      %v894 = vpop.f32.mrb[0].mxu0
      %v895 = vpop.f32.mrb[0].mxu0
      %v896 = vadd.f32 0.0, %v895
      %v897 = vpop.f32.mrb[0].mxu0
      %898 = vmatprep.mubr.bf16.mxu0 0
      %899 = vmatmul.mubr.bf16.gmra.mrb[0].mxu0 %v803
      %v900 = vpop.f32.mrb[0].mxu0
      %v901 = vadd.f32 0.0, %v900
      %v902 = vpop.f32.mrb[0].mxu0
      %v903 = vpop.f32.mrb[0].mxu0
      %v904 = vadd.f32 0.0, %v903
      %v905 = vpop.f32.mrb[0].mxu0
      %906 = vmatprep.mubr.bf16.mxu0 0
      %907 = vmatmul.mubr.bf16.gmra.mrb[0].mxu0 %v806
      %v908 = vpop.f32.mrb[0].mxu0
      %v909 = vadd.f32 0.0, %v908
      %v910 = vpop.f32.mrb[0].mxu0
      %v911 = vpop.f32.mrb[0].mxu0
      %v912 = vadd.f32 0.0, %v911
      %v913 = vpop.f32.mrb[0].mxu0
      %914 = vmatprep.mubr.bf16.mxu0 0
      %915 = vmatmul.mubr.bf16.gmra.mrb[0].mxu0 %v809
      %v916 = vpop.f32.mrb[0].mxu0
      %v917 = vadd.f32 0.0, %v916
      %v918 = vpop.f32.mrb[0].mxu0
      %v919 = vpop.f32.mrb[0].mxu0
      %v920 = vadd.f32 0.0, %v919
      %v921 = vpop.f32.mrb[0].mxu0
      %922 = vmatprep.mubr.bf16.mxu0 0
      %923 = vmatmul.mubr.bf16.gmra.mrb[0].mxu0 %v812
      %v924 = vpop.f32.mrb[0].mxu0
      %v925 = vadd.f32 0.0, %v924
      %v926 = vpop.f32.mrb[0].mxu0
      %v927 = vpop.f32.mrb[0].mxu0
      %v928 = vadd.f32 0.0, %v927
      %v929 = vpop.f32.mrb[0].mxu0
      %930 = vmatprep.mubr.bf16.mxu0 0
      %931 = vmatmul.mubr.bf16.gmra.mrb[0].mxu0 %v815
      %v932 = vpop.f32.mrb[0].mxu0
      %v933 = vadd.f32 0.0, %v932
      %v934 = vpop.f32.mrb[0].mxu0
      %v935 = vpop.f32.mrb[0].mxu0
      %v936 = vadd.f32 0.0, %v935
      %v937 = vpop.f32.mrb[0].mxu0
      %938 = vmatprep.mubr.bf16.mxu0 0
      %939 = vmatmul.mubr.bf16.gmra.mrb[0].mxu0 %v818
      %v940 = vpop.f32.mrb[0].mxu0
      %v941 = vadd.f32 0.0, %v940
      %v942 = vpop.f32.mrb[0].mxu0
      %v943 = vpop.f32.mrb[0].mxu0
      %v944 = vadd.f32 0.0, %v943
      %v945 = vpop.f32.mrb[0].mxu0
      %946 = vmatprep.mubr.bf16.mxu0 0
      %947 = vmatmul.mubr.bf16.gmra.mrb[0].mxu0 %v821
      %v948 = vpop.f32.mrb[0].mxu0
      %v949 = vadd.f32 0.0, %v948
      %v950 = vpop.f32.mrb[0].mxu0
      %v951 = vpop.f32.mrb[0].mxu0
      %v952 = vadd.f32 0.0, %v951
      %v953 = vpop.f32.mrb[0].mxu0
      %954 = vmatprep.mubr.bf16.mxu0 0
      %955 = vmatmul.mubr.bf16.gmra.mrb[0].mxu0 %v824
      %v956 = vpop.f32.mrb[0].mxu0
      %v957 = vadd.f32 0.0, %v956
      %v958 = vpop.f32.mrb[0].mxu0
      %v959 = vpop.f32.mrb[0].mxu0
      %v960 = vadd.f32 0.0, %v959
      %v961 = vpop.f32.mrb[0].mxu0
      %962 = vmatprep.mubr.bf16.mxu0 0
      %963 = vmatmul.mubr.bf16.gmra.mrb[0].mxu0 %v827
      %v964 = vpop.f32.mrb[0].mxu0
      %v965 = vadd.f32 0.0, %v964
      %v966 = vpop.f32.mrb[0].mxu0
      %v967 = vpop.f32.mrb[0].mxu0
      %v968 = vadd.f32 0.0, %v967
      %v969 = vpop.f32.mrb[0].mxu0
      %970 = vmatprep.mubr.bf16.mxu0 0
      %971 = vmatmul.mubr.bf16.gmra.mrb[0].mxu0 %v830
      %v972 = vpop.f32.mrb[0].mxu0
      %v973 = vadd.f32 0.0, %v972
      %v974 = vpop.f32.mrb[0].mxu0
      %v975 = vpop.f32.mrb[0].mxu0
      %v976 = vadd.f32 0.0, %v975
      %v977 = vpop.f32.mrb[0].mxu0
      %978 = vmatprep.mubr.bf16.mxu0 0
      %979 = vmatmul.mubr.bf16.gmra.mrb[0].mxu0 %v833
      %v980 = vpop.f32.mrb[0].mxu0
      %v981 = vadd.f32 0.0, %v980
      %v982 = vpop.f32.mrb[0].mxu0
      %v983 = vpop.f32.mrb[0].mxu0
      %v984 = vadd.f32 0.0, %v983
      %v985 = vpop.f32.mrb[0].mxu0
      %986 = vmatprep.mubr.bf16.mxu0 0
      %987 = vmatmul.mubr.bf16.gmra.mrb[0].mxu0 %v836
      %v988 = vpop.f32.mrb[0].mxu0
      %v989 = vadd.f32 0.0, %v988
      %v990 = vpop.f32.mrb[0].mxu0
      %v991 = vpop.f32.mrb[0].mxu0
      %v992 = vadd.f32 0.0, %v991
      %v993 = vpop.f32.mrb[0].mxu0
      %994 = vmatprep.mubr.bf16.mxu0 0
      %995 = vmatmul.mubr.bf16.gmra.mrb[0].mxu0 %v839
      %v996 = vpop.f32.mrb[0].mxu0
      %v997 = vadd.f32 0.0, %v996
      %v998 = vpop.f32.mrb[0].mxu0
      %v999 = vpop.f32.mrb[0].mxu0
      %v1000 = vadd.f32 0.0, %v999
      %v1001 = vpop.f32.mrb[0].mxu0
      %1002 = vmatprep.mubr.bf16.mxu0 0
      %1003 = vmatmul.mubr.bf16.gmra.mrb[0].mxu0 %v842
      %v1004 = vpop.f32.mrb[0].mxu0
      %v1005 = vadd.f32 0.0, %v1004
      %v1006 = vpop.f32.mrb[0].mxu0
      %v1007 = vpop.f32.mrb[0].mxu0
      %v1008 = vadd.f32 0.0, %v1007
      %v1009 = vpop.f32.mrb[0].mxu0
      %1010 = vmatprep.mubr.bf16.mxu0 0
      %1011 = vmatmul.mubr.bf16.gmra.mrb[0].mxu0 %v845
      %v1012 = vpop.f32.mrb[0].mxu0
      %v1013 = vadd.f32 0.0, %v1012
      %v1014 = vpop.f32.mrb[0].mxu0
      %v1015 = vpop.f32.mrb[0].mxu0
      %v1016 = vadd.f32 0.0, %v1015
      %v1017 = vpop.f32.mrb[0].mxu0
      %1018 = vmatprep.mubr.bf16.mxu0 0
      %1019 = vmatmul.mubr.bf16.gmra.mrb[0].mxu0 %v848
      %v1020 = vpop.f32.mrb[0].mxu0
      %v1021 = vadd.f32 0.0, %v1020
      %v1022 = vpop.f32.mrb[0].mxu0
      %v1023 = vpop.f32.mrb[0].mxu0
      %v1024 = vadd.f32 0.0, %v1023
      %v1025 = vpop.f32.mrb[0].mxu0
      %1026 = vdwg.mxu0
      %v1027 = vunpack.c.l.b16 %v269
      %v1028 = vunpack.c.l.b16 %v279
      %v1029 = vunpack.c.l.b16 %v289
      %v1030 = vunpack.c.l.b16 %v303
      %v1031 = vunpack.c.l.b16 %v313
      %v1032 = vunpack.c.l.b16 %v323
      %v1033 = vunpack.c.l.b16 %v337
      %v1034 = vunpack.c.l.b16 %v347
      %v1035 = vunpack.c.l.b16 %v357
      %v1036 = vunpack.c.l.b16 %v371
      %v1037 = vunpack.c.l.b16 %v381
      %v1038 = vunpack.c.l.b16 %v391
      %v1039 = vunpack.c.l.b16 %v405
      %v1040 = vunpack.c.l.b16 %v415
      %v1041 = vunpack.c.l.b16 %v425
      %v1042 = vunpack.c.l.b16 %v439
      %v1043 = vunpack.c.l.b16 %v449
      %v1044 = vunpack.c.l.b16 %v459
      %v1045 = vunpack.c.l.b16 %v473
      %v1046 = vunpack.c.l.b16 %v483
      %v1047 = vunpack.c.l.b16 %v493
      %v1048 = vunpack.c.l.b16 %v507
      %v1049 = vunpack.c.l.b16 %v517
      %v1050 = vunpack.c.l.b16 %v527
      %v1051 = vunpack.c.l.b16 %v541
      %v1052 = vunpack.c.l.b16 %v551
      %v1053 = vunpack.c.l.b16 %v561
      %v1054 = vunpack.c.l.b16 %v575
      %v1055 = vunpack.c.l.b16 %v585
      %v1056 = vunpack.c.l.b16 %v595
      %v1057 = vunpack.c.l.b16 %v609
      %v1058 = vunpack.c.l.b16 %v619
      %v1059 = vunpack.c.l.b16 %v629
      %v1060 = vunpack.c.l.b16 %v643
      %v1061 = vunpack.c.l.b16 %v653
      %v1062 = vunpack.c.l.b16 %v663
      %v1063 = vpack.c.b16 %v1028, %v1027
      %v1064 = vpack.c.b16 %v1030, %v1029
      %v1065 = vpack.c.b16 %v1032, %v1031
      %v1066 = vpack.c.b16 %v1034, %v1033
      %v1067 = vpack.c.b16 %v1036, %v1035
      %v1068 = vpack.c.b16 %v1038, %v1037
      %v1069 = vpack.c.b16 %v1040, %v1039
      %v1070 = vpack.c.b16 %v1042, %v1041
      %v1071 = vpack.c.b16 %v1044, %v1043
      %v1072 = vpack.c.b16 %v1046, %v1045
      %v1073 = vpack.c.b16 %v1048, %v1047
      %v1074 = vpack.c.b16 %v1050, %v1049
      %v1075 = vpack.c.b16 %v1052, %v1051
      %v1076 = vpack.c.b16 %v1054, %v1053
      %v1077 = vpack.c.b16 %v1056, %v1055
      %v1078 = vpack.c.b16 %v1058, %v1057
      %v1079 = vpack.c.b16 %v1060, %v1059
      %v1080 = vpack.c.b16 %v1062, %v1061
      %v1089 = vunpack.c.l.b16 %v664
      %v1090 = vunpack.c.l.b16 %v665
      %v1091 = vunpack.c.l.b16 %v666
      %v1092 = vunpack.c.l.b16 %v667
      %v1093 = vunpack.c.l.b16 %v668
      %v1094 = vunpack.c.l.b16 %v669
      %v1095 = vunpack.c.l.b16 %v670
      %v1096 = vunpack.c.l.b16 %v671
      %v1097 = vpack.c.b16 %v1090, %v1089
      %v1098 = vpack.c.b16 %v1092, %v1091
      %v1099 = vpack.c.b16 %v1094, %v1093
      %v1100 = vpack.c.b16 %v1096, %v1095
      %v1106 = vsel %vm795, %v1063, 0
      %v1109 = vsel %vm795, %v1064, 0
      %v1112 = vsel %vm795, %v1065, 0
      %v1115 = vsel %vm795, %v1066, 0
      %v1118 = vsel %vm795, %v1067, 0
      %v1121 = vsel %vm795, %v1068, 0
      %v1124 = vsel %vm795, %v1069, 0
      %v1127 = vsel %vm795, %v1070, 0
      %v1130 = vsel %vm795, %v1071, 0
      %v1133 = vsel %vm795, %v1072, 0
      %v1136 = vsel %vm795, %v1073, 0
      %v1139 = vsel %vm795, %v1074, 0
      %v1142 = vsel %vm795, %v1075, 0
      %v1145 = vsel %vm795, %v1076, 0
      %v1148 = vsel %vm795, %v1077, 0
      %v1151 = vsel %vm795, %v1078, 0
      %v1154 = vsel %vm795, %v1079, 0
      %v1157 = vsel %vm795, %v1080, 0
      %1159 = vmatprep.subr.bf16.mxu0 0
      %1160 = vmatpush1.bf16.msra.mxu0 %v1097
      %1161 = vmatprep.subr.bf16.mxu0 0
      %1162 = vmatpush1.bf16.msra.mxu0 %v1098
      %1163 = vmatprep.subr.bf16.mxu0 0
      %1164 = vmatpush1.bf16.msra.mxu0 %v1099
      %1165 = vmatprep.subr.bf16.mxu0 0
      %1166 = vmatpush1.bf16.msra.mxu0 %v1100
      %1167 = vmatprep.subr.bf16.mxu0 0
      %1168 = vmatpush1.bf16.msra.mxu0 0
      %1169 = vmatprep.subr.bf16.mxu0 0
      %1170 = vmatpush1.bf16.msra.mxu0 0
      %1171 = vmatprep.subr.bf16.mxu0 0
      %1172 = vmatpush1.bf16.msra.mxu0 0
      %1173 = vmatprep.subr.bf16.mxu0 0
      %1174 = vmatpush1.bf16.msra.mxu0 0
      %1175 = vmatprep.subr.bf16.mxu0 0
      %1176 = vmatpush1.bf16.msra.mxu0 0
      %1177 = vmatprep.subr.bf16.mxu0 0
      %1178 = vmatpush1.bf16.msra.mxu0 0
      %1179 = vmatprep.subr.bf16.mxu0 0
      %1180 = vmatpush1.bf16.msra.mxu0 0
      %1181 = vmatprep.subr.bf16.mxu0 0
      %1182 = vmatpush1.bf16.msra.mxu0 0
      %1183 = vmatprep.subr.bf16.mxu0 0
      %1184 = vmatpush1.bf16.msra.mxu0 0
      %1185 = vmatprep.subr.bf16.mxu0 0
      %1186 = vmatpush1.bf16.msra.mxu0 0
      %1187 = vmatprep.subr.bf16.mxu0 0
      %1188 = vmatpush1.bf16.msra.mxu0 0
      %1189 = vmatprep.subr.bf16.mxu0 0
      %1190 = vmatpush1.bf16.msra.mxu0 0
      %1191 = vmatprep.mubr.bf16.mxu0 0
      %1192 = vmatmul.mubr.bf16.gmra.mrb[0].mxu0 %v1106
      %v1193 = vpop.f32.mrb[0].mxu0
      %v1194 = vadd.f32 %v885, %v1193
      %v1195 = vpop.f32.mrb[0].mxu0
      %v1196 = vpop.f32.mrb[0].mxu0
      %v1197 = vadd.f32 %v888, %v1196
      %v1198 = vpop.f32.mrb[0].mxu0
      %1199 = vmatprep.mubr.bf16.mxu0 0
      %1200 = vmatmul.mubr.bf16.gmra.mrb[0].mxu0 %v1109
      %v1201 = vpop.f32.mrb[0].mxu0
      %v1202 = vadd.f32 %v893, %v1201
      %v1203 = vpop.f32.mrb[0].mxu0
      %v1204 = vpop.f32.mrb[0].mxu0
      %v1205 = vadd.f32 %v896, %v1204
      %v1206 = vpop.f32.mrb[0].mxu0
      %1207 = vmatprep.mubr.bf16.mxu0 0
      %1208 = vmatmul.mubr.bf16.gmra.mrb[0].mxu0 %v1112
      %v1209 = vpop.f32.mrb[0].mxu0
      %v1210 = vadd.f32 %v901, %v1209
      %v1211 = vpop.f32.mrb[0].mxu0
      %v1212 = vpop.f32.mrb[0].mxu0
      %v1213 = vadd.f32 %v904, %v1212
      %v1214 = vpop.f32.mrb[0].mxu0
      %1215 = vmatprep.mubr.bf16.mxu0 0
      %1216 = vmatmul.mubr.bf16.gmra.mrb[0].mxu0 %v1115
      %v1217 = vpop.f32.mrb[0].mxu0
      %v1218 = vadd.f32 %v909, %v1217
      %v1219 = vpop.f32.mrb[0].mxu0
      %v1220 = vpop.f32.mrb[0].mxu0
      %v1221 = vadd.f32 %v912, %v1220
      %v1222 = vpop.f32.mrb[0].mxu0
      %1223 = vmatprep.mubr.bf16.mxu0 0
      %1224 = vmatmul.mubr.bf16.gmra.mrb[0].mxu0 %v1118
      %v1225 = vpop.f32.mrb[0].mxu0
      %v1226 = vadd.f32 %v917, %v1225
      %v1227 = vpop.f32.mrb[0].mxu0
      %v1228 = vpop.f32.mrb[0].mxu0
      %v1229 = vadd.f32 %v920, %v1228
      %v1230 = vpop.f32.mrb[0].mxu0
      %1231 = vmatprep.mubr.bf16.mxu0 0
      %1232 = vmatmul.mubr.bf16.gmra.mrb[0].mxu0 %v1121
      %v1233 = vpop.f32.mrb[0].mxu0
      %v1234 = vadd.f32 %v925, %v1233
      %v1235 = vpop.f32.mrb[0].mxu0
      %v1236 = vpop.f32.mrb[0].mxu0
      %v1237 = vadd.f32 %v928, %v1236
      %v1238 = vpop.f32.mrb[0].mxu0
      %1239 = vmatprep.mubr.bf16.mxu0 0
      %1240 = vmatmul.mubr.bf16.gmra.mrb[0].mxu0 %v1124
      %v1241 = vpop.f32.mrb[0].mxu0
      %v1242 = vadd.f32 %v933, %v1241
      %v1243 = vpop.f32.mrb[0].mxu0
      %v1244 = vpop.f32.mrb[0].mxu0
      %v1245 = vadd.f32 %v936, %v1244
      %v1246 = vpop.f32.mrb[0].mxu0
      %1247 = vmatprep.mubr.bf16.mxu0 0
      %1248 = vmatmul.mubr.bf16.gmra.mrb[0].mxu0 %v1127
      %v1249 = vpop.f32.mrb[0].mxu0
      %v1250 = vadd.f32 %v941, %v1249
      %v1251 = vpop.f32.mrb[0].mxu0
      %v1252 = vpop.f32.mrb[0].mxu0
      %v1253 = vadd.f32 %v944, %v1252
      %v1254 = vpop.f32.mrb[0].mxu0
      %1255 = vmatprep.mubr.bf16.mxu0 0
      %1256 = vmatmul.mubr.bf16.gmra.mrb[0].mxu0 %v1130
      %v1257 = vpop.f32.mrb[0].mxu0
      %v1258 = vadd.f32 %v949, %v1257
      %v1259 = vpop.f32.mrb[0].mxu0
      %v1260 = vpop.f32.mrb[0].mxu0
      %v1261 = vadd.f32 %v952, %v1260
      %v1262 = vpop.f32.mrb[0].mxu0
      %1263 = vmatprep.mubr.bf16.mxu0 0
      %1264 = vmatmul.mubr.bf16.gmra.mrb[0].mxu0 %v1133
      %v1265 = vpop.f32.mrb[0].mxu0
      %v1266 = vadd.f32 %v957, %v1265
      %v1267 = vpop.f32.mrb[0].mxu0
      %v1268 = vpop.f32.mrb[0].mxu0
      %v1269 = vadd.f32 %v960, %v1268
      %v1270 = vpop.f32.mrb[0].mxu0
      %1271 = vmatprep.mubr.bf16.mxu0 0
      %1272 = vmatmul.mubr.bf16.gmra.mrb[0].mxu0 %v1136
      %v1273 = vpop.f32.mrb[0].mxu0
      %v1274 = vadd.f32 %v965, %v1273
      %v1275 = vpop.f32.mrb[0].mxu0
      %v1276 = vpop.f32.mrb[0].mxu0
      %v1277 = vadd.f32 %v968, %v1276
      %v1278 = vpop.f32.mrb[0].mxu0
      %1279 = vmatprep.mubr.bf16.mxu0 0
      %1280 = vmatmul.mubr.bf16.gmra.mrb[0].mxu0 %v1139
      %v1281 = vpop.f32.mrb[0].mxu0
      %v1282 = vadd.f32 %v973, %v1281
      %v1283 = vpop.f32.mrb[0].mxu0
      %v1284 = vpop.f32.mrb[0].mxu0
      %v1285 = vadd.f32 %v976, %v1284
      %v1286 = vpop.f32.mrb[0].mxu0
      %1287 = vmatprep.mubr.bf16.mxu0 0
      %1288 = vmatmul.mubr.bf16.gmra.mrb[0].mxu0 %v1142
      %v1289 = vpop.f32.mrb[0].mxu0
      %v1290 = vadd.f32 %v981, %v1289
      %v1291 = vpop.f32.mrb[0].mxu0
      %v1292 = vpop.f32.mrb[0].mxu0
      %v1293 = vadd.f32 %v984, %v1292
      %v1294 = vpop.f32.mrb[0].mxu0
      %1295 = vmatprep.mubr.bf16.mxu0 0
      %1296 = vmatmul.mubr.bf16.gmra.mrb[0].mxu0 %v1145
      %v1297 = vpop.f32.mrb[0].mxu0
      %v1298 = vadd.f32 %v989, %v1297
      %v1299 = vpop.f32.mrb[0].mxu0
      %v1300 = vpop.f32.mrb[0].mxu0
      %v1301 = vadd.f32 %v992, %v1300
      %v1302 = vpop.f32.mrb[0].mxu0
      %1303 = vmatprep.mubr.bf16.mxu0 0
      %1304 = vmatmul.mubr.bf16.gmra.mrb[0].mxu0 %v1148
      %v1305 = vpop.f32.mrb[0].mxu0
      %v1306 = vadd.f32 %v997, %v1305
      %v1307 = vpop.f32.mrb[0].mxu0
      %v1308 = vpop.f32.mrb[0].mxu0
      %v1309 = vadd.f32 %v1000, %v1308
      %v1310 = vpop.f32.mrb[0].mxu0
      %1311 = vmatprep.mubr.bf16.mxu0 0
      %1312 = vmatmul.mubr.bf16.gmra.mrb[0].mxu0 %v1151
      %v1313 = vpop.f32.mrb[0].mxu0
      %v1314 = vadd.f32 %v1005, %v1313
      %v1315 = vpop.f32.mrb[0].mxu0
      %v1316 = vpop.f32.mrb[0].mxu0
      %v1317 = vadd.f32 %v1008, %v1316
      %v1318 = vpop.f32.mrb[0].mxu0
      %1319 = vmatprep.mubr.bf16.mxu0 0
      %1320 = vmatmul.mubr.bf16.gmra.mrb[0].mxu0 %v1154
      %v1321 = vpop.f32.mrb[0].mxu0
      %v1322 = vadd.f32 %v1013, %v1321
      %v1323 = vpop.f32.mrb[0].mxu0
      %v1324 = vpop.f32.mrb[0].mxu0
      %v1325 = vadd.f32 %v1016, %v1324
      %v1326 = vpop.f32.mrb[0].mxu0
      %1327 = vmatprep.mubr.bf16.mxu0 0
      %1328 = vmatmul.mubr.bf16.gmra.mrb[0].mxu0 %v1157
      %v1329 = vpop.f32.mrb[0].mxu0
      %v1330 = vadd.f32 %v1021, %v1329
      %v1331 = vpop.f32.mrb[0].mxu0
      %v1332 = vpop.f32.mrb[0].mxu0
      %v1333 = vadd.f32 %v1024, %v1332
      %v1334 = vpop.f32.mrb[0].mxu0
      %1335 = vdwg.mxu0
      %v1337 = vshrl.u32 %v201, 16
      %v1339 = vrot.slane %v1337, 4
      %v1340 = vshll.u32 %v201, 16
      %v1342 = vrot.slane %v1340, 5
      %v1343 = vor.u32 %v1339, %v1342
      %v1344 = vrot.slane %v1343, 4
      %v1346 = vshll.u32 %v202, 16
      %v1348 = vrot.slane %v1346, 5
      %v1349 = vsel %vm255, %v1344, %v1348
      %v1350 = vshrl.u32 %v202, 16
      %v1352 = vrot.slane %v1350, 4
      %v1353 = vor.u32 %v1352, %v1348
      %v1354 = vrot.slane %v1353, 4
      %v1356 = vshll.u32 %v203, 16
      %v1358 = vrot.slane %v1356, 5
      %v1359 = vsel %vm255, %v1354, %v1358
      %v1360 = vshrl.u32 %v203, 16
      %v1362 = vrot.slane %v1360, 4
      %v1363 = vor.u32 %v1362, %v1358
      %v1364 = vrot.slane %v1363, 4
      %v1366 = vshll.u32 %v204, 16
      %v1368 = vrot.slane %v1366, 5
      %v1369 = vsel %vm255, %v1364, %v1368
      %s1370 = scalar_lea.vmem %s1, 64
      %v1371 = vld [vmem:[%s1370] sm:$0xf]
      %v1372 = vld [vmem:[%s1370 + $0x4] sm:$0xf]
      %v1373 = vld [vmem:[%s1370 + $0x8] sm:$0xf]
      %v1374 = vld [vmem:[%s1370 + $0xc] sm:$0xf]
      %v1375 = vld [vmem:[%s1370 + $0x10] sm:$0xf]
      %v1376 = vld [vmem:[%s1370 + $0x14] sm:$0xf]
      %v1377 = vld [vmem:[%s1370 + $0x18] sm:$0xf]
      %v1378 = vld [vmem:[%s1370 + $0x1c] sm:$0xf]
      %v1379 = vunpack.c.l.b16 %v1349
      %v1380 = vunpack.c.l.b16 %v1359
      %v1381 = vunpack.c.l.b16 %v1369
      %v1382 = vpack.c.b16 %v1380, %v1379
      %v1383 = vpack.c.b16 %v1027, %v1381
      %v1384 = vpack.c.b16 %v1029, %v1028
      %v1385 = vpack.c.b16 %v1031, %v1030
      %v1386 = vpack.c.b16 %v1033, %v1032
      %v1387 = vpack.c.b16 %v1035, %v1034
      %v1388 = vpack.c.b16 %v1037, %v1036
      %v1389 = vpack.c.b16 %v1039, %v1038
      %v1390 = vpack.c.b16 %v1041, %v1040
      %v1391 = vpack.c.b16 %v1043, %v1042
      %v1392 = vpack.c.b16 %v1045, %v1044
      %v1393 = vpack.c.b16 %v1047, %v1046
      %v1394 = vpack.c.b16 %v1049, %v1048
      %v1395 = vpack.c.b16 %v1051, %v1050
      %v1396 = vpack.c.b16 %v1053, %v1052
      %v1397 = vpack.c.b16 %v1055, %v1054
      %v1398 = vpack.c.b16 %v1057, %v1056
      %v1399 = vpack.c.b16 %v1059, %v1058
      %v1408 = vunpack.c.l.b16 %v1371
      %v1409 = vunpack.c.l.b16 %v1372
      %v1410 = vunpack.c.l.b16 %v1373
      %v1411 = vunpack.c.l.b16 %v1374
      %v1412 = vunpack.c.l.b16 %v1375
      %v1413 = vunpack.c.l.b16 %v1376
      %v1414 = vunpack.c.l.b16 %v1377
      %v1415 = vunpack.c.l.b16 %v1378
      %v1416 = vpack.c.b16 %v1409, %v1408
      %v1417 = vpack.c.b16 %v1411, %v1410
      %v1418 = vpack.c.b16 %v1413, %v1412
      %v1419 = vpack.c.b16 %v1415, %v1414
      %v1425 = vsel %vm795, %v1382, 0
      %v1428 = vsel %vm795, %v1383, 0
      %v1431 = vsel %vm795, %v1384, 0
      %v1434 = vsel %vm795, %v1385, 0
      %v1437 = vsel %vm795, %v1386, 0
      %v1440 = vsel %vm795, %v1387, 0
      %v1443 = vsel %vm795, %v1388, 0
      %v1446 = vsel %vm795, %v1389, 0
      %v1449 = vsel %vm795, %v1390, 0
      %v1452 = vsel %vm795, %v1391, 0
      %v1455 = vsel %vm795, %v1392, 0
      %v1458 = vsel %vm795, %v1393, 0
      %v1461 = vsel %vm795, %v1394, 0
      %v1464 = vsel %vm795, %v1395, 0
      %v1467 = vsel %vm795, %v1396, 0
      %v1470 = vsel %vm795, %v1397, 0
      %v1473 = vsel %vm795, %v1398, 0
      %v1476 = vsel %vm795, %v1399, 0
      %1478 = vmatprep.subr.bf16.mxu0 0
      %1479 = vmatpush1.bf16.msra.mxu0 %v1416
      %1480 = vmatprep.subr.bf16.mxu0 0
      %1481 = vmatpush1.bf16.msra.mxu0 %v1417
      %1482 = vmatprep.subr.bf16.mxu0 0
      %1483 = vmatpush1.bf16.msra.mxu0 %v1418
      %1484 = vmatprep.subr.bf16.mxu0 0
      %1485 = vmatpush1.bf16.msra.mxu0 %v1419
      %1486 = vmatprep.subr.bf16.mxu0 0
      %1487 = vmatpush1.bf16.msra.mxu0 0
      %1488 = vmatprep.subr.bf16.mxu0 0
      %1489 = vmatpush1.bf16.msra.mxu0 0
      %1490 = vmatprep.subr.bf16.mxu0 0
      %1491 = vmatpush1.bf16.msra.mxu0 0
      %1492 = vmatprep.subr.bf16.mxu0 0
      %1493 = vmatpush1.bf16.msra.mxu0 0
      %1494 = vmatprep.subr.bf16.mxu0 0
      %1495 = vmatpush1.bf16.msra.mxu0 0
      %1496 = vmatprep.subr.bf16.mxu0 0
      %1497 = vmatpush1.bf16.msra.mxu0 0
      %1498 = vmatprep.subr.bf16.mxu0 0
      %1499 = vmatpush1.bf16.msra.mxu0 0
      %1500 = vmatprep.subr.bf16.mxu0 0
      %1501 = vmatpush1.bf16.msra.mxu0 0
      %1502 = vmatprep.subr.bf16.mxu0 0
      %1503 = vmatpush1.bf16.msra.mxu0 0
      %1504 = vmatprep.subr.bf16.mxu0 0
      %1505 = vmatpush1.bf16.msra.mxu0 0
      %1506 = vmatprep.subr.bf16.mxu0 0
      %1507 = vmatpush1.bf16.msra.mxu0 0
      %1508 = vmatprep.subr.bf16.mxu0 0
      %1509 = vmatpush1.bf16.msra.mxu0 0
      %1510 = vmatprep.mubr.bf16.mxu0 0
      %1511 = vmatmul.mubr.bf16.gmra.mrb[0].mxu0 %v1425
      %v1512 = vpop.f32.mrb[0].mxu0
      %v1513 = vadd.f32 0.0, %v1512
      %v1514 = vpop.f32.mrb[0].mxu0
      %v1515 = vpop.f32.mrb[0].mxu0
      %v1516 = vadd.f32 0.0, %v1515
      %v1517 = vpop.f32.mrb[0].mxu0
      %1518 = vmatprep.mubr.bf16.mxu0 0
      %1519 = vmatmul.mubr.bf16.gmra.mrb[0].mxu0 %v1428
      %v1520 = vpop.f32.mrb[0].mxu0
      %v1521 = vadd.f32 0.0, %v1520
      %v1522 = vpop.f32.mrb[0].mxu0
      %v1523 = vpop.f32.mrb[0].mxu0
      %v1524 = vadd.f32 0.0, %v1523
      %v1525 = vpop.f32.mrb[0].mxu0
      %1526 = vmatprep.mubr.bf16.mxu0 0
      %1527 = vmatmul.mubr.bf16.gmra.mrb[0].mxu0 %v1431
      %v1528 = vpop.f32.mrb[0].mxu0
      %v1529 = vadd.f32 0.0, %v1528
      %v1530 = vpop.f32.mrb[0].mxu0
      %v1531 = vpop.f32.mrb[0].mxu0
      %v1532 = vadd.f32 0.0, %v1531
      %v1533 = vpop.f32.mrb[0].mxu0
      %1534 = vmatprep.mubr.bf16.mxu0 0
      %1535 = vmatmul.mubr.bf16.gmra.mrb[0].mxu0 %v1434
      %v1536 = vpop.f32.mrb[0].mxu0
      %v1537 = vadd.f32 0.0, %v1536
      %v1538 = vpop.f32.mrb[0].mxu0
      %v1539 = vpop.f32.mrb[0].mxu0
      %v1540 = vadd.f32 0.0, %v1539
      %v1541 = vpop.f32.mrb[0].mxu0
      %1542 = vmatprep.mubr.bf16.mxu0 0
      %1543 = vmatmul.mubr.bf16.gmra.mrb[0].mxu0 %v1437
      %v1544 = vpop.f32.mrb[0].mxu0
      %v1545 = vadd.f32 0.0, %v1544
      %v1546 = vpop.f32.mrb[0].mxu0
      %v1547 = vpop.f32.mrb[0].mxu0
      %v1548 = vadd.f32 0.0, %v1547
      %v1549 = vpop.f32.mrb[0].mxu0
      %1550 = vmatprep.mubr.bf16.mxu0 0
      %1551 = vmatmul.mubr.bf16.gmra.mrb[0].mxu0 %v1440
      %v1552 = vpop.f32.mrb[0].mxu0
      %v1553 = vadd.f32 0.0, %v1552
      %v1554 = vpop.f32.mrb[0].mxu0
      %v1555 = vpop.f32.mrb[0].mxu0
      %v1556 = vadd.f32 0.0, %v1555
      %v1557 = vpop.f32.mrb[0].mxu0
      %1558 = vmatprep.mubr.bf16.mxu0 0
      %1559 = vmatmul.mubr.bf16.gmra.mrb[0].mxu0 %v1443
      %v1560 = vpop.f32.mrb[0].mxu0
      %v1561 = vadd.f32 0.0, %v1560
      %v1562 = vpop.f32.mrb[0].mxu0
      %v1563 = vpop.f32.mrb[0].mxu0
      %v1564 = vadd.f32 0.0, %v1563
      %v1565 = vpop.f32.mrb[0].mxu0
      %1566 = vmatprep.mubr.bf16.mxu0 0
      %1567 = vmatmul.mubr.bf16.gmra.mrb[0].mxu0 %v1446
      %v1568 = vpop.f32.mrb[0].mxu0
      %v1569 = vadd.f32 0.0, %v1568
      %v1570 = vpop.f32.mrb[0].mxu0
      %v1571 = vpop.f32.mrb[0].mxu0
      %v1572 = vadd.f32 0.0, %v1571
      %v1573 = vpop.f32.mrb[0].mxu0
      %1574 = vmatprep.mubr.bf16.mxu0 0
      %1575 = vmatmul.mubr.bf16.gmra.mrb[0].mxu0 %v1449
      %v1576 = vpop.f32.mrb[0].mxu0
      %v1577 = vadd.f32 0.0, %v1576
      %v1578 = vpop.f32.mrb[0].mxu0
      %v1579 = vpop.f32.mrb[0].mxu0
      %v1580 = vadd.f32 0.0, %v1579
      %v1581 = vpop.f32.mrb[0].mxu0
      %1582 = vmatprep.mubr.bf16.mxu0 0
      %1583 = vmatmul.mubr.bf16.gmra.mrb[0].mxu0 %v1452
      %v1584 = vpop.f32.mrb[0].mxu0
      %v1585 = vadd.f32 0.0, %v1584
      %v1586 = vpop.f32.mrb[0].mxu0
      %v1587 = vpop.f32.mrb[0].mxu0
      %v1588 = vadd.f32 0.0, %v1587
      %v1589 = vpop.f32.mrb[0].mxu0
      %1590 = vmatprep.mubr.bf16.mxu0 0
      %1591 = vmatmul.mubr.bf16.gmra.mrb[0].mxu0 %v1455
      %v1592 = vpop.f32.mrb[0].mxu0
      %v1593 = vadd.f32 0.0, %v1592
      %v1594 = vpop.f32.mrb[0].mxu0
      %v1595 = vpop.f32.mrb[0].mxu0
      %v1596 = vadd.f32 0.0, %v1595
      %v1597 = vpop.f32.mrb[0].mxu0
      %1598 = vmatprep.mubr.bf16.mxu0 0
      %1599 = vmatmul.mubr.bf16.gmra.mrb[0].mxu0 %v1458
      %v1600 = vpop.f32.mrb[0].mxu0
      %v1601 = vadd.f32 0.0, %v1600
      %v1602 = vpop.f32.mrb[0].mxu0
      %v1603 = vpop.f32.mrb[0].mxu0
      %v1604 = vadd.f32 0.0, %v1603
      %v1605 = vpop.f32.mrb[0].mxu0
      %1606 = vmatprep.mubr.bf16.mxu0 0
      %1607 = vmatmul.mubr.bf16.gmra.mrb[0].mxu0 %v1461
      %v1608 = vpop.f32.mrb[0].mxu0
      %v1609 = vadd.f32 0.0, %v1608
      %v1610 = vpop.f32.mrb[0].mxu0
      %v1611 = vpop.f32.mrb[0].mxu0
      %v1612 = vadd.f32 0.0, %v1611
      %v1613 = vpop.f32.mrb[0].mxu0
      %1614 = vmatprep.mubr.bf16.mxu0 0
      %1615 = vmatmul.mubr.bf16.gmra.mrb[0].mxu0 %v1464
      %v1616 = vpop.f32.mrb[0].mxu0
      %v1617 = vadd.f32 0.0, %v1616
      %v1618 = vpop.f32.mrb[0].mxu0
      %v1619 = vpop.f32.mrb[0].mxu0
      %v1620 = vadd.f32 0.0, %v1619
      %v1621 = vpop.f32.mrb[0].mxu0
      %1622 = vmatprep.mubr.bf16.mxu0 0
      %1623 = vmatmul.mubr.bf16.gmra.mrb[0].mxu0 %v1467
      %v1624 = vpop.f32.mrb[0].mxu0
      %v1625 = vadd.f32 0.0, %v1624
      %v1626 = vpop.f32.mrb[0].mxu0
      %v1627 = vpop.f32.mrb[0].mxu0
      %v1628 = vadd.f32 0.0, %v1627
      %v1629 = vpop.f32.mrb[0].mxu0
      %1630 = vmatprep.mubr.bf16.mxu0 0
      %1631 = vmatmul.mubr.bf16.gmra.mrb[0].mxu0 %v1470
      %v1632 = vpop.f32.mrb[0].mxu0
      %v1633 = vadd.f32 0.0, %v1632
      %v1634 = vpop.f32.mrb[0].mxu0
      %v1635 = vpop.f32.mrb[0].mxu0
      %v1636 = vadd.f32 0.0, %v1635
      %v1637 = vpop.f32.mrb[0].mxu0
      %1638 = vmatprep.mubr.bf16.mxu0 0
      %1639 = vmatmul.mubr.bf16.gmra.mrb[0].mxu0 %v1473
      %v1640 = vpop.f32.mrb[0].mxu0
      %v1641 = vadd.f32 0.0, %v1640
      %v1642 = vpop.f32.mrb[0].mxu0
      %v1643 = vpop.f32.mrb[0].mxu0
      %v1644 = vadd.f32 0.0, %v1643
      %v1645 = vpop.f32.mrb[0].mxu0
      %1646 = vmatprep.mubr.bf16.mxu0 0
      %1647 = vmatmul.mubr.bf16.gmra.mrb[0].mxu0 %v1476
      %v1648 = vpop.f32.mrb[0].mxu0
      %v1649 = vadd.f32 0.0, %v1648
      %v1650 = vpop.f32.mrb[0].mxu0
      %v1651 = vpop.f32.mrb[0].mxu0
      %v1652 = vadd.f32 0.0, %v1651
      %v1653 = vpop.f32.mrb[0].mxu0
      %1654 = vdwg.mxu0
      %v1655 = vadd.f32 %v1194, %v1513
      %v1656 = vadd.f32 %v1197, %v1516
      %v1657 = vadd.f32 %v1202, %v1521
      %v1658 = vadd.f32 %v1205, %v1524
      %v1659 = vadd.f32 %v1210, %v1529
      %v1660 = vadd.f32 %v1213, %v1532
      %v1661 = vadd.f32 %v1218, %v1537
      %v1662 = vadd.f32 %v1221, %v1540
      %v1663 = vadd.f32 %v1226, %v1545
      %v1664 = vadd.f32 %v1229, %v1548
      %v1665 = vadd.f32 %v1234, %v1553
      %v1666 = vadd.f32 %v1237, %v1556
      %v1667 = vadd.f32 %v1242, %v1561
      %v1668 = vadd.f32 %v1245, %v1564
      %v1669 = vadd.f32 %v1250, %v1569
      %v1670 = vadd.f32 %v1253, %v1572
      %v1671 = vadd.f32 %v1258, %v1577
      %v1672 = vadd.f32 %v1261, %v1580
      %v1673 = vadd.f32 %v1266, %v1585
      %v1674 = vadd.f32 %v1269, %v1588
      %v1675 = vadd.f32 %v1274, %v1593
      %v1676 = vadd.f32 %v1277, %v1596
      %v1677 = vadd.f32 %v1282, %v1601
      %v1678 = vadd.f32 %v1285, %v1604
      %v1679 = vadd.f32 %v1290, %v1609
      %v1680 = vadd.f32 %v1293, %v1612
      %v1681 = vadd.f32 %v1298, %v1617
      %v1682 = vadd.f32 %v1301, %v1620
      %v1683 = vadd.f32 %v1306, %v1625
      %v1684 = vadd.f32 %v1309, %v1628
      %v1685 = vadd.f32 %v1314, %v1633
      %v1686 = vadd.f32 %v1317, %v1636
      %v1687 = vadd.f32 %v1322, %v1641
      %v1688 = vadd.f32 %v1325, %v1644
      %v1689 = vadd.f32 %v1330, %v1649
      %v1690 = vadd.f32 %v1333, %v1652
      %s1691 = scalar_lea.vmem %s1, 96
      %v1692 = vld [vmem:[%s1691] sm:$0xf]
      %v1693 = vld [vmem:[%s1691 + $0x4] sm:$0xf]
      %v1694 = vld [vmem:[%s1691 + $0x8] sm:$0xf]
      %v1695 = vld [vmem:[%s1691 + $0xc] sm:$0xf]
      %v1696 = vld [vmem:[%s1691 + $0x10] sm:$0xf]
      %v1697 = vld [vmem:[%s1691 + $0x14] sm:$0xf]
      %v1698 = vld [vmem:[%s1691 + $0x18] sm:$0xf]
      %v1699 = vld [vmem:[%s1691 + $0x1c] sm:$0xf]
      %v1703 = vunpack.c.l.b16 %v201
      %v1704 = vunpack.c.l.b16 %v202
      %v1705 = vunpack.c.l.b16 %v203
      %v1706 = vpack.c.b16 %v1704, %v1703
      %v1707 = vpack.c.b16 %v717, %v1705
      %v1708 = vpack.c.b16 %v719, %v718
      %v1709 = vpack.c.b16 %v721, %v720
      %v1710 = vpack.c.b16 %v723, %v722
      %v1711 = vpack.c.b16 %v725, %v724
      %v1712 = vpack.c.b16 %v727, %v726
      %v1713 = vpack.c.b16 %v729, %v728
      %v1714 = vpack.c.b16 %v731, %v730
      %v1715 = vpack.c.b16 %v733, %v732
      %v1716 = vpack.c.b16 %v735, %v734
      %v1717 = vpack.c.b16 %v737, %v736
      %v1718 = vpack.c.b16 %v739, %v738
      %v1719 = vpack.c.b16 %v741, %v740
      %v1720 = vpack.c.b16 %v743, %v742
      %v1721 = vpack.c.b16 %v745, %v744
      %v1722 = vpack.c.b16 %v747, %v746
      %v1723 = vpack.c.b16 %v749, %v748
      %v1732 = vunpack.c.l.b16 %v1692
      %v1733 = vunpack.c.l.b16 %v1693
      %v1734 = vunpack.c.l.b16 %v1694
      %v1735 = vunpack.c.l.b16 %v1695
      %v1736 = vunpack.c.l.b16 %v1696
      %v1737 = vunpack.c.l.b16 %v1697
      %v1738 = vunpack.c.l.b16 %v1698
      %v1739 = vunpack.c.l.b16 %v1699
      %v1740 = vpack.c.b16 %v1733, %v1732
      %v1741 = vpack.c.b16 %v1735, %v1734
      %v1742 = vpack.c.b16 %v1737, %v1736
      %v1743 = vpack.c.b16 %v1739, %v1738
      %v1749 = vsel %vm795, %v1706, 0
      %v1752 = vsel %vm795, %v1707, 0
      %v1755 = vsel %vm795, %v1708, 0
      %v1758 = vsel %vm795, %v1709, 0
      %v1761 = vsel %vm795, %v1710, 0
      %v1764 = vsel %vm795, %v1711, 0
      %v1767 = vsel %vm795, %v1712, 0
      %v1770 = vsel %vm795, %v1713, 0
      %v1773 = vsel %vm795, %v1714, 0
      %v1776 = vsel %vm795, %v1715, 0
      %v1779 = vsel %vm795, %v1716, 0
      %v1782 = vsel %vm795, %v1717, 0
      %v1785 = vsel %vm795, %v1718, 0
      %v1788 = vsel %vm795, %v1719, 0
      %v1791 = vsel %vm795, %v1720, 0
      %v1794 = vsel %vm795, %v1721, 0
      %v1797 = vsel %vm795, %v1722, 0
      %v1800 = vsel %vm795, %v1723, 0
      %1802 = vmatprep.subr.bf16.mxu0 0
      %1803 = vmatpush1.bf16.msra.mxu0 %v1740
      %1804 = vmatprep.subr.bf16.mxu0 0
      %1805 = vmatpush1.bf16.msra.mxu0 %v1741
      %1806 = vmatprep.subr.bf16.mxu0 0
      %1807 = vmatpush1.bf16.msra.mxu0 %v1742
      %1808 = vmatprep.subr.bf16.mxu0 0
      %1809 = vmatpush1.bf16.msra.mxu0 %v1743
      %1810 = vmatprep.subr.bf16.mxu0 0
      %1811 = vmatpush1.bf16.msra.mxu0 0
      %1812 = vmatprep.subr.bf16.mxu0 0
      %1813 = vmatpush1.bf16.msra.mxu0 0
      %1814 = vmatprep.subr.bf16.mxu0 0
      %1815 = vmatpush1.bf16.msra.mxu0 0
      %1816 = vmatprep.subr.bf16.mxu0 0
      %1817 = vmatpush1.bf16.msra.mxu0 0
      %1818 = vmatprep.subr.bf16.mxu0 0
      %1819 = vmatpush1.bf16.msra.mxu0 0
      %1820 = vmatprep.subr.bf16.mxu0 0
      %1821 = vmatpush1.bf16.msra.mxu0 0
      %1822 = vmatprep.subr.bf16.mxu0 0
      %1823 = vmatpush1.bf16.msra.mxu0 0
      %1824 = vmatprep.subr.bf16.mxu0 0
      %1825 = vmatpush1.bf16.msra.mxu0 0
      %1826 = vmatprep.subr.bf16.mxu0 0
      %1827 = vmatpush1.bf16.msra.mxu0 0
      %1828 = vmatprep.subr.bf16.mxu0 0
      %1829 = vmatpush1.bf16.msra.mxu0 0
      %1830 = vmatprep.subr.bf16.mxu0 0
      %1831 = vmatpush1.bf16.msra.mxu0 0
      %1832 = vmatprep.subr.bf16.mxu0 0
      %1833 = vmatpush1.bf16.msra.mxu0 0
      %1834 = vmatprep.mubr.bf16.mxu0 0
      %1835 = vmatmul.mubr.bf16.gmra.mrb[0].mxu0 %v1749
      %v1836 = vpop.f32.mrb[0].mxu0
      %v1837 = vadd.f32 0.0, %v1836
      %v1838 = vpop.f32.mrb[0].mxu0
      %v1839 = vpop.f32.mrb[0].mxu0
      %v1840 = vadd.f32 0.0, %v1839
      %v1841 = vpop.f32.mrb[0].mxu0
      %1842 = vmatprep.mubr.bf16.mxu0 0
      %1843 = vmatmul.mubr.bf16.gmra.mrb[0].mxu0 %v1752
      %v1844 = vpop.f32.mrb[0].mxu0
      %v1845 = vadd.f32 0.0, %v1844
      %v1846 = vpop.f32.mrb[0].mxu0
      %v1847 = vpop.f32.mrb[0].mxu0
      %v1848 = vadd.f32 0.0, %v1847
      %v1849 = vpop.f32.mrb[0].mxu0
      %1850 = vmatprep.mubr.bf16.mxu0 0
      %1851 = vmatmul.mubr.bf16.gmra.mrb[0].mxu0 %v1755
      %v1852 = vpop.f32.mrb[0].mxu0
      %v1853 = vadd.f32 0.0, %v1852
      %v1854 = vpop.f32.mrb[0].mxu0
      %v1855 = vpop.f32.mrb[0].mxu0
      %v1856 = vadd.f32 0.0, %v1855
      %v1857 = vpop.f32.mrb[0].mxu0
      %1858 = vmatprep.mubr.bf16.mxu0 0
      %1859 = vmatmul.mubr.bf16.gmra.mrb[0].mxu0 %v1758
      %v1860 = vpop.f32.mrb[0].mxu0
      %v1861 = vadd.f32 0.0, %v1860
      %v1862 = vpop.f32.mrb[0].mxu0
      %v1863 = vpop.f32.mrb[0].mxu0
      %v1864 = vadd.f32 0.0, %v1863
      %v1865 = vpop.f32.mrb[0].mxu0
      %1866 = vmatprep.mubr.bf16.mxu0 0
      %1867 = vmatmul.mubr.bf16.gmra.mrb[0].mxu0 %v1761
      %v1868 = vpop.f32.mrb[0].mxu0
      %v1869 = vadd.f32 0.0, %v1868
      %v1870 = vpop.f32.mrb[0].mxu0
      %v1871 = vpop.f32.mrb[0].mxu0
      %v1872 = vadd.f32 0.0, %v1871
      %v1873 = vpop.f32.mrb[0].mxu0
      %1874 = vmatprep.mubr.bf16.mxu0 0
      %1875 = vmatmul.mubr.bf16.gmra.mrb[0].mxu0 %v1764
      %v1876 = vpop.f32.mrb[0].mxu0
      %v1877 = vadd.f32 0.0, %v1876
      %v1878 = vpop.f32.mrb[0].mxu0
      %v1879 = vpop.f32.mrb[0].mxu0
      %v1880 = vadd.f32 0.0, %v1879
      %v1881 = vpop.f32.mrb[0].mxu0
      %1882 = vmatprep.mubr.bf16.mxu0 0
      %1883 = vmatmul.mubr.bf16.gmra.mrb[0].mxu0 %v1767
      %v1884 = vpop.f32.mrb[0].mxu0
      %v1885 = vadd.f32 0.0, %v1884
      %v1886 = vpop.f32.mrb[0].mxu0
      %v1887 = vpop.f32.mrb[0].mxu0
      %v1888 = vadd.f32 0.0, %v1887
      %v1889 = vpop.f32.mrb[0].mxu0
      %1890 = vmatprep.mubr.bf16.mxu0 0
      %1891 = vmatmul.mubr.bf16.gmra.mrb[0].mxu0 %v1770
      %v1892 = vpop.f32.mrb[0].mxu0
      %v1893 = vadd.f32 0.0, %v1892
      %v1894 = vpop.f32.mrb[0].mxu0
      %v1895 = vpop.f32.mrb[0].mxu0
      %v1896 = vadd.f32 0.0, %v1895
      %v1897 = vpop.f32.mrb[0].mxu0
      %1898 = vmatprep.mubr.bf16.mxu0 0
      %1899 = vmatmul.mubr.bf16.gmra.mrb[0].mxu0 %v1773
      %v1900 = vpop.f32.mrb[0].mxu0
      %v1901 = vadd.f32 0.0, %v1900
      %v1902 = vpop.f32.mrb[0].mxu0
      %v1903 = vpop.f32.mrb[0].mxu0
      %v1904 = vadd.f32 0.0, %v1903
      %v1905 = vpop.f32.mrb[0].mxu0
      %1906 = vmatprep.mubr.bf16.mxu0 0
      %1907 = vmatmul.mubr.bf16.gmra.mrb[0].mxu0 %v1776
      %v1908 = vpop.f32.mrb[0].mxu0
      %v1909 = vadd.f32 0.0, %v1908
      %v1910 = vpop.f32.mrb[0].mxu0
      %v1911 = vpop.f32.mrb[0].mxu0
      %v1912 = vadd.f32 0.0, %v1911
      %v1913 = vpop.f32.mrb[0].mxu0
      %1914 = vmatprep.mubr.bf16.mxu0 0
      %1915 = vmatmul.mubr.bf16.gmra.mrb[0].mxu0 %v1779
      %v1916 = vpop.f32.mrb[0].mxu0
      %v1917 = vadd.f32 0.0, %v1916
      %v1918 = vpop.f32.mrb[0].mxu0
      %v1919 = vpop.f32.mrb[0].mxu0
      %v1920 = vadd.f32 0.0, %v1919
      %v1921 = vpop.f32.mrb[0].mxu0
      %1922 = vmatprep.mubr.bf16.mxu0 0
      %1923 = vmatmul.mubr.bf16.gmra.mrb[0].mxu0 %v1782
      %v1924 = vpop.f32.mrb[0].mxu0
      %v1925 = vadd.f32 0.0, %v1924
      %v1926 = vpop.f32.mrb[0].mxu0
      %v1927 = vpop.f32.mrb[0].mxu0
      %v1928 = vadd.f32 0.0, %v1927
      %v1929 = vpop.f32.mrb[0].mxu0
      %1930 = vmatprep.mubr.bf16.mxu0 0
      %1931 = vmatmul.mubr.bf16.gmra.mrb[0].mxu0 %v1785
      %v1932 = vpop.f32.mrb[0].mxu0
      %v1933 = vadd.f32 0.0, %v1932
      %v1934 = vpop.f32.mrb[0].mxu0
      %v1935 = vpop.f32.mrb[0].mxu0
      %v1936 = vadd.f32 0.0, %v1935
      %v1937 = vpop.f32.mrb[0].mxu0
      %1938 = vmatprep.mubr.bf16.mxu0 0
      %1939 = vmatmul.mubr.bf16.gmra.mrb[0].mxu0 %v1788
      %v1940 = vpop.f32.mrb[0].mxu0
      %v1941 = vadd.f32 0.0, %v1940
      %v1942 = vpop.f32.mrb[0].mxu0
      %v1943 = vpop.f32.mrb[0].mxu0
      %v1944 = vadd.f32 0.0, %v1943
      %v1945 = vpop.f32.mrb[0].mxu0
      %1946 = vmatprep.mubr.bf16.mxu0 0
      %1947 = vmatmul.mubr.bf16.gmra.mrb[0].mxu0 %v1791
      %v1948 = vpop.f32.mrb[0].mxu0
      %v1949 = vadd.f32 0.0, %v1948
      %v1950 = vpop.f32.mrb[0].mxu0
      %v1951 = vpop.f32.mrb[0].mxu0
      %v1952 = vadd.f32 0.0, %v1951
      %v1953 = vpop.f32.mrb[0].mxu0
      %1954 = vmatprep.mubr.bf16.mxu0 0
      %1955 = vmatmul.mubr.bf16.gmra.mrb[0].mxu0 %v1794
      %v1956 = vpop.f32.mrb[0].mxu0
      %v1957 = vadd.f32 0.0, %v1956
      %v1958 = vpop.f32.mrb[0].mxu0
      %v1959 = vpop.f32.mrb[0].mxu0
      %v1960 = vadd.f32 0.0, %v1959
      %v1961 = vpop.f32.mrb[0].mxu0
      %1962 = vmatprep.mubr.bf16.mxu0 0
      %1963 = vmatmul.mubr.bf16.gmra.mrb[0].mxu0 %v1797
      %v1964 = vpop.f32.mrb[0].mxu0
      %v1965 = vadd.f32 0.0, %v1964
      %v1966 = vpop.f32.mrb[0].mxu0
      %v1967 = vpop.f32.mrb[0].mxu0
      %v1968 = vadd.f32 0.0, %v1967
      %v1969 = vpop.f32.mrb[0].mxu0
      %1970 = vmatprep.mubr.bf16.mxu0 0
      %1971 = vmatmul.mubr.bf16.gmra.mrb[0].mxu0 %v1800
      %v1972 = vpop.f32.mrb[0].mxu0
      %v1973 = vadd.f32 0.0, %v1972
      %v1974 = vpop.f32.mrb[0].mxu0
      %v1975 = vpop.f32.mrb[0].mxu0
      %v1976 = vadd.f32 0.0, %v1975
      %v1977 = vpop.f32.mrb[0].mxu0
      %1978 = vdwg.mxu0
      %v1979 = vadd.f32 %v1655, %v1837
      %v1980 = vadd.f32 %v1656, %v1840
      %v1981 = vadd.f32 %v1657, %v1845
      %v1982 = vadd.f32 %v1658, %v1848
      %v1983 = vadd.f32 %v1659, %v1853
      %v1984 = vadd.f32 %v1660, %v1856
      %v1985 = vadd.f32 %v1661, %v1861
      %v1986 = vadd.f32 %v1662, %v1864
      %v1987 = vadd.f32 %v1663, %v1869
      %v1988 = vadd.f32 %v1664, %v1872
      %v1989 = vadd.f32 %v1665, %v1877
      %v1990 = vadd.f32 %v1666, %v1880
      %v1991 = vadd.f32 %v1667, %v1885
      %v1992 = vadd.f32 %v1668, %v1888
      %v1993 = vadd.f32 %v1669, %v1893
      %v1994 = vadd.f32 %v1670, %v1896
      %v1995 = vadd.f32 %v1671, %v1901
      %v1996 = vadd.f32 %v1672, %v1904
      %v1997 = vadd.f32 %v1673, %v1909
      %v1998 = vadd.f32 %v1674, %v1912
      %v1999 = vadd.f32 %v1675, %v1917
      %v2000 = vadd.f32 %v1676, %v1920
      %v2001 = vadd.f32 %v1677, %v1925
      %v2002 = vadd.f32 %v1678, %v1928
      %v2003 = vadd.f32 %v1679, %v1933
      %v2004 = vadd.f32 %v1680, %v1936
      %v2005 = vadd.f32 %v1681, %v1941
      %v2006 = vadd.f32 %v1682, %v1944
      %v2007 = vadd.f32 %v1683, %v1949
      %v2008 = vadd.f32 %v1684, %v1952
      %v2009 = vadd.f32 %v1685, %v1957
      %v2010 = vadd.f32 %v1686, %v1960
      %v2011 = vadd.f32 %v1687, %v1965
      %v2012 = vadd.f32 %v1688, %v1968
      %v2013 = vadd.f32 %v1689, %v1973
      %v2014 = vadd.f32 %v1690, %v1976
      %v2015 = vld [vmem:[%s2] sm:$0x1]
      %v2017 = vlaneseq
      %v2018 = vshrl.u32 %v2017, 7
      %v2019 = vsub.s32 0, %v2018
      %v2020 = vrot.slane %v2015, %v2019
      %v2022 = vadd.f32 %v1979, %v2020
      %v2023 = vadd.f32 %v1980, %v2020
      %v2024 = vadd.f32 %v1981, %v2020
      %v2025 = vadd.f32 %v1982, %v2020
      %v2026 = vadd.f32 %v1983, %v2020
      %v2027 = vadd.f32 %v1984, %v2020
      %v2028 = vadd.f32 %v1985, %v2020
      %v2029 = vadd.f32 %v1986, %v2020
      %v2030 = vadd.f32 %v1987, %v2020
      %v2031 = vadd.f32 %v1988, %v2020
      %v2032 = vadd.f32 %v1989, %v2020
      %v2033 = vadd.f32 %v1990, %v2020
      %v2034 = vadd.f32 %v1991, %v2020
      %v2035 = vadd.f32 %v1992, %v2020
      %v2036 = vadd.f32 %v1993, %v2020
      %v2037 = vadd.f32 %v1994, %v2020
      %v2038 = vadd.f32 %v1995, %v2020
      %v2039 = vadd.f32 %v1996, %v2020
      %v2040 = vadd.f32 %v1997, %v2020
      %v2041 = vadd.f32 %v1998, %v2020
      %v2042 = vadd.f32 %v1999, %v2020
      %v2043 = vadd.f32 %v2000, %v2020
      %v2044 = vadd.f32 %v2001, %v2020
      %v2045 = vadd.f32 %v2002, %v2020
      %v2046 = vadd.f32 %v2003, %v2020
      %v2047 = vadd.f32 %v2004, %v2020
      %v2048 = vadd.f32 %v2005, %v2020
      %v2049 = vadd.f32 %v2006, %v2020
      %v2050 = vadd.f32 %v2007, %v2020
      %v2051 = vadd.f32 %v2008, %v2020
      %v2052 = vadd.f32 %v2009, %v2020
      %v2053 = vadd.f32 %v2010, %v2020
      %v2054 = vadd.f32 %v2011, %v2020
      %v2055 = vadd.f32 %v2012, %v2020
      %v2056 = vadd.f32 %v2013, %v2020
      %v2057 = vadd.f32 %v2014, %v2020
      %v2058 = vmax.f32 %v2022, 0.0
      %v2059 = vmax.f32 %v2023, 0.0
      %v2060 = vmax.f32 %v2024, 0.0
      %v2061 = vmax.f32 %v2025, 0.0
      %v2062 = vmax.f32 %v2026, 0.0
      %v2063 = vmax.f32 %v2027, 0.0
      %v2064 = vmax.f32 %v2028, 0.0
      %v2065 = vmax.f32 %v2029, 0.0
      %v2066 = vmax.f32 %v2030, 0.0
      %v2067 = vmax.f32 %v2031, 0.0
      %v2068 = vmax.f32 %v2032, 0.0
      %v2069 = vmax.f32 %v2033, 0.0
      %v2070 = vmax.f32 %v2034, 0.0
      %v2071 = vmax.f32 %v2035, 0.0
      %v2072 = vmax.f32 %v2036, 0.0
      %v2073 = vmax.f32 %v2037, 0.0
      %v2074 = vmax.f32 %v2038, 0.0
      %v2075 = vmax.f32 %v2039, 0.0
      %v2076 = vmax.f32 %v2040, 0.0
      %v2077 = vmax.f32 %v2041, 0.0
      %v2078 = vmax.f32 %v2042, 0.0
      %v2079 = vmax.f32 %v2043, 0.0
      %v2080 = vmax.f32 %v2044, 0.0
      %v2081 = vmax.f32 %v2045, 0.0
      %v2082 = vmax.f32 %v2046, 0.0
      %v2083 = vmax.f32 %v2047, 0.0
      %v2084 = vmax.f32 %v2048, 0.0
      %v2085 = vmax.f32 %v2049, 0.0
      %v2086 = vmax.f32 %v2050, 0.0
      %v2087 = vmax.f32 %v2051, 0.0
      %v2088 = vmax.f32 %v2052, 0.0
      %v2089 = vmax.f32 %v2053, 0.0
      %v2090 = vmax.f32 %v2054, 0.0
      %v2091 = vmax.f32 %v2055, 0.0
      %v2092 = vmax.f32 %v2056, 0.0
      %v2093 = vmax.f32 %v2057, 0.0
      %v2094 = vpack.c.bf16 %v2059, %v2058
      %v2095 = vpack.c.bf16 %v2060, %v2060
      %v2096 = vpack.c.bf16 %v2062, %v2061
      %v2097 = vpack.c.bf16 %v2063, %v2063
      %v2098 = vpack.c.bf16 %v2065, %v2064
      %v2099 = vpack.c.bf16 %v2066, %v2066
      %v2100 = vpack.c.bf16 %v2068, %v2067
      %v2101 = vpack.c.bf16 %v2069, %v2069
      %v2102 = vpack.c.bf16 %v2071, %v2070
      %v2103 = vpack.c.bf16 %v2072, %v2072
      %v2104 = vpack.c.bf16 %v2074, %v2073
      %v2105 = vpack.c.bf16 %v2075, %v2075
      %v2106 = vpack.c.bf16 %v2077, %v2076
      %v2107 = vpack.c.bf16 %v2078, %v2078
      %v2108 = vpack.c.bf16 %v2080, %v2079
      %v2109 = vpack.c.bf16 %v2081, %v2081
      %v2110 = vpack.c.bf16 %v2083, %v2082
      %v2111 = vpack.c.bf16 %v2084, %v2084
      %v2112 = vpack.c.bf16 %v2086, %v2085
      %v2113 = vpack.c.bf16 %v2087, %v2087
      %v2114 = vpack.c.bf16 %v2089, %v2088
      %v2115 = vpack.c.bf16 %v2090, %v2090
      %v2116 = vpack.c.bf16 %v2092, %v2091
      %v2117 = vpack.c.bf16 %v2093, %v2093
      %v2142 = vunpack.c.l.b16 %v2094
      %v2143 = vunpack.c.h.b16 %v2094
      %v2144 = vunpack.c.l.b16 %v2095
      %v2145 = vunpack.c.l.b16 %v2096
      %v2146 = vunpack.c.h.b16 %v2096
      %v2147 = vunpack.c.l.b16 %v2097
      %v2148 = vunpack.c.l.b16 %v2098
      %v2149 = vunpack.c.h.b16 %v2098
      %v2150 = vunpack.c.l.b16 %v2099
      %v2151 = vunpack.c.l.b16 %v2100
      %v2152 = vunpack.c.h.b16 %v2100
      %v2153 = vunpack.c.l.b16 %v2101
      %v2154 = vunpack.c.l.b16 %v2102
      %v2155 = vunpack.c.h.b16 %v2102
      %v2156 = vunpack.c.l.b16 %v2103
      %v2157 = vunpack.c.l.b16 %v2104
      %v2158 = vunpack.c.h.b16 %v2104
      %v2159 = vunpack.c.l.b16 %v2105
      %v2160 = vunpack.c.l.b16 %v2106
      %v2161 = vunpack.c.h.b16 %v2106
      %v2162 = vunpack.c.l.b16 %v2107
      %v2163 = vunpack.c.l.b16 %v2108
      %v2164 = vunpack.c.h.b16 %v2108
      %v2165 = vunpack.c.l.b16 %v2109
      %v2166 = vunpack.c.l.b16 %v2110
      %v2167 = vunpack.c.h.b16 %v2110
      %v2168 = vunpack.c.l.b16 %v2111
      %v2169 = vunpack.c.l.b16 %v2112
      %v2170 = vunpack.c.h.b16 %v2112
      %v2171 = vunpack.c.l.b16 %v2113
      %v2172 = vunpack.c.l.b16 %v2114
      %v2173 = vunpack.c.h.b16 %v2114
      %v2174 = vunpack.c.l.b16 %v2115
      %v2175 = vunpack.c.l.b16 %v2116
      %v2176 = vunpack.c.h.b16 %v2116
      %v2177 = vunpack.c.l.b16 %v2117
      %v2178 = vpack.c.b16 %v2142, %v2142
      %v2179 = vpack.c.b16 %v2143, %v2143
      %v2180 = vpack.c.b16 %v2144, %v2144
      %v2181 = vpack.c.b16 %v2145, %v2145
      %v2182 = vpack.c.b16 %v2146, %v2146
      %v2183 = vpack.c.b16 %v2147, %v2147
      %v2184 = vpack.c.b16 %v2148, %v2148
      %v2185 = vpack.c.b16 %v2149, %v2149
      %v2186 = vpack.c.b16 %v2150, %v2150
      %v2187 = vpack.c.b16 %v2151, %v2151
      %v2188 = vpack.c.b16 %v2152, %v2152
      %v2189 = vpack.c.b16 %v2153, %v2153
      %v2190 = vpack.c.b16 %v2154, %v2154
      %v2191 = vpack.c.b16 %v2155, %v2155
      %v2192 = vpack.c.b16 %v2156, %v2156
      %v2193 = vpack.c.b16 %v2157, %v2157
      %v2194 = vpack.c.b16 %v2158, %v2158
      %v2195 = vpack.c.b16 %v2159, %v2159
      %v2196 = vpack.c.b16 %v2160, %v2160
      %v2197 = vpack.c.b16 %v2161, %v2161
      %v2198 = vpack.c.b16 %v2162, %v2162
      %v2199 = vpack.c.b16 %v2163, %v2163
      %v2200 = vpack.c.b16 %v2164, %v2164
      %v2201 = vpack.c.b16 %v2165, %v2165
      %v2202 = vpack.c.b16 %v2166, %v2166
      %v2203 = vpack.c.b16 %v2167, %v2167
      %v2204 = vpack.c.b16 %v2168, %v2168
      %v2205 = vpack.c.b16 %v2169, %v2169
      %v2206 = vpack.c.b16 %v2170, %v2170
      %v2207 = vpack.c.b16 %v2171, %v2171
      %v2208 = vpack.c.b16 %v2172, %v2172
      %v2209 = vpack.c.b16 %v2173, %v2173
      %v2210 = vpack.c.b16 %v2174, %v2174
      %v2211 = vpack.c.b16 %v2175, %v2175
      %v2212 = vpack.c.b16 %v2176, %v2176
      %v2213 = vpack.c.b16 %v2177, %v2177
      %2250 = vst [vmem:[%s194] sm:$0xf] %v2178
      %2251 = vst [vmem:[%s194 + $0x4] sm:$0xf] %v2179
      %2252 = vst [vmem:[%s194 + $0x8] sm:$0xf] %v2180
      %2253 = vst [vmem:[%s194 + $0xc] sm:$0xf] %v2181
      %2254 = vst [vmem:[%s194 + $0x10] sm:$0xf] %v2182
      %2255 = vst [vmem:[%s194 + $0x14] sm:$0xf] %v2183
      %2256 = vst [vmem:[%s194 + $0x18] sm:$0xf] %v2184
      %2257 = vst [vmem:[%s194 + $0x1c] sm:$0xf] %v2185
      %2258 = vst [vmem:[%s194 + $0x20] sm:$0xf] %v2186
      %2259 = vst [vmem:[%s194 + $0x24] sm:$0xf] %v2187
      %2260 = vst [vmem:[%s194 + $0x28] sm:$0xf] %v2188
      %2261 = vst [vmem:[%s194 + $0x2c] sm:$0xf] %v2189
      %2262 = vst [vmem:[%s194 + $0x30] sm:$0xf] %v2190
      %2263 = vst [vmem:[%s194 + $0x34] sm:$0xf] %v2191
      %2264 = vst [vmem:[%s194 + $0x38] sm:$0xf] %v2192
      %2265 = vst [vmem:[%s194 + $0x3c] sm:$0xf] %v2193
      %2266 = vst [vmem:[%s194 + $0x40] sm:$0xf] %v2194
      %2267 = vst [vmem:[%s194 + $0x44] sm:$0xf] %v2195
      %2268 = vst [vmem:[%s194 + $0x48] sm:$0xf] %v2196
      %2269 = vst [vmem:[%s194 + $0x4c] sm:$0xf] %v2197
      %2270 = vst [vmem:[%s194 + $0x50] sm:$0xf] %v2198
      %2271 = vst [vmem:[%s194 + $0x54] sm:$0xf] %v2199
      %2272 = vst [vmem:[%s194 + $0x58] sm:$0xf] %v2200
      %2273 = vst [vmem:[%s194 + $0x5c] sm:$0xf] %v2201
      %2274 = vst [vmem:[%s194 + $0x60] sm:$0xf] %v2202
      %2275 = vst [vmem:[%s194 + $0x64] sm:$0xf] %v2203
      %2276 = vst [vmem:[%s194 + $0x68] sm:$0xf] %v2204
      %2277 = vst [vmem:[%s194 + $0x6c] sm:$0xf] %v2205
      %2278 = vst [vmem:[%s194 + $0x70] sm:$0xf] %v2206
      %2279 = vst [vmem:[%s194 + $0x74] sm:$0xf] %v2207
      %2280 = vst [vmem:[%s194 + $0x78] sm:$0xf] %v2208
      %2281 = vst [vmem:[%s194 + $0x7c] sm:$0xf] %v2209
      %2282 = vst [vmem:[%s194 + $0x80] sm:$0xf] %v2210
      %2283 = vst [vmem:[%s194 + $0x84] sm:$0xf] %v2211
      %2284 = vst [vmem:[%s194 + $0x88] sm:$0xf] %v2212
      %2285 = vst [vmem:[%s194 + $0x8c] sm:$0xf] %v2213
      %s2286 = smul.u32 12, %s19
      %p2287 = scmp.lt.s32.totalorder %s18, 1
      %s2288 = scalar_select %p2287, %s18, 1
      %p2289 = scmp.lt.s32.totalorder %s2286, 23
      %s2290 = scalar_select %p2289, %s2286, 23
      %s2291 = smul.addr %s2290, 3
      %s2292 = smul.addr %s2288, 72
      %s2293 = sadd.s32 %s2291, %s2292
      %s2294 = smul.addr %s2293, 4
      %s2295 = scalar_lea.vmem %s3, %s2294
      // Predicated region
      $region33: #{conv_decoder_forward.8} parent=31 // pred_check
        %p2296 = pneg %p114
      $region34: #{conv_decoder_forward.8} parent=31 // pred_check_branch
        %2298 = sbr.rel (%p2296) target = $region36
      $region35: #{conv_decoder_forward.8} parent=31 // pred_region
        %s2299 = smul.u32 12, %s19
      $region36: #{conv_decoder_forward.8} parent=31 // pred_fallthru
        _
    $region32: #{conv_decoder_forward.8} parent=5 // pred_fallthru
      _
    %p2300 = scmp.le.s32.totalorder 2, %s9
    // Predicated region
    $region37: #{conv_decoder_forward.8} parent=5 // pred_check
      %p2301 = pneg %p2300
    $region38: #{conv_decoder_forward.8} parent=5 // pred_check_branch
      %2303 = sbr.rel (%p2301) target = $region40
    $region39: #{conv_decoder_forward.8} parent=5 // pred_region
      %s2304 = ssub.s32 %s9, 2
      // Predicated region
      $region41: #{conv_decoder_forward.8} parent=39 // pred_check
        %p2305 = pneg %p120
      $region42: #{conv_decoder_forward.8} parent=39 // pred_check_branch
        %2307 = sbr.rel (%p2305) target = $region44
      $region43: #{conv_decoder_forward.8} parent=39 // pred_region
        %s2308 = smul.u32 12, %s21
        %p2309 = scmp.lt.s32.totalorder %s20, 1
        %s2310 = scalar_select %p2309, %s20, 1
        %p2311 = scmp.lt.s32.totalorder %s2308, 23
        %s2312 = scalar_select %p2311, %s2308, 23
        %s2313 = smul.addr %s2312, 3
        %s2314 = smul.addr %s2310, 72
        %s2315 = sadd.s32 %s2313, %s2314
        %s2316 = smul.addr %s2315, 4
        %s2317 = scalar_lea.vmem %s3, %s2316
      $region44: #{conv_decoder_forward.8} parent=39 // pred_fallthru
        _
    $region40: #{conv_decoder_forward.8} parent=5 // pred_fallthru
      _
  $region6: #{conv_decoder_forward.8} parent=0 // loop_footer
    %s13 = sadd.s32 1, %s9
  $region7: #{conv_decoder_forward.8} parent=0 // loop_footer_branch
    %8 = sbr.rel target = $region3
  $region8: #{conv_decoder_forward.8} parent=0 // loop_exit
    _

// kernel: conv_decoder_forward.9
$region0: #{conv_decoder_forward.9}
  #allocation0 [shape = 'u32[]', space=smem, size = 0x4, offset = 0x4, fixed_abs, tag = 'smem constant byte address 0x4 - core index']
  #allocation1 [shape = 'u32[144,128]{1,0:T(1,128)}', space=vmem, size = 0x12000, scoped, tag = 'internal scratch']
  %s0 = inlined_call_operand.vmem [shape: bf16[2,51,49,32], index: 0, kind: input, shape index: {}]
  %s1 = inlined_call_operand.vmem [shape: bf16[4,32,128], index: 1, kind: input, shape index: {}]
  %s2 = inlined_call_operand.vmem [shape: f32[1,128], index: 2, kind: input, shape index: {}]
  %s3 = inlined_call_operand.vmem [shape: f32[2,50,48,128], index: 3, kind: output, shape index: {}]
  %s4 = sld [smem:[#allocation0]]
  $region45: #{conv_decoder_forward.9} parent=0
    _
  %s6 = ssub.s32 1, %s4
  %s7 = scalar_select 0, %s6, %s4
  loop: start=0, step=1, limit=12
  $region2: #{conv_decoder_forward.9} parent=0 // loop_pre_header
    _
  $region3: #{conv_decoder_forward.9} parent=0 // loop_header
    %s9 = sphi 0, %s13
    %p10 = scmp.ge.s32.totalorder %s9, 12
    %s16 = sphi 0, %s28
    %s17 = sphi 0, %s24
    %s18 = sphi 0, %s16
    %s19 = sphi 0, %s17
    %s20 = sphi 0, %s18
    %s21 = sphi 0, %s19
    %s31 = sphi 0, %s33
    %s34 = sphi 0, %s31
    %s35 = sphi 0, %s34
    %s51 = sphi 0, %s35
    %s55 = sphi 0, %s55
    %s57 = sphi 0, %s55
    %s58 = sphi 0, %s57
    %s72 = sphi 0, %s58
    %s76 = sphi 0, %s76
    %s78 = sphi 0, %s76
    %s79 = sphi 0, %s78
    %s93 = sphi 0, %s79
    %s101 = sphi 0, %s103
    %s104 = sphi 0, %s101
    %s105 = sphi 0, %s104
    %s121 = sphi 0, %s105
  $region4: #{conv_decoder_forward.9} parent=0 // loop_header_branch
    %12 = sbr.rel (%p10) target = $region8
  $region5: #{conv_decoder_forward.9} parent=0 // loop_body
    %s14 = ssub.s32 %s9, 1
    %s15 = ssub.s32 %s9, 2
    %s22 = sadd.s32 1, %s17
    %p23 = scmp.ge.s32.totalorder %s22, 5
    %s24 = scalar_select %p23, 0, %s22
    %s25 = sadd.s32 1, %s16
    %s26 = scalar_select %p23, %s25, %s16
    %p27 = scmp.ge.s32.totalorder %s26, 2
    %s28 = scalar_select %p27, 0, %s26
    %s29 = ssub.s32 %s16, %s28
    %p30 = scmp.eq.s32.totalorder %s29, 0
    %s32 = sadd.s32 %s31, 1
    %s33 = scalar_select %p30, %s31, %s32
    %p36 = pneg %p30
    %p37 = scmp.eq.s32.totalorder %s9, 9
    %p38 = por %p36, %p37
    %p39 = scmp.ne.s32.totalorder %s31, %s34
    %p40 = scmp.eq.s32.totalorder %s9, 0
    %p41 = por %p39, %p40
    %p42 = scmp.ne.s32.totalorder %s31, %s34
    %p43 = scmp.eq.s32.totalorder %s14, 9
    %p44 = por %p42, %p43
    %p45 = scmp.ne.s32.totalorder %s34, %s35
    %p46 = scmp.eq.s32.totalorder %s14, 0
    %p47 = por %p45, %p46
    %p48 = scmp.ne.s32.totalorder %s34, %s35
    %p49 = scmp.eq.s32.totalorder %s15, 9
    %p50 = por %p48, %p49
    %p52 = scmp.ne.s32.totalorder %s35, %s51
    %p53 = scmp.eq.s32.totalorder %s15, 0
    %p54 = por %p52, %p53
    %s56 = sadd.s32 %s55, 1
    %p59 = scmp.eq.s32.totalorder %s9, 9
    %p60 = scmp.ne.s32.totalorder %s55, %s57
    %p61 = scmp.eq.s32.totalorder %s9, 0
    %p62 = por %p60, %p61
    %p63 = scmp.ne.s32.totalorder %s55, %s57
    %p64 = scmp.eq.s32.totalorder %s14, 9
    %p65 = por %p63, %p64
    %p66 = scmp.ne.s32.totalorder %s57, %s58
    %p67 = scmp.eq.s32.totalorder %s14, 0
    %p68 = por %p66, %p67
    %p69 = scmp.ne.s32.totalorder %s57, %s58
    %p70 = scmp.eq.s32.totalorder %s15, 9
    %p71 = por %p69, %p70
    %p73 = scmp.ne.s32.totalorder %s58, %s72
    %p74 = scmp.eq.s32.totalorder %s15, 0
    %p75 = por %p73, %p74
    %s77 = sadd.s32 %s76, 1
    %p80 = scmp.eq.s32.totalorder %s9, 9
    %p81 = scmp.ne.s32.totalorder %s76, %s78
    %p82 = scmp.eq.s32.totalorder %s9, 0
    %p83 = por %p81, %p82
    %p84 = scmp.ne.s32.totalorder %s76, %s78
    %p85 = scmp.eq.s32.totalorder %s14, 9
    %p86 = por %p84, %p85
    %p87 = scmp.ne.s32.totalorder %s78, %s79
    %p88 = scmp.eq.s32.totalorder %s14, 0
    %p89 = por %p87, %p88
    %p90 = scmp.ne.s32.totalorder %s78, %s79
    %p91 = scmp.eq.s32.totalorder %s15, 9
    %p92 = por %p90, %p91
    %p94 = scmp.ne.s32.totalorder %s79, %s93
    %p95 = scmp.eq.s32.totalorder %s15, 0
    %p96 = por %p94, %p95
    %s97 = ssub.s32 %s16, %s28
    %s98 = ssub.s32 %s17, %s24
    %s99 = sor.u32 %s97, %s98
    %p100 = scmp.eq.s32.totalorder %s99, 0
    %s102 = sadd.s32 %s101, 1
    %s103 = scalar_select %p100, %s101, %s102
    %p106 = pneg %p100
    %p107 = scmp.eq.s32.totalorder %s9, 9
    %p108 = por %p106, %p107
    %p109 = scmp.ne.s32.totalorder %s101, %s104
    %p110 = scmp.eq.s32.totalorder %s9, 0
    %p111 = por %p109, %p110
    %p112 = scmp.ne.s32.totalorder %s101, %s104
    %p113 = scmp.eq.s32.totalorder %s14, 9
    %p114 = por %p112, %p113
    %p115 = scmp.ne.s32.totalorder %s104, %s105
    %p116 = scmp.eq.s32.totalorder %s14, 0
    %p117 = por %p115, %p116
    %p118 = scmp.ne.s32.totalorder %s104, %s105
    %p119 = scmp.eq.s32.totalorder %s15, 9
    %p120 = por %p118, %p119
    %p122 = scmp.ne.s32.totalorder %s105, %s121
    %p123 = scmp.eq.s32.totalorder %s15, 0
    %p124 = por %p122, %p123
    %p125 = scmp.le.s32.totalorder 1, %s9
    %p126 = scmp.lt.s32.totalorder %s9, 11
    %p127 = pnand %p125, %p126
    %p128 = pneg %p127
    // Predicated region
    $region9: #{conv_decoder_forward.9} parent=5 // pred_check
      _
    $region10: #{conv_decoder_forward.9} parent=5 // pred_check_branch
      %130 = sbr.rel (%p127) target = $region12
    $region11: #{conv_decoder_forward.9} parent=5 // pred_region
      %s131 = ssub.s32 %s9, 1
      // Predicated region
      $region13: #{conv_decoder_forward.9} parent=11 // pred_check
        %p132 = pneg %p68
      $region14: #{conv_decoder_forward.9} parent=11 // pred_check_branch
        %134 = sbr.rel (%p132) target = $region16
      $region15: #{conv_decoder_forward.9} parent=11 // pred_region
        _
      $region16: #{conv_decoder_forward.9} parent=11 // pred_fallthru
        _
      // Predicated region
      $region17: #{conv_decoder_forward.9} parent=11 // pred_check
        %p135 = pneg %p89
      $region18: #{conv_decoder_forward.9} parent=11 // pred_check_branch
        %137 = sbr.rel (%p135) target = $region20
      $region19: #{conv_decoder_forward.9} parent=11 // pred_region
        _
      $region20: #{conv_decoder_forward.9} parent=11 // pred_fallthru
        _
    $region12: #{conv_decoder_forward.9} parent=5 // pred_fallthru
      _
    %p138 = scmp.lt.s32.totalorder %s9, 10
    // Predicated region
    $region21: #{conv_decoder_forward.9} parent=5 // pred_check
      %p139 = pneg %p138
    $region22: #{conv_decoder_forward.9} parent=5 // pred_check_branch
      %141 = sbr.rel (%p139) target = $region24
    $region23: #{conv_decoder_forward.9} parent=5 // pred_region
      // Predicated region
      $region25: #{conv_decoder_forward.9} parent=23 // pred_check
        %p142 = pneg %p41
      $region26: #{conv_decoder_forward.9} parent=23 // pred_check_branch
        %144 = sbr.rel (%p142) target = $region28
      $region27: #{conv_decoder_forward.9} parent=23 // pred_region
        %p145 = scmp.lt.s32.totalorder %s16, 1
        %s146 = scalar_select %p145, %s16, 1
        %s147 = smul.addr %s146, 357
        %s148 = smul.addr %s147, 4
        %s149 = scalar_lea.vmem %s0, %s148
      $region28: #{conv_decoder_forward.9} parent=23 // pred_fallthru
        _
    $region24: #{conv_decoder_forward.9} parent=5 // pred_fallthru
      _
    %p150 = scmp.le.s32.totalorder 1, %s9
    %p151 = scmp.lt.s32.totalorder %s9, 11
    %p152 = pnand %p150, %p151
    %p153 = pneg %p152
    // Predicated region
    $region29: #{conv_decoder_forward.9} parent=5 // pred_check
      _
    $region30: #{conv_decoder_forward.9} parent=5 // pred_check_branch
      %155 = sbr.rel (%p152) target = $region32
    $region31: #{conv_decoder_forward.9} parent=5 // pred_region
      %s156 = ssub.s32 %s9, 1
      %p157 = scmp.lt.s32.totalorder %s18, 1
      %s158 = scalar_select %p157, %s18, 1
      %s159 = smul.addr %s158, 357
      %s160 = smul.addr %s159, 4
      %s161 = scalar_lea.vmem %s0, %s160
      %p162 = pneg %p47
      %p163 = pneg %p44
      %p164 = pneg %p68
      %p165 = pneg %p65
      %p166 = pneg %p89
      %p167 = pneg %p86
      %p168 = pneg %p117
      %p169 = pneg %p114
      %s170 = smul.u32 10, %s19
      %p171 = scmp.lt.s32.totalorder %s18, 1
      %s172 = scalar_select %p171, %s18, 1
      %p173 = scmp.lt.s32.totalorder %s170, 49
      %s174 = scalar_select %p173, %s170, 49
      %s175 = smul.addr %s174, 6
      %s176 = smul.addr %s172, 300
      %s177 = sadd.s32 %s175, %s176
      %s178 = smul.addr %s177, 8
      %s179 = scalar_lea.vmem %s3, %s178
      %p180 = scmp.lt.s32.totalorder %s18, 1
      %s181 = scalar_select %p180, %s18, 1
      %s182 = smul.addr %s181, 357
      %s183 = smul.addr %s182, 4
      %s184 = scalar_lea.vmem %s0, %s183
      %s185 = smul.u32 10, %s19
      %p186 = scmp.lt.s32.totalorder %s18, 1
      %s187 = scalar_select %p186, %s18, 1
      %p188 = scmp.lt.s32.totalorder %s185, 49
      %s189 = scalar_select %p188, %s185, 49
      %s190 = smul.addr %s189, 6
      %s191 = smul.addr %s187, 300
      %s192 = sadd.s32 %s190, %s191
      %s193 = smul.addr %s192, 8
      %s194 = scalar_lea.vmem %s3, %s193
      %s195 = smul.u32 10, %s19
      %s197 = smul.u32 %s19, 10
      %s198 = smul.u32 %s197, 7
      %s199 = smul.addr %s198, 4
      %s200 = scalar_lea.vmem %s184, %s199
      %v201 = vld [vmem:[%s200] sm:$0xf]
      %v202 = vld [vmem:[%s200 + $0x4] sm:$0xf]
      %v203 = vld [vmem:[%s200 + $0x8] sm:$0xf]
      %v204 = vld [vmem:[%s200 + $0xc] sm:$0xf]
      %v205 = vld [vmem:[%s200 + $0x10] sm:$0xf]
      %v206 = vld [vmem:[%s200 + $0x14] sm:$0xf]
      %v207 = vld [vmem:[%s200 + $0x18] sm:$0x1]
      %v208 = vld [vmem:[%s200 + $0x1c] sm:$0xf]
      %v209 = vld [vmem:[%s200 + $0x20] sm:$0xf]
      %v210 = vld [vmem:[%s200 + $0x24] sm:$0xf]
      %v211 = vld [vmem:[%s200 + $0x28] sm:$0xf]
      %v212 = vld [vmem:[%s200 + $0x2c] sm:$0xf]
      %v213 = vld [vmem:[%s200 + $0x30] sm:$0xf]
      %v214 = vld [vmem:[%s200 + $0x34] sm:$0x1]
      %v215 = vld [vmem:[%s200 + $0x38] sm:$0xf]
      %v216 = vld [vmem:[%s200 + $0x3c] sm:$0xf]
      %v217 = vld [vmem:[%s200 + $0x40] sm:$0xf]
      %v218 = vld [vmem:[%s200 + $0x44] sm:$0xf]
      %v219 = vld [vmem:[%s200 + $0x48] sm:$0xf]
      %v220 = vld [vmem:[%s200 + $0x4c] sm:$0xf]
      %v221 = vld [vmem:[%s200 + $0x50] sm:$0x1]
      %v222 = vld [vmem:[%s200 + $0x54] sm:$0xf]
      %v223 = vld [vmem:[%s200 + $0x58] sm:$0xf]
      %v224 = vld [vmem:[%s200 + $0x5c] sm:$0xf]
      %v225 = vld [vmem:[%s200 + $0x60] sm:$0xf]
      %v226 = vld [vmem:[%s200 + $0x64] sm:$0xf]
      %v227 = vld [vmem:[%s200 + $0x68] sm:$0xf]
      %v228 = vld [vmem:[%s200 + $0x6c] sm:$0x1]
      %v229 = vld [vmem:[%s200 + $0x70] sm:$0xf]
      %v230 = vld [vmem:[%s200 + $0x74] sm:$0xf]
      %v231 = vld [vmem:[%s200 + $0x78] sm:$0xf]
      %v232 = vld [vmem:[%s200 + $0x7c] sm:$0xf]
      %v233 = vld [vmem:[%s200 + $0x80] sm:$0xf]
      %v234 = vld [vmem:[%s200 + $0x84] sm:$0xf]
      %v235 = vld [vmem:[%s200 + $0x88] sm:$0x1]
      %v236 = vld [vmem:[%s200 + $0x8c] sm:$0xf]
      %v237 = vld [vmem:[%s200 + $0x90] sm:$0xf]
      %v238 = vld [vmem:[%s200 + $0x94] sm:$0xf]
      %v239 = vld [vmem:[%s200 + $0x98] sm:$0xf]
      %v240 = vld [vmem:[%s200 + $0x9c] sm:$0xf]
      %v241 = vld [vmem:[%s200 + $0xa0] sm:$0xf]
      %v242 = vld [vmem:[%s200 + $0xa4] sm:$0x1]
      %v243 = vld [vmem:[%s200 + $0xa8] sm:$0xf]
      %v244 = vld [vmem:[%s200 + $0xac] sm:$0xf]
      %v245 = vld [vmem:[%s200 + $0xb0] sm:$0xf]
      %v246 = vld [vmem:[%s200 + $0xb4] sm:$0xf]
      %v247 = vld [vmem:[%s200 + $0xb8] sm:$0xf]
      %v248 = vld [vmem:[%s200 + $0xbc] sm:$0xf]
      %v249 = vld [vmem:[%s200 + $0xc0] sm:$0x1]
      %v250 = vld [vmem:[%s200 + $0xc4] sm:$0xf]
      %v251 = vld [vmem:[%s200 + $0xc8] sm:$0xf]
      %v252 = vld [vmem:[%s200 + $0xcc] sm:$0xf]
      %v253 = vld [vmem:[%s200 + $0xd0] sm:$0xf]
      %v254 = vld [vmem:[%s200 + $0xd4] sm:$0xf]
      %v255 = vld [vmem:[%s200 + $0xd8] sm:$0xf]
      %v256 = vld [vmem:[%s200 + $0xdc] sm:$0x1]
      %v257 = vld [vmem:[%s200 + $0xe0] sm:$0xf]
      %v258 = vld [vmem:[%s200 + $0xe4] sm:$0xf]
      %v259 = vld [vmem:[%s200 + $0xe8] sm:$0xf]
      %v260 = vld [vmem:[%s200 + $0xec] sm:$0xf]
      %v261 = vld [vmem:[%s200 + $0xf0] sm:$0xf]
      %v262 = vld [vmem:[%s200 + $0xf4] sm:$0xf]
      %v263 = vld [vmem:[%s200 + $0xf8] sm:$0x1]
      %v264 = vld [vmem:[%s200 + $0xfc] sm:$0xf]
      %v265 = vld [vmem:[%s200 + $0x100] sm:$0xf]
      %v266 = vld [vmem:[%s200 + $0x104] sm:$0xf]
      %v267 = vld [vmem:[%s200 + $0x108] sm:$0xf]
      %v268 = vld [vmem:[%s200 + $0x10c] sm:$0xf]
      %v269 = vld [vmem:[%s200 + $0x110] sm:$0xf]
      %v270 = vld [vmem:[%s200 + $0x114] sm:$0x1]
      %v271 = vld [vmem:[%s200 + $0x118] sm:$0xf]
      %v272 = vld [vmem:[%s200 + $0x11c] sm:$0xf]
      %v273 = vld [vmem:[%s200 + $0x120] sm:$0xf]
      %v274 = vld [vmem:[%s200 + $0x124] sm:$0xf]
      %v275 = vld [vmem:[%s200 + $0x128] sm:$0xf]
      %v276 = vld [vmem:[%s200 + $0x12c] sm:$0xf]
      %v277 = vld [vmem:[%s200 + $0x130] sm:$0x1]
      %vm278 = vsmask.f32 3328
      %vm279 = vsmask.f32 7440
      %vm280 = vmor %vm278, %vm279
      %v282 = vshrl.u32 %v208, 16
      %v284 = vrot.slane %v282, 4
      %v285 = vshll.u32 %v208, 16
      %v287 = vrot.slane %v285, 5
      %v288 = vor.u32 %v284, %v287
      %v289 = vrot.slane %v288, 4
      %v291 = vshll.u32 %v209, 16
      %v293 = vrot.slane %v291, 5
      %v294 = vsel %vm280, %v289, %v293
      %v295 = vshrl.u32 %v209, 16
      %v297 = vrot.slane %v295, 4
      %v298 = vor.u32 %v297, %v293
      %v299 = vrot.slane %v298, 4
      %v301 = vshll.u32 %v210, 16
      %v303 = vrot.slane %v301, 5
      %v304 = vsel %vm280, %v299, %v303
      %v305 = vshrl.u32 %v210, 16
      %v307 = vrot.slane %v305, 4
      %v308 = vor.u32 %v307, %v303
      %v309 = vrot.slane %v308, 4
      %v311 = vshll.u32 %v211, 16
      %v313 = vrot.slane %v311, 5
      %v314 = vsel %vm280, %v309, %v313
      %v315 = vshrl.u32 %v211, 16
      %v317 = vrot.slane %v315, 4
      %v318 = vor.u32 %v317, %v313
      %v319 = vrot.slane %v318, 4
      %v321 = vshll.u32 %v212, 16
      %v323 = vrot.slane %v321, 5
      %v324 = vsel %vm280, %v319, %v323
      %v325 = vshrl.u32 %v212, 16
      %v327 = vrot.slane %v325, 4
      %v328 = vor.u32 %v327, %v323
      %v329 = vrot.slane %v328, 4
      %v331 = vshll.u32 %v213, 16
      %v333 = vrot.slane %v331, 5
      %v334 = vsel %vm280, %v329, %v333
      %v335 = vshrl.u32 %v213, 16
      %v337 = vrot.slane %v335, 4
      %v338 = vor.u32 %v337, %v333
      %v339 = vrot.slane %v338, 4
      %v341 = vshll.u32 %v214, 16
      %v343 = vrot.slane %v341, 5
      %v344 = vsel %vm280, %v339, %v343
      %v346 = vshrl.u32 %v215, 16
      %v348 = vrot.slane %v346, 4
      %v349 = vshll.u32 %v215, 16
      %v351 = vrot.slane %v349, 5
      %v352 = vor.u32 %v348, %v351
      %v353 = vrot.slane %v352, 4
      %v355 = vshll.u32 %v216, 16
      %v357 = vrot.slane %v355, 5
      %v358 = vsel %vm280, %v353, %v357
      %v359 = vshrl.u32 %v216, 16
      %v361 = vrot.slane %v359, 4
      %v362 = vor.u32 %v361, %v357
      %v363 = vrot.slane %v362, 4
      %v365 = vshll.u32 %v217, 16
      %v367 = vrot.slane %v365, 5
      %v368 = vsel %vm280, %v363, %v367
      %v369 = vshrl.u32 %v217, 16
      %v371 = vrot.slane %v369, 4
      %v372 = vor.u32 %v371, %v367
      %v373 = vrot.slane %v372, 4
      %v375 = vshll.u32 %v218, 16
      %v377 = vrot.slane %v375, 5
      %v378 = vsel %vm280, %v373, %v377
      %v379 = vshrl.u32 %v218, 16
      %v381 = vrot.slane %v379, 4
      %v382 = vor.u32 %v381, %v377
      %v383 = vrot.slane %v382, 4
      %v385 = vshll.u32 %v219, 16
      %v387 = vrot.slane %v385, 5
      %v388 = vsel %vm280, %v383, %v387
      %v389 = vshrl.u32 %v219, 16
      %v391 = vrot.slane %v389, 4
      %v392 = vor.u32 %v391, %v387
      %v393 = vrot.slane %v392, 4
      %v395 = vshll.u32 %v220, 16
      %v397 = vrot.slane %v395, 5
      %v398 = vsel %vm280, %v393, %v397
      %v399 = vshrl.u32 %v220, 16
      %v401 = vrot.slane %v399, 4
      %v402 = vor.u32 %v401, %v397
      %v403 = vrot.slane %v402, 4
      %v405 = vshll.u32 %v221, 16
      %v407 = vrot.slane %v405, 5
      %v408 = vsel %vm280, %v403, %v407
      %v410 = vshrl.u32 %v222, 16
      %v412 = vrot.slane %v410, 4
      %v413 = vshll.u32 %v222, 16
      %v415 = vrot.slane %v413, 5
      %v416 = vor.u32 %v412, %v415
      %v417 = vrot.slane %v416, 4
      %v419 = vshll.u32 %v223, 16
      %v421 = vrot.slane %v419, 5
      %v422 = vsel %vm280, %v417, %v421
      %v423 = vshrl.u32 %v223, 16
      %v425 = vrot.slane %v423, 4
      %v426 = vor.u32 %v425, %v421
      %v427 = vrot.slane %v426, 4
      %v429 = vshll.u32 %v224, 16
      %v431 = vrot.slane %v429, 5
      %v432 = vsel %vm280, %v427, %v431
      %v433 = vshrl.u32 %v224, 16
      %v435 = vrot.slane %v433, 4
      %v436 = vor.u32 %v435, %v431
      %v437 = vrot.slane %v436, 4
      %v439 = vshll.u32 %v225, 16
      %v441 = vrot.slane %v439, 5
      %v442 = vsel %vm280, %v437, %v441
      %v443 = vshrl.u32 %v225, 16
      %v445 = vrot.slane %v443, 4
      %v446 = vor.u32 %v445, %v441
      %v447 = vrot.slane %v446, 4
      %v449 = vshll.u32 %v226, 16
      %v451 = vrot.slane %v449, 5
      %v452 = vsel %vm280, %v447, %v451
      %v453 = vshrl.u32 %v226, 16
      %v455 = vrot.slane %v453, 4
      %v456 = vor.u32 %v455, %v451
      %v457 = vrot.slane %v456, 4
      %v459 = vshll.u32 %v227, 16
      %v461 = vrot.slane %v459, 5
      %v462 = vsel %vm280, %v457, %v461
      %v463 = vshrl.u32 %v227, 16
      %v465 = vrot.slane %v463, 4
      %v466 = vor.u32 %v465, %v461
      %v467 = vrot.slane %v466, 4
      %v469 = vshll.u32 %v228, 16
      %v471 = vrot.slane %v469, 5
      %v472 = vsel %vm280, %v467, %v471
      %v474 = vshrl.u32 %v229, 16
      %v476 = vrot.slane %v474, 4
      %v477 = vshll.u32 %v229, 16
      %v479 = vrot.slane %v477, 5
      %v480 = vor.u32 %v476, %v479
      %v481 = vrot.slane %v480, 4
      %v483 = vshll.u32 %v230, 16
      %v485 = vrot.slane %v483, 5
      %v486 = vsel %vm280, %v481, %v485
      %v487 = vshrl.u32 %v230, 16
      %v489 = vrot.slane %v487, 4
      %v490 = vor.u32 %v489, %v485
      %v491 = vrot.slane %v490, 4
      %v493 = vshll.u32 %v231, 16
      %v495 = vrot.slane %v493, 5
      %v496 = vsel %vm280, %v491, %v495
      %v497 = vshrl.u32 %v231, 16
      %v499 = vrot.slane %v497, 4
      %v500 = vor.u32 %v499, %v495
      %v501 = vrot.slane %v500, 4
      %v503 = vshll.u32 %v232, 16
      %v505 = vrot.slane %v503, 5
      %v506 = vsel %vm280, %v501, %v505
      %v507 = vshrl.u32 %v232, 16
      %v509 = vrot.slane %v507, 4
      %v510 = vor.u32 %v509, %v505
      %v511 = vrot.slane %v510, 4
      %v513 = vshll.u32 %v233, 16
      %v515 = vrot.slane %v513, 5
      %v516 = vsel %vm280, %v511, %v515
      %v517 = vshrl.u32 %v233, 16
      %v519 = vrot.slane %v517, 4
      %v520 = vor.u32 %v519, %v515
      %v521 = vrot.slane %v520, 4
      %v523 = vshll.u32 %v234, 16
      %v525 = vrot.slane %v523, 5
      %v526 = vsel %vm280, %v521, %v525
      %v527 = vshrl.u32 %v234, 16
      %v529 = vrot.slane %v527, 4
      %v530 = vor.u32 %v529, %v525
      %v531 = vrot.slane %v530, 4
      %v533 = vshll.u32 %v235, 16
      %v535 = vrot.slane %v533, 5
      %v536 = vsel %vm280, %v531, %v535
      %v538 = vshrl.u32 %v236, 16
      %v540 = vrot.slane %v538, 4
      %v541 = vshll.u32 %v236, 16
      %v543 = vrot.slane %v541, 5
      %v544 = vor.u32 %v540, %v543
      %v545 = vrot.slane %v544, 4
      %v547 = vshll.u32 %v237, 16
      %v549 = vrot.slane %v547, 5
      %v550 = vsel %vm280, %v545, %v549
      %v551 = vshrl.u32 %v237, 16
      %v553 = vrot.slane %v551, 4
      %v554 = vor.u32 %v553, %v549
      %v555 = vrot.slane %v554, 4
      %v557 = vshll.u32 %v238, 16
      %v559 = vrot.slane %v557, 5
      %v560 = vsel %vm280, %v555, %v559
      %v561 = vshrl.u32 %v238, 16
      %v563 = vrot.slane %v561, 4
      %v564 = vor.u32 %v563, %v559
      %v565 = vrot.slane %v564, 4
      %v567 = vshll.u32 %v239, 16
      %v569 = vrot.slane %v567, 5
      %v570 = vsel %vm280, %v565, %v569
      %v571 = vshrl.u32 %v239, 16
      %v573 = vrot.slane %v571, 4
      %v574 = vor.u32 %v573, %v569
      %v575 = vrot.slane %v574, 4
      %v577 = vshll.u32 %v240, 16
      %v579 = vrot.slane %v577, 5
      %v580 = vsel %vm280, %v575, %v579
      %v581 = vshrl.u32 %v240, 16
      %v583 = vrot.slane %v581, 4
      %v584 = vor.u32 %v583, %v579
      %v585 = vrot.slane %v584, 4
      %v587 = vshll.u32 %v241, 16
      %v589 = vrot.slane %v587, 5
      %v590 = vsel %vm280, %v585, %v589
      %v591 = vshrl.u32 %v241, 16
      %v593 = vrot.slane %v591, 4
      %v594 = vor.u32 %v593, %v589
      %v595 = vrot.slane %v594, 4
      %v597 = vshll.u32 %v242, 16
      %v599 = vrot.slane %v597, 5
      %v600 = vsel %vm280, %v595, %v599
      %v602 = vshrl.u32 %v243, 16
      %v604 = vrot.slane %v602, 4
      %v605 = vshll.u32 %v243, 16
      %v607 = vrot.slane %v605, 5
      %v608 = vor.u32 %v604, %v607
      %v609 = vrot.slane %v608, 4
      %v611 = vshll.u32 %v244, 16
      %v613 = vrot.slane %v611, 5
      %v614 = vsel %vm280, %v609, %v613
      %v615 = vshrl.u32 %v244, 16
      %v617 = vrot.slane %v615, 4
      %v618 = vor.u32 %v617, %v613
      %v619 = vrot.slane %v618, 4
      %v621 = vshll.u32 %v245, 16
      %v623 = vrot.slane %v621, 5
      %v624 = vsel %vm280, %v619, %v623
      %v625 = vshrl.u32 %v245, 16
      %v627 = vrot.slane %v625, 4
      %v628 = vor.u32 %v627, %v623
      %v629 = vrot.slane %v628, 4
      %v631 = vshll.u32 %v246, 16
      %v633 = vrot.slane %v631, 5
      %v634 = vsel %vm280, %v629, %v633
      %v635 = vshrl.u32 %v246, 16
      %v637 = vrot.slane %v635, 4
      %v638 = vor.u32 %v637, %v633
      %v639 = vrot.slane %v638, 4
      %v641 = vshll.u32 %v247, 16
      %v643 = vrot.slane %v641, 5
      %v644 = vsel %vm280, %v639, %v643
      %v645 = vshrl.u32 %v247, 16
      %v647 = vrot.slane %v645, 4
      %v648 = vor.u32 %v647, %v643
      %v649 = vrot.slane %v648, 4
      %v651 = vshll.u32 %v248, 16
      %v653 = vrot.slane %v651, 5
      %v654 = vsel %vm280, %v649, %v653
      %v655 = vshrl.u32 %v248, 16
      %v657 = vrot.slane %v655, 4
      %v658 = vor.u32 %v657, %v653
      %v659 = vrot.slane %v658, 4
      %v661 = vshll.u32 %v249, 16
      %v663 = vrot.slane %v661, 5
      %v664 = vsel %vm280, %v659, %v663
      %v666 = vshrl.u32 %v250, 16
      %v668 = vrot.slane %v666, 4
      %v669 = vshll.u32 %v250, 16
      %v671 = vrot.slane %v669, 5
      %v672 = vor.u32 %v668, %v671
      %v673 = vrot.slane %v672, 4
      %v675 = vshll.u32 %v251, 16
      %v677 = vrot.slane %v675, 5
      %v678 = vsel %vm280, %v673, %v677
      %v679 = vshrl.u32 %v251, 16
      %v681 = vrot.slane %v679, 4
      %v682 = vor.u32 %v681, %v677
      %v683 = vrot.slane %v682, 4
      %v685 = vshll.u32 %v252, 16
      %v687 = vrot.slane %v685, 5
      %v688 = vsel %vm280, %v683, %v687
      %v689 = vshrl.u32 %v252, 16
      %v691 = vrot.slane %v689, 4
      %v692 = vor.u32 %v691, %v687
      %v693 = vrot.slane %v692, 4
      %v695 = vshll.u32 %v253, 16
      %v697 = vrot.slane %v695, 5
      %v698 = vsel %vm280, %v693, %v697
      %v699 = vshrl.u32 %v253, 16
      %v701 = vrot.slane %v699, 4
      %v702 = vor.u32 %v701, %v697
      %v703 = vrot.slane %v702, 4
      %v705 = vshll.u32 %v254, 16
      %v707 = vrot.slane %v705, 5
      %v708 = vsel %vm280, %v703, %v707
      %v709 = vshrl.u32 %v254, 16
      %v711 = vrot.slane %v709, 4
      %v712 = vor.u32 %v711, %v707
      %v713 = vrot.slane %v712, 4
      %v715 = vshll.u32 %v255, 16
      %v717 = vrot.slane %v715, 5
      %v718 = vsel %vm280, %v713, %v717
      %v719 = vshrl.u32 %v255, 16
      %v721 = vrot.slane %v719, 4
      %v722 = vor.u32 %v721, %v717
      %v723 = vrot.slane %v722, 4
      %v725 = vshll.u32 %v256, 16
      %v727 = vrot.slane %v725, 5
      %v728 = vsel %vm280, %v723, %v727
      %v730 = vshrl.u32 %v257, 16
      %v732 = vrot.slane %v730, 4
      %v733 = vshll.u32 %v257, 16
      %v735 = vrot.slane %v733, 5
      %v736 = vor.u32 %v732, %v735
      %v737 = vrot.slane %v736, 4
      %v739 = vshll.u32 %v258, 16
      %v741 = vrot.slane %v739, 5
      %v742 = vsel %vm280, %v737, %v741
      %v743 = vshrl.u32 %v258, 16
      %v745 = vrot.slane %v743, 4
      %v746 = vor.u32 %v745, %v741
      %v747 = vrot.slane %v746, 4
      %v749 = vshll.u32 %v259, 16
      %v751 = vrot.slane %v749, 5
      %v752 = vsel %vm280, %v747, %v751
      %v753 = vshrl.u32 %v259, 16
      %v755 = vrot.slane %v753, 4
      %v756 = vor.u32 %v755, %v751
      %v757 = vrot.slane %v756, 4
      %v759 = vshll.u32 %v260, 16
      %v761 = vrot.slane %v759, 5
      %v762 = vsel %vm280, %v757, %v761
      %v763 = vshrl.u32 %v260, 16
      %v765 = vrot.slane %v763, 4
      %v766 = vor.u32 %v765, %v761
      %v767 = vrot.slane %v766, 4
      %v769 = vshll.u32 %v261, 16
      %v771 = vrot.slane %v769, 5
      %v772 = vsel %vm280, %v767, %v771
      %v773 = vshrl.u32 %v261, 16
      %v775 = vrot.slane %v773, 4
      %v776 = vor.u32 %v775, %v771
      %v777 = vrot.slane %v776, 4
      %v779 = vshll.u32 %v262, 16
      %v781 = vrot.slane %v779, 5
      %v782 = vsel %vm280, %v777, %v781
      %v783 = vshrl.u32 %v262, 16
      %v785 = vrot.slane %v783, 4
      %v786 = vor.u32 %v785, %v781
      %v787 = vrot.slane %v786, 4
      %v789 = vshll.u32 %v263, 16
      %v791 = vrot.slane %v789, 5
      %v792 = vsel %vm280, %v787, %v791
      %v794 = vshrl.u32 %v264, 16
      %v796 = vrot.slane %v794, 4
      %v797 = vshll.u32 %v264, 16
      %v799 = vrot.slane %v797, 5
      %v800 = vor.u32 %v796, %v799
      %v801 = vrot.slane %v800, 4
      %v803 = vshll.u32 %v265, 16
      %v805 = vrot.slane %v803, 5
      %v806 = vsel %vm280, %v801, %v805
      %v807 = vshrl.u32 %v265, 16
      %v809 = vrot.slane %v807, 4
      %v810 = vor.u32 %v809, %v805
      %v811 = vrot.slane %v810, 4
      %v813 = vshll.u32 %v266, 16
      %v815 = vrot.slane %v813, 5
      %v816 = vsel %vm280, %v811, %v815
      %v817 = vshrl.u32 %v266, 16
      %v819 = vrot.slane %v817, 4
      %v820 = vor.u32 %v819, %v815
      %v821 = vrot.slane %v820, 4
      %v823 = vshll.u32 %v267, 16
      %v825 = vrot.slane %v823, 5
      %v826 = vsel %vm280, %v821, %v825
      %v827 = vshrl.u32 %v267, 16
      %v829 = vrot.slane %v827, 4
      %v830 = vor.u32 %v829, %v825
      %v831 = vrot.slane %v830, 4
      %v833 = vshll.u32 %v268, 16
      %v835 = vrot.slane %v833, 5
      %v836 = vsel %vm280, %v831, %v835
      %v837 = vshrl.u32 %v268, 16
      %v839 = vrot.slane %v837, 4
      %v840 = vor.u32 %v839, %v835
      %v841 = vrot.slane %v840, 4
      %v843 = vshll.u32 %v269, 16
      %v845 = vrot.slane %v843, 5
      %v846 = vsel %vm280, %v841, %v845
      %v847 = vshrl.u32 %v269, 16
      %v849 = vrot.slane %v847, 4
      %v850 = vor.u32 %v849, %v845
      %v851 = vrot.slane %v850, 4
      %v853 = vshll.u32 %v270, 16
      %v855 = vrot.slane %v853, 5
      %v856 = vsel %vm280, %v851, %v855
      %v858 = vshrl.u32 %v271, 16
      %v860 = vrot.slane %v858, 4
      %v861 = vshll.u32 %v271, 16
      %v863 = vrot.slane %v861, 5
      %v864 = vor.u32 %v860, %v863
      %v865 = vrot.slane %v864, 4
      %v867 = vshll.u32 %v272, 16
      %v869 = vrot.slane %v867, 5
      %v870 = vsel %vm280, %v865, %v869
      %v871 = vshrl.u32 %v272, 16
      %v873 = vrot.slane %v871, 4
      %v874 = vor.u32 %v873, %v869
      %v875 = vrot.slane %v874, 4
      %v877 = vshll.u32 %v273, 16
      %v879 = vrot.slane %v877, 5
      %v880 = vsel %vm280, %v875, %v879
      %v881 = vshrl.u32 %v273, 16
      %v883 = vrot.slane %v881, 4
      %v884 = vor.u32 %v883, %v879
      %v885 = vrot.slane %v884, 4
      %v887 = vshll.u32 %v274, 16
      %v889 = vrot.slane %v887, 5
      %v890 = vsel %vm280, %v885, %v889
      %v891 = vshrl.u32 %v274, 16
      %v893 = vrot.slane %v891, 4
      %v894 = vor.u32 %v893, %v889
      %v895 = vrot.slane %v894, 4
      %v897 = vshll.u32 %v275, 16
      %v899 = vrot.slane %v897, 5
      %v900 = vsel %vm280, %v895, %v899
      %v901 = vshrl.u32 %v275, 16
      %v903 = vrot.slane %v901, 4
      %v904 = vor.u32 %v903, %v899
      %v905 = vrot.slane %v904, 4
      %v907 = vshll.u32 %v276, 16
      %v909 = vrot.slane %v907, 5
      %v910 = vsel %vm280, %v905, %v909
      %v911 = vshrl.u32 %v276, 16
      %v913 = vrot.slane %v911, 4
      %v914 = vor.u32 %v913, %v909
      %v915 = vrot.slane %v914, 4
      %v917 = vshll.u32 %v277, 16
      %v919 = vrot.slane %v917, 5
      %v920 = vsel %vm280, %v915, %v919
      %v921 = vld [vmem:[%s1] sm:$0xf]
      %v922 = vld [vmem:[%s1 + $0x4] sm:$0xf]
      %v923 = vld [vmem:[%s1 + $0x8] sm:$0xf]
      %v924 = vld [vmem:[%s1 + $0xc] sm:$0xf]
      %s925 = scalar_lea.vmem %s1, 16
      %v926 = vld [vmem:[%s925] sm:$0xf]
      %v927 = vld [vmem:[%s925 + $0x4] sm:$0xf]
      %v928 = vld [vmem:[%s925 + $0x8] sm:$0xf]
      %v929 = vld [vmem:[%s925 + $0xc] sm:$0xf]
      %v990 = vunpack.c.l.b16 %v208
      %v991 = vunpack.c.l.b16 %v209
      %v992 = vunpack.c.l.b16 %v210
      %v993 = vunpack.c.l.b16 %v211
      %v994 = vunpack.c.l.b16 %v212
      %v995 = vunpack.c.l.b16 %v213
      %v996 = vunpack.c.l.b16 %v215
      %v997 = vunpack.c.l.b16 %v216
      %v998 = vunpack.c.l.b16 %v217
      %v999 = vunpack.c.l.b16 %v218
      %v1000 = vunpack.c.l.b16 %v219
      %v1001 = vunpack.c.l.b16 %v220
      %v1002 = vunpack.c.l.b16 %v222
      %v1003 = vunpack.c.l.b16 %v223
      %v1004 = vunpack.c.l.b16 %v224
      %v1005 = vunpack.c.l.b16 %v225
      %v1006 = vunpack.c.l.b16 %v226
      %v1007 = vunpack.c.l.b16 %v227
      %v1008 = vunpack.c.l.b16 %v229
      %v1009 = vunpack.c.l.b16 %v230
      %v1010 = vunpack.c.l.b16 %v231
      %v1011 = vunpack.c.l.b16 %v232
      %v1012 = vunpack.c.l.b16 %v233
      %v1013 = vunpack.c.l.b16 %v234
      %v1014 = vunpack.c.l.b16 %v236
      %v1015 = vunpack.c.l.b16 %v237
      %v1016 = vunpack.c.l.b16 %v238
      %v1017 = vunpack.c.l.b16 %v239
      %v1018 = vunpack.c.l.b16 %v240
      %v1019 = vunpack.c.l.b16 %v241
      %v1020 = vunpack.c.l.b16 %v243
      %v1021 = vunpack.c.l.b16 %v244
      %v1022 = vunpack.c.l.b16 %v245
      %v1023 = vunpack.c.l.b16 %v246
      %v1024 = vunpack.c.l.b16 %v247
      %v1025 = vunpack.c.l.b16 %v248
      %v1026 = vunpack.c.l.b16 %v250
      %v1027 = vunpack.c.l.b16 %v251
      %v1028 = vunpack.c.l.b16 %v252
      %v1029 = vunpack.c.l.b16 %v253
      %v1030 = vunpack.c.l.b16 %v254
      %v1031 = vunpack.c.l.b16 %v255
      %v1032 = vunpack.c.l.b16 %v257
      %v1033 = vunpack.c.l.b16 %v258
      %v1034 = vunpack.c.l.b16 %v259
      %v1035 = vunpack.c.l.b16 %v260
      %v1036 = vunpack.c.l.b16 %v261
      %v1037 = vunpack.c.l.b16 %v262
      %v1038 = vunpack.c.l.b16 %v264
      %v1039 = vunpack.c.l.b16 %v265
      %v1040 = vunpack.c.l.b16 %v266
      %v1041 = vunpack.c.l.b16 %v267
      %v1042 = vunpack.c.l.b16 %v268
      %v1043 = vunpack.c.l.b16 %v269
      %v1044 = vunpack.c.l.b16 %v271
      %v1045 = vunpack.c.l.b16 %v272
      %v1046 = vunpack.c.l.b16 %v273
      %v1047 = vunpack.c.l.b16 %v274
      %v1048 = vunpack.c.l.b16 %v275
      %v1049 = vunpack.c.l.b16 %v276
      %v1050 = vpack.c.b16 %v991, %v990
      %v1051 = vpack.c.b16 %v993, %v992
      %v1052 = vpack.c.b16 %v995, %v994
      %v1053 = vpack.c.b16 %v997, %v996
      %v1054 = vpack.c.b16 %v999, %v998
      %v1055 = vpack.c.b16 %v1001, %v1000
      %v1056 = vpack.c.b16 %v1003, %v1002
      %v1057 = vpack.c.b16 %v1005, %v1004
      %v1058 = vpack.c.b16 %v1007, %v1006
      %v1059 = vpack.c.b16 %v1009, %v1008
      %v1060 = vpack.c.b16 %v1011, %v1010
      %v1061 = vpack.c.b16 %v1013, %v1012
      %v1062 = vpack.c.b16 %v1015, %v1014
      %v1063 = vpack.c.b16 %v1017, %v1016
      %v1064 = vpack.c.b16 %v1019, %v1018
      %v1065 = vpack.c.b16 %v1021, %v1020
      %v1066 = vpack.c.b16 %v1023, %v1022
      %v1067 = vpack.c.b16 %v1025, %v1024
      %v1068 = vpack.c.b16 %v1027, %v1026
      %v1069 = vpack.c.b16 %v1029, %v1028
      %v1070 = vpack.c.b16 %v1031, %v1030
      %v1071 = vpack.c.b16 %v1033, %v1032
      %v1072 = vpack.c.b16 %v1035, %v1034
      %v1073 = vpack.c.b16 %v1037, %v1036
      %v1074 = vpack.c.b16 %v1039, %v1038
      %v1075 = vpack.c.b16 %v1041, %v1040
      %v1076 = vpack.c.b16 %v1043, %v1042
      %v1077 = vpack.c.b16 %v1045, %v1044
      %v1078 = vpack.c.b16 %v1047, %v1046
      %v1079 = vpack.c.b16 %v1049, %v1048
      %v1084 = vunpack.c.l.b16 %v926
      %v1085 = vunpack.c.l.b16 %v927
      %v1086 = vunpack.c.l.b16 %v928
      %v1087 = vunpack.c.l.b16 %v929
      %v1088 = vpack.c.b16 %v1085, %v1084
      %v1089 = vpack.c.b16 %v1087, %v1086
      %vm1092 = vcmask 261120
      %v1094 = vsel %vm1092, %v1050, 0
      %v1097 = vsel %vm1092, %v1051, 0
      %v1100 = vsel %vm1092, %v1052, 0
      %v1103 = vsel %vm1092, %v1053, 0
      %v1106 = vsel %vm1092, %v1054, 0
      %v1109 = vsel %vm1092, %v1055, 0
      %v1112 = vsel %vm1092, %v1056, 0
      %v1115 = vsel %vm1092, %v1057, 0
      %v1118 = vsel %vm1092, %v1058, 0
      %v1121 = vsel %vm1092, %v1059, 0
      %v1124 = vsel %vm1092, %v1060, 0
      %v1127 = vsel %vm1092, %v1061, 0
      %v1130 = vsel %vm1092, %v1062, 0
      %v1133 = vsel %vm1092, %v1063, 0
      %v1136 = vsel %vm1092, %v1064, 0
      %v1139 = vsel %vm1092, %v1065, 0
      %v1142 = vsel %vm1092, %v1066, 0
      %v1145 = vsel %vm1092, %v1067, 0
      %v1148 = vsel %vm1092, %v1068, 0
      %v1151 = vsel %vm1092, %v1069, 0
      %v1154 = vsel %vm1092, %v1070, 0
      %v1157 = vsel %vm1092, %v1071, 0
      %v1160 = vsel %vm1092, %v1072, 0
      %v1163 = vsel %vm1092, %v1073, 0
      %v1166 = vsel %vm1092, %v1074, 0
      %v1169 = vsel %vm1092, %v1075, 0
      %v1172 = vsel %vm1092, %v1076, 0
      %v1175 = vsel %vm1092, %v1077, 0
      %v1178 = vsel %vm1092, %v1078, 0
      %v1181 = vsel %vm1092, %v1079, 0
      %1183 = vmatprep.subr.bf16.mxu0 0
      %1184 = vmatpush1.bf16.msra.mxu0 %v1088
      %1185 = vmatprep.subr.bf16.mxu0 0
      %1186 = vmatpush1.bf16.msra.mxu0 %v1089
      %1187 = vmatprep.subr.bf16.mxu0 0
      %1188 = vmatpush1.bf16.msra.mxu0 0
      %1189 = vmatprep.subr.bf16.mxu0 0
      %1190 = vmatpush1.bf16.msra.mxu0 0
      %1191 = vmatprep.subr.bf16.mxu0 0
      %1192 = vmatpush1.bf16.msra.mxu0 0
      %1193 = vmatprep.subr.bf16.mxu0 0
      %1194 = vmatpush1.bf16.msra.mxu0 0
      %1195 = vmatprep.subr.bf16.mxu0 0
      %1196 = vmatpush1.bf16.msra.mxu0 0
      %1197 = vmatprep.subr.bf16.mxu0 0
      %1198 = vmatpush1.bf16.msra.mxu0 0
      %1199 = vmatprep.subr.bf16.mxu0 0
      %1200 = vmatpush1.bf16.msra.mxu0 0
      %1201 = vmatprep.subr.bf16.mxu0 0
      %1202 = vmatpush1.bf16.msra.mxu0 0
      %1203 = vmatprep.subr.bf16.mxu0 0
      %1204 = vmatpush1.bf16.msra.mxu0 0
      %1205 = vmatprep.subr.bf16.mxu0 0
      %1206 = vmatpush1.bf16.msra.mxu0 0
      %1207 = vmatprep.subr.bf16.mxu0 0
      %1208 = vmatpush1.bf16.msra.mxu0 0
      %1209 = vmatprep.subr.bf16.mxu0 0
      %1210 = vmatpush1.bf16.msra.mxu0 0
      %1211 = vmatprep.subr.bf16.mxu0 0
      %1212 = vmatpush1.bf16.msra.mxu0 0
      %1213 = vmatprep.subr.bf16.mxu0 0
      %1214 = vmatpush1.bf16.msra.mxu0 0
      %1215 = vmatprep.mubr.bf16.mxu0 0
      %1216 = vmatmul.mubr.bf16.gmra.mrb[0].mxu0 %v1094
      %v1217 = vpop.f32.mrb[0].mxu0
      %v1218 = vadd.f32 0.0, %v1217
      %v1219 = vpop.f32.mrb[0].mxu0
      %v1220 = vpop.f32.mrb[0].mxu0
      %v1221 = vadd.f32 0.0, %v1220
      %v1222 = vpop.f32.mrb[0].mxu0
      %1223 = vmatprep.mubr.bf16.mxu0 0
      %1224 = vmatmul.mubr.bf16.gmra.mrb[0].mxu0 %v1097
      %v1225 = vpop.f32.mrb[0].mxu0
      %v1226 = vadd.f32 0.0, %v1225
      %v1227 = vpop.f32.mrb[0].mxu0
      %v1228 = vpop.f32.mrb[0].mxu0
      %v1229 = vadd.f32 0.0, %v1228
      %v1230 = vpop.f32.mrb[0].mxu0
      %1231 = vmatprep.mubr.bf16.mxu0 0
      %1232 = vmatmul.mubr.bf16.gmra.mrb[0].mxu0 %v1100
      %v1233 = vpop.f32.mrb[0].mxu0
      %v1234 = vadd.f32 0.0, %v1233
      %v1235 = vpop.f32.mrb[0].mxu0
      %v1236 = vpop.f32.mrb[0].mxu0
      %v1237 = vadd.f32 0.0, %v1236
      %v1238 = vpop.f32.mrb[0].mxu0
      %1239 = vmatprep.mubr.bf16.mxu0 0
      %1240 = vmatmul.mubr.bf16.gmra.mrb[0].mxu0 %v1103
      %v1241 = vpop.f32.mrb[0].mxu0
      %v1242 = vadd.f32 0.0, %v1241
      %v1243 = vpop.f32.mrb[0].mxu0
      %v1244 = vpop.f32.mrb[0].mxu0
      %v1245 = vadd.f32 0.0, %v1244
      %v1246 = vpop.f32.mrb[0].mxu0
      %1247 = vmatprep.mubr.bf16.mxu0 0
      %1248 = vmatmul.mubr.bf16.gmra.mrb[0].mxu0 %v1106
      %v1249 = vpop.f32.mrb[0].mxu0
      %v1250 = vadd.f32 0.0, %v1249
      %v1251 = vpop.f32.mrb[0].mxu0
      %v1252 = vpop.f32.mrb[0].mxu0
      %v1253 = vadd.f32 0.0, %v1252
      %v1254 = vpop.f32.mrb[0].mxu0
      %1255 = vmatprep.mubr.bf16.mxu0 0
      %1256 = vmatmul.mubr.bf16.gmra.mrb[0].mxu0 %v1109
      %v1257 = vpop.f32.mrb[0].mxu0
      %v1258 = vadd.f32 0.0, %v1257
      %v1259 = vpop.f32.mrb[0].mxu0
      %v1260 = vpop.f32.mrb[0].mxu0
      %v1261 = vadd.f32 0.0, %v1260
      %v1262 = vpop.f32.mrb[0].mxu0
      %1263 = vmatprep.mubr.bf16.mxu0 0
      %1264 = vmatmul.mubr.bf16.gmra.mrb[0].mxu0 %v1112
      %v1265 = vpop.f32.mrb[0].mxu0
      %v1266 = vadd.f32 0.0, %v1265
      %v1267 = vpop.f32.mrb[0].mxu0
      %v1268 = vpop.f32.mrb[0].mxu0
      %v1269 = vadd.f32 0.0, %v1268
      %v1270 = vpop.f32.mrb[0].mxu0
      %1271 = vmatprep.mubr.bf16.mxu0 0
      %1272 = vmatmul.mubr.bf16.gmra.mrb[0].mxu0 %v1115
      %v1273 = vpop.f32.mrb[0].mxu0
      %v1274 = vadd.f32 0.0, %v1273
      %v1275 = vpop.f32.mrb[0].mxu0
      %v1276 = vpop.f32.mrb[0].mxu0
      %v1277 = vadd.f32 0.0, %v1276
      %v1278 = vpop.f32.mrb[0].mxu0
      %1279 = vmatprep.mubr.bf16.mxu0 0
      %1280 = vmatmul.mubr.bf16.gmra.mrb[0].mxu0 %v1118
      %v1281 = vpop.f32.mrb[0].mxu0
      %v1282 = vadd.f32 0.0, %v1281
      %v1283 = vpop.f32.mrb[0].mxu0
      %v1284 = vpop.f32.mrb[0].mxu0
      %v1285 = vadd.f32 0.0, %v1284
      %v1286 = vpop.f32.mrb[0].mxu0
      %1287 = vmatprep.mubr.bf16.mxu0 0
      %1288 = vmatmul.mubr.bf16.gmra.mrb[0].mxu0 %v1121
      %v1289 = vpop.f32.mrb[0].mxu0
      %v1290 = vadd.f32 0.0, %v1289
      %v1291 = vpop.f32.mrb[0].mxu0
      %v1292 = vpop.f32.mrb[0].mxu0
      %v1293 = vadd.f32 0.0, %v1292
      %v1294 = vpop.f32.mrb[0].mxu0
      %1295 = vmatprep.mubr.bf16.mxu0 0
      %1296 = vmatmul.mubr.bf16.gmra.mrb[0].mxu0 %v1124
      %v1297 = vpop.f32.mrb[0].mxu0
      %v1298 = vadd.f32 0.0, %v1297
      %v1299 = vpop.f32.mrb[0].mxu0
      %v1300 = vpop.f32.mrb[0].mxu0
      %v1301 = vadd.f32 0.0, %v1300
      %v1302 = vpop.f32.mrb[0].mxu0
      %1303 = vmatprep.mubr.bf16.mxu0 0
      %1304 = vmatmul.mubr.bf16.gmra.mrb[0].mxu0 %v1127
      %v1305 = vpop.f32.mrb[0].mxu0
      %v1306 = vadd.f32 0.0, %v1305
      %v1307 = vpop.f32.mrb[0].mxu0
      %v1308 = vpop.f32.mrb[0].mxu0
      %v1309 = vadd.f32 0.0, %v1308
      %v1310 = vpop.f32.mrb[0].mxu0
      %1311 = vmatprep.mubr.bf16.mxu0 0
      %1312 = vmatmul.mubr.bf16.gmra.mrb[0].mxu0 %v1130
      %v1313 = vpop.f32.mrb[0].mxu0
      %v1314 = vadd.f32 0.0, %v1313
      %v1315 = vpop.f32.mrb[0].mxu0
      %v1316 = vpop.f32.mrb[0].mxu0
      %v1317 = vadd.f32 0.0, %v1316
      %v1318 = vpop.f32.mrb[0].mxu0
      %1319 = vmatprep.mubr.bf16.mxu0 0
      %1320 = vmatmul.mubr.bf16.gmra.mrb[0].mxu0 %v1133
      %v1321 = vpop.f32.mrb[0].mxu0
      %v1322 = vadd.f32 0.0, %v1321
      %v1323 = vpop.f32.mrb[0].mxu0
      %v1324 = vpop.f32.mrb[0].mxu0
      %v1325 = vadd.f32 0.0, %v1324
      %v1326 = vpop.f32.mrb[0].mxu0
      %1327 = vmatprep.mubr.bf16.mxu0 0
      %1328 = vmatmul.mubr.bf16.gmra.mrb[0].mxu0 %v1136
      %v1329 = vpop.f32.mrb[0].mxu0
      %v1330 = vadd.f32 0.0, %v1329
      %v1331 = vpop.f32.mrb[0].mxu0
      %v1332 = vpop.f32.mrb[0].mxu0
      %v1333 = vadd.f32 0.0, %v1332
      %v1334 = vpop.f32.mrb[0].mxu0
      %1335 = vmatprep.mubr.bf16.mxu0 0
      %1336 = vmatmul.mubr.bf16.gmra.mrb[0].mxu0 %v1139
      %v1337 = vpop.f32.mrb[0].mxu0
      %v1338 = vadd.f32 0.0, %v1337
      %v1339 = vpop.f32.mrb[0].mxu0
      %v1340 = vpop.f32.mrb[0].mxu0
      %v1341 = vadd.f32 0.0, %v1340
      %v1342 = vpop.f32.mrb[0].mxu0
      %1343 = vmatprep.mubr.bf16.mxu0 0
      %1344 = vmatmul.mubr.bf16.gmra.mrb[0].mxu0 %v1142
      %v1345 = vpop.f32.mrb[0].mxu0
      %v1346 = vadd.f32 0.0, %v1345
      %v1347 = vpop.f32.mrb[0].mxu0
      %v1348 = vpop.f32.mrb[0].mxu0
      %v1349 = vadd.f32 0.0, %v1348
      %v1350 = vpop.f32.mrb[0].mxu0
      %1351 = vmatprep.mubr.bf16.mxu0 0
      %1352 = vmatmul.mubr.bf16.gmra.mrb[0].mxu0 %v1145
      %v1353 = vpop.f32.mrb[0].mxu0
      %v1354 = vadd.f32 0.0, %v1353
      %v1355 = vpop.f32.mrb[0].mxu0
      %v1356 = vpop.f32.mrb[0].mxu0
      %v1357 = vadd.f32 0.0, %v1356
      %v1358 = vpop.f32.mrb[0].mxu0
      %1359 = vmatprep.mubr.bf16.mxu0 0
      %1360 = vmatmul.mubr.bf16.gmra.mrb[0].mxu0 %v1148
      %v1361 = vpop.f32.mrb[0].mxu0
      %v1362 = vadd.f32 0.0, %v1361
      %v1363 = vpop.f32.mrb[0].mxu0
      %v1364 = vpop.f32.mrb[0].mxu0
      %v1365 = vadd.f32 0.0, %v1364
      %v1366 = vpop.f32.mrb[0].mxu0
      %1367 = vmatprep.mubr.bf16.mxu0 0
      %1368 = vmatmul.mubr.bf16.gmra.mrb[0].mxu0 %v1151
      %v1369 = vpop.f32.mrb[0].mxu0
      %v1370 = vadd.f32 0.0, %v1369
      %v1371 = vpop.f32.mrb[0].mxu0
      %v1372 = vpop.f32.mrb[0].mxu0
      %v1373 = vadd.f32 0.0, %v1372
      %v1374 = vpop.f32.mrb[0].mxu0
      %1375 = vmatprep.mubr.bf16.mxu0 0
      %1376 = vmatmul.mubr.bf16.gmra.mrb[0].mxu0 %v1154
      %v1377 = vpop.f32.mrb[0].mxu0
      %v1378 = vadd.f32 0.0, %v1377
      %v1379 = vpop.f32.mrb[0].mxu0
      %v1380 = vpop.f32.mrb[0].mxu0
      %v1381 = vadd.f32 0.0, %v1380
      %v1382 = vpop.f32.mrb[0].mxu0
      %1383 = vmatprep.mubr.bf16.mxu0 0
      %1384 = vmatmul.mubr.bf16.gmra.mrb[0].mxu0 %v1157
      %v1385 = vpop.f32.mrb[0].mxu0
      %v1386 = vadd.f32 0.0, %v1385
      %v1387 = vpop.f32.mrb[0].mxu0
      %v1388 = vpop.f32.mrb[0].mxu0
      %v1389 = vadd.f32 0.0, %v1388
      %v1390 = vpop.f32.mrb[0].mxu0
      %1391 = vmatprep.mubr.bf16.mxu0 0
      %1392 = vmatmul.mubr.bf16.gmra.mrb[0].mxu0 %v1160
      %v1393 = vpop.f32.mrb[0].mxu0
      %v1394 = vadd.f32 0.0, %v1393
      %v1395 = vpop.f32.mrb[0].mxu0
      %v1396 = vpop.f32.mrb[0].mxu0
      %v1397 = vadd.f32 0.0, %v1396
      %v1398 = vpop.f32.mrb[0].mxu0
      %1399 = vmatprep.mubr.bf16.mxu0 0
      %1400 = vmatmul.mubr.bf16.gmra.mrb[0].mxu0 %v1163
      %v1401 = vpop.f32.mrb[0].mxu0
      %v1402 = vadd.f32 0.0, %v1401
      %v1403 = vpop.f32.mrb[0].mxu0
      %v1404 = vpop.f32.mrb[0].mxu0
      %v1405 = vadd.f32 0.0, %v1404
      %v1406 = vpop.f32.mrb[0].mxu0
      %1407 = vmatprep.mubr.bf16.mxu0 0
      %1408 = vmatmul.mubr.bf16.gmra.mrb[0].mxu0 %v1166
      %v1409 = vpop.f32.mrb[0].mxu0
      %v1410 = vadd.f32 0.0, %v1409
      %v1411 = vpop.f32.mrb[0].mxu0
      %v1412 = vpop.f32.mrb[0].mxu0
      %v1413 = vadd.f32 0.0, %v1412
      %v1414 = vpop.f32.mrb[0].mxu0
      %1415 = vmatprep.mubr.bf16.mxu0 0
      %1416 = vmatmul.mubr.bf16.gmra.mrb[0].mxu0 %v1169
      %v1417 = vpop.f32.mrb[0].mxu0
      %v1418 = vadd.f32 0.0, %v1417
      %v1419 = vpop.f32.mrb[0].mxu0
      %v1420 = vpop.f32.mrb[0].mxu0
      %v1421 = vadd.f32 0.0, %v1420
      %v1422 = vpop.f32.mrb[0].mxu0
      %1423 = vmatprep.mubr.bf16.mxu0 0
      %1424 = vmatmul.mubr.bf16.gmra.mrb[0].mxu0 %v1172
      %v1425 = vpop.f32.mrb[0].mxu0
      %v1426 = vadd.f32 0.0, %v1425
      %v1427 = vpop.f32.mrb[0].mxu0
      %v1428 = vpop.f32.mrb[0].mxu0
      %v1429 = vadd.f32 0.0, %v1428
      %v1430 = vpop.f32.mrb[0].mxu0
      %1431 = vmatprep.mubr.bf16.mxu0 0
      %1432 = vmatmul.mubr.bf16.gmra.mrb[0].mxu0 %v1175
      %v1433 = vpop.f32.mrb[0].mxu0
      %v1434 = vadd.f32 0.0, %v1433
      %v1435 = vpop.f32.mrb[0].mxu0
      %v1436 = vpop.f32.mrb[0].mxu0
      %v1437 = vadd.f32 0.0, %v1436
      %v1438 = vpop.f32.mrb[0].mxu0
      %1439 = vmatprep.mubr.bf16.mxu0 0
      %1440 = vmatmul.mubr.bf16.gmra.mrb[0].mxu0 %v1178
      %v1441 = vpop.f32.mrb[0].mxu0
      %v1442 = vadd.f32 0.0, %v1441
      %v1443 = vpop.f32.mrb[0].mxu0
      %v1444 = vpop.f32.mrb[0].mxu0
      %v1445 = vadd.f32 0.0, %v1444
      %v1446 = vpop.f32.mrb[0].mxu0
      %1447 = vmatprep.mubr.bf16.mxu0 0
      %1448 = vmatmul.mubr.bf16.gmra.mrb[0].mxu0 %v1181
      %v1449 = vpop.f32.mrb[0].mxu0
      %v1450 = vadd.f32 0.0, %v1449
      %v1451 = vpop.f32.mrb[0].mxu0
      %v1452 = vpop.f32.mrb[0].mxu0
      %v1453 = vadd.f32 0.0, %v1452
      %v1454 = vpop.f32.mrb[0].mxu0
      %1455 = vdwg.mxu0
      %v1456 = vunpack.c.l.b16 %v294
      %v1457 = vunpack.c.l.b16 %v304
      %v1458 = vunpack.c.l.b16 %v314
      %v1459 = vunpack.c.l.b16 %v324
      %v1460 = vunpack.c.l.b16 %v334
      %v1461 = vunpack.c.l.b16 %v344
      %v1462 = vunpack.c.l.b16 %v358
      %v1463 = vunpack.c.l.b16 %v368
      %v1464 = vunpack.c.l.b16 %v378
      %v1465 = vunpack.c.l.b16 %v388
      %v1466 = vunpack.c.l.b16 %v398
      %v1467 = vunpack.c.l.b16 %v408
      %v1468 = vunpack.c.l.b16 %v422
      %v1469 = vunpack.c.l.b16 %v432
      %v1470 = vunpack.c.l.b16 %v442
      %v1471 = vunpack.c.l.b16 %v452
      %v1472 = vunpack.c.l.b16 %v462
      %v1473 = vunpack.c.l.b16 %v472
      %v1474 = vunpack.c.l.b16 %v486
      %v1475 = vunpack.c.l.b16 %v496
      %v1476 = vunpack.c.l.b16 %v506
      %v1477 = vunpack.c.l.b16 %v516
      %v1478 = vunpack.c.l.b16 %v526
      %v1479 = vunpack.c.l.b16 %v536
      %v1480 = vunpack.c.l.b16 %v550
      %v1481 = vunpack.c.l.b16 %v560
      %v1482 = vunpack.c.l.b16 %v570
      %v1483 = vunpack.c.l.b16 %v580
      %v1484 = vunpack.c.l.b16 %v590
      %v1485 = vunpack.c.l.b16 %v600
      %v1486 = vunpack.c.l.b16 %v614
      %v1487 = vunpack.c.l.b16 %v624
      %v1488 = vunpack.c.l.b16 %v634
      %v1489 = vunpack.c.l.b16 %v644
      %v1490 = vunpack.c.l.b16 %v654
      %v1491 = vunpack.c.l.b16 %v664
      %v1492 = vunpack.c.l.b16 %v678
      %v1493 = vunpack.c.l.b16 %v688
      %v1494 = vunpack.c.l.b16 %v698
      %v1495 = vunpack.c.l.b16 %v708
      %v1496 = vunpack.c.l.b16 %v718
      %v1497 = vunpack.c.l.b16 %v728
      %v1498 = vunpack.c.l.b16 %v742
      %v1499 = vunpack.c.l.b16 %v752
      %v1500 = vunpack.c.l.b16 %v762
      %v1501 = vunpack.c.l.b16 %v772
      %v1502 = vunpack.c.l.b16 %v782
      %v1503 = vunpack.c.l.b16 %v792
      %v1504 = vunpack.c.l.b16 %v806
      %v1505 = vunpack.c.l.b16 %v816
      %v1506 = vunpack.c.l.b16 %v826
      %v1507 = vunpack.c.l.b16 %v836
      %v1508 = vunpack.c.l.b16 %v846
      %v1509 = vunpack.c.l.b16 %v856
      %v1510 = vunpack.c.l.b16 %v870
      %v1511 = vunpack.c.l.b16 %v880
      %v1512 = vunpack.c.l.b16 %v890
      %v1513 = vunpack.c.l.b16 %v900
      %v1514 = vunpack.c.l.b16 %v910
      %v1515 = vunpack.c.l.b16 %v920
      %v1516 = vpack.c.b16 %v1457, %v1456
      %v1517 = vpack.c.b16 %v1459, %v1458
      %v1518 = vpack.c.b16 %v1461, %v1460
      %v1519 = vpack.c.b16 %v1463, %v1462
      %v1520 = vpack.c.b16 %v1465, %v1464
      %v1521 = vpack.c.b16 %v1467, %v1466
      %v1522 = vpack.c.b16 %v1469, %v1468
      %v1523 = vpack.c.b16 %v1471, %v1470
      %v1524 = vpack.c.b16 %v1473, %v1472
      %v1525 = vpack.c.b16 %v1475, %v1474
      %v1526 = vpack.c.b16 %v1477, %v1476
      %v1527 = vpack.c.b16 %v1479, %v1478
      %v1528 = vpack.c.b16 %v1481, %v1480
      %v1529 = vpack.c.b16 %v1483, %v1482
      %v1530 = vpack.c.b16 %v1485, %v1484
      %v1531 = vpack.c.b16 %v1487, %v1486
      %v1532 = vpack.c.b16 %v1489, %v1488
      %v1533 = vpack.c.b16 %v1491, %v1490
      %v1534 = vpack.c.b16 %v1493, %v1492
      %v1535 = vpack.c.b16 %v1495, %v1494
      %v1536 = vpack.c.b16 %v1497, %v1496
      %v1537 = vpack.c.b16 %v1499, %v1498
      %v1538 = vpack.c.b16 %v1501, %v1500
      %v1539 = vpack.c.b16 %v1503, %v1502
      %v1540 = vpack.c.b16 %v1505, %v1504
      %v1541 = vpack.c.b16 %v1507, %v1506
      %v1542 = vpack.c.b16 %v1509, %v1508
      %v1543 = vpack.c.b16 %v1511, %v1510
      %v1544 = vpack.c.b16 %v1513, %v1512
      %v1545 = vpack.c.b16 %v1515, %v1514
      %v1550 = vunpack.c.l.b16 %v921
      %v1551 = vunpack.c.l.b16 %v922
      %v1552 = vunpack.c.l.b16 %v923
      %v1553 = vunpack.c.l.b16 %v924
      %v1554 = vpack.c.b16 %v1551, %v1550
      %v1555 = vpack.c.b16 %v1553, %v1552
      %v1559 = vsel %vm1092, %v1516, 0
      %v1562 = vsel %vm1092, %v1517, 0
      %v1565 = vsel %vm1092, %v1518, 0
      %v1568 = vsel %vm1092, %v1519, 0
      %v1571 = vsel %vm1092, %v1520, 0
      %v1574 = vsel %vm1092, %v1521, 0
      %v1577 = vsel %vm1092, %v1522, 0
      %v1580 = vsel %vm1092, %v1523, 0
      %v1583 = vsel %vm1092, %v1524, 0
      %v1586 = vsel %vm1092, %v1525, 0
      %v1589 = vsel %vm1092, %v1526, 0
      %v1592 = vsel %vm1092, %v1527, 0
      %v1595 = vsel %vm1092, %v1528, 0
      %v1598 = vsel %vm1092, %v1529, 0
      %v1601 = vsel %vm1092, %v1530, 0
      %v1604 = vsel %vm1092, %v1531, 0
      %v1607 = vsel %vm1092, %v1532, 0
      %v1610 = vsel %vm1092, %v1533, 0
      %v1613 = vsel %vm1092, %v1534, 0
      %v1616 = vsel %vm1092, %v1535, 0
      %v1619 = vsel %vm1092, %v1536, 0
      %v1622 = vsel %vm1092, %v1537, 0
      %v1625 = vsel %vm1092, %v1538, 0
      %v1628 = vsel %vm1092, %v1539, 0
      %v1631 = vsel %vm1092, %v1540, 0
      %v1634 = vsel %vm1092, %v1541, 0
      %v1637 = vsel %vm1092, %v1542, 0
      %v1640 = vsel %vm1092, %v1543, 0
      %v1643 = vsel %vm1092, %v1544, 0
      %v1646 = vsel %vm1092, %v1545, 0
      %1648 = vmatprep.subr.bf16.mxu0 0
      %1649 = vmatpush1.bf16.msra.mxu0 %v1554
      %1650 = vmatprep.subr.bf16.mxu0 0
      %1651 = vmatpush1.bf16.msra.mxu0 %v1555
      %1652 = vmatprep.subr.bf16.mxu0 0
      %1653 = vmatpush1.bf16.msra.mxu0 0
      %1654 = vmatprep.subr.bf16.mxu0 0
      %1655 = vmatpush1.bf16.msra.mxu0 0
      %1656 = vmatprep.subr.bf16.mxu0 0
      %1657 = vmatpush1.bf16.msra.mxu0 0
      %1658 = vmatprep.subr.bf16.mxu0 0
      %1659 = vmatpush1.bf16.msra.mxu0 0
      %1660 = vmatprep.subr.bf16.mxu0 0
      %1661 = vmatpush1.bf16.msra.mxu0 0
      %1662 = vmatprep.subr.bf16.mxu0 0
      %1663 = vmatpush1.bf16.msra.mxu0 0
      %1664 = vmatprep.subr.bf16.mxu0 0
      %1665 = vmatpush1.bf16.msra.mxu0 0
      %1666 = vmatprep.subr.bf16.mxu0 0
      %1667 = vmatpush1.bf16.msra.mxu0 0
      %1668 = vmatprep.subr.bf16.mxu0 0
      %1669 = vmatpush1.bf16.msra.mxu0 0
      %1670 = vmatprep.subr.bf16.mxu0 0
      %1671 = vmatpush1.bf16.msra.mxu0 0
      %1672 = vmatprep.subr.bf16.mxu0 0
      %1673 = vmatpush1.bf16.msra.mxu0 0
      %1674 = vmatprep.subr.bf16.mxu0 0
      %1675 = vmatpush1.bf16.msra.mxu0 0
      %1676 = vmatprep.subr.bf16.mxu0 0
      %1677 = vmatpush1.bf16.msra.mxu0 0
      %1678 = vmatprep.subr.bf16.mxu0 0
      %1679 = vmatpush1.bf16.msra.mxu0 0
      %1680 = vmatprep.mubr.bf16.mxu0 0
      %1681 = vmatmul.mubr.bf16.gmra.mrb[0].mxu0 %v1559
      %v1682 = vpop.f32.mrb[0].mxu0
      %v1683 = vadd.f32 %v1218, %v1682
      %v1684 = vpop.f32.mrb[0].mxu0
      %v1685 = vpop.f32.mrb[0].mxu0
      %v1686 = vadd.f32 %v1221, %v1685
      %v1687 = vpop.f32.mrb[0].mxu0
      %1688 = vmatprep.mubr.bf16.mxu0 0
      %1689 = vmatmul.mubr.bf16.gmra.mrb[0].mxu0 %v1562
      %v1690 = vpop.f32.mrb[0].mxu0
      %v1691 = vadd.f32 %v1226, %v1690
      %v1692 = vpop.f32.mrb[0].mxu0
      %v1693 = vpop.f32.mrb[0].mxu0
      %v1694 = vadd.f32 %v1229, %v1693
      %v1695 = vpop.f32.mrb[0].mxu0
      %1696 = vmatprep.mubr.bf16.mxu0 0
      %1697 = vmatmul.mubr.bf16.gmra.mrb[0].mxu0 %v1565
      %v1698 = vpop.f32.mrb[0].mxu0
      %v1699 = vadd.f32 %v1234, %v1698
      %v1700 = vpop.f32.mrb[0].mxu0
      %v1701 = vpop.f32.mrb[0].mxu0
      %v1702 = vadd.f32 %v1237, %v1701
      %v1703 = vpop.f32.mrb[0].mxu0
      %1704 = vmatprep.mubr.bf16.mxu0 0
      %1705 = vmatmul.mubr.bf16.gmra.mrb[0].mxu0 %v1568
      %v1706 = vpop.f32.mrb[0].mxu0
      %v1707 = vadd.f32 %v1242, %v1706
      %v1708 = vpop.f32.mrb[0].mxu0
      %v1709 = vpop.f32.mrb[0].mxu0
      %v1710 = vadd.f32 %v1245, %v1709
      %v1711 = vpop.f32.mrb[0].mxu0
      %1712 = vmatprep.mubr.bf16.mxu0 0
      %1713 = vmatmul.mubr.bf16.gmra.mrb[0].mxu0 %v1571
      %v1714 = vpop.f32.mrb[0].mxu0
      %v1715 = vadd.f32 %v1250, %v1714
      %v1716 = vpop.f32.mrb[0].mxu0
      %v1717 = vpop.f32.mrb[0].mxu0
      %v1718 = vadd.f32 %v1253, %v1717
      %v1719 = vpop.f32.mrb[0].mxu0
      %1720 = vmatprep.mubr.bf16.mxu0 0
      %1721 = vmatmul.mubr.bf16.gmra.mrb[0].mxu0 %v1574
      %v1722 = vpop.f32.mrb[0].mxu0
      %v1723 = vadd.f32 %v1258, %v1722
      %v1724 = vpop.f32.mrb[0].mxu0
      %v1725 = vpop.f32.mrb[0].mxu0
      %v1726 = vadd.f32 %v1261, %v1725
      %v1727 = vpop.f32.mrb[0].mxu0
      %1728 = vmatprep.mubr.bf16.mxu0 0
      %1729 = vmatmul.mubr.bf16.gmra.mrb[0].mxu0 %v1577
      %v1730 = vpop.f32.mrb[0].mxu0
      %v1731 = vadd.f32 %v1266, %v1730
      %v1732 = vpop.f32.mrb[0].mxu0
      %v1733 = vpop.f32.mrb[0].mxu0
      %v1734 = vadd.f32 %v1269, %v1733
      %v1735 = vpop.f32.mrb[0].mxu0
      %1736 = vmatprep.mubr.bf16.mxu0 0
      %1737 = vmatmul.mubr.bf16.gmra.mrb[0].mxu0 %v1580
      %v1738 = vpop.f32.mrb[0].mxu0
      %v1739 = vadd.f32 %v1274, %v1738
      %v1740 = vpop.f32.mrb[0].mxu0
      %v1741 = vpop.f32.mrb[0].mxu0
      %v1742 = vadd.f32 %v1277, %v1741
      %v1743 = vpop.f32.mrb[0].mxu0
      %1744 = vmatprep.mubr.bf16.mxu0 0
      %1745 = vmatmul.mubr.bf16.gmra.mrb[0].mxu0 %v1583
      %v1746 = vpop.f32.mrb[0].mxu0
      %v1747 = vadd.f32 %v1282, %v1746
      %v1748 = vpop.f32.mrb[0].mxu0
      %v1749 = vpop.f32.mrb[0].mxu0
      %v1750 = vadd.f32 %v1285, %v1749
      %v1751 = vpop.f32.mrb[0].mxu0
      %1752 = vmatprep.mubr.bf16.mxu0 0
      %1753 = vmatmul.mubr.bf16.gmra.mrb[0].mxu0 %v1586
      %v1754 = vpop.f32.mrb[0].mxu0
      %v1755 = vadd.f32 %v1290, %v1754
      %v1756 = vpop.f32.mrb[0].mxu0
      %v1757 = vpop.f32.mrb[0].mxu0
      %v1758 = vadd.f32 %v1293, %v1757
      %v1759 = vpop.f32.mrb[0].mxu0
      %1760 = vmatprep.mubr.bf16.mxu0 0
      %1761 = vmatmul.mubr.bf16.gmra.mrb[0].mxu0 %v1589
      %v1762 = vpop.f32.mrb[0].mxu0
      %v1763 = vadd.f32 %v1298, %v1762
      %v1764 = vpop.f32.mrb[0].mxu0
      %v1765 = vpop.f32.mrb[0].mxu0
      %v1766 = vadd.f32 %v1301, %v1765
      %v1767 = vpop.f32.mrb[0].mxu0
      %1768 = vmatprep.mubr.bf16.mxu0 0
      %1769 = vmatmul.mubr.bf16.gmra.mrb[0].mxu0 %v1592
      %v1770 = vpop.f32.mrb[0].mxu0
      %v1771 = vadd.f32 %v1306, %v1770
      %v1772 = vpop.f32.mrb[0].mxu0
      %v1773 = vpop.f32.mrb[0].mxu0
      %v1774 = vadd.f32 %v1309, %v1773
      %v1775 = vpop.f32.mrb[0].mxu0
      %1776 = vmatprep.mubr.bf16.mxu0 0
      %1777 = vmatmul.mubr.bf16.gmra.mrb[0].mxu0 %v1595
      %v1778 = vpop.f32.mrb[0].mxu0
      %v1779 = vadd.f32 %v1314, %v1778
      %v1780 = vpop.f32.mrb[0].mxu0
      %v1781 = vpop.f32.mrb[0].mxu0
      %v1782 = vadd.f32 %v1317, %v1781
      %v1783 = vpop.f32.mrb[0].mxu0
      %1784 = vmatprep.mubr.bf16.mxu0 0
      %1785 = vmatmul.mubr.bf16.gmra.mrb[0].mxu0 %v1598
      %v1786 = vpop.f32.mrb[0].mxu0
      %v1787 = vadd.f32 %v1322, %v1786
      %v1788 = vpop.f32.mrb[0].mxu0
      %v1789 = vpop.f32.mrb[0].mxu0
      %v1790 = vadd.f32 %v1325, %v1789
      %v1791 = vpop.f32.mrb[0].mxu0
      %1792 = vmatprep.mubr.bf16.mxu0 0
      %1793 = vmatmul.mubr.bf16.gmra.mrb[0].mxu0 %v1601
      %v1794 = vpop.f32.mrb[0].mxu0
      %v1795 = vadd.f32 %v1330, %v1794
      %v1796 = vpop.f32.mrb[0].mxu0
      %v1797 = vpop.f32.mrb[0].mxu0
      %v1798 = vadd.f32 %v1333, %v1797
      %v1799 = vpop.f32.mrb[0].mxu0
      %1800 = vmatprep.mubr.bf16.mxu0 0
      %1801 = vmatmul.mubr.bf16.gmra.mrb[0].mxu0 %v1604
      %v1802 = vpop.f32.mrb[0].mxu0
      %v1803 = vadd.f32 %v1338, %v1802
      %v1804 = vpop.f32.mrb[0].mxu0
      %v1805 = vpop.f32.mrb[0].mxu0
      %v1806 = vadd.f32 %v1341, %v1805
      %v1807 = vpop.f32.mrb[0].mxu0
      %1808 = vmatprep.mubr.bf16.mxu0 0
      %1809 = vmatmul.mubr.bf16.gmra.mrb[0].mxu0 %v1607
      %v1810 = vpop.f32.mrb[0].mxu0
      %v1811 = vadd.f32 %v1346, %v1810
      %v1812 = vpop.f32.mrb[0].mxu0
      %v1813 = vpop.f32.mrb[0].mxu0
      %v1814 = vadd.f32 %v1349, %v1813
      %v1815 = vpop.f32.mrb[0].mxu0
      %1816 = vmatprep.mubr.bf16.mxu0 0
      %1817 = vmatmul.mubr.bf16.gmra.mrb[0].mxu0 %v1610
      %v1818 = vpop.f32.mrb[0].mxu0
      %v1819 = vadd.f32 %v1354, %v1818
      %v1820 = vpop.f32.mrb[0].mxu0
      %v1821 = vpop.f32.mrb[0].mxu0
      %v1822 = vadd.f32 %v1357, %v1821
      %v1823 = vpop.f32.mrb[0].mxu0
      %1824 = vmatprep.mubr.bf16.mxu0 0
      %1825 = vmatmul.mubr.bf16.gmra.mrb[0].mxu0 %v1613
      %v1826 = vpop.f32.mrb[0].mxu0
      %v1827 = vadd.f32 %v1362, %v1826
      %v1828 = vpop.f32.mrb[0].mxu0
      %v1829 = vpop.f32.mrb[0].mxu0
      %v1830 = vadd.f32 %v1365, %v1829
      %v1831 = vpop.f32.mrb[0].mxu0
      %1832 = vmatprep.mubr.bf16.mxu0 0
      %1833 = vmatmul.mubr.bf16.gmra.mrb[0].mxu0 %v1616
      %v1834 = vpop.f32.mrb[0].mxu0
      %v1835 = vadd.f32 %v1370, %v1834
      %v1836 = vpop.f32.mrb[0].mxu0
      %v1837 = vpop.f32.mrb[0].mxu0
      %v1838 = vadd.f32 %v1373, %v1837
      %v1839 = vpop.f32.mrb[0].mxu0
      %1840 = vmatprep.mubr.bf16.mxu0 0
      %1841 = vmatmul.mubr.bf16.gmra.mrb[0].mxu0 %v1619
      %v1842 = vpop.f32.mrb[0].mxu0
      %v1843 = vadd.f32 %v1378, %v1842
      %v1844 = vpop.f32.mrb[0].mxu0
      %v1845 = vpop.f32.mrb[0].mxu0
      %v1846 = vadd.f32 %v1381, %v1845
      %v1847 = vpop.f32.mrb[0].mxu0
      %1848 = vmatprep.mubr.bf16.mxu0 0
      %1849 = vmatmul.mubr.bf16.gmra.mrb[0].mxu0 %v1622
      %v1850 = vpop.f32.mrb[0].mxu0
      %v1851 = vadd.f32 %v1386, %v1850
      %v1852 = vpop.f32.mrb[0].mxu0
      %v1853 = vpop.f32.mrb[0].mxu0
      %v1854 = vadd.f32 %v1389, %v1853
      %v1855 = vpop.f32.mrb[0].mxu0
      %1856 = vmatprep.mubr.bf16.mxu0 0
      %1857 = vmatmul.mubr.bf16.gmra.mrb[0].mxu0 %v1625
      %v1858 = vpop.f32.mrb[0].mxu0
      %v1859 = vadd.f32 %v1394, %v1858
      %v1860 = vpop.f32.mrb[0].mxu0
      %v1861 = vpop.f32.mrb[0].mxu0
      %v1862 = vadd.f32 %v1397, %v1861
      %v1863 = vpop.f32.mrb[0].mxu0
      %1864 = vmatprep.mubr.bf16.mxu0 0
      %1865 = vmatmul.mubr.bf16.gmra.mrb[0].mxu0 %v1628
      %v1866 = vpop.f32.mrb[0].mxu0
      %v1867 = vadd.f32 %v1402, %v1866
      %v1868 = vpop.f32.mrb[0].mxu0
      %v1869 = vpop.f32.mrb[0].mxu0
      %v1870 = vadd.f32 %v1405, %v1869
      %v1871 = vpop.f32.mrb[0].mxu0
      %1872 = vmatprep.mubr.bf16.mxu0 0
      %1873 = vmatmul.mubr.bf16.gmra.mrb[0].mxu0 %v1631
      %v1874 = vpop.f32.mrb[0].mxu0
      %v1875 = vadd.f32 %v1410, %v1874
      %v1876 = vpop.f32.mrb[0].mxu0
      %v1877 = vpop.f32.mrb[0].mxu0
      %v1878 = vadd.f32 %v1413, %v1877
      %v1879 = vpop.f32.mrb[0].mxu0
      %1880 = vmatprep.mubr.bf16.mxu0 0
      %1881 = vmatmul.mubr.bf16.gmra.mrb[0].mxu0 %v1634
      %v1882 = vpop.f32.mrb[0].mxu0
      %v1883 = vadd.f32 %v1418, %v1882
      %v1884 = vpop.f32.mrb[0].mxu0
      %v1885 = vpop.f32.mrb[0].mxu0
      %v1886 = vadd.f32 %v1421, %v1885
      %v1887 = vpop.f32.mrb[0].mxu0
      %1888 = vmatprep.mubr.bf16.mxu0 0
      %1889 = vmatmul.mubr.bf16.gmra.mrb[0].mxu0 %v1637
      %v1890 = vpop.f32.mrb[0].mxu0
      %v1891 = vadd.f32 %v1426, %v1890
      %v1892 = vpop.f32.mrb[0].mxu0
      %v1893 = vpop.f32.mrb[0].mxu0
      %v1894 = vadd.f32 %v1429, %v1893
      %v1895 = vpop.f32.mrb[0].mxu0
      %1896 = vmatprep.mubr.bf16.mxu0 0
      %1897 = vmatmul.mubr.bf16.gmra.mrb[0].mxu0 %v1640
      %v1898 = vpop.f32.mrb[0].mxu0
      %v1899 = vadd.f32 %v1434, %v1898
      %v1900 = vpop.f32.mrb[0].mxu0
      %v1901 = vpop.f32.mrb[0].mxu0
      %v1902 = vadd.f32 %v1437, %v1901
      %v1903 = vpop.f32.mrb[0].mxu0
      %1904 = vmatprep.mubr.bf16.mxu0 0
      %1905 = vmatmul.mubr.bf16.gmra.mrb[0].mxu0 %v1643
      %v1906 = vpop.f32.mrb[0].mxu0
      %v1907 = vadd.f32 %v1442, %v1906
      %v1908 = vpop.f32.mrb[0].mxu0
      %v1909 = vpop.f32.mrb[0].mxu0
      %v1910 = vadd.f32 %v1445, %v1909
      %v1911 = vpop.f32.mrb[0].mxu0
      %1912 = vmatprep.mubr.bf16.mxu0 0
      %1913 = vmatmul.mubr.bf16.gmra.mrb[0].mxu0 %v1646
      %v1914 = vpop.f32.mrb[0].mxu0
      %v1915 = vadd.f32 %v1450, %v1914
      %v1916 = vpop.f32.mrb[0].mxu0
      %v1917 = vpop.f32.mrb[0].mxu0
      %v1918 = vadd.f32 %v1453, %v1917
      %v1919 = vpop.f32.mrb[0].mxu0
      %1920 = vdwg.mxu0
      %v1922 = vshrl.u32 %v201, 16
      %v1924 = vrot.slane %v1922, 4
      %v1925 = vshll.u32 %v201, 16
      %v1927 = vrot.slane %v1925, 5
      %v1928 = vor.u32 %v1924, %v1927
      %v1929 = vrot.slane %v1928, 4
      %v1931 = vshll.u32 %v202, 16
      %v1933 = vrot.slane %v1931, 5
      %v1934 = vsel %vm280, %v1929, %v1933
      %v1935 = vshrl.u32 %v202, 16
      %v1937 = vrot.slane %v1935, 4
      %v1938 = vor.u32 %v1937, %v1933
      %v1939 = vrot.slane %v1938, 4
      %v1941 = vshll.u32 %v203, 16
      %v1943 = vrot.slane %v1941, 5
      %v1944 = vsel %vm280, %v1939, %v1943
      %v1945 = vshrl.u32 %v203, 16
      %v1947 = vrot.slane %v1945, 4
      %v1948 = vor.u32 %v1947, %v1943
      %v1949 = vrot.slane %v1948, 4
      %v1951 = vshll.u32 %v204, 16
      %v1953 = vrot.slane %v1951, 5
      %v1954 = vsel %vm280, %v1949, %v1953
      %v1955 = vshrl.u32 %v204, 16
      %v1957 = vrot.slane %v1955, 4
      %v1958 = vor.u32 %v1957, %v1953
      %v1959 = vrot.slane %v1958, 4
      %v1961 = vshll.u32 %v205, 16
      %v1963 = vrot.slane %v1961, 5
      %v1964 = vsel %vm280, %v1959, %v1963
      %v1965 = vshrl.u32 %v205, 16
      %v1967 = vrot.slane %v1965, 4
      %v1968 = vor.u32 %v1967, %v1963
      %v1969 = vrot.slane %v1968, 4
      %v1971 = vshll.u32 %v206, 16
      %v1973 = vrot.slane %v1971, 5
      %v1974 = vsel %vm280, %v1969, %v1973
      %v1975 = vshrl.u32 %v206, 16
      %v1977 = vrot.slane %v1975, 4
      %v1978 = vor.u32 %v1977, %v1973
      %v1979 = vrot.slane %v1978, 4
      %v1981 = vshll.u32 %v207, 16
      %v1983 = vrot.slane %v1981, 5
      %v1984 = vsel %vm280, %v1979, %v1983
      %s1985 = scalar_lea.vmem %s1, 32
      %v1986 = vld [vmem:[%s1985] sm:$0xf]
      %v1987 = vld [vmem:[%s1985 + $0x4] sm:$0xf]
      %v1988 = vld [vmem:[%s1985 + $0x8] sm:$0xf]
      %v1989 = vld [vmem:[%s1985 + $0xc] sm:$0xf]
      %v1990 = vunpack.c.l.b16 %v1934
      %v1991 = vunpack.c.l.b16 %v1944
      %v1992 = vunpack.c.l.b16 %v1954
      %v1993 = vunpack.c.l.b16 %v1964
      %v1994 = vunpack.c.l.b16 %v1974
      %v1995 = vunpack.c.l.b16 %v1984
      %v1996 = vpack.c.b16 %v1991, %v1990
      %v1997 = vpack.c.b16 %v1993, %v1992
      %v1998 = vpack.c.b16 %v1995, %v1994
      %v2003 = vunpack.c.l.b16 %v1986
      %v2004 = vunpack.c.l.b16 %v1987
      %v2005 = vunpack.c.l.b16 %v1988
      %v2006 = vunpack.c.l.b16 %v1989
      %v2007 = vpack.c.b16 %v2004, %v2003
      %v2008 = vpack.c.b16 %v2006, %v2005
      %v2012 = vsel %vm1092, %v1996, 0
      %v2015 = vsel %vm1092, %v1997, 0
      %v2018 = vsel %vm1092, %v1998, 0
      %2020 = vmatprep.subr.bf16.mxu0 0
      %2021 = vmatpush1.bf16.msra.mxu0 %v2007
      %2022 = vmatprep.subr.bf16.mxu0 0
      %2023 = vmatpush1.bf16.msra.mxu0 %v2008
      %2024 = vmatprep.subr.bf16.mxu0 0
      %2025 = vmatpush1.bf16.msra.mxu0 0
      %2026 = vmatprep.subr.bf16.mxu0 0
      %2027 = vmatpush1.bf16.msra.mxu0 0
      %2028 = vmatprep.subr.bf16.mxu0 0
      %2029 = vmatpush1.bf16.msra.mxu0 0
      %2030 = vmatprep.subr.bf16.mxu0 0
      %2031 = vmatpush1.bf16.msra.mxu0 0
      %2032 = vmatprep.subr.bf16.mxu0 0
      %2033 = vmatpush1.bf16.msra.mxu0 0
      %2034 = vmatprep.subr.bf16.mxu0 0
      %2035 = vmatpush1.bf16.msra.mxu0 0
      %2036 = vmatprep.subr.bf16.mxu0 0
      %2037 = vmatpush1.bf16.msra.mxu0 0
      %2038 = vmatprep.subr.bf16.mxu0 0
      %2039 = vmatpush1.bf16.msra.mxu0 0
      %2040 = vmatprep.subr.bf16.mxu0 0
      %2041 = vmatpush1.bf16.msra.mxu0 0
      %2042 = vmatprep.subr.bf16.mxu0 0
      %2043 = vmatpush1.bf16.msra.mxu0 0
      %2044 = vmatprep.subr.bf16.mxu0 0
      %2045 = vmatpush1.bf16.msra.mxu0 0
      %2046 = vmatprep.subr.bf16.mxu0 0
      %2047 = vmatpush1.bf16.msra.mxu0 0
      %2048 = vmatprep.subr.bf16.mxu0 0
      %2049 = vmatpush1.bf16.msra.mxu0 0
      %2050 = vmatprep.subr.bf16.mxu0 0
      %2051 = vmatpush1.bf16.msra.mxu0 0
      %2052 = vmatprep.mubr.bf16.mxu0 0
      %2053 = vmatmul.mubr.bf16.gmra.mrb[0].mxu0 %v2012
      %v2054 = vpop.f32.mrb[0].mxu0
      %v2055 = vadd.f32 0.0, %v2054
      %v2056 = vpop.f32.mrb[0].mxu0
      %v2057 = vpop.f32.mrb[0].mxu0
      %v2058 = vadd.f32 0.0, %v2057
      %v2059 = vpop.f32.mrb[0].mxu0
      %2060 = vmatprep.mubr.bf16.mxu0 0
      %2061 = vmatmul.mubr.bf16.gmra.mrb[0].mxu0 %v2015
      %v2062 = vpop.f32.mrb[0].mxu0
      %v2063 = vadd.f32 0.0, %v2062
      %v2064 = vpop.f32.mrb[0].mxu0
      %v2065 = vpop.f32.mrb[0].mxu0
      %v2066 = vadd.f32 0.0, %v2065
      %v2067 = vpop.f32.mrb[0].mxu0
      %2068 = vmatprep.mubr.bf16.mxu0 0
      %2069 = vmatmul.mubr.bf16.gmra.mrb[0].mxu0 %v2018
      %v2070 = vpop.f32.mrb[0].mxu0
      %v2071 = vadd.f32 0.0, %v2070
      %v2072 = vpop.f32.mrb[0].mxu0
      %v2073 = vpop.f32.mrb[0].mxu0
      %v2074 = vadd.f32 0.0, %v2073
      %v2075 = vpop.f32.mrb[0].mxu0
      %2076 = vmatprep.mubr.bf16.mxu0 0
      %2077 = vmatmul.mubr.bf16.gmra.mrb[0].mxu0 %v1559
      %v2078 = vpop.f32.mrb[0].mxu0
      %v2079 = vadd.f32 0.0, %v2078
      %v2080 = vpop.f32.mrb[0].mxu0
      %v2081 = vpop.f32.mrb[0].mxu0
      %v2082 = vadd.f32 0.0, %v2081
      %v2083 = vpop.f32.mrb[0].mxu0
      %2084 = vmatprep.mubr.bf16.mxu0 0
      %2085 = vmatmul.mubr.bf16.gmra.mrb[0].mxu0 %v1562
      %v2086 = vpop.f32.mrb[0].mxu0
      %v2087 = vadd.f32 0.0, %v2086
      %v2088 = vpop.f32.mrb[0].mxu0
      %v2089 = vpop.f32.mrb[0].mxu0
      %v2090 = vadd.f32 0.0, %v2089
      %v2091 = vpop.f32.mrb[0].mxu0
      %2092 = vmatprep.mubr.bf16.mxu0 0
      %2093 = vmatmul.mubr.bf16.gmra.mrb[0].mxu0 %v1565
      %v2094 = vpop.f32.mrb[0].mxu0
      %v2095 = vadd.f32 0.0, %v2094
      %v2096 = vpop.f32.mrb[0].mxu0
      %v2097 = vpop.f32.mrb[0].mxu0
      %v2098 = vadd.f32 0.0, %v2097
      %v2099 = vpop.f32.mrb[0].mxu0
      %2100 = vmatprep.mubr.bf16.mxu0 0
      %2101 = vmatmul.mubr.bf16.gmra.mrb[0].mxu0 %v1568
      %v2102 = vpop.f32.mrb[0].mxu0
      %v2103 = vadd.f32 0.0, %v2102
      %v2104 = vpop.f32.mrb[0].mxu0
      %v2105 = vpop.f32.mrb[0].mxu0
      %v2106 = vadd.f32 0.0, %v2105
      %v2107 = vpop.f32.mrb[0].mxu0
      %2108 = vmatprep.mubr.bf16.mxu0 0
      %2109 = vmatmul.mubr.bf16.gmra.mrb[0].mxu0 %v1571
      %v2110 = vpop.f32.mrb[0].mxu0
      %v2111 = vadd.f32 0.0, %v2110
      %v2112 = vpop.f32.mrb[0].mxu0
      %v2113 = vpop.f32.mrb[0].mxu0
      %v2114 = vadd.f32 0.0, %v2113
      %v2115 = vpop.f32.mrb[0].mxu0
      %2116 = vmatprep.mubr.bf16.mxu0 0
      %2117 = vmatmul.mubr.bf16.gmra.mrb[0].mxu0 %v1574
      %v2118 = vpop.f32.mrb[0].mxu0
      %v2119 = vadd.f32 0.0, %v2118
      %v2120 = vpop.f32.mrb[0].mxu0
      %v2121 = vpop.f32.mrb[0].mxu0
      %v2122 = vadd.f32 0.0, %v2121
      %v2123 = vpop.f32.mrb[0].mxu0
      %2124 = vmatprep.mubr.bf16.mxu0 0
      %2125 = vmatmul.mubr.bf16.gmra.mrb[0].mxu0 %v1577
      %v2126 = vpop.f32.mrb[0].mxu0
      %v2127 = vadd.f32 0.0, %v2126
      %v2128 = vpop.f32.mrb[0].mxu0
      %v2129 = vpop.f32.mrb[0].mxu0
      %v2130 = vadd.f32 0.0, %v2129
      %v2131 = vpop.f32.mrb[0].mxu0
      %2132 = vmatprep.mubr.bf16.mxu0 0
      %2133 = vmatmul.mubr.bf16.gmra.mrb[0].mxu0 %v1580
      %v2134 = vpop.f32.mrb[0].mxu0
      %v2135 = vadd.f32 0.0, %v2134
      %v2136 = vpop.f32.mrb[0].mxu0
      %v2137 = vpop.f32.mrb[0].mxu0
      %v2138 = vadd.f32 0.0, %v2137
      %v2139 = vpop.f32.mrb[0].mxu0
      %2140 = vmatprep.mubr.bf16.mxu0 0
      %2141 = vmatmul.mubr.bf16.gmra.mrb[0].mxu0 %v1583
      %v2142 = vpop.f32.mrb[0].mxu0
      %v2143 = vadd.f32 0.0, %v2142
      %v2144 = vpop.f32.mrb[0].mxu0
      %v2145 = vpop.f32.mrb[0].mxu0
      %v2146 = vadd.f32 0.0, %v2145
      %v2147 = vpop.f32.mrb[0].mxu0
      %2148 = vmatprep.mubr.bf16.mxu0 0
      %2149 = vmatmul.mubr.bf16.gmra.mrb[0].mxu0 %v1586
      %v2150 = vpop.f32.mrb[0].mxu0
      %v2151 = vadd.f32 0.0, %v2150
      %v2152 = vpop.f32.mrb[0].mxu0
      %v2153 = vpop.f32.mrb[0].mxu0
      %v2154 = vadd.f32 0.0, %v2153
      %v2155 = vpop.f32.mrb[0].mxu0
      %2156 = vmatprep.mubr.bf16.mxu0 0
      %2157 = vmatmul.mubr.bf16.gmra.mrb[0].mxu0 %v1589
      %v2158 = vpop.f32.mrb[0].mxu0
      %v2159 = vadd.f32 0.0, %v2158
      %v2160 = vpop.f32.mrb[0].mxu0
      %v2161 = vpop.f32.mrb[0].mxu0
      %v2162 = vadd.f32 0.0, %v2161
      %v2163 = vpop.f32.mrb[0].mxu0
      %2164 = vmatprep.mubr.bf16.mxu0 0
      %2165 = vmatmul.mubr.bf16.gmra.mrb[0].mxu0 %v1592
      %v2166 = vpop.f32.mrb[0].mxu0
      %v2167 = vadd.f32 0.0, %v2166
      %v2168 = vpop.f32.mrb[0].mxu0
      %v2169 = vpop.f32.mrb[0].mxu0
      %v2170 = vadd.f32 0.0, %v2169
      %v2171 = vpop.f32.mrb[0].mxu0
      %2172 = vmatprep.mubr.bf16.mxu0 0
      %2173 = vmatmul.mubr.bf16.gmra.mrb[0].mxu0 %v1595
      %v2174 = vpop.f32.mrb[0].mxu0
      %v2175 = vadd.f32 0.0, %v2174
      %v2176 = vpop.f32.mrb[0].mxu0
      %v2177 = vpop.f32.mrb[0].mxu0
      %v2178 = vadd.f32 0.0, %v2177
      %v2179 = vpop.f32.mrb[0].mxu0
      %2180 = vmatprep.mubr.bf16.mxu0 0
      %2181 = vmatmul.mubr.bf16.gmra.mrb[0].mxu0 %v1598
      %v2182 = vpop.f32.mrb[0].mxu0
      %v2183 = vadd.f32 0.0, %v2182
      %v2184 = vpop.f32.mrb[0].mxu0
      %v2185 = vpop.f32.mrb[0].mxu0
      %v2186 = vadd.f32 0.0, %v2185
      %v2187 = vpop.f32.mrb[0].mxu0
      %2188 = vmatprep.mubr.bf16.mxu0 0
      %2189 = vmatmul.mubr.bf16.gmra.mrb[0].mxu0 %v1601
      %v2190 = vpop.f32.mrb[0].mxu0
      %v2191 = vadd.f32 0.0, %v2190
      %v2192 = vpop.f32.mrb[0].mxu0
      %v2193 = vpop.f32.mrb[0].mxu0
      %v2194 = vadd.f32 0.0, %v2193
      %v2195 = vpop.f32.mrb[0].mxu0
      %2196 = vmatprep.mubr.bf16.mxu0 0
      %2197 = vmatmul.mubr.bf16.gmra.mrb[0].mxu0 %v1604
      %v2198 = vpop.f32.mrb[0].mxu0
      %v2199 = vadd.f32 0.0, %v2198
      %v2200 = vpop.f32.mrb[0].mxu0
      %v2201 = vpop.f32.mrb[0].mxu0
      %v2202 = vadd.f32 0.0, %v2201
      %v2203 = vpop.f32.mrb[0].mxu0
      %2204 = vmatprep.mubr.bf16.mxu0 0
      %2205 = vmatmul.mubr.bf16.gmra.mrb[0].mxu0 %v1607
      %v2206 = vpop.f32.mrb[0].mxu0
      %v2207 = vadd.f32 0.0, %v2206
      %v2208 = vpop.f32.mrb[0].mxu0
      %v2209 = vpop.f32.mrb[0].mxu0
      %v2210 = vadd.f32 0.0, %v2209
      %v2211 = vpop.f32.mrb[0].mxu0
      %2212 = vmatprep.mubr.bf16.mxu0 0
      %2213 = vmatmul.mubr.bf16.gmra.mrb[0].mxu0 %v1610
      %v2214 = vpop.f32.mrb[0].mxu0
      %v2215 = vadd.f32 0.0, %v2214
      %v2216 = vpop.f32.mrb[0].mxu0
      %v2217 = vpop.f32.mrb[0].mxu0
      %v2218 = vadd.f32 0.0, %v2217
      %v2219 = vpop.f32.mrb[0].mxu0
      %2220 = vmatprep.mubr.bf16.mxu0 0
      %2221 = vmatmul.mubr.bf16.gmra.mrb[0].mxu0 %v1613
      %v2222 = vpop.f32.mrb[0].mxu0
      %v2223 = vadd.f32 0.0, %v2222
      %v2224 = vpop.f32.mrb[0].mxu0
      %v2225 = vpop.f32.mrb[0].mxu0
      %v2226 = vadd.f32 0.0, %v2225
      %v2227 = vpop.f32.mrb[0].mxu0
      %2228 = vmatprep.mubr.bf16.mxu0 0
      %2229 = vmatmul.mubr.bf16.gmra.mrb[0].mxu0 %v1616
      %v2230 = vpop.f32.mrb[0].mxu0
      %v2231 = vadd.f32 0.0, %v2230
      %v2232 = vpop.f32.mrb[0].mxu0
      %v2233 = vpop.f32.mrb[0].mxu0
      %v2234 = vadd.f32 0.0, %v2233
      %v2235 = vpop.f32.mrb[0].mxu0
      %2236 = vmatprep.mubr.bf16.mxu0 0
      %2237 = vmatmul.mubr.bf16.gmra.mrb[0].mxu0 %v1619
      %v2238 = vpop.f32.mrb[0].mxu0
      %v2239 = vadd.f32 0.0, %v2238
      %v2240 = vpop.f32.mrb[0].mxu0
      %v2241 = vpop.f32.mrb[0].mxu0
      %v2242 = vadd.f32 0.0, %v2241
      %v2243 = vpop.f32.mrb[0].mxu0
      %2244 = vmatprep.mubr.bf16.mxu0 0
      %2245 = vmatmul.mubr.bf16.gmra.mrb[0].mxu0 %v1622
      %v2246 = vpop.f32.mrb[0].mxu0
      %v2247 = vadd.f32 0.0, %v2246
      %v2248 = vpop.f32.mrb[0].mxu0
      %v2249 = vpop.f32.mrb[0].mxu0
      %v2250 = vadd.f32 0.0, %v2249
      %v2251 = vpop.f32.mrb[0].mxu0
      %2252 = vmatprep.mubr.bf16.mxu0 0
      %2253 = vmatmul.mubr.bf16.gmra.mrb[0].mxu0 %v1625
      %v2254 = vpop.f32.mrb[0].mxu0
      %v2255 = vadd.f32 0.0, %v2254
      %v2256 = vpop.f32.mrb[0].mxu0
      %v2257 = vpop.f32.mrb[0].mxu0
      %v2258 = vadd.f32 0.0, %v2257
      %v2259 = vpop.f32.mrb[0].mxu0
      %2260 = vmatprep.mubr.bf16.mxu0 0
      %2261 = vmatmul.mubr.bf16.gmra.mrb[0].mxu0 %v1628
      %v2262 = vpop.f32.mrb[0].mxu0
      %v2263 = vadd.f32 0.0, %v2262
      %v2264 = vpop.f32.mrb[0].mxu0
      %v2265 = vpop.f32.mrb[0].mxu0
      %v2266 = vadd.f32 0.0, %v2265
      %v2267 = vpop.f32.mrb[0].mxu0
      %2268 = vmatprep.mubr.bf16.mxu0 0
      %2269 = vmatmul.mubr.bf16.gmra.mrb[0].mxu0 %v1631
      %v2270 = vpop.f32.mrb[0].mxu0
      %v2271 = vadd.f32 0.0, %v2270
      %v2272 = vpop.f32.mrb[0].mxu0
      %v2273 = vpop.f32.mrb[0].mxu0
      %v2274 = vadd.f32 0.0, %v2273
      %v2275 = vpop.f32.mrb[0].mxu0
      %2276 = vmatprep.mubr.bf16.mxu0 0
      %2277 = vmatmul.mubr.bf16.gmra.mrb[0].mxu0 %v1634
      %v2278 = vpop.f32.mrb[0].mxu0
      %v2279 = vadd.f32 0.0, %v2278
      %v2280 = vpop.f32.mrb[0].mxu0
      %v2281 = vpop.f32.mrb[0].mxu0
      %v2282 = vadd.f32 0.0, %v2281
      %v2283 = vpop.f32.mrb[0].mxu0
      %2284 = vmatprep.mubr.bf16.mxu0 0
      %2285 = vmatmul.mubr.bf16.gmra.mrb[0].mxu0 %v1637
      %v2286 = vpop.f32.mrb[0].mxu0
      %v2287 = vadd.f32 0.0, %v2286
      %v2288 = vpop.f32.mrb[0].mxu0
      %v2289 = vpop.f32.mrb[0].mxu0
      %v2290 = vadd.f32 0.0, %v2289
      %v2291 = vpop.f32.mrb[0].mxu0
      %2292 = vdwg.mxu0
      %v2293 = vadd.f32 %v1683, %v2055
      %v2294 = vadd.f32 %v1686, %v2058
      %v2295 = vadd.f32 %v1691, %v2063
      %v2296 = vadd.f32 %v1694, %v2066
      %v2297 = vadd.f32 %v1699, %v2071
      %v2298 = vadd.f32 %v1702, %v2074
      %v2299 = vadd.f32 %v1707, %v2079
      %v2300 = vadd.f32 %v1710, %v2082
      %v2301 = vadd.f32 %v1715, %v2087
      %v2302 = vadd.f32 %v1718, %v2090
      %v2303 = vadd.f32 %v1723, %v2095
      %v2304 = vadd.f32 %v1726, %v2098
      %v2305 = vadd.f32 %v1731, %v2103
      %v2306 = vadd.f32 %v1734, %v2106
      %v2307 = vadd.f32 %v1739, %v2111
      %v2308 = vadd.f32 %v1742, %v2114
      %v2309 = vadd.f32 %v1747, %v2119
      %v2310 = vadd.f32 %v1750, %v2122
      %v2311 = vadd.f32 %v1755, %v2127
      %v2312 = vadd.f32 %v1758, %v2130
      %v2313 = vadd.f32 %v1763, %v2135
      %v2314 = vadd.f32 %v1766, %v2138
      %v2315 = vadd.f32 %v1771, %v2143
      %v2316 = vadd.f32 %v1774, %v2146
      %v2317 = vadd.f32 %v1779, %v2151
      %v2318 = vadd.f32 %v1782, %v2154
      %v2319 = vadd.f32 %v1787, %v2159
      %v2320 = vadd.f32 %v1790, %v2162
      %v2321 = vadd.f32 %v1795, %v2167
      %v2322 = vadd.f32 %v1798, %v2170
      %v2323 = vadd.f32 %v1803, %v2175
      %v2324 = vadd.f32 %v1806, %v2178
      %v2325 = vadd.f32 %v1811, %v2183
      %v2326 = vadd.f32 %v1814, %v2186
      %v2327 = vadd.f32 %v1819, %v2191
      %v2328 = vadd.f32 %v1822, %v2194
      %v2329 = vadd.f32 %v1827, %v2199
      %v2330 = vadd.f32 %v1830, %v2202
      %v2331 = vadd.f32 %v1835, %v2207
      %v2332 = vadd.f32 %v1838, %v2210
      %v2333 = vadd.f32 %v1843, %v2215
      %v2334 = vadd.f32 %v1846, %v2218
      %v2335 = vadd.f32 %v1851, %v2223
      %v2336 = vadd.f32 %v1854, %v2226
      %v2337 = vadd.f32 %v1859, %v2231
      %v2338 = vadd.f32 %v1862, %v2234
      %v2339 = vadd.f32 %v1867, %v2239
      %v2340 = vadd.f32 %v1870, %v2242
      %v2341 = vadd.f32 %v1875, %v2247
      %v2342 = vadd.f32 %v1878, %v2250
      %v2343 = vadd.f32 %v1883, %v2255
      %v2344 = vadd.f32 %v1886, %v2258
      %v2345 = vadd.f32 %v1891, %v2263
      %v2346 = vadd.f32 %v1894, %v2266
      %v2347 = vadd.f32 %v1899, %v2271
      %v2348 = vadd.f32 %v1902, %v2274
      %v2349 = vadd.f32 %v1907, %v2279
      %v2350 = vadd.f32 %v1910, %v2282
      %v2351 = vadd.f32 %v1915, %v2287
      %v2352 = vadd.f32 %v1918, %v2290
      %s2353 = scalar_lea.vmem %s1, 48
      %v2354 = vld [vmem:[%s2353] sm:$0xf]
      %v2355 = vld [vmem:[%s2353 + $0x4] sm:$0xf]
      %v2356 = vld [vmem:[%s2353 + $0x8] sm:$0xf]
      %v2357 = vld [vmem:[%s2353 + $0xc] sm:$0xf]
      %v2364 = vunpack.c.l.b16 %v201
      %v2365 = vunpack.c.l.b16 %v202
      %v2366 = vunpack.c.l.b16 %v203
      %v2367 = vunpack.c.l.b16 %v204
      %v2368 = vunpack.c.l.b16 %v205
      %v2369 = vunpack.c.l.b16 %v206
      %v2370 = vpack.c.b16 %v2365, %v2364
      %v2371 = vpack.c.b16 %v2367, %v2366
      %v2372 = vpack.c.b16 %v2369, %v2368
      %v2377 = vunpack.c.l.b16 %v2354
      %v2378 = vunpack.c.l.b16 %v2355
      %v2379 = vunpack.c.l.b16 %v2356
      %v2380 = vunpack.c.l.b16 %v2357
      %v2381 = vpack.c.b16 %v2378, %v2377
      %v2382 = vpack.c.b16 %v2380, %v2379
      %v2386 = vsel %vm1092, %v2370, 0
      %v2389 = vsel %vm1092, %v2371, 0
      %v2392 = vsel %vm1092, %v2372, 0
      %2394 = vmatprep.subr.bf16.mxu0 0
      %2395 = vmatpush1.bf16.msra.mxu0 %v2381
      %2396 = vmatprep.subr.bf16.mxu0 0
      %2397 = vmatpush1.bf16.msra.mxu0 %v2382
      %2398 = vmatprep.subr.bf16.mxu0 0
      %2399 = vmatpush1.bf16.msra.mxu0 0
      %2400 = vmatprep.subr.bf16.mxu0 0
      %2401 = vmatpush1.bf16.msra.mxu0 0
      %2402 = vmatprep.subr.bf16.mxu0 0
      %2403 = vmatpush1.bf16.msra.mxu0 0
      %2404 = vmatprep.subr.bf16.mxu0 0
      %2405 = vmatpush1.bf16.msra.mxu0 0
      %2406 = vmatprep.subr.bf16.mxu0 0
      %2407 = vmatpush1.bf16.msra.mxu0 0
      %2408 = vmatprep.subr.bf16.mxu0 0
      %2409 = vmatpush1.bf16.msra.mxu0 0
      %2410 = vmatprep.subr.bf16.mxu0 0
      %2411 = vmatpush1.bf16.msra.mxu0 0
      %2412 = vmatprep.subr.bf16.mxu0 0
      %2413 = vmatpush1.bf16.msra.mxu0 0
      %2414 = vmatprep.subr.bf16.mxu0 0
      %2415 = vmatpush1.bf16.msra.mxu0 0
      %2416 = vmatprep.subr.bf16.mxu0 0
      %2417 = vmatpush1.bf16.msra.mxu0 0
      %2418 = vmatprep.subr.bf16.mxu0 0
      %2419 = vmatpush1.bf16.msra.mxu0 0
      %2420 = vmatprep.subr.bf16.mxu0 0
      %2421 = vmatpush1.bf16.msra.mxu0 0
      %2422 = vmatprep.subr.bf16.mxu0 0
      %2423 = vmatpush1.bf16.msra.mxu0 0
      %2424 = vmatprep.subr.bf16.mxu0 0
      %2425 = vmatpush1.bf16.msra.mxu0 0
      %2426 = vmatprep.mubr.bf16.mxu0 0
      %2427 = vmatmul.mubr.bf16.gmra.mrb[0].mxu0 %v2386
      %v2428 = vpop.f32.mrb[0].mxu0
      %v2429 = vadd.f32 0.0, %v2428
      %v2430 = vpop.f32.mrb[0].mxu0
      %v2431 = vpop.f32.mrb[0].mxu0
      %v2432 = vadd.f32 0.0, %v2431
      %v2433 = vpop.f32.mrb[0].mxu0
      %2434 = vmatprep.mubr.bf16.mxu0 0
      %2435 = vmatmul.mubr.bf16.gmra.mrb[0].mxu0 %v2389
      %v2436 = vpop.f32.mrb[0].mxu0
      %v2437 = vadd.f32 0.0, %v2436
      %v2438 = vpop.f32.mrb[0].mxu0
      %v2439 = vpop.f32.mrb[0].mxu0
      %v2440 = vadd.f32 0.0, %v2439
      %v2441 = vpop.f32.mrb[0].mxu0
      %2442 = vmatprep.mubr.bf16.mxu0 0
      %2443 = vmatmul.mubr.bf16.gmra.mrb[0].mxu0 %v2392
      %v2444 = vpop.f32.mrb[0].mxu0
      %v2445 = vadd.f32 0.0, %v2444
      %v2446 = vpop.f32.mrb[0].mxu0
      %v2447 = vpop.f32.mrb[0].mxu0
      %v2448 = vadd.f32 0.0, %v2447
      %v2449 = vpop.f32.mrb[0].mxu0
      %2450 = vmatprep.mubr.bf16.mxu0 0
      %2451 = vmatmul.mubr.bf16.gmra.mrb[0].mxu0 %v1094
      %v2452 = vpop.f32.mrb[0].mxu0
      %v2453 = vadd.f32 0.0, %v2452
      %v2454 = vpop.f32.mrb[0].mxu0
      %v2455 = vpop.f32.mrb[0].mxu0
      %v2456 = vadd.f32 0.0, %v2455
      %v2457 = vpop.f32.mrb[0].mxu0
      %2458 = vmatprep.mubr.bf16.mxu0 0
      %2459 = vmatmul.mubr.bf16.gmra.mrb[0].mxu0 %v1097
      %v2460 = vpop.f32.mrb[0].mxu0
      %v2461 = vadd.f32 0.0, %v2460
      %v2462 = vpop.f32.mrb[0].mxu0
      %v2463 = vpop.f32.mrb[0].mxu0
      %v2464 = vadd.f32 0.0, %v2463
      %v2465 = vpop.f32.mrb[0].mxu0
      %2466 = vmatprep.mubr.bf16.mxu0 0
      %2467 = vmatmul.mubr.bf16.gmra.mrb[0].mxu0 %v1100
      %v2468 = vpop.f32.mrb[0].mxu0
      %v2469 = vadd.f32 0.0, %v2468
      %v2470 = vpop.f32.mrb[0].mxu0
      %v2471 = vpop.f32.mrb[0].mxu0
      %v2472 = vadd.f32 0.0, %v2471
      %v2473 = vpop.f32.mrb[0].mxu0
      %2474 = vmatprep.mubr.bf16.mxu0 0
      %2475 = vmatmul.mubr.bf16.gmra.mrb[0].mxu0 %v1103
      %v2476 = vpop.f32.mrb[0].mxu0
      %v2477 = vadd.f32 0.0, %v2476
      %v2478 = vpop.f32.mrb[0].mxu0
      %v2479 = vpop.f32.mrb[0].mxu0
      %v2480 = vadd.f32 0.0, %v2479
      %v2481 = vpop.f32.mrb[0].mxu0
      %2482 = vmatprep.mubr.bf16.mxu0 0
      %2483 = vmatmul.mubr.bf16.gmra.mrb[0].mxu0 %v1106
      %v2484 = vpop.f32.mrb[0].mxu0
      %v2485 = vadd.f32 0.0, %v2484
      %v2486 = vpop.f32.mrb[0].mxu0
      %v2487 = vpop.f32.mrb[0].mxu0
      %v2488 = vadd.f32 0.0, %v2487
      %v2489 = vpop.f32.mrb[0].mxu0
      %2490 = vmatprep.mubr.bf16.mxu0 0
      %2491 = vmatmul.mubr.bf16.gmra.mrb[0].mxu0 %v1109
      %v2492 = vpop.f32.mrb[0].mxu0
      %v2493 = vadd.f32 0.0, %v2492
      %v2494 = vpop.f32.mrb[0].mxu0
      %v2495 = vpop.f32.mrb[0].mxu0
      %v2496 = vadd.f32 0.0, %v2495
      %v2497 = vpop.f32.mrb[0].mxu0
      %2498 = vmatprep.mubr.bf16.mxu0 0
      %2499 = vmatmul.mubr.bf16.gmra.mrb[0].mxu0 %v1112
      %v2500 = vpop.f32.mrb[0].mxu0
      %v2501 = vadd.f32 0.0, %v2500
      %v2502 = vpop.f32.mrb[0].mxu0
      %v2503 = vpop.f32.mrb[0].mxu0
      %v2504 = vadd.f32 0.0, %v2503
      %v2505 = vpop.f32.mrb[0].mxu0
      %2506 = vmatprep.mubr.bf16.mxu0 0
      %2507 = vmatmul.mubr.bf16.gmra.mrb[0].mxu0 %v1115
      %v2508 = vpop.f32.mrb[0].mxu0
      %v2509 = vadd.f32 0.0, %v2508
      %v2510 = vpop.f32.mrb[0].mxu0
      %v2511 = vpop.f32.mrb[0].mxu0
      %v2512 = vadd.f32 0.0, %v2511
      %v2513 = vpop.f32.mrb[0].mxu0
      %2514 = vmatprep.mubr.bf16.mxu0 0
      %2515 = vmatmul.mubr.bf16.gmra.mrb[0].mxu0 %v1118
      %v2516 = vpop.f32.mrb[0].mxu0
      %v2517 = vadd.f32 0.0, %v2516
      %v2518 = vpop.f32.mrb[0].mxu0
      %v2519 = vpop.f32.mrb[0].mxu0
      %v2520 = vadd.f32 0.0, %v2519
      %v2521 = vpop.f32.mrb[0].mxu0
      %2522 = vmatprep.mubr.bf16.mxu0 0
      %2523 = vmatmul.mubr.bf16.gmra.mrb[0].mxu0 %v1121
      %v2524 = vpop.f32.mrb[0].mxu0
      %v2525 = vadd.f32 0.0, %v2524
      %v2526 = vpop.f32.mrb[0].mxu0
      %v2527 = vpop.f32.mrb[0].mxu0
      %v2528 = vadd.f32 0.0, %v2527
      %v2529 = vpop.f32.mrb[0].mxu0
      %2530 = vmatprep.mubr.bf16.mxu0 0
      %2531 = vmatmul.mubr.bf16.gmra.mrb[0].mxu0 %v1124
      %v2532 = vpop.f32.mrb[0].mxu0
      %v2533 = vadd.f32 0.0, %v2532
      %v2534 = vpop.f32.mrb[0].mxu0
      %v2535 = vpop.f32.mrb[0].mxu0
      %v2536 = vadd.f32 0.0, %v2535
      %v2537 = vpop.f32.mrb[0].mxu0
      %2538 = vmatprep.mubr.bf16.mxu0 0
      %2539 = vmatmul.mubr.bf16.gmra.mrb[0].mxu0 %v1127
      %v2540 = vpop.f32.mrb[0].mxu0
      %v2541 = vadd.f32 0.0, %v2540
      %v2542 = vpop.f32.mrb[0].mxu0
      %v2543 = vpop.f32.mrb[0].mxu0
      %v2544 = vadd.f32 0.0, %v2543
      %v2545 = vpop.f32.mrb[0].mxu0
      %2546 = vmatprep.mubr.bf16.mxu0 0
      %2547 = vmatmul.mubr.bf16.gmra.mrb[0].mxu0 %v1130
      %v2548 = vpop.f32.mrb[0].mxu0
      %v2549 = vadd.f32 0.0, %v2548
      %v2550 = vpop.f32.mrb[0].mxu0
      %v2551 = vpop.f32.mrb[0].mxu0
      %v2552 = vadd.f32 0.0, %v2551
      %v2553 = vpop.f32.mrb[0].mxu0
      %2554 = vmatprep.mubr.bf16.mxu0 0
      %2555 = vmatmul.mubr.bf16.gmra.mrb[0].mxu0 %v1133
      %v2556 = vpop.f32.mrb[0].mxu0
      %v2557 = vadd.f32 0.0, %v2556
      %v2558 = vpop.f32.mrb[0].mxu0
      %v2559 = vpop.f32.mrb[0].mxu0
      %v2560 = vadd.f32 0.0, %v2559
      %v2561 = vpop.f32.mrb[0].mxu0
      %2562 = vmatprep.mubr.bf16.mxu0 0
      %2563 = vmatmul.mubr.bf16.gmra.mrb[0].mxu0 %v1136
      %v2564 = vpop.f32.mrb[0].mxu0
      %v2565 = vadd.f32 0.0, %v2564
      %v2566 = vpop.f32.mrb[0].mxu0
      %v2567 = vpop.f32.mrb[0].mxu0
      %v2568 = vadd.f32 0.0, %v2567
      %v2569 = vpop.f32.mrb[0].mxu0
      %2570 = vmatprep.mubr.bf16.mxu0 0
      %2571 = vmatmul.mubr.bf16.gmra.mrb[0].mxu0 %v1139
      %v2572 = vpop.f32.mrb[0].mxu0
      %v2573 = vadd.f32 0.0, %v2572
      %v2574 = vpop.f32.mrb[0].mxu0
      %v2575 = vpop.f32.mrb[0].mxu0
      %v2576 = vadd.f32 0.0, %v2575
      %v2577 = vpop.f32.mrb[0].mxu0
      %2578 = vmatprep.mubr.bf16.mxu0 0
      %2579 = vmatmul.mubr.bf16.gmra.mrb[0].mxu0 %v1142
      %v2580 = vpop.f32.mrb[0].mxu0
      %v2581 = vadd.f32 0.0, %v2580
      %v2582 = vpop.f32.mrb[0].mxu0
      %v2583 = vpop.f32.mrb[0].mxu0
      %v2584 = vadd.f32 0.0, %v2583
      %v2585 = vpop.f32.mrb[0].mxu0
      %2586 = vmatprep.mubr.bf16.mxu0 0
      %2587 = vmatmul.mubr.bf16.gmra.mrb[0].mxu0 %v1145
      %v2588 = vpop.f32.mrb[0].mxu0
      %v2589 = vadd.f32 0.0, %v2588
      %v2590 = vpop.f32.mrb[0].mxu0
      %v2591 = vpop.f32.mrb[0].mxu0
      %v2592 = vadd.f32 0.0, %v2591
      %v2593 = vpop.f32.mrb[0].mxu0
      %2594 = vmatprep.mubr.bf16.mxu0 0
      %2595 = vmatmul.mubr.bf16.gmra.mrb[0].mxu0 %v1148
      %v2596 = vpop.f32.mrb[0].mxu0
      %v2597 = vadd.f32 0.0, %v2596
      %v2598 = vpop.f32.mrb[0].mxu0
      %v2599 = vpop.f32.mrb[0].mxu0
      %v2600 = vadd.f32 0.0, %v2599
      %v2601 = vpop.f32.mrb[0].mxu0
      %2602 = vmatprep.mubr.bf16.mxu0 0
      %2603 = vmatmul.mubr.bf16.gmra.mrb[0].mxu0 %v1151
      %v2604 = vpop.f32.mrb[0].mxu0
      %v2605 = vadd.f32 0.0, %v2604
      %v2606 = vpop.f32.mrb[0].mxu0
      %v2607 = vpop.f32.mrb[0].mxu0
      %v2608 = vadd.f32 0.0, %v2607
      %v2609 = vpop.f32.mrb[0].mxu0
      %2610 = vmatprep.mubr.bf16.mxu0 0
      %2611 = vmatmul.mubr.bf16.gmra.mrb[0].mxu0 %v1154
      %v2612 = vpop.f32.mrb[0].mxu0
      %v2613 = vadd.f32 0.0, %v2612
      %v2614 = vpop.f32.mrb[0].mxu0
      %v2615 = vpop.f32.mrb[0].mxu0
      %v2616 = vadd.f32 0.0, %v2615
      %v2617 = vpop.f32.mrb[0].mxu0
      %2618 = vmatprep.mubr.bf16.mxu0 0
      %2619 = vmatmul.mubr.bf16.gmra.mrb[0].mxu0 %v1157
      %v2620 = vpop.f32.mrb[0].mxu0
      %v2621 = vadd.f32 0.0, %v2620
      %v2622 = vpop.f32.mrb[0].mxu0
      %v2623 = vpop.f32.mrb[0].mxu0
      %v2624 = vadd.f32 0.0, %v2623
      %v2625 = vpop.f32.mrb[0].mxu0
      %2626 = vmatprep.mubr.bf16.mxu0 0
      %2627 = vmatmul.mubr.bf16.gmra.mrb[0].mxu0 %v1160
      %v2628 = vpop.f32.mrb[0].mxu0
      %v2629 = vadd.f32 0.0, %v2628
      %v2630 = vpop.f32.mrb[0].mxu0
      %v2631 = vpop.f32.mrb[0].mxu0
      %v2632 = vadd.f32 0.0, %v2631
      %v2633 = vpop.f32.mrb[0].mxu0
      %2634 = vmatprep.mubr.bf16.mxu0 0
      %2635 = vmatmul.mubr.bf16.gmra.mrb[0].mxu0 %v1163
      %v2636 = vpop.f32.mrb[0].mxu0
      %v2637 = vadd.f32 0.0, %v2636
      %v2638 = vpop.f32.mrb[0].mxu0
      %v2639 = vpop.f32.mrb[0].mxu0
      %v2640 = vadd.f32 0.0, %v2639
      %v2641 = vpop.f32.mrb[0].mxu0
      %2642 = vmatprep.mubr.bf16.mxu0 0
      %2643 = vmatmul.mubr.bf16.gmra.mrb[0].mxu0 %v1166
      %v2644 = vpop.f32.mrb[0].mxu0
      %v2645 = vadd.f32 0.0, %v2644
      %v2646 = vpop.f32.mrb[0].mxu0
      %v2647 = vpop.f32.mrb[0].mxu0
      %v2648 = vadd.f32 0.0, %v2647
      %v2649 = vpop.f32.mrb[0].mxu0
      %2650 = vmatprep.mubr.bf16.mxu0 0
      %2651 = vmatmul.mubr.bf16.gmra.mrb[0].mxu0 %v1169
      %v2652 = vpop.f32.mrb[0].mxu0
      %v2653 = vadd.f32 0.0, %v2652
      %v2654 = vpop.f32.mrb[0].mxu0
      %v2655 = vpop.f32.mrb[0].mxu0
      %v2656 = vadd.f32 0.0, %v2655
      %v2657 = vpop.f32.mrb[0].mxu0
      %2658 = vmatprep.mubr.bf16.mxu0 0
      %2659 = vmatmul.mubr.bf16.gmra.mrb[0].mxu0 %v1172
      %v2660 = vpop.f32.mrb[0].mxu0
      %v2661 = vadd.f32 0.0, %v2660
      %v2662 = vpop.f32.mrb[0].mxu0
      %v2663 = vpop.f32.mrb[0].mxu0
      %v2664 = vadd.f32 0.0, %v2663
      %v2665 = vpop.f32.mrb[0].mxu0
      %2666 = vdwg.mxu0
      %v2667 = vadd.f32 %v2293, %v2429
      %v2668 = vadd.f32 %v2294, %v2432
      %v2669 = vadd.f32 %v2295, %v2437
      %v2670 = vadd.f32 %v2296, %v2440
      %v2671 = vadd.f32 %v2297, %v2445
      %v2672 = vadd.f32 %v2298, %v2448
      %v2673 = vadd.f32 %v2299, %v2453
      %v2674 = vadd.f32 %v2300, %v2456
      %v2675 = vadd.f32 %v2301, %v2461
      %v2676 = vadd.f32 %v2302, %v2464
      %v2677 = vadd.f32 %v2303, %v2469
      %v2678 = vadd.f32 %v2304, %v2472
      %v2679 = vadd.f32 %v2305, %v2477
      %v2680 = vadd.f32 %v2306, %v2480
      %v2681 = vadd.f32 %v2307, %v2485
      %v2682 = vadd.f32 %v2308, %v2488
      %v2683 = vadd.f32 %v2309, %v2493
      %v2684 = vadd.f32 %v2310, %v2496
      %v2685 = vadd.f32 %v2311, %v2501
      %v2686 = vadd.f32 %v2312, %v2504
      %v2687 = vadd.f32 %v2313, %v2509
      %v2688 = vadd.f32 %v2314, %v2512
      %v2689 = vadd.f32 %v2315, %v2517
      %v2690 = vadd.f32 %v2316, %v2520
      %v2691 = vadd.f32 %v2317, %v2525
      %v2692 = vadd.f32 %v2318, %v2528
      %v2693 = vadd.f32 %v2319, %v2533
      %v2694 = vadd.f32 %v2320, %v2536
      %v2695 = vadd.f32 %v2321, %v2541
      %v2696 = vadd.f32 %v2322, %v2544
      %v2697 = vadd.f32 %v2323, %v2549
      %v2698 = vadd.f32 %v2324, %v2552
      %v2699 = vadd.f32 %v2325, %v2557
      %v2700 = vadd.f32 %v2326, %v2560
      %v2701 = vadd.f32 %v2327, %v2565
      %v2702 = vadd.f32 %v2328, %v2568
      %v2703 = vadd.f32 %v2329, %v2573
      %v2704 = vadd.f32 %v2330, %v2576
      %v2705 = vadd.f32 %v2331, %v2581
      %v2706 = vadd.f32 %v2332, %v2584
      %v2707 = vadd.f32 %v2333, %v2589
      %v2708 = vadd.f32 %v2334, %v2592
      %v2709 = vadd.f32 %v2335, %v2597
      %v2710 = vadd.f32 %v2336, %v2600
      %v2711 = vadd.f32 %v2337, %v2605
      %v2712 = vadd.f32 %v2338, %v2608
      %v2713 = vadd.f32 %v2339, %v2613
      %v2714 = vadd.f32 %v2340, %v2616
      %v2715 = vadd.f32 %v2341, %v2621
      %v2716 = vadd.f32 %v2342, %v2624
      %v2717 = vadd.f32 %v2343, %v2629
      %v2718 = vadd.f32 %v2344, %v2632
      %v2719 = vadd.f32 %v2345, %v2637
      %v2720 = vadd.f32 %v2346, %v2640
      %v2721 = vadd.f32 %v2347, %v2645
      %v2722 = vadd.f32 %v2348, %v2648
      %v2723 = vadd.f32 %v2349, %v2653
      %v2724 = vadd.f32 %v2350, %v2656
      %v2725 = vadd.f32 %v2351, %v2661
      %v2726 = vadd.f32 %v2352, %v2664
      %v2727 = vld [vmem:[%s2] sm:$0x1]
      %v2729 = vlaneseq
      %v2730 = vshrl.u32 %v2729, 7
      %v2731 = vsub.s32 0, %v2730
      %v2732 = vrot.slane %v2727, %v2731
      %v2734 = vadd.f32 %v2667, %v2732
      %v2735 = vadd.f32 %v2668, %v2732
      %v2736 = vadd.f32 %v2669, %v2732
      %v2737 = vadd.f32 %v2670, %v2732
      %v2738 = vadd.f32 %v2671, %v2732
      %v2739 = vadd.f32 %v2672, %v2732
      %v2740 = vadd.f32 %v2673, %v2732
      %v2741 = vadd.f32 %v2674, %v2732
      %v2742 = vadd.f32 %v2675, %v2732
      %v2743 = vadd.f32 %v2676, %v2732
      %v2744 = vadd.f32 %v2677, %v2732
      %v2745 = vadd.f32 %v2678, %v2732
      %v2746 = vadd.f32 %v2679, %v2732
      %v2747 = vadd.f32 %v2680, %v2732
      %v2748 = vadd.f32 %v2681, %v2732
      %v2749 = vadd.f32 %v2682, %v2732
      %v2750 = vadd.f32 %v2683, %v2732
      %v2751 = vadd.f32 %v2684, %v2732
      %v2752 = vadd.f32 %v2685, %v2732
      %v2753 = vadd.f32 %v2686, %v2732
      %v2754 = vadd.f32 %v2687, %v2732
      %v2755 = vadd.f32 %v2688, %v2732
      %v2756 = vadd.f32 %v2689, %v2732
      %v2757 = vadd.f32 %v2690, %v2732
      %v2758 = vadd.f32 %v2691, %v2732
      %v2759 = vadd.f32 %v2692, %v2732
      %v2760 = vadd.f32 %v2693, %v2732
      %v2761 = vadd.f32 %v2694, %v2732
      %v2762 = vadd.f32 %v2695, %v2732
      %v2763 = vadd.f32 %v2696, %v2732
      %v2764 = vadd.f32 %v2697, %v2732
      %v2765 = vadd.f32 %v2698, %v2732
      %v2766 = vadd.f32 %v2699, %v2732
      %v2767 = vadd.f32 %v2700, %v2732
      %v2768 = vadd.f32 %v2701, %v2732
      %v2769 = vadd.f32 %v2702, %v2732
      %v2770 = vadd.f32 %v2703, %v2732
      %v2771 = vadd.f32 %v2704, %v2732
      %v2772 = vadd.f32 %v2705, %v2732
      %v2773 = vadd.f32 %v2706, %v2732
      %v2774 = vadd.f32 %v2707, %v2732
      %v2775 = vadd.f32 %v2708, %v2732
      %v2776 = vadd.f32 %v2709, %v2732
      %v2777 = vadd.f32 %v2710, %v2732
      %v2778 = vadd.f32 %v2711, %v2732
      %v2779 = vadd.f32 %v2712, %v2732
      %v2780 = vadd.f32 %v2713, %v2732
      %v2781 = vadd.f32 %v2714, %v2732
      %v2782 = vadd.f32 %v2715, %v2732
      %v2783 = vadd.f32 %v2716, %v2732
      %v2784 = vadd.f32 %v2717, %v2732
      %v2785 = vadd.f32 %v2718, %v2732
      %v2786 = vadd.f32 %v2719, %v2732
      %v2787 = vadd.f32 %v2720, %v2732
      %v2788 = vadd.f32 %v2721, %v2732
      %v2789 = vadd.f32 %v2722, %v2732
      %v2790 = vadd.f32 %v2723, %v2732
      %v2791 = vadd.f32 %v2724, %v2732
      %v2792 = vadd.f32 %v2725, %v2732
      %v2793 = vadd.f32 %v2726, %v2732
      %2794 = vst [vmem:[%s194] sm:$0xff] %v2734
      %2795 = vst [vmem:[%s194 + $0x8] sm:$0xff] %v2735
      %2796 = vst [vmem:[%s194 + $0x10] sm:$0xff] %v2736
      %2797 = vst [vmem:[%s194 + $0x18] sm:$0xff] %v2737
      %2798 = vst [vmem:[%s194 + $0x20] sm:$0xff] %v2738
      %2799 = vst [vmem:[%s194 + $0x28] sm:$0xff] %v2739
      %2800 = vst [vmem:[%s194 + $0x30] sm:$0xff] %v2740
      %2801 = vst [vmem:[%s194 + $0x38] sm:$0xff] %v2741
      %2802 = vst [vmem:[%s194 + $0x40] sm:$0xff] %v2742
      %2803 = vst [vmem:[%s194 + $0x48] sm:$0xff] %v2743
      %2804 = vst [vmem:[%s194 + $0x50] sm:$0xff] %v2744
      %2805 = vst [vmem:[%s194 + $0x58] sm:$0xff] %v2745
      %2806 = vst [vmem:[%s194 + $0x60] sm:$0xff] %v2746
      %2807 = vst [vmem:[%s194 + $0x68] sm:$0xff] %v2747
      %2808 = vst [vmem:[%s194 + $0x70] sm:$0xff] %v2748
      %2809 = vst [vmem:[%s194 + $0x78] sm:$0xff] %v2749
      %2810 = vst [vmem:[%s194 + $0x80] sm:$0xff] %v2750
      %2811 = vst [vmem:[%s194 + $0x88] sm:$0xff] %v2751
      %2812 = vst [vmem:[%s194 + $0x90] sm:$0xff] %v2752
      %2813 = vst [vmem:[%s194 + $0x98] sm:$0xff] %v2753
      %2814 = vst [vmem:[%s194 + $0xa0] sm:$0xff] %v2754
      %2815 = vst [vmem:[%s194 + $0xa8] sm:$0xff] %v2755
      %2816 = vst [vmem:[%s194 + $0xb0] sm:$0xff] %v2756
      %2817 = vst [vmem:[%s194 + $0xb8] sm:$0xff] %v2757
      %2818 = vst [vmem:[%s194 + $0xc0] sm:$0xff] %v2758
      %2819 = vst [vmem:[%s194 + $0xc8] sm:$0xff] %v2759
      %2820 = vst [vmem:[%s194 + $0xd0] sm:$0xff] %v2760
      %2821 = vst [vmem:[%s194 + $0xd8] sm:$0xff] %v2761
      %2822 = vst [vmem:[%s194 + $0xe0] sm:$0xff] %v2762
      %2823 = vst [vmem:[%s194 + $0xe8] sm:$0xff] %v2763
      %2824 = vst [vmem:[%s194 + $0xf0] sm:$0xff] %v2764
      %2825 = vst [vmem:[%s194 + $0xf8] sm:$0xff] %v2765
      %2826 = vst [vmem:[%s194 + $0x100] sm:$0xff] %v2766
      %2827 = vst [vmem:[%s194 + $0x108] sm:$0xff] %v2767
      %2828 = vst [vmem:[%s194 + $0x110] sm:$0xff] %v2768
      %2829 = vst [vmem:[%s194 + $0x118] sm:$0xff] %v2769
      %2830 = vst [vmem:[%s194 + $0x120] sm:$0xff] %v2770
      %2831 = vst [vmem:[%s194 + $0x128] sm:$0xff] %v2771
      %2832 = vst [vmem:[%s194 + $0x130] sm:$0xff] %v2772
      %2833 = vst [vmem:[%s194 + $0x138] sm:$0xff] %v2773
      %2834 = vst [vmem:[%s194 + $0x140] sm:$0xff] %v2774
      %2835 = vst [vmem:[%s194 + $0x148] sm:$0xff] %v2775
      %2836 = vst [vmem:[%s194 + $0x150] sm:$0xff] %v2776
      %2837 = vst [vmem:[%s194 + $0x158] sm:$0xff] %v2777
      %2838 = vst [vmem:[%s194 + $0x160] sm:$0xff] %v2778
      %2839 = vst [vmem:[%s194 + $0x168] sm:$0xff] %v2779
      %2840 = vst [vmem:[%s194 + $0x170] sm:$0xff] %v2780
      %2841 = vst [vmem:[%s194 + $0x178] sm:$0xff] %v2781
      %2842 = vst [vmem:[%s194 + $0x180] sm:$0xff] %v2782
      %2843 = vst [vmem:[%s194 + $0x188] sm:$0xff] %v2783
      %2844 = vst [vmem:[%s194 + $0x190] sm:$0xff] %v2784
      %2845 = vst [vmem:[%s194 + $0x198] sm:$0xff] %v2785
      %2846 = vst [vmem:[%s194 + $0x1a0] sm:$0xff] %v2786
      %2847 = vst [vmem:[%s194 + $0x1a8] sm:$0xff] %v2787
      %2848 = vst [vmem:[%s194 + $0x1b0] sm:$0xff] %v2788
      %2849 = vst [vmem:[%s194 + $0x1b8] sm:$0xff] %v2789
      %2850 = vst [vmem:[%s194 + $0x1c0] sm:$0xff] %v2790
      %2851 = vst [vmem:[%s194 + $0x1c8] sm:$0xff] %v2791
      %2852 = vst [vmem:[%s194 + $0x1d0] sm:$0xff] %v2792
      %2853 = vst [vmem:[%s194 + $0x1d8] sm:$0xff] %v2793
      %s2854 = smul.u32 10, %s19
      %p2855 = scmp.lt.s32.totalorder %s18, 1
      %s2856 = scalar_select %p2855, %s18, 1
      %p2857 = scmp.lt.s32.totalorder %s2854, 49
      %s2858 = scalar_select %p2857, %s2854, 49
      %s2859 = smul.addr %s2858, 6
      %s2860 = smul.addr %s2856, 300
      %s2861 = sadd.s32 %s2859, %s2860
      %s2862 = smul.addr %s2861, 8
      %s2863 = scalar_lea.vmem %s3, %s2862
      // Predicated region
      $region33: #{conv_decoder_forward.9} parent=31 // pred_check
        %p2864 = pneg %p114
      $region34: #{conv_decoder_forward.9} parent=31 // pred_check_branch
        %2866 = sbr.rel (%p2864) target = $region36
      $region35: #{conv_decoder_forward.9} parent=31 // pred_region
        %s2867 = smul.u32 10, %s19
      $region36: #{conv_decoder_forward.9} parent=31 // pred_fallthru
        _
    $region32: #{conv_decoder_forward.9} parent=5 // pred_fallthru
      _
    %p2868 = scmp.le.s32.totalorder 2, %s9
    // Predicated region
    $region37: #{conv_decoder_forward.9} parent=5 // pred_check
      %p2869 = pneg %p2868
    $region38: #{conv_decoder_forward.9} parent=5 // pred_check_branch
      %2871 = sbr.rel (%p2869) target = $region40
    $region39: #{conv_decoder_forward.9} parent=5 // pred_region
      %s2872 = ssub.s32 %s9, 2
      // Predicated region
      $region41: #{conv_decoder_forward.9} parent=39 // pred_check
        %p2873 = pneg %p120
      $region42: #{conv_decoder_forward.9} parent=39 // pred_check_branch
        %2875 = sbr.rel (%p2873) target = $region44
      $region43: #{conv_decoder_forward.9} parent=39 // pred_region
        %s2876 = smul.u32 10, %s21
        %p2877 = scmp.lt.s32.totalorder %s20, 1
        %s2878 = scalar_select %p2877, %s20, 1
        %p2879 = scmp.lt.s32.totalorder %s2876, 49
        %s2880 = scalar_select %p2879, %s2876, 49
        %s2881 = smul.addr %s2880, 6
        %s2882 = smul.addr %s2878, 300
        %s2883 = sadd.s32 %s2881, %s2882
        %s2884 = smul.addr %s2883, 8
        %s2885 = scalar_lea.vmem %s3, %s2884
      $region44: #{conv_decoder_forward.9} parent=39 // pred_fallthru
        _
    $region40: #{conv_decoder_forward.9} parent=5 // pred_fallthru
      _
  $region6: #{conv_decoder_forward.9} parent=0 // loop_footer
    %s13 = sadd.s32 1, %s9
  $region7: #{conv_decoder_forward.9} parent=0 // loop_footer_branch
    %8 = sbr.rel target = $region3
  $region8: #{conv_decoder_forward.9} parent=0 // loop_exit
    _

</llo_original>
